<compile_context>
chip_gen: v6e
topology: v6e:2x2x1
jax: 0.10.0
libtpu: 0.0.40
codegen_flags: <defaults>
</compile_context>

<pallas_src>
import functools

import jax
import jax.numpy as jnp
import numpy as np
from jax.experimental import pallas as pl
from jax.experimental.pallas import tpu as pltpu

EPS = 1e-5
LANE = 128


# ------------------- conv3x3x3 (+fused BN-ReLU on input, +fused stats) kernel -------------------

def _conv_slab_kernel(xm1_ref, x0_ref, xp1_ref, w_ref, s_ref, b_ref,   # inputs
                      o_ref, psum_ref, psq_ref,                        # outputs
                      acc_ref, pad_ref, col_ref,                       # scratch
                      *, H, W, Cin, fuse_bn_relu):
    """One grid point = (n, d): full 3x3x3 conv for the (H*W, Cout_p) output slab at batch n,
    depth d.  The 3 depth taps come in as 3 depth-shifted input views; the 9 spatial taps are
    packed into one im2col slab and contracted in a single MXU dot per depth tap."""
    d = pl.program_id(1)
    D = pl.num_programs(1)

    # Zero only the halo border (interior is fully overwritten every tap).  f32 halo keeps the
    # sublane-misaligned window stores/loads on the plain 32-bit path.
    pad_ref[0] = jnp.zeros((W + 2, Cin), jnp.float32)
    pad_ref[H + 1] = jnp.zeros((W + 2, Cin), jnp.float32)
    pad_ref[:, 0:1, :] = jnp.zeros((H + 2, 1, Cin), jnp.float32)
    pad_ref[:, W + 1:W + 2, :] = jnp.zeros((H + 2, 1, Cin), jnp.float32)

    def tap(kd, x_tap_ref, accumulate):
        xt = x_tap_ref[0].astype(jnp.float32)            # (H, W, Cin)
        if fuse_bn_relu:
            # BN-apply + ReLU of the previous layer, fused into this conv's input path
            # (f32 vregs; cast to bf16 only when building the im2col slab for the MXU).
            xt = jnp.maximum(xt * s_ref[0] + b_ref[0], 0.0)
        pad_ref[1:H + 1, 1:W + 1, :] = xt

        # Build the im2col slab once: col[:, :, (kh*3+kw)*Cin + ci] = x_pad[h+kh, w+kw, ci].
        for kh in range(3):
            for kw in range(3):
                j0 = (kh * 3 + kw) * Cin
                col_ref[:, :, j0:j0 + Cin] = (
                    pad_ref[kh:kh + H, kw:kw + W, :].astype(jnp.bfloat16))

        lhs = col_ref[...].reshape(H * W, 9 * Cin)       # bf16, K = 9*Cin
        contrib = jnp.dot(lhs, w_ref[kd], preferred_element_type=jnp.float32)
        if accumulate:
            acc_ref[...] += contrib                      # per-tap store: bounded live range
        else:
            acc_ref[...] = contrib                       # first (center) tap initializes

    # Center depth tap is always valid and initializes the accumulator.
    tap(1, x0_ref, accumulate=False)

    @pl.when(d > 0)
    def _():
        tap(0, xm1_ref, accumulate=True)

    @pl.when(d < D - 1)
    def _():
        tap(2, xp1_ref, accumulate=True)

    # Finalize: stats from the f32 accumulator (free VPU/XLU work), output possibly bf16.
    y = acc_ref[...]                                     # (H*W, Cout_p) f32
    psum_ref[0] = jnp.sum(y, axis=0, keepdims=True)
    psq_ref[0] = jnp.sum(y * y, axis=0, keepdims=True)
    o_ref[0] = y.reshape(H, W, y.shape[-1]).astype(o_ref.dtype)


def conv3x3x3_bn_stats_pallas(x4d, w_r, in_scale, in_bias, N, D, fuse_bn_relu, out_dtype):
    """x4d: (N*D, H, W, Cin) channels-last.  w_r: (3, 9*Cin, Cout_p) bf16.
    Returns y (N*D, H, W, Cout_p) out_dtype and per-(n,d) partial stats (N*D, 1, Cout_p) f32."""
    ND, H, W, Cin = x4d.shape
    assert ND == N * D
    Cout_p = w_r.shape[-1]

    kernel = functools.partial(_conv_slab_kernel, H=H, W=W, Cin=Cin,
                               fuse_bn_relu=fuse_bn_relu)

    # Three depth-shifted views of the same input (clamped at the boundaries; the invalid
    # boundary taps are skipped in-kernel, the clamped DMA is just wasted bandwidth).
    idx_m1 = lambda n, d: (n * D + jnp.maximum(d - 1, 0), 0, 0, 0)
    idx_0 = lambda n, d: (n * D + d, 0, 0, 0)
    idx_p1 = lambda n, d: (n * D + jnp.minimum(d + 1, D - 1), 0, 0, 0)

    return pl.pallas_call(
        kernel,
        out_shape=(
            jax.ShapeDtypeStruct((ND, H, W, Cout_p), out_dtype),
            jax.ShapeDtypeStruct((ND, 1, Cout_p), jnp.float32),
            jax.ShapeDtypeStruct((ND, 1, Cout_p), jnp.float32),
        ),
        grid=(N, D),
        in_specs=[
            pl.BlockSpec((1, H, W, Cin), idx_m1),
            pl.BlockSpec((1, H, W, Cin), idx_0),
            pl.BlockSpec((1, H, W, Cin), idx_p1),
            # full weight, constant index -> fetched once, stays VMEM-resident
            pl.BlockSpec((3, 9 * Cin, Cout_p), lambda n, d: (0, 0, 0)),
            pl.BlockSpec((1, Cin), lambda n, d: (0, 0)),
            pl.BlockSpec((1, Cin), lambda n, d: (0, 0)),
        ],
        out_specs=(
            pl.BlockSpec((1, H, W, Cout_p), lambda n, d: (n * D + d, 0, 0, 0)),
            pl.BlockSpec((1, 1, Cout_p), lambda n, d: (n * D + d, 0, 0)),
            pl.BlockSpec((1, 1, Cout_p), lambda n, d: (n * D + d, 0, 0)),
        ),
        scratch_shapes=[
            pltpu.VMEM((H * W, Cout_p), jnp.float32),          # f32 conv accumulator
            pltpu.VMEM((H + 2, W + 2, Cin), jnp.float32),      # zero-padded input halo slab
            pltpu.VMEM((H, W, 9 * Cin), jnp.bfloat16),         # im2col slab (MXU lhs)
        ],
        compiler_params=pltpu.CompilerParams(
            dimension_semantics=("parallel", "parallel"),
            vmem_limit_bytes=48 * 1024 * 1024),
    )(x4d, x4d, x4d, w_r, in_scale, in_bias)


# ----------------------------- bn2 + residual add kernel (lane-dense) -----------------------------

def _bn_add_kernel(y_ref, r_ref, s_ref, b_ref, o_ref):
    y = y_ref[...].astype(jnp.float32)                   # (TM, Cp)
    o_ref[...] = y * s_ref[...] + b_ref[...] + r_ref[...]


def _row_tile(M, cap=1024):
    for t in range(min(M, cap), 0, -1):
        if M % t == 0 and (t % 8 == 0 or t == M):
            return t
    return M


def bn_add_pallas(y2d, res2d_p, scale, bias):
    M, Cp = y2d.shape
    tm = _row_tile(M)
    return pl.pallas_call(
        _bn_add_kernel,
        out_shape=jax.ShapeDtypeStruct((M, Cp), jnp.float32),
        grid=(M // tm,),
        in_specs=[
            pl.BlockSpec((tm, Cp), lambda i: (i, 0)),
            pl.BlockSpec((tm, Cp), lambda i: (i, 0)),
            pl.BlockSpec((1, Cp), lambda i: (0, 0)),
            pl.BlockSpec((1, Cp), lambda i: (0, 0)),
        ],
        out_specs=pl.BlockSpec((tm, Cp), lambda i: (i, 0)),
        compiler_params=pltpu.CompilerParams(dimension_semantics=("parallel",)),
    )(y2d, res2d_p, scale, bias)


# ----------------------------- glue (weight layout, BN parameter folding) -----------------------------

def _prep_weight(w, cin_p, cout_p):
    """PyTorch Conv3d weight (Cout, Cin, 3, 3, 3) -> (3, 9*cin_p, cout_p) bf16,
    axis-1 index = (kh*3 + kw)*cin_p + ci  (matches the in-kernel im2col layout)."""
    Cout, Cin = w.shape[0], w.shape[1]
    wr = jnp.transpose(w, (2, 3, 4, 1, 0))                      # (kd, kh, kw, Cin, Cout)
    wr = jnp.pad(wr, ((0, 0), (0, 0), (0, 0), (0, cin_p - Cin), (0, cout_p - Cout)))
    return wr.reshape(3, 9 * cin_p, cout_p).astype(jnp.bfloat16)


def _bn_scale_bias(psum, psq, count, gamma_p, beta_p):
    s = jnp.sum(psum, axis=(0, 1))                       # (Cp,)
    q = jnp.sum(psq, axis=(0, 1))
    mean = s / count
    var = jnp.maximum(q / count - mean * mean, 0.0)      # guard tiny negative from cancellation
    scale = gamma_p * jax.lax.rsqrt(var + EPS)
    bias = beta_p - mean * scale
    return scale.reshape(1, -1), bias.reshape(1, -1)


# ----------------------------- forward pass -----------------------------

@jax.jit
def basic_block_3d_forward(x, w1, w2, gamma1, beta1, gamma2, beta2):
    """x: (N, C, D, H, W) f32.  stride=1, inplanes == planes (the module has no downsample)."""
    N, C, D, H, W = x.shape
    M = N * D * H * W
    Cp = ((C + LANE - 1) // LANE) * LANE                 # pad channels to a full 128-lane width

    x_cl = jnp.transpose(x, (0, 2, 3, 4, 1)).reshape(N * D, H, W, C)   # channels-last
    x_cl_bf16 = x_cl.astype(jnp.bfloat16)                # pass-1 input (re-read ~3x) in bf16
    res_p = jnp.pad(x_cl.reshape(M, C), ((0, 0), (0, Cp - C)))         # lane-dense f32 residual

    w1_r = _prep_weight(w1, cin_p=C, cout_p=Cp)          # (3, 9*C,  Cp)
    w2_r = _prep_weight(w2, cin_p=Cp, cout_p=Cp)         # (3, 9*Cp, Cp)
    g1 = jnp.pad(gamma1, (0, Cp - C)); b1 = jnp.pad(beta1, (0, Cp - C))
    g2 = jnp.pad(gamma2, (0, Cp - C)); b2 = jnp.pad(beta2, (0, Cp - C))

    dummy = jnp.zeros((1, C), jnp.float32)               # unused when fuse_bn_relu=False

    # pass 1: conv1 + fused channel stats (batch stats, i.e. training-mode BN of a fresh module)
    y1, ps1, pq1 = conv3x3x3_bn_stats_pallas(x_cl_bf16, w1_r, dummy, dummy, N, D,
                                             fuse_bn_relu=False, out_dtype=jnp.bfloat16)
    scale1, bias1 = _bn_scale_bias(ps1, pq1, M, g1, b1)

    # pass 2: bn1+relu fused onto conv2's input tiles, + fused stats for bn2
    y2, ps2, pq2 = conv3x3x3_bn_stats_pallas(y1, w2_r, scale1, bias1, N, D,
                                             fuse_bn_relu=True, out_dtype=jnp.float32)
    scale2, bias2 = _bn_scale_bias(ps2, pq2, M, g2, b2)

    # pass 3: bn2 apply + residual add (fully lane-dense on padded channels)
    out2d = bn_add_pallas(y2.reshape(M, Cp), res_p, scale2, bias2)

    out = out2d.reshape(N, D, H, W, Cp)[..., :C]         # drop channel padding (fuses w/ transpose)
    return jnp.transpose(out, (0, 4, 1, 2, 3))           # back to NCDHW


# ----------------------------- pure-JAX reference -----------------------------

def reference_forward(x, w1, w2, gamma1, beta1, gamma2, beta2):
    def conv(x, w):
        return jax.lax.conv_general_dilated(
            x, w, window_strides=(1, 1, 1),
            padding=((1, 1), (1, 1), (1, 1)),
            dimension_numbers=("NCDHW", "OIDHW", "NCDHW"),
            precision=jax.lax.Precision.HIGHEST,
        )

    def bn(x, gamma, beta):
        mean = jnp.mean(x, axis=(0, 2, 3, 4), keepdims=True)
        var = jnp.mean((x - mean) ** 2, axis=(0, 2, 3, 4), keepdims=True)
        g = gamma.reshape(1, -1, 1, 1, 1)
        b = beta.reshape(1, -1, 1, 1, 1)
        return g * (x - mean) / jnp.sqrt(var + EPS) + b

    out = jnp.maximum(bn(conv(x, w1), gamma1, beta1), 0.0)
    out = bn(conv(out, w2), gamma2, beta2)
    return out + x


# ----------------------------- main -----------------------------

if __name__ == "__main__":
    N, C, D, H, W = 2, 8, 4, 8, 8   # inplanes == planes == 8, stride = 1
    key = jax.random.PRNGKey(0)
    kx, k1, k2 = jax.random.split(key, 3)

    x = jax.random.normal(kx, (N, C, D, H, W), jnp.float32)
    w1 = jax.random.normal(k1, (C, C, 3, 3, 3), jnp.float32) * 0.1
    w2 = jax.random.normal(k2, (C, C, 3, 3, 3), jnp.float32) * 0.1
    gamma1 = jnp.ones((C,), jnp.float32)
    beta1 = jnp.zeros((C,), jnp.float32)
    gamma2 = jnp.ones((C,), jnp.float32)
    beta2 = jnp.zeros((C,), jnp.float32)
    # TODO(synk): BN running_mean/running_var buffer updates (momentum=0.1) are training-time
    # state tracking, not part of the forward math, and are not reproduced here.

    out = basic_block_3d_forward(x, w1, w2, gamma1, beta1, gamma2, beta2)
    out = jax.block_until_ready(out)

    ref = reference_forward(x, w1, w2, gamma1, beta1, gamma2, beta2)
    # Tolerance loosened vs the f32 HIGHEST-precision reference: the Pallas convs feed the MXU
    # bf16 inputs (f32 accumulation) and y1 is stored as bf16, per the performance review.
    np.testing.assert_allclose(np.asarray(out), np.asarray(ref), rtol=3e-2, atol=3e-2)

    print("KERNEL_OK")
</pallas_src>

<mosaic_0001>
module attributes {stable_mosaic.version = 11 : i64} {
  func.func @_conv_slab_kernel(%arg0: i32, %arg1: i32, %arg2: memref<1x8x8x8xbf16, #tpu.memory_space<vmem>>, %arg3: memref<1x8x8x8xbf16, #tpu.memory_space<vmem>>, %arg4: memref<1x8x8x8xbf16, #tpu.memory_space<vmem>>, %arg5: memref<3x72x128xbf16, #tpu.memory_space<vmem>>, %arg6: memref<1x8xf32, #tpu.memory_space<vmem>>, %arg7: memref<1x8xf32, #tpu.memory_space<vmem>>, %arg8: memref<1x8x8x128xbf16, #tpu.memory_space<vmem>>, %arg9: memref<1x1x128xf32, #tpu.memory_space<vmem>>, %arg10: memref<1x1x128xf32, #tpu.memory_space<vmem>>, %arg11: memref<64x128xf32, #tpu.memory_space<vmem>>, %arg12: memref<10x10x8xf32, #tpu.memory_space<vmem>>, %arg13: memref<8x8x72xbf16, #tpu.memory_space<vmem>>) attributes {dimension_semantics = [#tpu.dimension_semantics<parallel>, #tpu.dimension_semantics<parallel>], iteration_bounds = array<i64: 2, 4>, scalar_prefetch = 0 : i64, scratch_operands = 3 : i64, tpu.core_type = #tpu.core_type<tc>, window_params = [{transform_indices = @transform_0, window_bounds = array<i64: 1, 8, 8, 8>}, {transform_indices = @transform_1, window_bounds = array<i64: 1, 8, 8, 8>}, {transform_indices = @transform_2, window_bounds = array<i64: 1, 8, 8, 8>}, {pipeline_mode = #tpu.pipeline_mode<synchronous>, transform_indices = @transform_3, window_bounds = array<i64: 3, 72, 128>}, {pipeline_mode = #tpu.pipeline_mode<synchronous>, transform_indices = @transform_4, window_bounds = array<i64: 1, 8>}, {pipeline_mode = #tpu.pipeline_mode<synchronous>, transform_indices = @transform_5, window_bounds = array<i64: 1, 8>}, {transform_indices = @transform_6, window_bounds = array<i64: 1, 8, 8, 128>}, {transform_indices = @transform_7, window_bounds = array<i64: 1, 1, 128>}, {transform_indices = @transform_8, window_bounds = array<i64: 1, 1, 128>}]} {
    %cst = arith.constant 0.000000e+00 : f32
    %0 = vector.broadcast %cst : f32 to vector<10x8xf32>
    %c0 = arith.constant 0 : index
    %c0_0 = arith.constant 0 : index
    %c0_1 = arith.constant 0 : index
    %1 = vector.load %arg12[%c0, %c0_0, %c0_1] : memref<10x10x8xf32, #tpu.memory_space<vmem>>, vector<1x10x8xf32>
    %2 = vector.shape_cast %1 : vector<1x10x8xf32> to vector<10x8xf32>
    %3 = vector.shape_cast %0 : vector<10x8xf32> to vector<1x10x8xf32>
    tpu.vector_store %arg12[%c0, %c0_0, %c0_1], %3 {strides = array<i32>} : memref<10x10x8xf32, #tpu.memory_space<vmem>>, vector<1x10x8xf32>,
    %cst_2 = arith.constant 0.000000e+00 : f32
    %4 = vector.broadcast %cst_2 : f32 to vector<10x8xf32>
    %c9 = arith.constant 9 : index
    %c0_3 = arith.constant 0 : index
    %c0_4 = arith.constant 0 : index
    %5 = vector.load %arg12[%c9, %c0_3, %c0_4] : memref<10x10x8xf32, #tpu.memory_space<vmem>>, vector<1x10x8xf32>
    %6 = vector.shape_cast %5 : vector<1x10x8xf32> to vector<10x8xf32>
    %7 = vector.shape_cast %4 : vector<10x8xf32> to vector<1x10x8xf32>
    tpu.vector_store %arg12[%c9, %c0_3, %c0_4], %7 {strides = array<i32>} : memref<10x10x8xf32, #tpu.memory_space<vmem>>, vector<1x10x8xf32>,
    %cst_5 = arith.constant 0.000000e+00 : f32
    %8 = vector.broadcast %cst_5 : f32 to vector<10x1x8xf32>
    %c0_6 = arith.constant 0 : index
    %c0_7 = arith.constant 0 : index
    %c0_8 = arith.constant 0 : index
    %9 = vector.load %arg12[%c0_6, %c0_7, %c0_8] : memref<10x10x8xf32, #tpu.memory_space<vmem>>, vector<10x1x8xf32>
    tpu.vector_store %arg12[%c0_6, %c0_7, %c0_8], %8 {strides = array<i32>} : memref<10x10x8xf32, #tpu.memory_space<vmem>>, vector<10x1x8xf32>,
    %cst_9 = arith.constant 0.000000e+00 : f32
    %10 = vector.broadcast %cst_9 : f32 to vector<10x1x8xf32>
    %c0_10 = arith.constant 0 : index
    %c9_11 = arith.constant 9 : index
    %c0_12 = arith.constant 0 : index
    %11 = vector.load %arg12[%c0_10, %c9_11, %c0_12] : memref<10x10x8xf32, #tpu.memory_space<vmem>>, vector<10x1x8xf32>
    tpu.vector_store %arg12[%c0_10, %c9_11, %c0_12], %10 {strides = array<i32>} : memref<10x10x8xf32, #tpu.memory_space<vmem>>, vector<10x1x8xf32>,
    %c0_13 = arith.constant 0 : index
    %c0_14 = arith.constant 0 : index
    %c0_15 = arith.constant 0 : index
    %c0_16 = arith.constant 0 : index
    %12 = vector.load %arg3[%c0_13, %c0_14, %c0_15, %c0_16] : memref<1x8x8x8xbf16, #tpu.memory_space<vmem>>, vector<1x8x8x8xbf16>
    %13 = vector.shape_cast %12 : vector<1x8x8x8xbf16> to vector<8x8x8xbf16>
    %14 = arith.extf %13 : vector<8x8x8xbf16> to vector<8x8x8xf32>
    %c1 = arith.constant 1 : index
    %c1_17 = arith.constant 1 : index
    %c0_18 = arith.constant 0 : index
    %15 = vector.load %arg12[%c1, %c1_17, %c0_18] : memref<10x10x8xf32, #tpu.memory_space<vmem>>, vector<8x8x8xf32>
    tpu.vector_store %arg12[%c1, %c1_17, %c0_18], %14 {strides = array<i32>} : memref<10x10x8xf32, #tpu.memory_space<vmem>>, vector<8x8x8xf32>,
    %c0_19 = arith.constant 0 : index
    %c0_20 = arith.constant 0 : index
    %c0_21 = arith.constant 0 : index
    %16 = vector.load %arg12[%c0_19, %c0_20, %c0_21] : memref<10x10x8xf32, #tpu.memory_space<vmem>>, vector<8x8x8xf32>
    %17 = arith.truncf %16 : vector<8x8x8xf32> to vector<8x8x8xbf16>
    %c0_22 = arith.constant 0 : index
    %c0_23 = arith.constant 0 : index
    %c0_24 = arith.constant 0 : index
    %18 = vector.load %arg13[%c0_22, %c0_23, %c0_24] : memref<8x8x72xbf16, #tpu.memory_space<vmem>>, vector<8x8x8xbf16>
    tpu.vector_store %arg13[%c0_22, %c0_23, %c0_24], %17 {strides = array<i32>} : memref<8x8x72xbf16, #tpu.memory_space<vmem>>, vector<8x8x8xbf16>,
    %c0_25 = arith.constant 0 : index
    %c1_26 = arith.constant 1 : index
    %c0_27 = arith.constant 0 : index
    %19 = vector.load %arg12[%c0_25, %c1_26, %c0_27] : memref<10x10x8xf32, #tpu.memory_space<vmem>>, vector<8x8x8xf32>
    %20 = arith.truncf %19 : vector<8x8x8xf32> to vector<8x8x8xbf16>
    %c0_28 = arith.constant 0 : index
    %c0_29 = arith.constant 0 : index
    %c8 = arith.constant 8 : index
    %21 = vector.load %arg13[%c0_28, %c0_29, %c8] : memref<8x8x72xbf16, #tpu.memory_space<vmem>>, vector<8x8x8xbf16>
    tpu.vector_store %arg13[%c0_28, %c0_29, %c8], %20 {strides = array<i32>} : memref<8x8x72xbf16, #tpu.memory_space<vmem>>, vector<8x8x8xbf16>,
    %c0_30 = arith.constant 0 : index
    %c2 = arith.constant 2 : index
    %c0_31 = arith.constant 0 : index
    %22 = vector.load %arg12[%c0_30, %c2, %c0_31] : memref<10x10x8xf32, #tpu.memory_space<vmem>>, vector<8x8x8xf32>
    %23 = arith.truncf %22 : vector<8x8x8xf32> to vector<8x8x8xbf16>
    %c0_32 = arith.constant 0 : index
    %c0_33 = arith.constant 0 : index
    %c16 = arith.constant 16 : index
    %24 = vector.load %arg13[%c0_32, %c0_33, %c16] : memref<8x8x72xbf16, #tpu.memory_space<vmem>>, vector<8x8x8xbf16>
    tpu.vector_store %arg13[%c0_32, %c0_33, %c16], %23 {strides = array<i32>} : memref<8x8x72xbf16, #tpu.memory_space<vmem>>, vector<8x8x8xbf16>,
    %c1_34 = arith.constant 1 : index
    %c0_35 = arith.constant 0 : index
    %c0_36 = arith.constant 0 : index
    %25 = vector.load %arg12[%c1_34, %c0_35, %c0_36] : memref<10x10x8xf32, #tpu.memory_space<vmem>>, vector<8x8x8xf32>
    %26 = arith.truncf %25 : vector<8x8x8xf32> to vector<8x8x8xbf16>
    %c0_37 = arith.constant 0 : index
    %c0_38 = arith.constant 0 : index
    %c24 = arith.constant 24 : index
    %27 = vector.load %arg13[%c0_37, %c0_38, %c24] : memref<8x8x72xbf16, #tpu.memory_space<vmem>>, vector<8x8x8xbf16>
    tpu.vector_store %arg13[%c0_37, %c0_38, %c24], %26 {strides = array<i32>} : memref<8x8x72xbf16, #tpu.memory_space<vmem>>, vector<8x8x8xbf16>,
    %c1_39 = arith.constant 1 : index
    %c1_40 = arith.constant 1 : index
    %c0_41 = arith.constant 0 : index
    %28 = vector.load %arg12[%c1_39, %c1_40, %c0_41] : memref<10x10x8xf32, #tpu.memory_space<vmem>>, vector<8x8x8xf32>
    %29 = arith.truncf %28 : vector<8x8x8xf32> to vector<8x8x8xbf16>
    %c0_42 = arith.constant 0 : index
    %c0_43 = arith.constant 0 : index
    %c32 = arith.constant 32 : index
    %30 = vector.load %arg13[%c0_42, %c0_43, %c32] : memref<8x8x72xbf16, #tpu.memory_space<vmem>>, vector<8x8x8xbf16>
    tpu.vector_store %arg13[%c0_42, %c0_43, %c32], %29 {strides = array<i32>} : memref<8x8x72xbf16, #tpu.memory_space<vmem>>, vector<8x8x8xbf16>,
    %c1_44 = arith.constant 1 : index
    %c2_45 = arith.constant 2 : index
    %c0_46 = arith.constant 0 : index
    %31 = vector.load %arg12[%c1_44, %c2_45, %c0_46] : memref<10x10x8xf32, #tpu.memory_space<vmem>>, vector<8x8x8xf32>
    %32 = arith.truncf %31 : vector<8x8x8xf32> to vector<8x8x8xbf16>
    %c0_47 = arith.constant 0 : index
    %c0_48 = arith.constant 0 : index
    %c40 = arith.constant 40 : index
    %33 = vector.load %arg13[%c0_47, %c0_48, %c40] : memref<8x8x72xbf16, #tpu.memory_space<vmem>>, vector<8x8x8xbf16>
    tpu.vector_store %arg13[%c0_47, %c0_48, %c40], %32 {strides = array<i32>} : memref<8x8x72xbf16, #tpu.memory_space<vmem>>, vector<8x8x8xbf16>,
    %c2_49 = arith.constant 2 : index
    %c0_50 = arith.constant 0 : index
    %c0_51 = arith.constant 0 : index
    %34 = vector.load %arg12[%c2_49, %c0_50, %c0_51] : memref<10x10x8xf32, #tpu.memory_space<vmem>>, vector<8x8x8xf32>
    %35 = arith.truncf %34 : vector<8x8x8xf32> to vector<8x8x8xbf16>
    %c0_52 = arith.constant 0 : index
    %c0_53 = arith.constant 0 : index
    %c48 = arith.constant 48 : index
    %36 = vector.load %arg13[%c0_52, %c0_53, %c48] : memref<8x8x72xbf16, #tpu.memory_space<vmem>>, vector<8x8x8xbf16>
    tpu.vector_store %arg13[%c0_52, %c0_53, %c48], %35 {strides = array<i32>} : memref<8x8x72xbf16, #tpu.memory_space<vmem>>, vector<8x8x8xbf16>,
    %c2_54 = arith.constant 2 : index
    %c1_55 = arith.constant 1 : index
    %c0_56 = arith.constant 0 : index
    %37 = vector.load %arg12[%c2_54, %c1_55, %c0_56] : memref<10x10x8xf32, #tpu.memory_space<vmem>>, vector<8x8x8xf32>
    %38 = arith.truncf %37 : vector<8x8x8xf32> to vector<8x8x8xbf16>
    %c0_57 = arith.constant 0 : index
    %c0_58 = arith.constant 0 : index
    %c56 = arith.constant 56 : index
    %39 = vector.load %arg13[%c0_57, %c0_58, %c56] : memref<8x8x72xbf16, #tpu.memory_space<vmem>>, vector<8x8x8xbf16>
    tpu.vector_store %arg13[%c0_57, %c0_58, %c56], %38 {strides = array<i32>} : memref<8x8x72xbf16, #tpu.memory_space<vmem>>, vector<8x8x8xbf16>,
    %c2_59 = arith.constant 2 : index
    %c2_60 = arith.constant 2 : index
    %c0_61 = arith.constant 0 : index
    %40 = vector.load %arg12[%c2_59, %c2_60, %c0_61] : memref<10x10x8xf32, #tpu.memory_space<vmem>>, vector<8x8x8xf32>
    %41 = arith.truncf %40 : vector<8x8x8xf32> to vector<8x8x8xbf16>
    %c0_62 = arith.constant 0 : index
    %c0_63 = arith.constant 0 : index
    %c64 = arith.constant 64 : index
    %42 = vector.load %arg13[%c0_62, %c0_63, %c64] : memref<8x8x72xbf16, #tpu.memory_space<vmem>>, vector<8x8x8xbf16>
    tpu.vector_store %arg13[%c0_62, %c0_63, %c64], %41 {strides = array<i32>} : memref<8x8x72xbf16, #tpu.memory_space<vmem>>, vector<8x8x8xbf16>,
    %c0_64 = arith.constant 0 : index
    %c0_65 = arith.constant 0 : index
    %c0_66 = arith.constant 0 : index
    %43 = vector.load %arg13[%c0_64, %c0_65, %c0_66] : memref<8x8x72xbf16, #tpu.memory_space<vmem>>, vector<8x8x72xbf16>
    %44 = vector.shape_cast %43 : vector<8x8x72xbf16> to vector<64x72xbf16>
    %c1_67 = arith.constant 1 : index
    %c0_68 = arith.constant 0 : index
    %c0_69 = arith.constant 0 : index
    %45 = vector.load %arg5[%c1_67, %c0_68, %c0_69] : memref<3x72x128xbf16, #tpu.memory_space<vmem>>, vector<1x72x128xbf16>
    %46 = vector.shape_cast %45 : vector<1x72x128xbf16> to vector<72x128xbf16>
    %cst_70 = arith.constant dense<0.000000e+00> : vector<64x128xf32>
    %47 = tpu.matmul %44, %46, %cst_70 {dimension_numbers = #tpu.dot_dimension_numbers<[1], [0], [0], [1], [0, 0, 1, 1], [], []>} : vector<64x72xbf16>, vector<72x128xbf16>, vector<64x128xf32> -> vector<64x128xf32>
    %c0_71 = arith.constant 0 : index
    %c0_72 = arith.constant 0 : index
    %48 = vector.load %arg11[%c0_71, %c0_72] : memref<64x128xf32, #tpu.memory_space<vmem>>, vector<64x128xf32>
    tpu.vector_store %arg11[%c0_71, %c0_72], %47 {strides = array<i32>} : memref<64x128xf32, #tpu.memory_space<vmem>>, vector<64x128xf32>,
    %c0_i32 = arith.constant 0 : i32
    %49 = arith.cmpi sgt, %arg1, %c0_i32 : i32
    %50 = arith.extui %49 : i1 to i32
    %c0_i32_73 = arith.constant 0 : i32
    %51 = arith.cmpi ne, %50, %c0_i32_73 : i32
    scf.if %51 {
      %c0_89 = arith.constant 0 : index
      %c0_90 = arith.constant 0 : index
      %c0_91 = arith.constant 0 : index
      %c0_92 = arith.constant 0 : index
      %72 = vector.load %arg2[%c0_89, %c0_90, %c0_91, %c0_92] : memref<1x8x8x8xbf16, #tpu.memory_space<vmem>>, vector<1x8x8x8xbf16>
      %73 = vector.shape_cast %72 : vector<1x8x8x8xbf16> to vector<8x8x8xbf16>
      %74 = arith.extf %73 : vector<8x8x8xbf16> to vector<8x8x8xf32>
      %c1_93 = arith.constant 1 : index
      %c1_94 = arith.constant 1 : index
      %c0_95 = arith.constant 0 : index
      %75 = vector.load %arg12[%c1_93, %c1_94, %c0_95] : memref<10x10x8xf32, #tpu.memory_space<vmem>>, vector<8x8x8xf32>
      tpu.vector_store %arg12[%c1_93, %c1_94, %c0_95], %74 {strides = array<i32>} : memref<10x10x8xf32, #tpu.memory_space<vmem>>, vector<8x8x8xf32>,
      %c0_96 = arith.constant 0 : index
      %c0_97 = arith.constant 0 : index
      %c0_98 = arith.constant 0 : index
      %76 = vector.load %arg12[%c0_96, %c0_97, %c0_98] : memref<10x10x8xf32, #tpu.memory_space<vmem>>, vector<8x8x8xf32>
      %77 = arith.truncf %76 : vector<8x8x8xf32> to vector<8x8x8xbf16>
      %c0_99 = arith.constant 0 : index
      %c0_100 = arith.constant 0 : index
      %c0_101 = arith.constant 0 : index
      %78 = vector.load %arg13[%c0_99, %c0_100, %c0_101] : memref<8x8x72xbf16, #tpu.memory_space<vmem>>, vector<8x8x8xbf16>
      tpu.vector_store %arg13[%c0_99, %c0_100, %c0_101], %77 {strides = array<i32>} : memref<8x8x72xbf16, #tpu.memory_space<vmem>>, vector<8x8x8xbf16>,
      %c0_102 = arith.constant 0 : index
      %c1_103 = arith.constant 1 : index
      %c0_104 = arith.constant 0 : index
      %79 = vector.load %arg12[%c0_102, %c1_103, %c0_104] : memref<10x10x8xf32, #tpu.memory_space<vmem>>, vector<8x8x8xf32>
      %80 = arith.truncf %79 : vector<8x8x8xf32> to vector<8x8x8xbf16>
      %c0_105 = arith.constant 0 : index
      %c0_106 = arith.constant 0 : index
      %c8_107 = arith.constant 8 : index
      %81 = vector.load %arg13[%c0_105, %c0_106, %c8_107] : memref<8x8x72xbf16, #tpu.memory_space<vmem>>, vector<8x8x8xbf16>
      tpu.vector_store %arg13[%c0_105, %c0_106, %c8_107], %80 {strides = array<i32>} : memref<8x8x72xbf16, #tpu.memory_space<vmem>>, vector<8x8x8xbf16>,
      %c0_108 = arith.constant 0 : index
      %c2_109 = arith.constant 2 : index
      %c0_110 = arith.constant 0 : index
      %82 = vector.load %arg12[%c0_108, %c2_109, %c0_110] : memref<10x10x8xf32, #tpu.memory_space<vmem>>, vector<8x8x8xf32>
      %83 = arith.truncf %82 : vector<8x8x8xf32> to vector<8x8x8xbf16>
      %c0_111 = arith.constant 0 : index
      %c0_112 = arith.constant 0 : index
      %c16_113 = arith.constant 16 : index
      %84 = vector.load %arg13[%c0_111, %c0_112, %c16_113] : memref<8x8x72xbf16, #tpu.memory_space<vmem>>, vector<8x8x8xbf16>
      tpu.vector_store %arg13[%c0_111, %c0_112, %c16_113], %83 {strides = array<i32>} : memref<8x8x72xbf16, #tpu.memory_space<vmem>>, vector<8x8x8xbf16>,
      %c1_114 = arith.constant 1 : index
      %c0_115 = arith.constant 0 : index
      %c0_116 = arith.constant 0 : index
      %85 = vector.load %arg12[%c1_114, %c0_115, %c0_116] : memref<10x10x8xf32, #tpu.memory_space<vmem>>, vector<8x8x8xf32>
      %86 = arith.truncf %85 : vector<8x8x8xf32> to vector<8x8x8xbf16>
      %c0_117 = arith.constant 0 : index
      %c0_118 = arith.constant 0 : index
      %c24_119 = arith.constant 24 : index
      %87 = vector.load %arg13[%c0_117, %c0_118, %c24_119] : memref<8x8x72xbf16, #tpu.memory_space<vmem>>, vector<8x8x8xbf16>
      tpu.vector_store %arg13[%c0_117, %c0_118, %c24_119], %86 {strides = array<i32>} : memref<8x8x72xbf16, #tpu.memory_space<vmem>>, vector<8x8x8xbf16>,
      %c1_120 = arith.constant 1 : index
      %c1_121 = arith.constant 1 : index
      %c0_122 = arith.constant 0 : index
      %88 = vector.load %arg12[%c1_120, %c1_121, %c0_122] : memref<10x10x8xf32, #tpu.memory_space<vmem>>, vector<8x8x8xf32>
      %89 = arith.truncf %88 : vector<8x8x8xf32> to vector<8x8x8xbf16>
      %c0_123 = arith.constant 0 : index
      %c0_124 = arith.constant 0 : index
      %c32_125 = arith.constant 32 : index
      %90 = vector.load %arg13[%c0_123, %c0_124, %c32_125] : memref<8x8x72xbf16, #tpu.memory_space<vmem>>, vector<8x8x8xbf16>
      tpu.vector_store %arg13[%c0_123, %c0_124, %c32_125], %89 {strides = array<i32>} : memref<8x8x72xbf16, #tpu.memory_space<vmem>>, vector<8x8x8xbf16>,
      %c1_126 = arith.constant 1 : index
      %c2_127 = arith.constant 2 : index
      %c0_128 = arith.constant 0 : index
      %91 = vector.load %arg12[%c1_126, %c2_127, %c0_128] : memref<10x10x8xf32, #tpu.memory_space<vmem>>, vector<8x8x8xf32>
      %92 = arith.truncf %91 : vector<8x8x8xf32> to vector<8x8x8xbf16>
      %c0_129 = arith.constant 0 : index
      %c0_130 = arith.constant 0 : index
      %c40_131 = arith.constant 40 : index
      %93 = vector.load %arg13[%c0_129, %c0_130, %c40_131] : memref<8x8x72xbf16, #tpu.memory_space<vmem>>, vector<8x8x8xbf16>
      tpu.vector_store %arg13[%c0_129, %c0_130, %c40_131], %92 {strides = array<i32>} : memref<8x8x72xbf16, #tpu.memory_space<vmem>>, vector<8x8x8xbf16>,
      %c2_132 = arith.constant 2 : index
      %c0_133 = arith.constant 0 : index
      %c0_134 = arith.constant 0 : index
      %94 = vector.load %arg12[%c2_132, %c0_133, %c0_134] : memref<10x10x8xf32, #tpu.memory_space<vmem>>, vector<8x8x8xf32>
      %95 = arith.truncf %94 : vector<8x8x8xf32> to vector<8x8x8xbf16>
      %c0_135 = arith.constant 0 : index
      %c0_136 = arith.constant 0 : index
      %c48_137 = arith.constant 48 : index
      %96 = vector.load %arg13[%c0_135, %c0_136, %c48_137] : memref<8x8x72xbf16, #tpu.memory_space<vmem>>, vector<8x8x8xbf16>
      tpu.vector_store %arg13[%c0_135, %c0_136, %c48_137], %95 {strides = array<i32>} : memref<8x8x72xbf16, #tpu.memory_space<vmem>>, vector<8x8x8xbf16>,
      %c2_138 = arith.constant 2 : index
      %c1_139 = arith.constant 1 : index
      %c0_140 = arith.constant 0 : index
      %97 = vector.load %arg12[%c2_138, %c1_139, %c0_140] : memref<10x10x8xf32, #tpu.memory_space<vmem>>, vector<8x8x8xf32>
      %98 = arith.truncf %97 : vector<8x8x8xf32> to vector<8x8x8xbf16>
      %c0_141 = arith.constant 0 : index
      %c0_142 = arith.constant 0 : index
      %c56_143 = arith.constant 56 : index
      %99 = vector.load %arg13[%c0_141, %c0_142, %c56_143] : memref<8x8x72xbf16, #tpu.memory_space<vmem>>, vector<8x8x8xbf16>
      tpu.vector_store %arg13[%c0_141, %c0_142, %c56_143], %98 {strides = array<i32>} : memref<8x8x72xbf16, #tpu.memory_space<vmem>>, vector<8x8x8xbf16>,
      %c2_144 = arith.constant 2 : index
      %c2_145 = arith.constant 2 : index
      %c0_146 = arith.constant 0 : index
      %100 = vector.load %arg12[%c2_144, %c2_145, %c0_146] : memref<10x10x8xf32, #tpu.memory_space<vmem>>, vector<8x8x8xf32>
      %101 = arith.truncf %100 : vector<8x8x8xf32> to vector<8x8x8xbf16>
      %c0_147 = arith.constant 0 : index
      %c0_148 = arith.constant 0 : index
      %c64_149 = arith.constant 64 : index
      %102 = vector.load %arg13[%c0_147, %c0_148, %c64_149] : memref<8x8x72xbf16, #tpu.memory_space<vmem>>, vector<8x8x8xbf16>
      tpu.vector_store %arg13[%c0_147, %c0_148, %c64_149], %101 {strides = array<i32>} : memref<8x8x72xbf16, #tpu.memory_space<vmem>>, vector<8x8x8xbf16>,
      %c0_150 = arith.constant 0 : index
      %c0_151 = arith.constant 0 : index
      %c0_152 = arith.constant 0 : index
      %103 = vector.load %arg13[%c0_150, %c0_151, %c0_152] : memref<8x8x72xbf16, #tpu.memory_space<vmem>>, vector<8x8x72xbf16>
      %104 = vector.shape_cast %103 : vector<8x8x72xbf16> to vector<64x72xbf16>
      %c0_153 = arith.constant 0 : index
      %c0_154 = arith.constant 0 : index
      %c0_155 = arith.constant 0 : index
      %105 = vector.load %arg5[%c0_153, %c0_154, %c0_155] : memref<3x72x128xbf16, #tpu.memory_space<vmem>>, vector<1x72x128xbf16>
      %106 = vector.shape_cast %105 : vector<1x72x128xbf16> to vector<72x128xbf16>
      %cst_156 = arith.constant dense<0.000000e+00> : vector<64x128xf32>
      %107 = tpu.matmul %104, %106, %cst_156 {dimension_numbers = #tpu.dot_dimension_numbers<[1], [0], [0], [1], [0, 0, 1, 1], [], []>} : vector<64x72xbf16>, vector<72x128xbf16>, vector<64x128xf32> -> vector<64x128xf32>
      %c0_157 = arith.constant 0 : index
      %c0_158 = arith.constant 0 : index
      %108 = vector.load %arg11[%c0_157, %c0_158] : memref<64x128xf32, #tpu.memory_space<vmem>>, vector<64x128xf32>
      %109 = arith.addf %108, %107 : vector<64x128xf32>
      %c0_159 = arith.constant 0 : index
      %c0_160 = arith.constant 0 : index
      %110 = vector.load %arg11[%c0_159, %c0_160] : memref<64x128xf32, #tpu.memory_space<vmem>>, vector<64x128xf32>
      tpu.vector_store %arg11[%c0_159, %c0_160], %109 {strides = array<i32>} : memref<64x128xf32, #tpu.memory_space<vmem>>, vector<64x128xf32>,
    } else {
    }
    %c3_i32 = arith.constant 3 : i32
    %52 = arith.cmpi slt, %arg1, %c3_i32 : i32
    %53 = arith.extui %52 : i1 to i32
    %c0_i32_74 = arith.constant 0 : i32
    %54 = arith.cmpi ne, %53, %c0_i32_74 : i32
    scf.if %54 {
      %c0_89 = arith.constant 0 : index
      %c0_90 = arith.constant 0 : index
      %c0_91 = arith.constant 0 : index
      %c0_92 = arith.constant 0 : index
      %72 = vector.load %arg4[%c0_89, %c0_90, %c0_91, %c0_92] : memref<1x8x8x8xbf16, #tpu.memory_space<vmem>>, vector<1x8x8x8xbf16>
      %73 = vector.shape_cast %72 : vector<1x8x8x8xbf16> to vector<8x8x8xbf16>
      %74 = arith.extf %73 : vector<8x8x8xbf16> to vector<8x8x8xf32>
      %c1_93 = arith.constant 1 : index
      %c1_94 = arith.constant 1 : index
      %c0_95 = arith.constant 0 : index
      %75 = vector.load %arg12[%c1_93, %c1_94, %c0_95] : memref<10x10x8xf32, #tpu.memory_space<vmem>>, vector<8x8x8xf32>
      tpu.vector_store %arg12[%c1_93, %c1_94, %c0_95], %74 {strides = array<i32>} : memref<10x10x8xf32, #tpu.memory_space<vmem>>, vector<8x8x8xf32>,
      %c0_96 = arith.constant 0 : index
      %c0_97 = arith.constant 0 : index
      %c0_98 = arith.constant 0 : index
      %76 = vector.load %arg12[%c0_96, %c0_97, %c0_98] : memref<10x10x8xf32, #tpu.memory_space<vmem>>, vector<8x8x8xf32>
      %77 = arith.truncf %76 : vector<8x8x8xf32> to vector<8x8x8xbf16>
      %c0_99 = arith.constant 0 : index
      %c0_100 = arith.constant 0 : index
      %c0_101 = arith.constant 0 : index
      %78 = vector.load %arg13[%c0_99, %c0_100, %c0_101] : memref<8x8x72xbf16, #tpu.memory_space<vmem>>, vector<8x8x8xbf16>
      tpu.vector_store %arg13[%c0_99, %c0_100, %c0_101], %77 {strides = array<i32>} : memref<8x8x72xbf16, #tpu.memory_space<vmem>>, vector<8x8x8xbf16>,
      %c0_102 = arith.constant 0 : index
      %c1_103 = arith.constant 1 : index
      %c0_104 = arith.constant 0 : index
      %79 = vector.load %arg12[%c0_102, %c1_103, %c0_104] : memref<10x10x8xf32, #tpu.memory_space<vmem>>, vector<8x8x8xf32>
      %80 = arith.truncf %79 : vector<8x8x8xf32> to vector<8x8x8xbf16>
      %c0_105 = arith.constant 0 : index
      %c0_106 = arith.constant 0 : index
      %c8_107 = arith.constant 8 : index
      %81 = vector.load %arg13[%c0_105, %c0_106, %c8_107] : memref<8x8x72xbf16, #tpu.memory_space<vmem>>, vector<8x8x8xbf16>
      tpu.vector_store %arg13[%c0_105, %c0_106, %c8_107], %80 {strides = array<i32>} : memref<8x8x72xbf16, #tpu.memory_space<vmem>>, vector<8x8x8xbf16>,
      %c0_108 = arith.constant 0 : index
      %c2_109 = arith.constant 2 : index
      %c0_110 = arith.constant 0 : index
      %82 = vector.load %arg12[%c0_108, %c2_109, %c0_110] : memref<10x10x8xf32, #tpu.memory_space<vmem>>, vector<8x8x8xf32>
      %83 = arith.truncf %82 : vector<8x8x8xf32> to vector<8x8x8xbf16>
      %c0_111 = arith.constant 0 : index
      %c0_112 = arith.constant 0 : index
      %c16_113 = arith.constant 16 : index
      %84 = vector.load %arg13[%c0_111, %c0_112, %c16_113] : memref<8x8x72xbf16, #tpu.memory_space<vmem>>, vector<8x8x8xbf16>
      tpu.vector_store %arg13[%c0_111, %c0_112, %c16_113], %83 {strides = array<i32>} : memref<8x8x72xbf16, #tpu.memory_space<vmem>>, vector<8x8x8xbf16>,
      %c1_114 = arith.constant 1 : index
      %c0_115 = arith.constant 0 : index
      %c0_116 = arith.constant 0 : index
      %85 = vector.load %arg12[%c1_114, %c0_115, %c0_116] : memref<10x10x8xf32, #tpu.memory_space<vmem>>, vector<8x8x8xf32>
      %86 = arith.truncf %85 : vector<8x8x8xf32> to vector<8x8x8xbf16>
      %c0_117 = arith.constant 0 : index
      %c0_118 = arith.constant 0 : index
      %c24_119 = arith.constant 24 : index
      %87 = vector.load %arg13[%c0_117, %c0_118, %c24_119] : memref<8x8x72xbf16, #tpu.memory_space<vmem>>, vector<8x8x8xbf16>
      tpu.vector_store %arg13[%c0_117, %c0_118, %c24_119], %86 {strides = array<i32>} : memref<8x8x72xbf16, #tpu.memory_space<vmem>>, vector<8x8x8xbf16>,
      %c1_120 = arith.constant 1 : index
      %c1_121 = arith.constant 1 : index
      %c0_122 = arith.constant 0 : index
      %88 = vector.load %arg12[%c1_120, %c1_121, %c0_122] : memref<10x10x8xf32, #tpu.memory_space<vmem>>, vector<8x8x8xf32>
      %89 = arith.truncf %88 : vector<8x8x8xf32> to vector<8x8x8xbf16>
      %c0_123 = arith.constant 0 : index
      %c0_124 = arith.constant 0 : index
      %c32_125 = arith.constant 32 : index
      %90 = vector.load %arg13[%c0_123, %c0_124, %c32_125] : memref<8x8x72xbf16, #tpu.memory_space<vmem>>, vector<8x8x8xbf16>
      tpu.vector_store %arg13[%c0_123, %c0_124, %c32_125], %89 {strides = array<i32>} : memref<8x8x72xbf16, #tpu.memory_space<vmem>>, vector<8x8x8xbf16>,
      %c1_126 = arith.constant 1 : index
      %c2_127 = arith.constant 2 : index
      %c0_128 = arith.constant 0 : index
      %91 = vector.load %arg12[%c1_126, %c2_127, %c0_128] : memref<10x10x8xf32, #tpu.memory_space<vmem>>, vector<8x8x8xf32>
      %92 = arith.truncf %91 : vector<8x8x8xf32> to vector<8x8x8xbf16>
      %c0_129 = arith.constant 0 : index
      %c0_130 = arith.constant 0 : index
      %c40_131 = arith.constant 40 : index
      %93 = vector.load %arg13[%c0_129, %c0_130, %c40_131] : memref<8x8x72xbf16, #tpu.memory_space<vmem>>, vector<8x8x8xbf16>
      tpu.vector_store %arg13[%c0_129, %c0_130, %c40_131], %92 {strides = array<i32>} : memref<8x8x72xbf16, #tpu.memory_space<vmem>>, vector<8x8x8xbf16>,
      %c2_132 = arith.constant 2 : index
      %c0_133 = arith.constant 0 : index
      %c0_134 = arith.constant 0 : index
      %94 = vector.load %arg12[%c2_132, %c0_133, %c0_134] : memref<10x10x8xf32, #tpu.memory_space<vmem>>, vector<8x8x8xf32>
      %95 = arith.truncf %94 : vector<8x8x8xf32> to vector<8x8x8xbf16>
      %c0_135 = arith.constant 0 : index
      %c0_136 = arith.constant 0 : index
      %c48_137 = arith.constant 48 : index
      %96 = vector.load %arg13[%c0_135, %c0_136, %c48_137] : memref<8x8x72xbf16, #tpu.memory_space<vmem>>, vector<8x8x8xbf16>
      tpu.vector_store %arg13[%c0_135, %c0_136, %c48_137], %95 {strides = array<i32>} : memref<8x8x72xbf16, #tpu.memory_space<vmem>>, vector<8x8x8xbf16>,
      %c2_138 = arith.constant 2 : index
      %c1_139 = arith.constant 1 : index
      %c0_140 = arith.constant 0 : index
      %97 = vector.load %arg12[%c2_138, %c1_139, %c0_140] : memref<10x10x8xf32, #tpu.memory_space<vmem>>, vector<8x8x8xf32>
      %98 = arith.truncf %97 : vector<8x8x8xf32> to vector<8x8x8xbf16>
      %c0_141 = arith.constant 0 : index
      %c0_142 = arith.constant 0 : index
      %c56_143 = arith.constant 56 : index
      %99 = vector.load %arg13[%c0_141, %c0_142, %c56_143] : memref<8x8x72xbf16, #tpu.memory_space<vmem>>, vector<8x8x8xbf16>
      tpu.vector_store %arg13[%c0_141, %c0_142, %c56_143], %98 {strides = array<i32>} : memref<8x8x72xbf16, #tpu.memory_space<vmem>>, vector<8x8x8xbf16>,
      %c2_144 = arith.constant 2 : index
      %c2_145 = arith.constant 2 : index
      %c0_146 = arith.constant 0 : index
      %100 = vector.load %arg12[%c2_144, %c2_145, %c0_146] : memref<10x10x8xf32, #tpu.memory_space<vmem>>, vector<8x8x8xf32>
      %101 = arith.truncf %100 : vector<8x8x8xf32> to vector<8x8x8xbf16>
      %c0_147 = arith.constant 0 : index
      %c0_148 = arith.constant 0 : index
      %c64_149 = arith.constant 64 : index
      %102 = vector.load %arg13[%c0_147, %c0_148, %c64_149] : memref<8x8x72xbf16, #tpu.memory_space<vmem>>, vector<8x8x8xbf16>
      tpu.vector_store %arg13[%c0_147, %c0_148, %c64_149], %101 {strides = array<i32>} : memref<8x8x72xbf16, #tpu.memory_space<vmem>>, vector<8x8x8xbf16>,
      %c0_150 = arith.constant 0 : index
      %c0_151 = arith.constant 0 : index
      %c0_152 = arith.constant 0 : index
      %103 = vector.load %arg13[%c0_150, %c0_151, %c0_152] : memref<8x8x72xbf16, #tpu.memory_space<vmem>>, vector<8x8x72xbf16>
      %104 = vector.shape_cast %103 : vector<8x8x72xbf16> to vector<64x72xbf16>
      %c2_153 = arith.constant 2 : index
      %c0_154 = arith.constant 0 : index
      %c0_155 = arith.constant 0 : index
      %105 = vector.load %arg5[%c2_153, %c0_154, %c0_155] : memref<3x72x128xbf16, #tpu.memory_space<vmem>>, vector<1x72x128xbf16>
      %106 = vector.shape_cast %105 : vector<1x72x128xbf16> to vector<72x128xbf16>
      %cst_156 = arith.constant dense<0.000000e+00> : vector<64x128xf32>
      %107 = tpu.matmul %104, %106, %cst_156 {dimension_numbers = #tpu.dot_dimension_numbers<[1], [0], [0], [1], [0, 0, 1, 1], [], []>} : vector<64x72xbf16>, vector<72x128xbf16>, vector<64x128xf32> -> vector<64x128xf32>
      %c0_157 = arith.constant 0 : index
      %c0_158 = arith.constant 0 : index
      %108 = vector.load %arg11[%c0_157, %c0_158] : memref<64x128xf32, #tpu.memory_space<vmem>>, vector<64x128xf32>
      %109 = arith.addf %108, %107 : vector<64x128xf32>
      %c0_159 = arith.constant 0 : index
      %c0_160 = arith.constant 0 : index
      %110 = vector.load %arg11[%c0_159, %c0_160] : memref<64x128xf32, #tpu.memory_space<vmem>>, vector<64x128xf32>
      tpu.vector_store %arg11[%c0_159, %c0_160], %109 {strides = array<i32>} : memref<64x128xf32, #tpu.memory_space<vmem>>, vector<64x128xf32>,
    } else {
    }
    %c0_75 = arith.constant 0 : index
    %c0_76 = arith.constant 0 : index
    %55 = vector.load %arg11[%c0_75, %c0_76] : memref<64x128xf32, #tpu.memory_space<vmem>>, vector<64x128xf32>
    %cst_77 = arith.constant dense<0.000000e+00> : vector<128xf32>
    %56 = vector.multi_reduction <add>, %55, %cst_77 [0] : vector<64x128xf32> to vector<128xf32>
    %57 = vector.shape_cast %56 : vector<128xf32> to vector<1x128xf32>
    %c0_78 = arith.constant 0 : index
    %c0_79 = arith.constant 0 : index
    %c0_80 = arith.constant 0 : index
    %58 = vector.load %arg9[%c0_78, %c0_79, %c0_80] : memref<1x1x128xf32, #tpu.memory_space<vmem>>, vector<1x1x128xf32>
    %59 = vector.shape_cast %58 : vector<1x1x128xf32> to vector<1x128xf32>
    %60 = vector.shape_cast %57 : vector<1x128xf32> to vector<1x1x128xf32>
    tpu.vector_store %arg9[%c0_78, %c0_79, %c0_80], %60 {strides = array<i32>} : memref<1x1x128xf32, #tpu.memory_space<vmem>>, vector<1x1x128xf32>,
    %61 = arith.mulf %55, %55 : vector<64x128xf32>
    %cst_81 = arith.constant dense<0.000000e+00> : vector<128xf32>
    %62 = vector.multi_reduction <add>, %61, %cst_81 [0] : vector<64x128xf32> to vector<128xf32>
    %63 = vector.shape_cast %62 : vector<128xf32> to vector<1x128xf32>
    %c0_82 = arith.constant 0 : index
    %c0_83 = arith.constant 0 : index
    %c0_84 = arith.constant 0 : index
    %64 = vector.load %arg10[%c0_82, %c0_83, %c0_84] : memref<1x1x128xf32, #tpu.memory_space<vmem>>, vector<1x1x128xf32>
    %65 = vector.shape_cast %64 : vector<1x1x128xf32> to vector<1x128xf32>
    %66 = vector.shape_cast %63 : vector<1x128xf32> to vector<1x1x128xf32>
    tpu.vector_store %arg10[%c0_82, %c0_83, %c0_84], %66 {strides = array<i32>} : memref<1x1x128xf32, #tpu.memory_space<vmem>>, vector<1x1x128xf32>,
    %67 = vector.shape_cast %55 : vector<64x128xf32> to vector<8x8x128xf32>
    %68 = arith.truncf %67 : vector<8x8x128xf32> to vector<8x8x128xbf16>
    %c0_85 = arith.constant 0 : index
    %c0_86 = arith.constant 0 : index
    %c0_87 = arith.constant 0 : index
    %c0_88 = arith.constant 0 : index
    %69 = vector.load %arg8[%c0_85, %c0_86, %c0_87, %c0_88] : memref<1x8x8x128xbf16, #tpu.memory_space<vmem>>, vector<1x8x8x128xbf16>
    %70 = vector.shape_cast %69 : vector<1x8x8x128xbf16> to vector<8x8x128xbf16>
    %71 = vector.shape_cast %68 : vector<8x8x128xbf16> to vector<1x8x8x128xbf16>
    tpu.vector_store %arg8[%c0_85, %c0_86, %c0_87, %c0_88], %71 {strides = array<i32>} : memref<1x8x8x128xbf16, #tpu.memory_space<vmem>>, vector<1x8x8x128xbf16>,
    return
  }
  func.func @transform_0(%arg0: i32, %arg1: i32) -> (i32, i32, i32, i32) {
    %c4_i32 = arith.constant 4 : i32
    %0 = arith.muli %arg0, %c4_i32 : i32
    %c1_i32 = arith.constant 1 : i32
    %1 = arith.subi %arg1, %c1_i32 : i32
    %c0_i32 = arith.constant 0 : i32
    %2 = arith.maxsi %1, %c0_i32 : i32
    %3 = arith.addi %0, %2 : i32
    %c0_i32_0 = arith.constant 0 : i32
    %c0_i32_1 = arith.constant 0 : i32
    %c0_i32_2 = arith.constant 0 : i32
    %c0_i32_3 = arith.constant 0 : i32
    return %3, %c0_i32_0, %c0_i32_1, %c0_i32_2 : i32, i32, i32, i32
  }
  func.func @transform_1(%arg0: i32, %arg1: i32) -> (i32, i32, i32, i32) {
    %c4_i32 = arith.constant 4 : i32
    %0 = arith.muli %arg0, %c4_i32 : i32
    %1 = arith.addi %0, %arg1 : i32
    %c0_i32 = arith.constant 0 : i32
    %c0_i32_0 = arith.constant 0 : i32
    %c0_i32_1 = arith.constant 0 : i32
    %c0_i32_2 = arith.constant 0 : i32
    return %1, %c0_i32, %c0_i32_0, %c0_i32_1 : i32, i32, i32, i32
  }
  func.func @transform_2(%arg0: i32, %arg1: i32) -> (i32, i32, i32, i32) {
    %c4_i32 = arith.constant 4 : i32
    %0 = arith.muli %arg0, %c4_i32 : i32
    %c1_i32 = arith.constant 1 : i32
    %1 = arith.addi %arg1, %c1_i32 : i32
    %c3_i32 = arith.constant 3 : i32
    %2 = arith.minsi %1, %c3_i32 : i32
    %3 = arith.addi %0, %2 : i32
    %c0_i32 = arith.constant 0 : i32
    %c0_i32_0 = arith.constant 0 : i32
    %c0_i32_1 = arith.constant 0 : i32
    %c0_i32_2 = arith.constant 0 : i32
    return %3, %c0_i32, %c0_i32_0, %c0_i32_1 : i32, i32, i32, i32
  }
  func.func @transform_3(%arg0: i32, %arg1: i32) -> (i32, i32, i32) {
    %c0_i32 = arith.constant 0 : i32
    %c0_i32_0 = arith.constant 0 : i32
    %c0_i32_1 = arith.constant 0 : i32
    %c0_i32_2 = arith.constant 0 : i32
    return %c0_i32, %c0_i32_0, %c0_i32_1 : i32, i32, i32
  }
  func.func @transform_4(%arg0: i32, %arg1: i32) -> (i32, i32) {
    %c0_i32 = arith.constant 0 : i32
    %c0_i32_0 = arith.constant 0 : i32
    %c0_i32_1 = arith.constant 0 : i32
    return %c0_i32, %c0_i32_0 : i32, i32
  }
  func.func @transform_5(%arg0: i32, %arg1: i32) -> (i32, i32) {
    %c0_i32 = arith.constant 0 : i32
    %c0_i32_0 = arith.constant 0 : i32
    %c0_i32_1 = arith.constant 0 : i32
    return %c0_i32, %c0_i32_0 : i32, i32
  }
  func.func @transform_6(%arg0: i32, %arg1: i32) -> (i32, i32, i32, i32) {
    %c4_i32 = arith.constant 4 : i32
    %0 = arith.muli %arg0, %c4_i32 : i32
    %1 = arith.addi %0, %arg1 : i32
    %c0_i32 = arith.constant 0 : i32
    %c0_i32_0 = arith.constant 0 : i32
    %c0_i32_1 = arith.constant 0 : i32
    %c0_i32_2 = arith.constant 0 : i32
    return %1, %c0_i32, %c0_i32_0, %c0_i32_1 : i32, i32, i32, i32
  }
  func.func @transform_7(%arg0: i32, %arg1: i32) -> (i32, i32, i32) {
    %c4_i32 = arith.constant 4 : i32
    %0 = arith.muli %arg0, %c4_i32 : i32
    %1 = arith.addi %0, %arg1 : i32
    %c0_i32 = arith.constant 0 : i32
    %c0_i32_0 = arith.constant 0 : i32
    %c0_i32_1 = arith.constant 0 : i32
    return %1, %c0_i32, %c0_i32_0 : i32, i32, i32
  }
  func.func @transform_8(%arg0: i32, %arg1: i32) -> (i32, i32, i32) {
    %c4_i32 = arith.constant 4 : i32
    %0 = arith.muli %arg0, %c4_i32 : i32
    %1 = arith.addi %0, %arg1 : i32
    %c0_i32 = arith.constant 0 : i32
    %c0_i32_0 = arith.constant 0 : i32
    %c0_i32_1 = arith.constant 0 : i32
    return %1, %c0_i32, %c0_i32_0 : i32, i32, i32
  }
}

module attributes {stable_mosaic.version = 11 : i64} {
  func.func @_conv_slab_kernel(%arg0: i32, %arg1: i32, %arg2: memref<1x8x8x128xbf16, #tpu.memory_space<vmem>>, %arg3: memref<1x8x8x128xbf16, #tpu.memory_space<vmem>>, %arg4: memref<1x8x8x128xbf16, #tpu.memory_space<vmem>>, %arg5: memref<3x1152x128xbf16, #tpu.memory_space<vmem>>, %arg6: memref<1x128xf32, #tpu.memory_space<vmem>>, %arg7: memref<1x128xf32, #tpu.memory_space<vmem>>, %arg8: memref<1x8x8x128xf32, #tpu.memory_space<vmem>>, %arg9: memref<1x1x128xf32, #tpu.memory_space<vmem>>, %arg10: memref<1x1x128xf32, #tpu.memory_space<vmem>>, %arg11: memref<64x128xf32, #tpu.memory_space<vmem>>, %arg12: memref<10x10x128xf32, #tpu.memory_space<vmem>>, %arg13: memref<8x8x1152xbf16, #tpu.memory_space<vmem>>) attributes {dimension_semantics = [#tpu.dimension_semantics<parallel>, #tpu.dimension_semantics<parallel>], iteration_bounds = array<i64: 2, 4>, scalar_prefetch = 0 : i64, scratch_operands = 3 : i64, tpu.core_type = #tpu.core_type<tc>, window_params = [{transform_indices = @transform_0, window_bounds = array<i64: 1, 8, 8, 128>}, {transform_indices = @transform_1, window_bounds = array<i64: 1, 8, 8, 128>}, {transform_indices = @transform_2, window_bounds = array<i64: 1, 8, 8, 128>}, {pipeline_mode = #tpu.pipeline_mode<synchronous>, transform_indices = @transform_3, window_bounds = array<i64: 3, 1152, 128>}, {pipeline_mode = #tpu.pipeline_mode<synchronous>, transform_indices = @transform_4, window_bounds = array<i64: 1, 128>}, {pipeline_mode = #tpu.pipeline_mode<synchronous>, transform_indices = @transform_5, window_bounds = array<i64: 1, 128>}, {transform_indices = @transform_6, window_bounds = array<i64: 1, 8, 8, 128>}, {transform_indices = @transform_7, window_bounds = array<i64: 1, 1, 128>}, {transform_indices = @transform_8, window_bounds = array<i64: 1, 1, 128>}]} {
    %cst = arith.constant 0.000000e+00 : f32
    %0 = vector.broadcast %cst : f32 to vector<10x128xf32>
    %c0 = arith.constant 0 : index
    %c0_0 = arith.constant 0 : index
    %c0_1 = arith.constant 0 : index
    %1 = vector.load %arg12[%c0, %c0_0, %c0_1] : memref<10x10x128xf32, #tpu.memory_space<vmem>>, vector<1x10x128xf32>
    %2 = vector.shape_cast %1 : vector<1x10x128xf32> to vector<10x128xf32>
    %3 = vector.shape_cast %0 : vector<10x128xf32> to vector<1x10x128xf32>
    tpu.vector_store %arg12[%c0, %c0_0, %c0_1], %3 {strides = array<i32>} : memref<10x10x128xf32, #tpu.memory_space<vmem>>, vector<1x10x128xf32>,
    %cst_2 = arith.constant 0.000000e+00 : f32
    %4 = vector.broadcast %cst_2 : f32 to vector<10x128xf32>
    %c9 = arith.constant 9 : index
    %c0_3 = arith.constant 0 : index
    %c0_4 = arith.constant 0 : index
    %5 = vector.load %arg12[%c9, %c0_3, %c0_4] : memref<10x10x128xf32, #tpu.memory_space<vmem>>, vector<1x10x128xf32>
    %6 = vector.shape_cast %5 : vector<1x10x128xf32> to vector<10x128xf32>
    %7 = vector.shape_cast %4 : vector<10x128xf32> to vector<1x10x128xf32>
    tpu.vector_store %arg12[%c9, %c0_3, %c0_4], %7 {strides = array<i32>} : memref<10x10x128xf32, #tpu.memory_space<vmem>>, vector<1x10x128xf32>,
    %cst_5 = arith.constant 0.000000e+00 : f32
    %8 = vector.broadcast %cst_5 : f32 to vector<10x1x128xf32>
    %c0_6 = arith.constant 0 : index
    %c0_7 = arith.constant 0 : index
    %c0_8 = arith.constant 0 : index
    %9 = vector.load %arg12[%c0_6, %c0_7, %c0_8] : memref<10x10x128xf32, #tpu.memory_space<vmem>>, vector<10x1x128xf32>
    tpu.vector_store %arg12[%c0_6, %c0_7, %c0_8], %8 {strides = array<i32>} : memref<10x10x128xf32, #tpu.memory_space<vmem>>, vector<10x1x128xf32>,
    %cst_9 = arith.constant 0.000000e+00 : f32
    %10 = vector.broadcast %cst_9 : f32 to vector<10x1x128xf32>
    %c0_10 = arith.constant 0 : index
    %c9_11 = arith.constant 9 : index
    %c0_12 = arith.constant 0 : index
    %11 = vector.load %arg12[%c0_10, %c9_11, %c0_12] : memref<10x10x128xf32, #tpu.memory_space<vmem>>, vector<10x1x128xf32>
    tpu.vector_store %arg12[%c0_10, %c9_11, %c0_12], %10 {strides = array<i32>} : memref<10x10x128xf32, #tpu.memory_space<vmem>>, vector<10x1x128xf32>,
    %c0_13 = arith.constant 0 : index
    %c0_14 = arith.constant 0 : index
    %c0_15 = arith.constant 0 : index
    %c0_16 = arith.constant 0 : index
    %12 = vector.load %arg3[%c0_13, %c0_14, %c0_15, %c0_16] : memref<1x8x8x128xbf16, #tpu.memory_space<vmem>>, vector<1x8x8x128xbf16>
    %13 = vector.shape_cast %12 : vector<1x8x8x128xbf16> to vector<8x8x128xbf16>
    %14 = arith.extf %13 : vector<8x8x128xbf16> to vector<8x8x128xf32>
    %c0_17 = arith.constant 0 : index
    %c0_18 = arith.constant 0 : index
    %15 = vector.load %arg6[%c0_17, %c0_18] : memref<1x128xf32, #tpu.memory_space<vmem>>, vector<1x128xf32>
    %16 = vector.shape_cast %15 : vector<1x128xf32> to vector<128xf32>
    %17 = vector.shape_cast %16 : vector<128xf32> to vector<1x1x128xf32>
    %18 = vector.broadcast %17 : vector<1x1x128xf32> to vector<8x8x128xf32>
    %19 = arith.mulf %14, %18 : vector<8x8x128xf32>
    %c0_19 = arith.constant 0 : index
    %c0_20 = arith.constant 0 : index
    %20 = vector.load %arg7[%c0_19, %c0_20] : memref<1x128xf32, #tpu.memory_space<vmem>>, vector<1x128xf32>
    %21 = vector.shape_cast %20 : vector<1x128xf32> to vector<128xf32>
    %22 = vector.shape_cast %21 : vector<128xf32> to vector<1x1x128xf32>
    %23 = vector.broadcast %22 : vector<1x1x128xf32> to vector<8x8x128xf32>
    %24 = arith.addf %19, %23 : vector<8x8x128xf32>
    %cst_21 = arith.constant 0.000000e+00 : f32
    %25 = vector.broadcast %cst_21 : f32 to vector<8x8x128xf32>
    %26 = arith.maximumf %24, %25 : vector<8x8x128xf32>
    %c1 = arith.constant 1 : index
    %c1_22 = arith.constant 1 : index
    %c0_23 = arith.constant 0 : index
    %27 = vector.load %arg12[%c1, %c1_22, %c0_23] : memref<10x10x128xf32, #tpu.memory_space<vmem>>, vector<8x8x128xf32>
    tpu.vector_store %arg12[%c1, %c1_22, %c0_23], %26 {strides = array<i32>} : memref<10x10x128xf32, #tpu.memory_space<vmem>>, vector<8x8x128xf32>,
    %c0_24 = arith.constant 0 : index
    %c0_25 = arith.constant 0 : index
    %c0_26 = arith.constant 0 : index
    %28 = vector.load %arg12[%c0_24, %c0_25, %c0_26] : memref<10x10x128xf32, #tpu.memory_space<vmem>>, vector<8x8x128xf32>
    %29 = arith.truncf %28 : vector<8x8x128xf32> to vector<8x8x128xbf16>
    %c0_27 = arith.constant 0 : index
    %c0_28 = arith.constant 0 : index
    %c0_29 = arith.constant 0 : index
    %30 = vector.load %arg13[%c0_27, %c0_28, %c0_29] : memref<8x8x1152xbf16, #tpu.memory_space<vmem>>, vector<8x8x128xbf16>
    tpu.vector_store %arg13[%c0_27, %c0_28, %c0_29], %29 {strides = array<i32>} : memref<8x8x1152xbf16, #tpu.memory_space<vmem>>, vector<8x8x128xbf16>,
    %c0_30 = arith.constant 0 : index
    %c1_31 = arith.constant 1 : index
    %c0_32 = arith.constant 0 : index
    %31 = vector.load %arg12[%c0_30, %c1_31, %c0_32] : memref<10x10x128xf32, #tpu.memory_space<vmem>>, vector<8x8x128xf32>
    %32 = arith.truncf %31 : vector<8x8x128xf32> to vector<8x8x128xbf16>
    %c0_33 = arith.constant 0 : index
    %c0_34 = arith.constant 0 : index
    %c128 = arith.constant 128 : index
    %33 = vector.load %arg13[%c0_33, %c0_34, %c128] : memref<8x8x1152xbf16, #tpu.memory_space<vmem>>, vector<8x8x128xbf16>
    tpu.vector_store %arg13[%c0_33, %c0_34, %c128], %32 {strides = array<i32>} : memref<8x8x1152xbf16, #tpu.memory_space<vmem>>, vector<8x8x128xbf16>,
    %c0_35 = arith.constant 0 : index
    %c2 = arith.constant 2 : index
    %c0_36 = arith.constant 0 : index
    %34 = vector.load %arg12[%c0_35, %c2, %c0_36] : memref<10x10x128xf32, #tpu.memory_space<vmem>>, vector<8x8x128xf32>
    %35 = arith.truncf %34 : vector<8x8x128xf32> to vector<8x8x128xbf16>
    %c0_37 = arith.constant 0 : index
    %c0_38 = arith.constant 0 : index
    %c256 = arith.constant 256 : index
    %36 = vector.load %arg13[%c0_37, %c0_38, %c256] : memref<8x8x1152xbf16, #tpu.memory_space<vmem>>, vector<8x8x128xbf16>
    tpu.vector_store %arg13[%c0_37, %c0_38, %c256], %35 {strides = array<i32>} : memref<8x8x1152xbf16, #tpu.memory_space<vmem>>, vector<8x8x128xbf16>,
    %c1_39 = arith.constant 1 : index
    %c0_40 = arith.constant 0 : index
    %c0_41 = arith.constant 0 : index
    %37 = vector.load %arg12[%c1_39, %c0_40, %c0_41] : memref<10x10x128xf32, #tpu.memory_space<vmem>>, vector<8x8x128xf32>
    %38 = arith.truncf %37 : vector<8x8x128xf32> to vector<8x8x128xbf16>
    %c0_42 = arith.constant 0 : index
    %c0_43 = arith.constant 0 : index
    %c384 = arith.constant 384 : index
    %39 = vector.load %arg13[%c0_42, %c0_43, %c384] : memref<8x8x1152xbf16, #tpu.memory_space<vmem>>, vector<8x8x128xbf16>
    tpu.vector_store %arg13[%c0_42, %c0_43, %c384], %38 {strides = array<i32>} : memref<8x8x1152xbf16, #tpu.memory_space<vmem>>, vector<8x8x128xbf16>,
    %c1_44 = arith.constant 1 : index
    %c1_45 = arith.constant 1 : index
    %c0_46 = arith.constant 0 : index
    %40 = vector.load %arg12[%c1_44, %c1_45, %c0_46] : memref<10x10x128xf32, #tpu.memory_space<vmem>>, vector<8x8x128xf32>
    %41 = arith.truncf %40 : vector<8x8x128xf32> to vector<8x8x128xbf16>
    %c0_47 = arith.constant 0 : index
    %c0_48 = arith.constant 0 : index
    %c512 = arith.constant 512 : index
    %42 = vector.load %arg13[%c0_47, %c0_48, %c512] : memref<8x8x1152xbf16, #tpu.memory_space<vmem>>, vector<8x8x128xbf16>
    tpu.vector_store %arg13[%c0_47, %c0_48, %c512], %41 {strides = array<i32>} : memref<8x8x1152xbf16, #tpu.memory_space<vmem>>, vector<8x8x128xbf16>,
    %c1_49 = arith.constant 1 : index
    %c2_50 = arith.constant 2 : index
    %c0_51 = arith.constant 0 : index
    %43 = vector.load %arg12[%c1_49, %c2_50, %c0_51] : memref<10x10x128xf32, #tpu.memory_space<vmem>>, vector<8x8x128xf32>
    %44 = arith.truncf %43 : vector<8x8x128xf32> to vector<8x8x128xbf16>
    %c0_52 = arith.constant 0 : index
    %c0_53 = arith.constant 0 : index
    %c640 = arith.constant 640 : index
    %45 = vector.load %arg13[%c0_52, %c0_53, %c640] : memref<8x8x1152xbf16, #tpu.memory_space<vmem>>, vector<8x8x128xbf16>
    tpu.vector_store %arg13[%c0_52, %c0_53, %c640], %44 {strides = array<i32>} : memref<8x8x1152xbf16, #tpu.memory_space<vmem>>, vector<8x8x128xbf16>,
    %c2_54 = arith.constant 2 : index
    %c0_55 = arith.constant 0 : index
    %c0_56 = arith.constant 0 : index
    %46 = vector.load %arg12[%c2_54, %c0_55, %c0_56] : memref<10x10x128xf32, #tpu.memory_space<vmem>>, vector<8x8x128xf32>
    %47 = arith.truncf %46 : vector<8x8x128xf32> to vector<8x8x128xbf16>
    %c0_57 = arith.constant 0 : index
    %c0_58 = arith.constant 0 : index
    %c768 = arith.constant 768 : index
    %48 = vector.load %arg13[%c0_57, %c0_58, %c768] : memref<8x8x1152xbf16, #tpu.memory_space<vmem>>, vector<8x8x128xbf16>
    tpu.vector_store %arg13[%c0_57, %c0_58, %c768], %47 {strides = array<i32>} : memref<8x8x1152xbf16, #tpu.memory_space<vmem>>, vector<8x8x128xbf16>,
    %c2_59 = arith.constant 2 : index
    %c1_60 = arith.constant 1 : index
    %c0_61 = arith.constant 0 : index
    %49 = vector.load %arg12[%c2_59, %c1_60, %c0_61] : memref<10x10x128xf32, #tpu.memory_space<vmem>>, vector<8x8x128xf32>
    %50 = arith.truncf %49 : vector<8x8x128xf32> to vector<8x8x128xbf16>
    %c0_62 = arith.constant 0 : index
    %c0_63 = arith.constant 0 : index
    %c896 = arith.constant 896 : index
    %51 = vector.load %arg13[%c0_62, %c0_63, %c896] : memref<8x8x1152xbf16, #tpu.memory_space<vmem>>, vector<8x8x128xbf16>
    tpu.vector_store %arg13[%c0_62, %c0_63, %c896], %50 {strides = array<i32>} : memref<8x8x1152xbf16, #tpu.memory_space<vmem>>, vector<8x8x128xbf16>,
    %c2_64 = arith.constant 2 : index
    %c2_65 = arith.constant 2 : index
    %c0_66 = arith.constant 0 : index
    %52 = vector.load %arg12[%c2_64, %c2_65, %c0_66] : memref<10x10x128xf32, #tpu.memory_space<vmem>>, vector<8x8x128xf32>
    %53 = arith.truncf %52 : vector<8x8x128xf32> to vector<8x8x128xbf16>
    %c0_67 = arith.constant 0 : index
    %c0_68 = arith.constant 0 : index
    %c1024 = arith.constant 1024 : index
    %54 = vector.load %arg13[%c0_67, %c0_68, %c1024] : memref<8x8x1152xbf16, #tpu.memory_space<vmem>>, vector<8x8x128xbf16>
    tpu.vector_store %arg13[%c0_67, %c0_68, %c1024], %53 {strides = array<i32>} : memref<8x8x1152xbf16, #tpu.memory_space<vmem>>, vector<8x8x128xbf16>,
    %c0_69 = arith.constant 0 : index
    %c0_70 = arith.constant 0 : index
    %c0_71 = arith.constant 0 : index
    %55 = vector.load %arg13[%c0_69, %c0_70, %c0_71] : memref<8x8x1152xbf16, #tpu.memory_space<vmem>>, vector<8x8x1152xbf16>
    %56 = vector.shape_cast %55 : vector<8x8x1152xbf16> to vector<64x1152xbf16>
    %c1_72 = arith.constant 1 : index
    %c0_73 = arith.constant 0 : index
    %c0_74 = arith.constant 0 : index
    %57 = vector.load %arg5[%c1_72, %c0_73, %c0_74] : memref<3x1152x128xbf16, #tpu.memory_space<vmem>>, vector<1x1152x128xbf16>
    %58 = vector.shape_cast %57 : vector<1x1152x128xbf16> to vector<1152x128xbf16>
    %cst_75 = arith.constant dense<0.000000e+00> : vector<64x128xf32>
    %59 = tpu.matmul %56, %58, %cst_75 {dimension_numbers = #tpu.dot_dimension_numbers<[1], [0], [0], [1], [0, 0, 1, 1], [], []>} : vector<64x1152xbf16>, vector<1152x128xbf16>, vector<64x128xf32> -> vector<64x128xf32>
    %c0_76 = arith.constant 0 : index
    %c0_77 = arith.constant 0 : index
    %60 = vector.load %arg11[%c0_76, %c0_77] : memref<64x128xf32, #tpu.memory_space<vmem>>, vector<64x128xf32>
    tpu.vector_store %arg11[%c0_76, %c0_77], %59 {strides = array<i32>} : memref<64x128xf32, #tpu.memory_space<vmem>>, vector<64x128xf32>,
    %c0_i32 = arith.constant 0 : i32
    %61 = arith.cmpi sgt, %arg1, %c0_i32 : i32
    %62 = arith.extui %61 : i1 to i32
    %c0_i32_78 = arith.constant 0 : i32
    %63 = arith.cmpi ne, %62, %c0_i32_78 : i32
    scf.if %63 {
      %c0_94 = arith.constant 0 : index
      %c0_95 = arith.constant 0 : index
      %c0_96 = arith.constant 0 : index
      %c0_97 = arith.constant 0 : index
      %83 = vector.load %arg2[%c0_94, %c0_95, %c0_96, %c0_97] : memref<1x8x8x128xbf16, #tpu.memory_space<vmem>>, vector<1x8x8x128xbf16>
      %84 = vector.shape_cast %83 : vector<1x8x8x128xbf16> to vector<8x8x128xbf16>
      %85 = arith.extf %84 : vector<8x8x128xbf16> to vector<8x8x128xf32>
      %c0_98 = arith.constant 0 : index
      %c0_99 = arith.constant 0 : index
      %86 = vector.load %arg6[%c0_98, %c0_99] : memref<1x128xf32, #tpu.memory_space<vmem>>, vector<1x128xf32>
      %87 = vector.shape_cast %86 : vector<1x128xf32> to vector<128xf32>
      %88 = vector.shape_cast %87 : vector<128xf32> to vector<1x1x128xf32>
      %89 = vector.broadcast %88 : vector<1x1x128xf32> to vector<8x8x128xf32>
      %90 = arith.mulf %85, %89 : vector<8x8x128xf32>
      %c0_100 = arith.constant 0 : index
      %c0_101 = arith.constant 0 : index
      %91 = vector.load %arg7[%c0_100, %c0_101] : memref<1x128xf32, #tpu.memory_space<vmem>>, vector<1x128xf32>
      %92 = vector.shape_cast %91 : vector<1x128xf32> to vector<128xf32>
      %93 = vector.shape_cast %92 : vector<128xf32> to vector<1x1x128xf32>
      %94 = vector.broadcast %93 : vector<1x1x128xf32> to vector<8x8x128xf32>
      %95 = arith.addf %90, %94 : vector<8x8x128xf32>
      %cst_102 = arith.constant 0.000000e+00 : f32
      %96 = vector.broadcast %cst_102 : f32 to vector<8x8x128xf32>
      %97 = arith.maximumf %95, %96 : vector<8x8x128xf32>
      %c1_103 = arith.constant 1 : index
      %c1_104 = arith.constant 1 : index
      %c0_105 = arith.constant 0 : index
      %98 = vector.load %arg12[%c1_103, %c1_104, %c0_105] : memref<10x10x128xf32, #tpu.memory_space<vmem>>, vector<8x8x128xf32>
      tpu.vector_store %arg12[%c1_103, %c1_104, %c0_105], %97 {strides = array<i32>} : memref<10x10x128xf32, #tpu.memory_space<vmem>>, vector<8x8x128xf32>,
      %c0_106 = arith.constant 0 : index
      %c0_107 = arith.constant 0 : index
      %c0_108 = arith.constant 0 : index
      %99 = vector.load %arg12[%c0_106, %c0_107, %c0_108] : memref<10x10x128xf32, #tpu.memory_space<vmem>>, vector<8x8x128xf32>
      %100 = arith.truncf %99 : vector<8x8x128xf32> to vector<8x8x128xbf16>
      %c0_109 = arith.constant 0 : index
      %c0_110 = arith.constant 0 : index
      %c0_111 = arith.constant 0 : index
      %101 = vector.load %arg13[%c0_109, %c0_110, %c0_111] : memref<8x8x1152xbf16, #tpu.memory_space<vmem>>, vector<8x8x128xbf16>
      tpu.vector_store %arg13[%c0_109, %c0_110, %c0_111], %100 {strides = array<i32>} : memref<8x8x1152xbf16, #tpu.memory_space<vmem>>, vector<8x8x128xbf16>,
      %c0_112 = arith.constant 0 : index
      %c1_113 = arith.constant 1 : index
      %c0_114 = arith.constant 0 : index
      %102 = vector.load %arg12[%c0_112, %c1_113, %c0_114] : memref<10x10x128xf32, #tpu.memory_space<vmem>>, vector<8x8x128xf32>
      %103 = arith.truncf %102 : vector<8x8x128xf32> to vector<8x8x128xbf16>
      %c0_115 = arith.constant 0 : index
      %c0_116 = arith.constant 0 : index
      %c128_117 = arith.constant 128 : index
      %104 = vector.load %arg13[%c0_115, %c0_116, %c128_117] : memref<8x8x1152xbf16, #tpu.memory_space<vmem>>, vector<8x8x128xbf16>
      tpu.vector_store %arg13[%c0_115, %c0_116, %c128_117], %103 {strides = array<i32>} : memref<8x8x1152xbf16, #tpu.memory_space<vmem>>, vector<8x8x128xbf16>,
      %c0_118 = arith.constant 0 : index
      %c2_119 = arith.constant 2 : index
      %c0_120 = arith.constant 0 : index
      %105 = vector.load %arg12[%c0_118, %c2_119, %c0_120] : memref<10x10x128xf32, #tpu.memory_space<vmem>>, vector<8x8x128xf32>
      %106 = arith.truncf %105 : vector<8x8x128xf32> to vector<8x8x128xbf16>
      %c0_121 = arith.constant 0 : index
      %c0_122 = arith.constant 0 : index
      %c256_123 = arith.constant 256 : index
      %107 = vector.load %arg13[%c0_121, %c0_122, %c256_123] : memref<8x8x1152xbf16, #tpu.memory_space<vmem>>, vector<8x8x128xbf16>
      tpu.vector_store %arg13[%c0_121, %c0_122, %c256_123], %106 {strides = array<i32>} : memref<8x8x1152xbf16, #tpu.memory_space<vmem>>, vector<8x8x128xbf16>,
      %c1_124 = arith.constant 1 : index
      %c0_125 = arith.constant 0 : index
      %c0_126 = arith.constant 0 : index
      %108 = vector.load %arg12[%c1_124, %c0_125, %c0_126] : memref<10x10x128xf32, #tpu.memory_space<vmem>>, vector<8x8x128xf32>
      %109 = arith.truncf %108 : vector<8x8x128xf32> to vector<8x8x128xbf16>
      %c0_127 = arith.constant 0 : index
      %c0_128 = arith.constant 0 : index
      %c384_129 = arith.constant 384 : index
      %110 = vector.load %arg13[%c0_127, %c0_128, %c384_129] : memref<8x8x1152xbf16, #tpu.memory_space<vmem>>, vector<8x8x128xbf16>
      tpu.vector_store %arg13[%c0_127, %c0_128, %c384_129], %109 {strides = array<i32>} : memref<8x8x1152xbf16, #tpu.memory_space<vmem>>, vector<8x8x128xbf16>,
      %c1_130 = arith.constant 1 : index
      %c1_131 = arith.constant 1 : index
      %c0_132 = arith.constant 0 : index
      %111 = vector.load %arg12[%c1_130, %c1_131, %c0_132] : memref<10x10x128xf32, #tpu.memory_space<vmem>>, vector<8x8x128xf32>
      %112 = arith.truncf %111 : vector<8x8x128xf32> to vector<8x8x128xbf16>
      %c0_133 = arith.constant 0 : index
      %c0_134 = arith.constant 0 : index
      %c512_135 = arith.constant 512 : index
      %113 = vector.load %arg13[%c0_133, %c0_134, %c512_135] : memref<8x8x1152xbf16, #tpu.memory_space<vmem>>, vector<8x8x128xbf16>
      tpu.vector_store %arg13[%c0_133, %c0_134, %c512_135], %112 {strides = array<i32>} : memref<8x8x1152xbf16, #tpu.memory_space<vmem>>, vector<8x8x128xbf16>,
      %c1_136 = arith.constant 1 : index
      %c2_137 = arith.constant 2 : index
      %c0_138 = arith.constant 0 : index
      %114 = vector.load %arg12[%c1_136, %c2_137, %c0_138] : memref<10x10x128xf32, #tpu.memory_space<vmem>>, vector<8x8x128xf32>
      %115 = arith.truncf %114 : vector<8x8x128xf32> to vector<8x8x128xbf16>
      %c0_139 = arith.constant 0 : index
      %c0_140 = arith.constant 0 : index
      %c640_141 = arith.constant 640 : index
      %116 = vector.load %arg13[%c0_139, %c0_140, %c640_141] : memref<8x8x1152xbf16, #tpu.memory_space<vmem>>, vector<8x8x128xbf16>
      tpu.vector_store %arg13[%c0_139, %c0_140, %c640_141], %115 {strides = array<i32>} : memref<8x8x1152xbf16, #tpu.memory_space<vmem>>, vector<8x8x128xbf16>,
      %c2_142 = arith.constant 2 : index
      %c0_143 = arith.constant 0 : index
      %c0_144 = arith.constant 0 : index
      %117 = vector.load %arg12[%c2_142, %c0_143, %c0_144] : memref<10x10x128xf32, #tpu.memory_space<vmem>>, vector<8x8x128xf32>
      %118 = arith.truncf %117 : vector<8x8x128xf32> to vector<8x8x128xbf16>
      %c0_145 = arith.constant 0 : index
      %c0_146 = arith.constant 0 : index
      %c768_147 = arith.constant 768 : index
      %119 = vector.load %arg13[%c0_145, %c0_146, %c768_147] : memref<8x8x1152xbf16, #tpu.memory_space<vmem>>, vector<8x8x128xbf16>
      tpu.vector_store %arg13[%c0_145, %c0_146, %c768_147], %118 {strides = array<i32>} : memref<8x8x1152xbf16, #tpu.memory_space<vmem>>, vector<8x8x128xbf16>,
      %c2_148 = arith.constant 2 : index
      %c1_149 = arith.constant 1 : index
      %c0_150 = arith.constant 0 : index
      %120 = vector.load %arg12[%c2_148, %c1_149, %c0_150] : memref<10x10x128xf32, #tpu.memory_space<vmem>>, vector<8x8x128xf32>
      %121 = arith.truncf %120 : vector<8x8x128xf32> to vector<8x8x128xbf16>
      %c0_151 = arith.constant 0 : index
      %c0_152 = arith.constant 0 : index
      %c896_153 = arith.constant 896 : index
      %122 = vector.load %arg13[%c0_151, %c0_152, %c896_153] : memref<8x8x1152xbf16, #tpu.memory_space<vmem>>, vector<8x8x128xbf16>
      tpu.vector_store %arg13[%c0_151, %c0_152, %c896_153], %121 {strides = array<i32>} : memref<8x8x1152xbf16, #tpu.memory_space<vmem>>, vector<8x8x128xbf16>,
      %c2_154 = arith.constant 2 : index
      %c2_155 = arith.constant 2 : index
      %c0_156 = arith.constant 0 : index
      %123 = vector.load %arg12[%c2_154, %c2_155, %c0_156] : memref<10x10x128xf32, #tpu.memory_space<vmem>>, vector<8x8x128xf32>
      %124 = arith.truncf %123 : vector<8x8x128xf32> to vector<8x8x128xbf16>
      %c0_157 = arith.constant 0 : index
      %c0_158 = arith.constant 0 : index
      %c1024_159 = arith.constant 1024 : index
      %125 = vector.load %arg13[%c0_157, %c0_158, %c1024_159] : memref<8x8x1152xbf16, #tpu.memory_space<vmem>>, vector<8x8x128xbf16>
      tpu.vector_store %arg13[%c0_157, %c0_158, %c1024_159], %124 {strides = array<i32>} : memref<8x8x1152xbf16, #tpu.memory_space<vmem>>, vector<8x8x128xbf16>,
      %c0_160 = arith.constant 0 : index
      %c0_161 = arith.constant 0 : index
      %c0_162 = arith.constant 0 : index
      %126 = vector.load %arg13[%c0_160, %c0_161, %c0_162] : memref<8x8x1152xbf16, #tpu.memory_space<vmem>>, vector<8x8x1152xbf16>
      %127 = vector.shape_cast %126 : vector<8x8x1152xbf16> to vector<64x1152xbf16>
      %c0_163 = arith.constant 0 : index
      %c0_164 = arith.constant 0 : index
      %c0_165 = arith.constant 0 : index
      %128 = vector.load %arg5[%c0_163, %c0_164, %c0_165] : memref<3x1152x128xbf16, #tpu.memory_space<vmem>>, vector<1x1152x128xbf16>
      %129 = vector.shape_cast %128 : vector<1x1152x128xbf16> to vector<1152x128xbf16>
      %cst_166 = arith.constant dense<0.000000e+00> : vector<64x128xf32>
      %130 = tpu.matmul %127, %129, %cst_166 {dimension_numbers = #tpu.dot_dimension_numbers<[1], [0], [0], [1], [0, 0, 1, 1], [], []>} : vector<64x1152xbf16>, vector<1152x128xbf16>, vector<64x128xf32> -> vector<64x128xf32>
      %c0_167 = arith.constant 0 : index
      %c0_168 = arith.constant 0 : index
      %131 = vector.load %arg11[%c0_167, %c0_168] : memref<64x128xf32, #tpu.memory_space<vmem>>, vector<64x128xf32>
      %132 = arith.addf %131, %130 : vector<64x128xf32>
      %c0_169 = arith.constant 0 : index
      %c0_170 = arith.constant 0 : index
      %133 = vector.load %arg11[%c0_169, %c0_170] : memref<64x128xf32, #tpu.memory_space<vmem>>, vector<64x128xf32>
      tpu.vector_store %arg11[%c0_169, %c0_170], %132 {strides = array<i32>} : memref<64x128xf32, #tpu.memory_space<vmem>>, vector<64x128xf32>,
    } else {
    }
    %c3_i32 = arith.constant 3 : i32
    %64 = arith.cmpi slt, %arg1, %c3_i32 : i32
    %65 = arith.extui %64 : i1 to i32
    %c0_i32_79 = arith.constant 0 : i32
    %66 = arith.cmpi ne, %65, %c0_i32_79 : i32
    scf.if %66 {
      %c0_94 = arith.constant 0 : index
      %c0_95 = arith.constant 0 : index
      %c0_96 = arith.constant 0 : index
      %c0_97 = arith.constant 0 : index
      %83 = vector.load %arg4[%c0_94, %c0_95, %c0_96, %c0_97] : memref<1x8x8x128xbf16, #tpu.memory_space<vmem>>, vector<1x8x8x128xbf16>
      %84 = vector.shape_cast %83 : vector<1x8x8x128xbf16> to vector<8x8x128xbf16>
      %85 = arith.extf %84 : vector<8x8x128xbf16> to vector<8x8x128xf32>
      %c0_98 = arith.constant 0 : index
      %c0_99 = arith.constant 0 : index
      %86 = vector.load %arg6[%c0_98, %c0_99] : memref<1x128xf32, #tpu.memory_space<vmem>>, vector<1x128xf32>
      %87 = vector.shape_cast %86 : vector<1x128xf32> to vector<128xf32>
      %88 = vector.shape_cast %87 : vector<128xf32> to vector<1x1x128xf32>
      %89 = vector.broadcast %88 : vector<1x1x128xf32> to vector<8x8x128xf32>
      %90 = arith.mulf %85, %89 : vector<8x8x128xf32>
      %c0_100 = arith.constant 0 : index
      %c0_101 = arith.constant 0 : index
      %91 = vector.load %arg7[%c0_100, %c0_101] : memref<1x128xf32, #tpu.memory_space<vmem>>, vector<1x128xf32>
      %92 = vector.shape_cast %91 : vector<1x128xf32> to vector<128xf32>
      %93 = vector.shape_cast %92 : vector<128xf32> to vector<1x1x128xf32>
      %94 = vector.broadcast %93 : vector<1x1x128xf32> to vector<8x8x128xf32>
      %95 = arith.addf %90, %94 : vector<8x8x128xf32>
      %cst_102 = arith.constant 0.000000e+00 : f32
      %96 = vector.broadcast %cst_102 : f32 to vector<8x8x128xf32>
      %97 = arith.maximumf %95, %96 : vector<8x8x128xf32>
      %c1_103 = arith.constant 1 : index
      %c1_104 = arith.constant 1 : index
      %c0_105 = arith.constant 0 : index
      %98 = vector.load %arg12[%c1_103, %c1_104, %c0_105] : memref<10x10x128xf32, #tpu.memory_space<vmem>>, vector<8x8x128xf32>
      tpu.vector_store %arg12[%c1_103, %c1_104, %c0_105], %97 {strides = array<i32>} : memref<10x10x128xf32, #tpu.memory_space<vmem>>, vector<8x8x128xf32>,
      %c0_106 = arith.constant 0 : index
      %c0_107 = arith.constant 0 : index
      %c0_108 = arith.constant 0 : index
      %99 = vector.load %arg12[%c0_106, %c0_107, %c0_108] : memref<10x10x128xf32, #tpu.memory_space<vmem>>, vector<8x8x128xf32>
      %100 = arith.truncf %99 : vector<8x8x128xf32> to vector<8x8x128xbf16>
      %c0_109 = arith.constant 0 : index
      %c0_110 = arith.constant 0 : index
      %c0_111 = arith.constant 0 : index
      %101 = vector.load %arg13[%c0_109, %c0_110, %c0_111] : memref<8x8x1152xbf16, #tpu.memory_space<vmem>>, vector<8x8x128xbf16>
      tpu.vector_store %arg13[%c0_109, %c0_110, %c0_111], %100 {strides = array<i32>} : memref<8x8x1152xbf16, #tpu.memory_space<vmem>>, vector<8x8x128xbf16>,
      %c0_112 = arith.constant 0 : index
      %c1_113 = arith.constant 1 : index
      %c0_114 = arith.constant 0 : index
      %102 = vector.load %arg12[%c0_112, %c1_113, %c0_114] : memref<10x10x128xf32, #tpu.memory_space<vmem>>, vector<8x8x128xf32>
      %103 = arith.truncf %102 : vector<8x8x128xf32> to vector<8x8x128xbf16>
      %c0_115 = arith.constant 0 : index
      %c0_116 = arith.constant 0 : index
      %c128_117 = arith.constant 128 : index
      %104 = vector.load %arg13[%c0_115, %c0_116, %c128_117] : memref<8x8x1152xbf16, #tpu.memory_space<vmem>>, vector<8x8x128xbf16>
      tpu.vector_store %arg13[%c0_115, %c0_116, %c128_117], %103 {strides = array<i32>} : memref<8x8x1152xbf16, #tpu.memory_space<vmem>>, vector<8x8x128xbf16>,
      %c0_118 = arith.constant 0 : index
      %c2_119 = arith.constant 2 : index
      %c0_120 = arith.constant 0 : index
      %105 = vector.load %arg12[%c0_118, %c2_119, %c0_120] : memref<10x10x128xf32, #tpu.memory_space<vmem>>, vector<8x8x128xf32>
      %106 = arith.truncf %105 : vector<8x8x128xf32> to vector<8x8x128xbf16>
      %c0_121 = arith.constant 0 : index
      %c0_122 = arith.constant 0 : index
      %c256_123 = arith.constant 256 : index
      %107 = vector.load %arg13[%c0_121, %c0_122, %c256_123] : memref<8x8x1152xbf16, #tpu.memory_space<vmem>>, vector<8x8x128xbf16>
      tpu.vector_store %arg13[%c0_121, %c0_122, %c256_123], %106 {strides = array<i32>} : memref<8x8x1152xbf16, #tpu.memory_space<vmem>>, vector<8x8x128xbf16>,
      %c1_124 = arith.constant 1 : index
      %c0_125 = arith.constant 0 : index
      %c0_126 = arith.constant 0 : index
      %108 = vector.load %arg12[%c1_124, %c0_125, %c0_126] : memref<10x10x128xf32, #tpu.memory_space<vmem>>, vector<8x8x128xf32>
      %109 = arith.truncf %108 : vector<8x8x128xf32> to vector<8x8x128xbf16>
      %c0_127 = arith.constant 0 : index
      %c0_128 = arith.constant 0 : index
      %c384_129 = arith.constant 384 : index
      %110 = vector.load %arg13[%c0_127, %c0_128, %c384_129] : memref<8x8x1152xbf16, #tpu.memory_space<vmem>>, vector<8x8x128xbf16>
      tpu.vector_store %arg13[%c0_127, %c0_128, %c384_129], %109 {strides = array<i32>} : memref<8x8x1152xbf16, #tpu.memory_space<vmem>>, vector<8x8x128xbf16>,
      %c1_130 = arith.constant 1 : index
      %c1_131 = arith.constant 1 : index
      %c0_132 = arith.constant 0 : index
      %111 = vector.load %arg12[%c1_130, %c1_131, %c0_132] : memref<10x10x128xf32, #tpu.memory_space<vmem>>, vector<8x8x128xf32>
      %112 = arith.truncf %111 : vector<8x8x128xf32> to vector<8x8x128xbf16>
      %c0_133 = arith.constant 0 : index
      %c0_134 = arith.constant 0 : index
      %c512_135 = arith.constant 512 : index
      %113 = vector.load %arg13[%c0_133, %c0_134, %c512_135] : memref<8x8x1152xbf16, #tpu.memory_space<vmem>>, vector<8x8x128xbf16>
      tpu.vector_store %arg13[%c0_133, %c0_134, %c512_135], %112 {strides = array<i32>} : memref<8x8x1152xbf16, #tpu.memory_space<vmem>>, vector<8x8x128xbf16>,
      %c1_136 = arith.constant 1 : index
      %c2_137 = arith.constant 2 : index
      %c0_138 = arith.constant 0 : index
      %114 = vector.load %arg12[%c1_136, %c2_137, %c0_138] : memref<10x10x128xf32, #tpu.memory_space<vmem>>, vector<8x8x128xf32>
      %115 = arith.truncf %114 : vector<8x8x128xf32> to vector<8x8x128xbf16>
      %c0_139 = arith.constant 0 : index
      %c0_140 = arith.constant 0 : index
      %c640_141 = arith.constant 640 : index
      %116 = vector.load %arg13[%c0_139, %c0_140, %c640_141] : memref<8x8x1152xbf16, #tpu.memory_space<vmem>>, vector<8x8x128xbf16>
      tpu.vector_store %arg13[%c0_139, %c0_140, %c640_141], %115 {strides = array<i32>} : memref<8x8x1152xbf16, #tpu.memory_space<vmem>>, vector<8x8x128xbf16>,
      %c2_142 = arith.constant 2 : index
      %c0_143 = arith.constant 0 : index
      %c0_144 = arith.constant 0 : index
      %117 = vector.load %arg12[%c2_142, %c0_143, %c0_144] : memref<10x10x128xf32, #tpu.memory_space<vmem>>, vector<8x8x128xf32>
      %118 = arith.truncf %117 : vector<8x8x128xf32> to vector<8x8x128xbf16>
      %c0_145 = arith.constant 0 : index
      %c0_146 = arith.constant 0 : index
      %c768_147 = arith.constant 768 : index
      %119 = vector.load %arg13[%c0_145, %c0_146, %c768_147] : memref<8x8x1152xbf16, #tpu.memory_space<vmem>>, vector<8x8x128xbf16>
      tpu.vector_store %arg13[%c0_145, %c0_146, %c768_147], %118 {strides = array<i32>} : memref<8x8x1152xbf16, #tpu.memory_space<vmem>>, vector<8x8x128xbf16>,
      %c2_148 = arith.constant 2 : index
      %c1_149 = arith.constant 1 : index
      %c0_150 = arith.constant 0 : index
      %120 = vector.load %arg12[%c2_148, %c1_149, %c0_150] : memref<10x10x128xf32, #tpu.memory_space<vmem>>, vector<8x8x128xf32>
      %121 = arith.truncf %120 : vector<8x8x128xf32> to vector<8x8x128xbf16>
      %c0_151 = arith.constant 0 : index
      %c0_152 = arith.constant 0 : index
      %c896_153 = arith.constant 896 : index
      %122 = vector.load %arg13[%c0_151, %c0_152, %c896_153] : memref<8x8x1152xbf16, #tpu.memory_space<vmem>>, vector<8x8x128xbf16>
      tpu.vector_store %arg13[%c0_151, %c0_152, %c896_153], %121 {strides = array<i32>} : memref<8x8x1152xbf16, #tpu.memory_space<vmem>>, vector<8x8x128xbf16>,
      %c2_154 = arith.constant 2 : index
      %c2_155 = arith.constant 2 : index
      %c0_156 = arith.constant 0 : index
      %123 = vector.load %arg12[%c2_154, %c2_155, %c0_156] : memref<10x10x128xf32, #tpu.memory_space<vmem>>, vector<8x8x128xf32>
      %124 = arith.truncf %123 : vector<8x8x128xf32> to vector<8x8x128xbf16>
      %c0_157 = arith.constant 0 : index
      %c0_158 = arith.constant 0 : index
      %c1024_159 = arith.constant 1024 : index
      %125 = vector.load %arg13[%c0_157, %c0_158, %c1024_159] : memref<8x8x1152xbf16, #tpu.memory_space<vmem>>, vector<8x8x128xbf16>
      tpu.vector_store %arg13[%c0_157, %c0_158, %c1024_159], %124 {strides = array<i32>} : memref<8x8x1152xbf16, #tpu.memory_space<vmem>>, vector<8x8x128xbf16>,
      %c0_160 = arith.constant 0 : index
      %c0_161 = arith.constant 0 : index
      %c0_162 = arith.constant 0 : index
      %126 = vector.load %arg13[%c0_160, %c0_161, %c0_162] : memref<8x8x1152xbf16, #tpu.memory_space<vmem>>, vector<8x8x1152xbf16>
      %127 = vector.shape_cast %126 : vector<8x8x1152xbf16> to vector<64x1152xbf16>
      %c2_163 = arith.constant 2 : index
      %c0_164 = arith.constant 0 : index
      %c0_165 = arith.constant 0 : index
      %128 = vector.load %arg5[%c2_163, %c0_164, %c0_165] : memref<3x1152x128xbf16, #tpu.memory_space<vmem>>, vector<1x1152x128xbf16>
      %129 = vector.shape_cast %128 : vector<1x1152x128xbf16> to vector<1152x128xbf16>
      %cst_166 = arith.constant dense<0.000000e+00> : vector<64x128xf32>
      %130 = tpu.matmul %127, %129, %cst_166 {dimension_numbers = #tpu.dot_dimension_numbers<[1], [0], [0], [1], [0, 0, 1, 1], [], []>} : vector<64x1152xbf16>, vector<1152x128xbf16>, vector<64x128xf32> -> vector<64x128xf32>
      %c0_167 = arith.constant 0 : index
      %c0_168 = arith.constant 0 : index
      %131 = vector.load %arg11[%c0_167, %c0_168] : memref<64x128xf32, #tpu.memory_space<vmem>>, vector<64x128xf32>
      %132 = arith.addf %131, %130 : vector<64x128xf32>
      %c0_169 = arith.constant 0 : index
      %c0_170 = arith.constant 0 : index
      %133 = vector.load %arg11[%c0_169, %c0_170] : memref<64x128xf32, #tpu.memory_space<vmem>>, vector<64x128xf32>
      tpu.vector_store %arg11[%c0_169, %c0_170], %132 {strides = array<i32>} : memref<64x128xf32, #tpu.memory_space<vmem>>, vector<64x128xf32>,
    } else {
    }
    %c0_80 = arith.constant 0 : index
    %c0_81 = arith.constant 0 : index
    %67 = vector.load %arg11[%c0_80, %c0_81] : memref<64x128xf32, #tpu.memory_space<vmem>>, vector<64x128xf32>
    %cst_82 = arith.constant dense<0.000000e+00> : vector<128xf32>
    %68 = vector.multi_reduction <add>, %67, %cst_82 [0] : vector<64x128xf32> to vector<128xf32>
    %69 = vector.shape_cast %68 : vector<128xf32> to vector<1x128xf32>
    %c0_83 = arith.constant 0 : index
    %c0_84 = arith.constant 0 : index
    %c0_85 = arith.constant 0 : index
    %70 = vector.load %arg9[%c0_83, %c0_84, %c0_85] : memref<1x1x128xf32, #tpu.memory_space<vmem>>, vector<1x1x128xf32>
    %71 = vector.shape_cast %70 : vector<1x1x128xf32> to vector<1x128xf32>
    %72 = vector.shape_cast %69 : vector<1x128xf32> to vector<1x1x128xf32>
    tpu.vector_store %arg9[%c0_83, %c0_84, %c0_85], %72 {strides = array<i32>} : memref<1x1x128xf32, #tpu.memory_space<vmem>>, vector<1x1x128xf32>,
    %73 = arith.mulf %67, %67 : vector<64x128xf32>
    %cst_86 = arith.constant dense<0.000000e+00> : vector<128xf32>
    %74 = vector.multi_reduction <add>, %73, %cst_86 [0] : vector<64x128xf32> to vector<128xf32>
    %75 = vector.shape_cast %74 : vector<128xf32> to vector<1x128xf32>
    %c0_87 = arith.constant 0 : index
    %c0_88 = arith.constant 0 : index
    %c0_89 = arith.constant 0 : index
    %76 = vector.load %arg10[%c0_87, %c0_88, %c0_89] : memref<1x1x128xf32, #tpu.memory_space<vmem>>, vector<1x1x128xf32>
    %77 = vector.shape_cast %76 : vector<1x1x128xf32> to vector<1x128xf32>
    %78 = vector.shape_cast %75 : vector<1x128xf32> to vector<1x1x128xf32>
    tpu.vector_store %arg10[%c0_87, %c0_88, %c0_89], %78 {strides = array<i32>} : memref<1x1x128xf32, #tpu.memory_space<vmem>>, vector<1x1x128xf32>,
    %79 = vector.shape_cast %67 : vector<64x128xf32> to vector<8x8x128xf32>
    %c0_90 = arith.constant 0 : index
    %c0_91 = arith.constant 0 : index
    %c0_92 = arith.constant 0 : index
    %c0_93 = arith.constant 0 : index
    %80 = vector.load %arg8[%c0_90, %c0_91, %c0_92, %c0_93] : memref<1x8x8x128xf32, #tpu.memory_space<vmem>>, vector<1x8x8x128xf32>
    %81 = vector.shape_cast %80 : vector<1x8x8x128xf32> to vector<8x8x128xf32>
    %82 = vector.shape_cast %79 : vector<8x8x128xf32> to vector<1x8x8x128xf32>
    tpu.vector_store %arg8[%c0_90, %c0_91, %c0_92, %c0_93], %82 {strides = array<i32>} : memref<1x8x8x128xf32, #tpu.memory_space<vmem>>, vector<1x8x8x128xf32>,
    return
  }
  func.func @transform_0(%arg0: i32, %arg1: i32) -> (i32, i32, i32, i32) {
    %c4_i32 = arith.constant 4 : i32
    %0 = arith.muli %arg0, %c4_i32 : i32
    %c1_i32 = arith.constant 1 : i32
    %1 = arith.subi %arg1, %c1_i32 : i32
    %c0_i32 = arith.constant 0 : i32
    %2 = arith.maxsi %1, %c0_i32 : i32
    %3 = arith.addi %0, %2 : i32
    %c0_i32_0 = arith.constant 0 : i32
    %c0_i32_1 = arith.constant 0 : i32
    %c0_i32_2 = arith.constant 0 : i32
    %c0_i32_3 = arith.constant 0 : i32
    return %3, %c0_i32_0, %c0_i32_1, %c0_i32_2 : i32, i32, i32, i32
  }
  func.func @transform_1(%arg0: i32, %arg1: i32) -> (i32, i32, i32, i32) {
    %c4_i32 = arith.constant 4 : i32
    %0 = arith.muli %arg0, %c4_i32 : i32
    %1 = arith.addi %0, %arg1 : i32
    %c0_i32 = arith.constant 0 : i32
    %c0_i32_0 = arith.constant 0 : i32
    %c0_i32_1 = arith.constant 0 : i32
    %c0_i32_2 = arith.constant 0 : i32
    return %1, %c0_i32, %c0_i32_0, %c0_i32_1 : i32, i32, i32, i32
  }
  func.func @transform_2(%arg0: i32, %arg1: i32) -> (i32, i32, i32, i32) {
    %c4_i32 = arith.constant 4 : i32
    %0 = arith.muli %arg0, %c4_i32 : i32
    %c1_i32 = arith.constant 1 : i32
    %1 = arith.addi %arg1, %c1_i32 : i32
    %c3_i32 = arith.constant 3 : i32
    %2 = arith.minsi %1, %c3_i32 : i32
    %3 = arith.addi %0, %2 : i32
    %c0_i32 = arith.constant 0 : i32
    %c0_i32_0 = arith.constant 0 : i32
    %c0_i32_1 = arith.constant 0 : i32
    %c0_i32_2 = arith.constant 0 : i32
    return %3, %c0_i32, %c0_i32_0, %c0_i32_1 : i32, i32, i32, i32
  }
  func.func @transform_3(%arg0: i32, %arg1: i32) -> (i32, i32, i32) {
    %c0_i32 = arith.constant 0 : i32
    %c0_i32_0 = arith.constant 0 : i32
    %c0_i32_1 = arith.constant 0 : i32
    %c0_i32_2 = arith.constant 0 : i32
    return %c0_i32, %c0_i32_0, %c0_i32_1 : i32, i32, i32
  }
  func.func @transform_4(%arg0: i32, %arg1: i32) -> (i32, i32) {
    %c0_i32 = arith.constant 0 : i32
    %c0_i32_0 = arith.constant 0 : i32
    %c0_i32_1 = arith.constant 0 : i32
    return %c0_i32, %c0_i32_0 : i32, i32
  }
  func.func @transform_5(%arg0: i32, %arg1: i32) -> (i32, i32) {
    %c0_i32 = arith.constant 0 : i32
    %c0_i32_0 = arith.constant 0 : i32
    %c0_i32_1 = arith.constant 0 : i32
    return %c0_i32, %c0_i32_0 : i32, i32
  }
  func.func @transform_6(%arg0: i32, %arg1: i32) -> (i32, i32, i32, i32) {
    %c4_i32 = arith.constant 4 : i32
    %0 = arith.muli %arg0, %c4_i32 : i32
    %1 = arith.addi %0, %arg1 : i32
    %c0_i32 = arith.constant 0 : i32
    %c0_i32_0 = arith.constant 0 : i32
    %c0_i32_1 = arith.constant 0 : i32
    %c0_i32_2 = arith.constant 0 : i32
    return %1, %c0_i32, %c0_i32_0, %c0_i32_1 : i32, i32, i32, i32
  }
  func.func @transform_7(%arg0: i32, %arg1: i32) -> (i32, i32, i32) {
    %c4_i32 = arith.constant 4 : i32
    %0 = arith.muli %arg0, %c4_i32 : i32
    %1 = arith.addi %0, %arg1 : i32
    %c0_i32 = arith.constant 0 : i32
    %c0_i32_0 = arith.constant 0 : i32
    %c0_i32_1 = arith.constant 0 : i32
    return %1, %c0_i32, %c0_i32_0 : i32, i32, i32
  }
  func.func @transform_8(%arg0: i32, %arg1: i32) -> (i32, i32, i32) {
    %c4_i32 = arith.constant 4 : i32
    %0 = arith.muli %arg0, %c4_i32 : i32
    %1 = arith.addi %0, %arg1 : i32
    %c0_i32 = arith.constant 0 : i32
    %c0_i32_0 = arith.constant 0 : i32
    %c0_i32_1 = arith.constant 0 : i32
    return %1, %c0_i32, %c0_i32_0 : i32, i32, i32
  }
}

module attributes {stable_mosaic.version = 11 : i64} {
  func.func @_bn_add_kernel(%arg0: i32, %arg1: memref<512x128xf32, #tpu.memory_space<vmem>>, %arg2: memref<512x128xf32, #tpu.memory_space<vmem>>, %arg3: memref<1x128xf32, #tpu.memory_space<vmem>>, %arg4: memref<1x128xf32, #tpu.memory_space<vmem>>, %arg5: memref<512x128xf32, #tpu.memory_space<vmem>>) attributes {dimension_semantics = [#tpu.dimension_semantics<parallel>], iteration_bounds = array<i64: 1>, scalar_prefetch = 0 : i64, scratch_operands = 0 : i64, tpu.core_type = #tpu.core_type<tc>, window_params = [{transform_indices = @transform_0, window_bounds = array<i64: 512, 128>}, {transform_indices = @transform_1, window_bounds = array<i64: 512, 128>}, {pipeline_mode = #tpu.pipeline_mode<synchronous>, transform_indices = @transform_2, window_bounds = array<i64: 1, 128>}, {pipeline_mode = #tpu.pipeline_mode<synchronous>, transform_indices = @transform_3, window_bounds = array<i64: 1, 128>}, {transform_indices = @transform_4, window_bounds = array<i64: 512, 128>}]} {
    %c0 = arith.constant 0 : index
    %c0_0 = arith.constant 0 : index
    %0 = vector.load %arg1[%c0, %c0_0] : memref<512x128xf32, #tpu.memory_space<vmem>>, vector<512x128xf32>
    %c0_1 = arith.constant 0 : index
    %c0_2 = arith.constant 0 : index
    %1 = vector.load %arg3[%c0_1, %c0_2] : memref<1x128xf32, #tpu.memory_space<vmem>>, vector<1x128xf32>
    %2 = vector.broadcast %1 : vector<1x128xf32> to vector<512x128xf32>
    %3 = arith.mulf %0, %2 : vector<512x128xf32>
    %c0_3 = arith.constant 0 : index
    %c0_4 = arith.constant 0 : index
    %4 = vector.load %arg4[%c0_3, %c0_4] : memref<1x128xf32, #tpu.memory_space<vmem>>, vector<1x128xf32>
    %5 = vector.broadcast %4 : vector<1x128xf32> to vector<512x128xf32>
    %6 = arith.addf %3, %5 : vector<512x128xf32>
    %c0_5 = arith.constant 0 : index
    %c0_6 = arith.constant 0 : index
    %7 = vector.load %arg2[%c0_5, %c0_6] : memref<512x128xf32, #tpu.memory_space<vmem>>, vector<512x128xf32>
    %8 = arith.addf %6, %7 : vector<512x128xf32>
    %c0_7 = arith.constant 0 : index
    %c0_8 = arith.constant 0 : index
    %9 = vector.load %arg5[%c0_7, %c0_8] : memref<512x128xf32, #tpu.memory_space<vmem>>, vector<512x128xf32>
    tpu.vector_store %arg5[%c0_7, %c0_8], %8 {strides = array<i32>} : memref<512x128xf32, #tpu.memory_space<vmem>>, vector<512x128xf32>,
    return
  }
  func.func @transform_0(%arg0: i32) -> (i32, i32) {
    %c0_i32 = arith.constant 0 : i32
    %c0_i32_0 = arith.constant 0 : i32
    return %arg0, %c0_i32 : i32, i32
  }
  func.func @transform_1(%arg0: i32) -> (i32, i32) {
    %c0_i32 = arith.constant 0 : i32
    %c0_i32_0 = arith.constant 0 : i32
    return %arg0, %c0_i32 : i32, i32
  }
  func.func @transform_2(%arg0: i32) -> (i32, i32) {
    %c0_i32 = arith.constant 0 : i32
    %c0_i32_0 = arith.constant 0 : i32
    %c0_i32_1 = arith.constant 0 : i32
    return %c0_i32, %c0_i32_0 : i32, i32
  }
  func.func @transform_3(%arg0: i32) -> (i32, i32) {
    %c0_i32 = arith.constant 0 : i32
    %c0_i32_0 = arith.constant 0 : i32
    %c0_i32_1 = arith.constant 0 : i32
    return %c0_i32, %c0_i32_0 : i32, i32
  }
  func.func @transform_4(%arg0: i32) -> (i32, i32) {
    %c0_i32 = arith.constant 0 : i32
    %c0_i32_0 = arith.constant 0 : i32
    return %arg0, %c0_i32 : i32, i32
  }
}

</mosaic_0001>

<llo_original>
// kernel: basic_block_3d_forward.3
$region0: #{basic_block_3d_forward.3}
  #allocation0 [shape = 'u32[]', space=smem, size = 0x4, offset = 0x4, fixed_abs, tag = 'smem constant byte address 0x4 - core index']
  #allocation1 [shape = 'u32[144,128]{1,0:T(1,128)}', space=vmem, size = 0x12000, scoped, tag = 'internal scratch']
  #allocation2 [shape = 'f32[64,128]{1,0:T(8,128)}', space=vmem, size = 0x8000, scoped, tag = 'scratch operand']
  #allocation3 [shape = 'f32[10,10,8]{2,1,0:T(8,128)}', space=vmem, size = 0x14000, scoped, tag = 'scratch operand']
  #allocation4 [shape = 'bf16[8,8,72]{2,1,0:T(8,128)(2,1)}', space=vmem, size = 0x4000, scoped, tag = 'scratch operand']
  %s0 = inlined_call_operand.vmem [shape: bf16[8,8,8,8], index: 0, kind: input, shape index: {}, may-alias: {0,1,2}]
  %s1 = inlined_call_operand.vmem [shape: bf16[8,8,8,8], index: 1, kind: input, shape index: {}, may-alias: {0,1,2}]
  %s2 = inlined_call_operand.vmem [shape: bf16[8,8,8,8], index: 2, kind: input, shape index: {}, may-alias: {0,1,2}]
  %s3 = inlined_call_operand.vmem [shape: bf16[3,72,128], index: 3, kind: input, shape index: {}]
  %s4 = inlined_call_operand.vmem [shape: f32[1,8], index: 4, kind: input, shape index: {}, may-alias: {4,5}]
  %s5 = inlined_call_operand.vmem [shape: f32[1,8], index: 5, kind: input, shape index: {}, may-alias: {4,5}]
  %s6 = inlined_call_operand.vmem [shape: bf16[8,8,8,128], index: 6, kind: output, shape index: {0}]
  %s7 = inlined_call_operand.vmem [shape: f32[8,1,128], index: 7, kind: output, shape index: {1}]
  %s8 = inlined_call_operand.vmem [shape: f32[8,1,128], index: 8, kind: output, shape index: {2}]
  %9 = xla_tuple %s6, %s7, %s8
  %s10 = sld [smem:[#allocation0]]
  $region81: #{basic_block_3d_forward.3} parent=0
    _
  %s12 = ssub.s32 1, %s10
  %s13 = scalar_select 0, %s12, %s10
  loop: start=0, step=1, limit=10
  $region2: #{basic_block_3d_forward.3} parent=0 // loop_pre_header
    _
  $region3: #{basic_block_3d_forward.3} parent=0 // loop_header
    %s15 = sphi 0, %s19
    %p16 = scmp.ge.s32.totalorder %s15, 10
    %s22 = sphi 0, %s34
    %s23 = sphi 0, %s30
    %s24 = sphi 0, %s22
    %s25 = sphi 0, %s23
    %s26 = sphi 0, %s24
    %s27 = sphi 0, %s25
    %s47 = sphi 0, %s49
    %s50 = sphi 0, %s47
    %s51 = sphi 0, %s50
    %s67 = sphi 0, %s51
    %s77 = sphi 0, %s79
    %s80 = sphi 0, %s77
    %s81 = sphi 0, %s80
    %s97 = sphi 0, %s81
    %s113 = sphi 0, %s115
    %s116 = sphi 0, %s113
    %s117 = sphi 0, %s116
    %s133 = sphi 0, %s117
    %s137 = sphi 0, %s137
    %s139 = sphi 0, %s137
    %s140 = sphi 0, %s139
    %s154 = sphi 0, %s140
    %s158 = sphi 0, %s158
    %s160 = sphi 0, %s158
    %s161 = sphi 0, %s160
    %s175 = sphi 0, %s161
    %s179 = sphi 0, %s179
    %s181 = sphi 0, %s179
    %s182 = sphi 0, %s181
    %s196 = sphi 0, %s182
    %s206 = sphi 0, %s208
    %s209 = sphi 0, %s206
    %s210 = sphi 0, %s209
    %s226 = sphi 0, %s210
    %s236 = sphi 0, %s238
    %s239 = sphi 0, %s236
    %s240 = sphi 0, %s239
    %s256 = sphi 0, %s240
    %s266 = sphi 0, %s268
    %s269 = sphi 0, %s266
    %s270 = sphi 0, %s269
    %s286 = sphi 0, %s270
  $region4: #{basic_block_3d_forward.3} parent=0 // loop_header_branch
    %18 = sbr.rel (%p16) target = $region8
  $region5: #{basic_block_3d_forward.3} parent=0 // loop_body
    %s20 = ssub.s32 %s15, 1
    %s21 = ssub.s32 %s15, 2
    %s28 = sadd.s32 1, %s23
    %p29 = scmp.ge.s32.totalorder %s28, 4
    %s30 = scalar_select %p29, 0, %s28
    %s31 = sadd.s32 1, %s22
    %s32 = scalar_select %p29, %s31, %s22
    %p33 = scmp.ge.s32.totalorder %s32, 2
    %s34 = scalar_select %p33, 0, %s32
    %s35 = smul.u32 %s22, 4
    %s36 = ssub.s32 %s23, 1
    %p37 = scmp.gt.s32.totalorder %s36, 0
    %s38 = scalar_select %p37, %s36, 0
    %s39 = sadd.s32 %s35, %s38
    %s40 = smul.u32 %s34, 4
    %s41 = ssub.s32 %s30, 1
    %p42 = scmp.gt.s32.totalorder %s41, 0
    %s43 = scalar_select %p42, %s41, 0
    %s44 = sadd.s32 %s40, %s43
    %s45 = ssub.s32 %s39, %s44
    %p46 = scmp.eq.s32.totalorder %s45, 0
    %s48 = sadd.s32 %s47, 1
    %s49 = scalar_select %p46, %s47, %s48
    %p52 = pneg %p46
    %p53 = scmp.eq.s32.totalorder %s15, 7
    %p54 = por %p52, %p53
    %p55 = scmp.ne.s32.totalorder %s47, %s50
    %p56 = scmp.eq.s32.totalorder %s15, 0
    %p57 = por %p55, %p56
    %p58 = scmp.ne.s32.totalorder %s47, %s50
    %p59 = scmp.eq.s32.totalorder %s20, 7
    %p60 = por %p58, %p59
    %p61 = scmp.ne.s32.totalorder %s50, %s51
    %p62 = scmp.eq.s32.totalorder %s20, 0
    %p63 = por %p61, %p62
    %p64 = scmp.ne.s32.totalorder %s50, %s51
    %p65 = scmp.eq.s32.totalorder %s21, 7
    %p66 = por %p64, %p65
    %p68 = scmp.ne.s32.totalorder %s51, %s67
    %p69 = scmp.eq.s32.totalorder %s21, 0
    %p70 = por %p68, %p69
    %s71 = smul.u32 %s22, 4
    %s72 = sadd.s32 %s71, %s23
    %s73 = smul.u32 %s34, 4
    %s74 = sadd.s32 %s73, %s30
    %s75 = ssub.s32 %s72, %s74
    %p76 = scmp.eq.s32.totalorder %s75, 0
    %s78 = sadd.s32 %s77, 1
    %s79 = scalar_select %p76, %s77, %s78
    %p82 = pneg %p76
    %p83 = scmp.eq.s32.totalorder %s15, 7
    %p84 = por %p82, %p83
    %p85 = scmp.ne.s32.totalorder %s77, %s80
    %p86 = scmp.eq.s32.totalorder %s15, 0
    %p87 = por %p85, %p86
    %p88 = scmp.ne.s32.totalorder %s77, %s80
    %p89 = scmp.eq.s32.totalorder %s20, 7
    %p90 = por %p88, %p89
    %p91 = scmp.ne.s32.totalorder %s80, %s81
    %p92 = scmp.eq.s32.totalorder %s20, 0
    %p93 = por %p91, %p92
    %p94 = scmp.ne.s32.totalorder %s80, %s81
    %p95 = scmp.eq.s32.totalorder %s21, 7
    %p96 = por %p94, %p95
    %p98 = scmp.ne.s32.totalorder %s81, %s97
    %p99 = scmp.eq.s32.totalorder %s21, 0
    %p100 = por %p98, %p99
    %s101 = smul.u32 %s22, 4
    %s102 = sadd.s32 %s23, 1
    %p103 = scmp.lt.s32.totalorder %s102, 3
    %s104 = scalar_select %p103, %s102, 3
    %s105 = sadd.s32 %s101, %s104
    %s106 = smul.u32 %s34, 4
    %s107 = sadd.s32 %s30, 1
    %p108 = scmp.lt.s32.totalorder %s107, 3
    %s109 = scalar_select %p108, %s107, 3
    %s110 = sadd.s32 %s106, %s109
    %s111 = ssub.s32 %s105, %s110
    %p112 = scmp.eq.s32.totalorder %s111, 0
    %s114 = sadd.s32 %s113, 1
    %s115 = scalar_select %p112, %s113, %s114
    %p118 = pneg %p112
    %p119 = scmp.eq.s32.totalorder %s15, 7
    %p120 = por %p118, %p119
    %p121 = scmp.ne.s32.totalorder %s113, %s116
    %p122 = scmp.eq.s32.totalorder %s15, 0
    %p123 = por %p121, %p122
    %p124 = scmp.ne.s32.totalorder %s113, %s116
    %p125 = scmp.eq.s32.totalorder %s20, 7
    %p126 = por %p124, %p125
    %p127 = scmp.ne.s32.totalorder %s116, %s117
    %p128 = scmp.eq.s32.totalorder %s20, 0
    %p129 = por %p127, %p128
    %p130 = scmp.ne.s32.totalorder %s116, %s117
    %p131 = scmp.eq.s32.totalorder %s21, 7
    %p132 = por %p130, %p131
    %p134 = scmp.ne.s32.totalorder %s117, %s133
    %p135 = scmp.eq.s32.totalorder %s21, 0
    %p136 = por %p134, %p135
    %s138 = sadd.s32 %s137, 1
    %p141 = scmp.eq.s32.totalorder %s15, 7
    %p142 = scmp.ne.s32.totalorder %s137, %s139
    %p143 = scmp.eq.s32.totalorder %s15, 0
    %p144 = por %p142, %p143
    %p145 = scmp.ne.s32.totalorder %s137, %s139
    %p146 = scmp.eq.s32.totalorder %s20, 7
    %p147 = por %p145, %p146
    %p148 = scmp.ne.s32.totalorder %s139, %s140
    %p149 = scmp.eq.s32.totalorder %s20, 0
    %p150 = por %p148, %p149
    %p151 = scmp.ne.s32.totalorder %s139, %s140
    %p152 = scmp.eq.s32.totalorder %s21, 7
    %p153 = por %p151, %p152
    %p155 = scmp.ne.s32.totalorder %s140, %s154
    %p156 = scmp.eq.s32.totalorder %s21, 0
    %p157 = por %p155, %p156
    %s159 = sadd.s32 %s158, 1
    %p162 = scmp.eq.s32.totalorder %s15, 7
    %p163 = scmp.ne.s32.totalorder %s158, %s160
    %p164 = scmp.eq.s32.totalorder %s15, 0
    %p165 = por %p163, %p164
    %p166 = scmp.ne.s32.totalorder %s158, %s160
    %p167 = scmp.eq.s32.totalorder %s20, 7
    %p168 = por %p166, %p167
    %p169 = scmp.ne.s32.totalorder %s160, %s161
    %p170 = scmp.eq.s32.totalorder %s20, 0
    %p171 = por %p169, %p170
    %p172 = scmp.ne.s32.totalorder %s160, %s161
    %p173 = scmp.eq.s32.totalorder %s21, 7
    %p174 = por %p172, %p173
    %p176 = scmp.ne.s32.totalorder %s161, %s175
    %p177 = scmp.eq.s32.totalorder %s21, 0
    %p178 = por %p176, %p177
    %s180 = sadd.s32 %s179, 1
    %p183 = scmp.eq.s32.totalorder %s15, 7
    %p184 = scmp.ne.s32.totalorder %s179, %s181
    %p185 = scmp.eq.s32.totalorder %s15, 0
    %p186 = por %p184, %p185
    %p187 = scmp.ne.s32.totalorder %s179, %s181
    %p188 = scmp.eq.s32.totalorder %s20, 7
    %p189 = por %p187, %p188
    %p190 = scmp.ne.s32.totalorder %s181, %s182
    %p191 = scmp.eq.s32.totalorder %s20, 0
    %p192 = por %p190, %p191
    %p193 = scmp.ne.s32.totalorder %s181, %s182
    %p194 = scmp.eq.s32.totalorder %s21, 7
    %p195 = por %p193, %p194
    %p197 = scmp.ne.s32.totalorder %s182, %s196
    %p198 = scmp.eq.s32.totalorder %s21, 0
    %p199 = por %p197, %p198
    %s200 = smul.u32 %s22, 4
    %s201 = sadd.s32 %s200, %s23
    %s202 = smul.u32 %s34, 4
    %s203 = sadd.s32 %s202, %s30
    %s204 = ssub.s32 %s201, %s203
    %p205 = scmp.eq.s32.totalorder %s204, 0
    %s207 = sadd.s32 %s206, 1
    %s208 = scalar_select %p205, %s206, %s207
    %p211 = pneg %p205
    %p212 = scmp.eq.s32.totalorder %s15, 7
    %p213 = por %p211, %p212
    %p214 = scmp.ne.s32.totalorder %s206, %s209
    %p215 = scmp.eq.s32.totalorder %s15, 0
    %p216 = por %p214, %p215
    %p217 = scmp.ne.s32.totalorder %s206, %s209
    %p218 = scmp.eq.s32.totalorder %s20, 7
    %p219 = por %p217, %p218
    %p220 = scmp.ne.s32.totalorder %s209, %s210
    %p221 = scmp.eq.s32.totalorder %s20, 0
    %p222 = por %p220, %p221
    %p223 = scmp.ne.s32.totalorder %s209, %s210
    %p224 = scmp.eq.s32.totalorder %s21, 7
    %p225 = por %p223, %p224
    %p227 = scmp.ne.s32.totalorder %s210, %s226
    %p228 = scmp.eq.s32.totalorder %s21, 0
    %p229 = por %p227, %p228
    %s230 = smul.u32 %s22, 4
    %s231 = sadd.s32 %s230, %s23
    %s232 = smul.u32 %s34, 4
    %s233 = sadd.s32 %s232, %s30
    %s234 = ssub.s32 %s231, %s233
    %p235 = scmp.eq.s32.totalorder %s234, 0
    %s237 = sadd.s32 %s236, 1
    %s238 = scalar_select %p235, %s236, %s237
    %p241 = pneg %p235
    %p242 = scmp.eq.s32.totalorder %s15, 7
    %p243 = por %p241, %p242
    %p244 = scmp.ne.s32.totalorder %s236, %s239
    %p245 = scmp.eq.s32.totalorder %s15, 0
    %p246 = por %p244, %p245
    %p247 = scmp.ne.s32.totalorder %s236, %s239
    %p248 = scmp.eq.s32.totalorder %s20, 7
    %p249 = por %p247, %p248
    %p250 = scmp.ne.s32.totalorder %s239, %s240
    %p251 = scmp.eq.s32.totalorder %s20, 0
    %p252 = por %p250, %p251
    %p253 = scmp.ne.s32.totalorder %s239, %s240
    %p254 = scmp.eq.s32.totalorder %s21, 7
    %p255 = por %p253, %p254
    %p257 = scmp.ne.s32.totalorder %s240, %s256
    %p258 = scmp.eq.s32.totalorder %s21, 0
    %p259 = por %p257, %p258
    %s260 = smul.u32 %s22, 4
    %s261 = sadd.s32 %s260, %s23
    %s262 = smul.u32 %s34, 4
    %s263 = sadd.s32 %s262, %s30
    %s264 = ssub.s32 %s261, %s263
    %p265 = scmp.eq.s32.totalorder %s264, 0
    %s267 = sadd.s32 %s266, 1
    %s268 = scalar_select %p265, %s266, %s267
    %p271 = pneg %p265
    %p272 = scmp.eq.s32.totalorder %s15, 7
    %p273 = por %p271, %p272
    %p274 = scmp.ne.s32.totalorder %s266, %s269
    %p275 = scmp.eq.s32.totalorder %s15, 0
    %p276 = por %p274, %p275
    %p277 = scmp.ne.s32.totalorder %s266, %s269
    %p278 = scmp.eq.s32.totalorder %s20, 7
    %p279 = por %p277, %p278
    %p280 = scmp.ne.s32.totalorder %s269, %s270
    %p281 = scmp.eq.s32.totalorder %s20, 0
    %p282 = por %p280, %p281
    %p283 = scmp.ne.s32.totalorder %s269, %s270
    %p284 = scmp.eq.s32.totalorder %s21, 7
    %p285 = por %p283, %p284
    %p287 = scmp.ne.s32.totalorder %s270, %s286
    %p288 = scmp.eq.s32.totalorder %s21, 0
    %p289 = por %p287, %p288
    %p290 = scmp.le.s32.totalorder 1, %s15
    %p291 = scmp.lt.s32.totalorder %s15, 9
    %p292 = pnand %p290, %p291
    %p293 = pneg %p292
    // Predicated region
    $region9: #{basic_block_3d_forward.3} parent=5 // pred_check
      _
    $region10: #{basic_block_3d_forward.3} parent=5 // pred_check_branch
      %295 = sbr.rel (%p292) target = $region12
    $region11: #{basic_block_3d_forward.3} parent=5 // pred_region
      %s296 = ssub.s32 %s15, 1
      // Predicated region
      $region13: #{basic_block_3d_forward.3} parent=11 // pred_check
        %p297 = pneg %p150
      $region14: #{basic_block_3d_forward.3} parent=11 // pred_check_branch
        %299 = sbr.rel (%p297) target = $region16
      $region15: #{basic_block_3d_forward.3} parent=11 // pred_region
        _
      $region16: #{basic_block_3d_forward.3} parent=11 // pred_fallthru
        _
      // Predicated region
      $region17: #{basic_block_3d_forward.3} parent=11 // pred_check
        %p300 = pneg %p171
      $region18: #{basic_block_3d_forward.3} parent=11 // pred_check_branch
        %302 = sbr.rel (%p300) target = $region20
      $region19: #{basic_block_3d_forward.3} parent=11 // pred_region
        _
      $region20: #{basic_block_3d_forward.3} parent=11 // pred_fallthru
        _
      // Predicated region
      $region21: #{basic_block_3d_forward.3} parent=11 // pred_check
        %p303 = pneg %p192
      $region22: #{basic_block_3d_forward.3} parent=11 // pred_check_branch
        %305 = sbr.rel (%p303) target = $region24
      $region23: #{basic_block_3d_forward.3} parent=11 // pred_region
        _
      $region24: #{basic_block_3d_forward.3} parent=11 // pred_fallthru
        _
    $region12: #{basic_block_3d_forward.3} parent=5 // pred_fallthru
      _
    %p306 = scmp.lt.s32.totalorder %s15, 8
    // Predicated region
    $region25: #{basic_block_3d_forward.3} parent=5 // pred_check
      %p307 = pneg %p306
    $region26: #{basic_block_3d_forward.3} parent=5 // pred_check_branch
      %309 = sbr.rel (%p307) target = $region28
    $region27: #{basic_block_3d_forward.3} parent=5 // pred_region
      // Predicated region
      $region29: #{basic_block_3d_forward.3} parent=27 // pred_check
        %p310 = pneg %p57
      $region30: #{basic_block_3d_forward.3} parent=27 // pred_check_branch
        %312 = sbr.rel (%p310) target = $region32
      $region31: #{basic_block_3d_forward.3} parent=27 // pred_region
        %s313 = smul.u32 %s22, 4
        %s314 = ssub.s32 %s23, 1
        %p315 = scmp.gt.s32.totalorder %s314, 0
        %s316 = scalar_select %p315, %s314, 0
        %s317 = sadd.s32 %s313, %s316
        %p318 = scmp.lt.s32.totalorder %s317, 7
        %s319 = scalar_select %p318, %s317, 7
        %s320 = smul.addr %s319, 8
        %s321 = smul.addr %s320, 4
        %s322 = scalar_lea.vmem %s0, %s321
        %s323 = smul.u32 %s22, 4
        %s324 = ssub.s32 %s23, 1
        %p325 = scmp.gt.s32.totalorder %s324, 0
        %s326 = scalar_select %p325, %s324, 0
        %s327 = sadd.s32 %s323, %s326
      $region32: #{basic_block_3d_forward.3} parent=27 // pred_fallthru
        _
      // Predicated region
      $region33: #{basic_block_3d_forward.3} parent=27 // pred_check
        %p328 = pneg %p87
      $region34: #{basic_block_3d_forward.3} parent=27 // pred_check_branch
        %330 = sbr.rel (%p328) target = $region36
      $region35: #{basic_block_3d_forward.3} parent=27 // pred_region
        %s331 = smul.u32 %s22, 4
        %s332 = sadd.s32 %s331, %s23
        %p333 = scmp.lt.s32.totalorder %s332, 7
        %s334 = scalar_select %p333, %s332, 7
        %s335 = smul.addr %s334, 8
        %s336 = smul.addr %s335, 4
        %s337 = scalar_lea.vmem %s1, %s336
        %s338 = smul.u32 %s22, 4
        %s339 = sadd.s32 %s338, %s23
      $region36: #{basic_block_3d_forward.3} parent=27 // pred_fallthru
        _
      // Predicated region
      $region37: #{basic_block_3d_forward.3} parent=27 // pred_check
        %p340 = pneg %p123
      $region38: #{basic_block_3d_forward.3} parent=27 // pred_check_branch
        %342 = sbr.rel (%p340) target = $region40
      $region39: #{basic_block_3d_forward.3} parent=27 // pred_region
        %s343 = smul.u32 %s22, 4
        %s344 = sadd.s32 %s23, 1
        %p345 = scmp.lt.s32.totalorder %s344, 3
        %s346 = scalar_select %p345, %s344, 3
        %s347 = sadd.s32 %s343, %s346
        %p348 = scmp.lt.s32.totalorder %s347, 7
        %s349 = scalar_select %p348, %s347, 7
        %s350 = smul.addr %s349, 8
        %s351 = smul.addr %s350, 4
        %s352 = scalar_lea.vmem %s2, %s351
        %s353 = smul.u32 %s22, 4
        %s354 = sadd.s32 %s23, 1
        %p355 = scmp.lt.s32.totalorder %s354, 3
        %s356 = scalar_select %p355, %s354, 3
        %s357 = sadd.s32 %s353, %s356
      $region40: #{basic_block_3d_forward.3} parent=27 // pred_fallthru
        _
    $region28: #{basic_block_3d_forward.3} parent=5 // pred_fallthru
      _
    %p358 = scmp.le.s32.totalorder 1, %s15
    %p359 = scmp.lt.s32.totalorder %s15, 9
    %p360 = pnand %p358, %p359
    %p361 = pneg %p360
    // Predicated region
    $region41: #{basic_block_3d_forward.3} parent=5 // pred_check
      _
    $region42: #{basic_block_3d_forward.3} parent=5 // pred_check_branch
      %363 = sbr.rel (%p360) target = $region44
    $region43: #{basic_block_3d_forward.3} parent=5 // pred_region
      %s364 = ssub.s32 %s15, 1
      %s365 = smul.u32 %s24, 4
      %s366 = ssub.s32 %s25, 1
      %p367 = scmp.gt.s32.totalorder %s366, 0
      %s368 = scalar_select %p367, %s366, 0
      %s369 = sadd.s32 %s365, %s368
      %p370 = scmp.lt.s32.totalorder %s369, 7
      %s371 = scalar_select %p370, %s369, 7
      %s372 = smul.addr %s371, 8
      %s373 = smul.addr %s372, 4
      %s374 = scalar_lea.vmem %s0, %s373
      %p375 = pneg %p63
      %p376 = pneg %p60
      %s377 = smul.u32 %s24, 4
      %s378 = sadd.s32 %s377, %s25
      %p379 = scmp.lt.s32.totalorder %s378, 7
      %s380 = scalar_select %p379, %s378, 7
      %s381 = smul.addr %s380, 8
      %s382 = smul.addr %s381, 4
      %s383 = scalar_lea.vmem %s1, %s382
      %p384 = pneg %p93
      %p385 = pneg %p90
      %s386 = smul.u32 %s24, 4
      %s387 = sadd.s32 %s25, 1
      %p388 = scmp.lt.s32.totalorder %s387, 3
      %s389 = scalar_select %p388, %s387, 3
      %s390 = sadd.s32 %s386, %s389
      %p391 = scmp.lt.s32.totalorder %s390, 7
      %s392 = scalar_select %p391, %s390, 7
      %s393 = smul.addr %s392, 8
      %s394 = smul.addr %s393, 4
      %s395 = scalar_lea.vmem %s2, %s394
      %p396 = pneg %p129
      %p397 = pneg %p126
      %p398 = pneg %p150
      %p399 = pneg %p147
      %p400 = pneg %p171
      %p401 = pneg %p168
      %p402 = pneg %p192
      %p403 = pneg %p189
      %p404 = pneg %p222
      %p405 = pneg %p219
      %s406 = smul.u32 %s24, 4
      %s407 = sadd.s32 %s406, %s25
      %p408 = scmp.lt.s32.totalorder %s407, 7
      %s409 = scalar_select %p408, %s407, 7
      %s410 = smul.addr %s409, 8
      %s411 = smul.addr %s410, 4
      %s412 = scalar_lea.vmem %s6, %s411
      %p413 = pneg %p252
      %p414 = pneg %p249
      %s415 = smul.u32 %s24, 4
      %s416 = sadd.s32 %s415, %s25
      %p417 = scmp.lt.s32.totalorder %s416, 7
      %s418 = scalar_select %p417, %s416, 7
      %s419 = scalar_lea.vmem %s7, %s418
      %p420 = pneg %p282
      %p421 = pneg %p279
      %s422 = smul.u32 %s24, 4
      %s423 = sadd.s32 %s422, %s25
      %p424 = scmp.lt.s32.totalorder %s423, 7
      %s425 = scalar_select %p424, %s423, 7
      %s426 = scalar_lea.vmem %s8, %s425
      %s427 = smul.u32 %s24, 4
      %s428 = ssub.s32 %s25, 1
      %p429 = scmp.gt.s32.totalorder %s428, 0
      %s430 = scalar_select %p429, %s428, 0
      %s431 = sadd.s32 %s427, %s430
      %p432 = scmp.lt.s32.totalorder %s431, 7
      %s433 = scalar_select %p432, %s431, 7
      %s434 = smul.addr %s433, 8
      %s435 = smul.addr %s434, 4
      %s436 = scalar_lea.vmem %s0, %s435
      %s437 = smul.u32 %s24, 4
      %s438 = ssub.s32 %s25, 1
      %p439 = scmp.gt.s32.totalorder %s438, 0
      %s440 = scalar_select %p439, %s438, 0
      %s441 = sadd.s32 %s437, %s440
      %s442 = smul.u32 %s24, 4
      %s443 = sadd.s32 %s442, %s25
      %p444 = scmp.lt.s32.totalorder %s443, 7
      %s445 = scalar_select %p444, %s443, 7
      %s446 = smul.addr %s445, 8
      %s447 = smul.addr %s446, 4
      %s448 = scalar_lea.vmem %s1, %s447
      %s449 = smul.u32 %s24, 4
      %s450 = sadd.s32 %s449, %s25
      %s451 = smul.u32 %s24, 4
      %s452 = sadd.s32 %s25, 1
      %p453 = scmp.lt.s32.totalorder %s452, 3
      %s454 = scalar_select %p453, %s452, 3
      %s455 = sadd.s32 %s451, %s454
      %p456 = scmp.lt.s32.totalorder %s455, 7
      %s457 = scalar_select %p456, %s455, 7
      %s458 = smul.addr %s457, 8
      %s459 = smul.addr %s458, 4
      %s460 = scalar_lea.vmem %s2, %s459
      %s461 = smul.u32 %s24, 4
      %s462 = sadd.s32 %s25, 1
      %p463 = scmp.lt.s32.totalorder %s462, 3
      %s464 = scalar_select %p463, %s462, 3
      %s465 = sadd.s32 %s461, %s464
      %s466 = smul.u32 %s24, 4
      %s467 = sadd.s32 %s466, %s25
      %p468 = scmp.lt.s32.totalorder %s467, 7
      %s469 = scalar_select %p468, %s467, 7
      %s470 = smul.addr %s469, 8
      %s471 = smul.addr %s470, 4
      %s472 = scalar_lea.vmem %s6, %s471
      %s473 = smul.u32 %s24, 4
      %s474 = sadd.s32 %s473, %s25
      %s475 = smul.u32 %s24, 4
      %s476 = sadd.s32 %s475, %s25
      %p477 = scmp.lt.s32.totalorder %s476, 7
      %s478 = scalar_select %p477, %s476, 7
      %s479 = scalar_lea.vmem %s7, %s478
      %s480 = smul.u32 %s24, 4
      %s481 = sadd.s32 %s480, %s25
      %s482 = smul.u32 %s24, 4
      %s483 = sadd.s32 %s482, %s25
      %p484 = scmp.lt.s32.totalorder %s483, 7
      %s485 = scalar_select %p484, %s483, 7
      %s486 = scalar_lea.vmem %s8, %s485
      %s487 = smul.u32 %s24, 4
      %s488 = sadd.s32 %s487, %s25
      %vm490 = vcmask 64512
      %491 = vst.msk [vmem:[#allocation3] sm:$0xff] %vm490, 0.0
      %vm492 = vcmask 58368
      %493 = vst.msk [vmem:[#allocation3 + $0x8] sm:$0x3] %vm492, 0.0
      %s494 = scalar_lea.vmem [#allocation3], 144
      %495 = vst.msk [vmem:[%s494] sm:$0xff] %vm490, 0.0
      %496 = vst.msk [vmem:[%s494 + $0x8] sm:$0x3] %vm492, 0.0
      %vm497 = vcmask 57344
      %498 = vst.msk [vmem:[#allocation3] sm:$0x1] %vm497, 0.0
      %499 = vst.msk [vmem:[#allocation3 + $0x10] sm:$0x1] %vm497, 0.0
      %500 = vst.msk [vmem:[#allocation3 + $0x20] sm:$0x1] %vm497, 0.0
      %501 = vst.msk [vmem:[#allocation3 + $0x30] sm:$0x1] %vm497, 0.0
      %502 = vst.msk [vmem:[#allocation3 + $0x40] sm:$0x1] %vm497, 0.0
      %503 = vst.msk [vmem:[#allocation3 + $0x50] sm:$0x1] %vm497, 0.0
      %504 = vst.msk [vmem:[#allocation3 + $0x60] sm:$0x1] %vm497, 0.0
      %505 = vst.msk [vmem:[#allocation3 + $0x70] sm:$0x1] %vm497, 0.0
      %506 = vst.msk [vmem:[#allocation3 + $0x80] sm:$0x1] %vm497, 0.0
      %507 = vst.msk [vmem:[#allocation3 + $0x90] sm:$0x1] %vm497, 0.0
      %508 = vst.msk [vmem:[#allocation3 + $0x9] sm:$0x1] %vm497, 0.0
      %509 = vst.msk [vmem:[#allocation3 + $0x19] sm:$0x1] %vm497, 0.0
      %510 = vst.msk [vmem:[#allocation3 + $0x29] sm:$0x1] %vm497, 0.0
      %511 = vst.msk [vmem:[#allocation3 + $0x39] sm:$0x1] %vm497, 0.0
      %512 = vst.msk [vmem:[#allocation3 + $0x49] sm:$0x1] %vm497, 0.0
      %513 = vst.msk [vmem:[#allocation3 + $0x59] sm:$0x1] %vm497, 0.0
      %514 = vst.msk [vmem:[#allocation3 + $0x69] sm:$0x1] %vm497, 0.0
      %515 = vst.msk [vmem:[#allocation3 + $0x79] sm:$0x1] %vm497, 0.0
      %516 = vst.msk [vmem:[#allocation3 + $0x89] sm:$0x1] %vm497, 0.0
      %517 = vst.msk [vmem:[#allocation3 + $0x99] sm:$0x1] %vm497, 0.0
      %v518 = vld [vmem:[%s448] sm:$0xf]
      %v519 = vld [vmem:[%s448 + $0x4] sm:$0xf]
      %v520 = vld [vmem:[%s448 + $0x8] sm:$0xf]
      %v521 = vld [vmem:[%s448 + $0xc] sm:$0xf]
      %v522 = vld [vmem:[%s448 + $0x10] sm:$0xf]
      %v523 = vld [vmem:[%s448 + $0x14] sm:$0xf]
      %v524 = vld [vmem:[%s448 + $0x18] sm:$0xf]
      %v525 = vld [vmem:[%s448 + $0x1c] sm:$0xf]
      %v526 = vunpack.c.l.bf16 %v518
      %v527 = vunpack.c.l.bf16 %v519
      %v528 = vunpack.c.l.bf16 %v520
      %v529 = vunpack.c.l.bf16 %v521
      %v530 = vunpack.c.l.bf16 %v522
      %v531 = vunpack.c.l.bf16 %v523
      %v532 = vunpack.c.l.bf16 %v524
      %v533 = vunpack.c.l.bf16 %v525
      %s534 = scalar_lea.vmem [#allocation3], 16
      %535 = vst.msk [vmem:[%s534 + $0x1] sm:$0xff] %vm490, %v526
      %536 = vst.msk [vmem:[%s534 + $0x11] sm:$0xff] %vm490, %v527
      %537 = vst.msk [vmem:[%s534 + $0x21] sm:$0xff] %vm490, %v528
      %538 = vst.msk [vmem:[%s534 + $0x31] sm:$0xff] %vm490, %v529
      %539 = vst.msk [vmem:[%s534 + $0x41] sm:$0xff] %vm490, %v530
      %540 = vst.msk [vmem:[%s534 + $0x51] sm:$0xff] %vm490, %v531
      %541 = vst.msk [vmem:[%s534 + $0x61] sm:$0xff] %vm490, %v532
      %542 = vst.msk [vmem:[%s534 + $0x71] sm:$0xff] %vm490, %v533
      %v543 = vld [vmem:[#allocation3] sm:$0xff]
      %v544 = vld [vmem:[#allocation3 + $0x10] sm:$0xff]
      %v545 = vld [vmem:[#allocation3 + $0x20] sm:$0xff]
      %v546 = vld [vmem:[#allocation3 + $0x30] sm:$0xff]
      %v547 = vld [vmem:[#allocation3 + $0x40] sm:$0xff]
      %v548 = vld [vmem:[#allocation3 + $0x50] sm:$0xff]
      %v549 = vld [vmem:[#allocation3 + $0x60] sm:$0xff]
      %v550 = vld [vmem:[#allocation3 + $0x70] sm:$0xff]
      %v551 = vpack.c.bf16 %v543, %v543
      %v552 = vpack.c.bf16 %v544, %v544
      %v553 = vpack.c.bf16 %v545, %v545
      %v554 = vpack.c.bf16 %v546, %v546
      %v555 = vpack.c.bf16 %v547, %v547
      %v556 = vpack.c.bf16 %v548, %v548
      %v557 = vpack.c.bf16 %v549, %v549
      %v558 = vpack.c.bf16 %v550, %v550
      %vm559 = vcmask 60416
      %560 = vst.msk [vmem:[#allocation4] sm:$0xf] %vm559, %v551
      %561 = vst.msk [vmem:[#allocation4 + $0x4] sm:$0xf] %vm559, %v552
      %562 = vst.msk [vmem:[#allocation4 + $0x8] sm:$0xf] %vm559, %v553
      %563 = vst.msk [vmem:[#allocation4 + $0xc] sm:$0xf] %vm559, %v554
      %564 = vst.msk [vmem:[#allocation4 + $0x10] sm:$0xf] %vm559, %v555
      %565 = vst.msk [vmem:[#allocation4 + $0x14] sm:$0xf] %vm559, %v556
      %566 = vst.msk [vmem:[#allocation4 + $0x18] sm:$0xf] %vm559, %v557
      %567 = vst.msk [vmem:[#allocation4 + $0x1c] sm:$0xf] %vm559, %v558
      %v568 = vld [vmem:[#allocation3 + $0x1] sm:$0xff]
      %v569 = vld [vmem:[#allocation3 + $0x11] sm:$0xff]
      %v570 = vld [vmem:[#allocation3 + $0x21] sm:$0xff]
      %v571 = vld [vmem:[#allocation3 + $0x31] sm:$0xff]
      %v572 = vld [vmem:[#allocation3 + $0x41] sm:$0xff]
      %v573 = vld [vmem:[#allocation3 + $0x51] sm:$0xff]
      %v574 = vld [vmem:[#allocation3 + $0x61] sm:$0xff]
      %v575 = vld [vmem:[#allocation3 + $0x71] sm:$0xff]
      %v576 = vpack.c.bf16 %v568, %v568
      %v577 = vpack.c.bf16 %v569, %v569
      %v578 = vpack.c.bf16 %v570, %v570
      %v579 = vpack.c.bf16 %v571, %v571
      %v580 = vpack.c.bf16 %v572, %v572
      %v581 = vpack.c.bf16 %v573, %v573
      %v582 = vpack.c.bf16 %v574, %v574
      %v583 = vpack.c.bf16 %v575, %v575
      %v592 = vunpack.c.l.b16 %v576
      %v593 = vunpack.c.l.b16 %v577
      %v594 = vunpack.c.l.b16 %v578
      %v595 = vunpack.c.l.b16 %v579
      %v596 = vunpack.c.l.b16 %v580
      %v597 = vunpack.c.l.b16 %v581
      %v598 = vunpack.c.l.b16 %v582
      %v599 = vunpack.c.l.b16 %v583
      %v600 = vpack.c.b16 %v592, %v592
      %v601 = vpack.c.b16 %v593, %v593
      %v602 = vpack.c.b16 %v594, %v594
      %v603 = vpack.c.b16 %v595, %v595
      %v604 = vpack.c.b16 %v596, %v596
      %v605 = vpack.c.b16 %v597, %v597
      %v606 = vpack.c.b16 %v598, %v598
      %v607 = vpack.c.b16 %v599, %v599
      %608 = vrot.lane.b32.xlu0 %v600, 8
      %v609 = vpop.permute.xlu0 %608
      %610 = vrot.lane.b32.xlu0 %v601, 8
      %v611 = vpop.permute.xlu0 %610
      %612 = vrot.lane.b32.xlu0 %v602, 8
      %v613 = vpop.permute.xlu0 %612
      %614 = vrot.lane.b32.xlu0 %v603, 8
      %v615 = vpop.permute.xlu0 %614
      %616 = vrot.lane.b32.xlu0 %v604, 8
      %v617 = vpop.permute.xlu0 %616
      %618 = vrot.lane.b32.xlu0 %v605, 8
      %v619 = vpop.permute.xlu0 %618
      %620 = vrot.lane.b32.xlu0 %v606, 8
      %v621 = vpop.permute.xlu0 %620
      %622 = vrot.lane.b32.xlu0 %v607, 8
      %v623 = vpop.permute.xlu0 %622
      %vm632 = vcmask 126016
      %633 = vst.msk [vmem:[#allocation4] sm:$0xf] %vm632, %v609
      %634 = vst.msk [vmem:[#allocation4 + $0x4] sm:$0xf] %vm632, %v611
      %635 = vst.msk [vmem:[#allocation4 + $0x8] sm:$0xf] %vm632, %v613
      %636 = vst.msk [vmem:[#allocation4 + $0xc] sm:$0xf] %vm632, %v615
      %637 = vst.msk [vmem:[#allocation4 + $0x10] sm:$0xf] %vm632, %v617
      %638 = vst.msk [vmem:[#allocation4 + $0x14] sm:$0xf] %vm632, %v619
      %639 = vst.msk [vmem:[#allocation4 + $0x18] sm:$0xf] %vm632, %v621
      %640 = vst.msk [vmem:[#allocation4 + $0x1c] sm:$0xf] %vm632, %v623
      %v641 = vld [vmem:[#allocation3 + $0x2] sm:$0xff]
      %v642 = vld [vmem:[#allocation3 + $0x12] sm:$0xff]
      %v643 = vld [vmem:[#allocation3 + $0x22] sm:$0xff]
      %v644 = vld [vmem:[#allocation3 + $0x32] sm:$0xff]
      %v645 = vld [vmem:[#allocation3 + $0x42] sm:$0xff]
      %v646 = vld [vmem:[#allocation3 + $0x52] sm:$0xff]
      %v647 = vld [vmem:[#allocation3 + $0x62] sm:$0xff]
      %v648 = vld [vmem:[#allocation3 + $0x72] sm:$0xff]
      %v649 = vpack.c.bf16 %v641, %v641
      %v650 = vpack.c.bf16 %v642, %v642
      %v651 = vpack.c.bf16 %v643, %v643
      %v652 = vpack.c.bf16 %v644, %v644
      %v653 = vpack.c.bf16 %v645, %v645
      %v654 = vpack.c.bf16 %v646, %v646
      %v655 = vpack.c.bf16 %v647, %v647
      %v656 = vpack.c.bf16 %v648, %v648
      %v665 = vunpack.c.l.b16 %v649
      %v666 = vunpack.c.l.b16 %v650
      %v667 = vunpack.c.l.b16 %v651
      %v668 = vunpack.c.l.b16 %v652
      %v669 = vunpack.c.l.b16 %v653
      %v670 = vunpack.c.l.b16 %v654
      %v671 = vunpack.c.l.b16 %v655
      %v672 = vunpack.c.l.b16 %v656
      %v673 = vpack.c.b16 %v665, %v665
      %v674 = vpack.c.b16 %v666, %v666
      %v675 = vpack.c.b16 %v667, %v667
      %v676 = vpack.c.b16 %v668, %v668
      %v677 = vpack.c.b16 %v669, %v669
      %v678 = vpack.c.b16 %v670, %v670
      %v679 = vpack.c.b16 %v671, %v671
      %v680 = vpack.c.b16 %v672, %v672
      %681 = vrot.lane.b32.xlu0 %v673, 16
      %v682 = vpop.permute.xlu0 %681
      %683 = vrot.lane.b32.xlu0 %v674, 16
      %v684 = vpop.permute.xlu0 %683
      %685 = vrot.lane.b32.xlu0 %v675, 16
      %v686 = vpop.permute.xlu0 %685
      %687 = vrot.lane.b32.xlu0 %v676, 16
      %v688 = vpop.permute.xlu0 %687
      %689 = vrot.lane.b32.xlu0 %v677, 16
      %v690 = vpop.permute.xlu0 %689
      %691 = vrot.lane.b32.xlu0 %v678, 16
      %v692 = vpop.permute.xlu0 %691
      %693 = vrot.lane.b32.xlu0 %v679, 16
      %v694 = vpop.permute.xlu0 %693
      %695 = vrot.lane.b32.xlu0 %v680, 16
      %v696 = vpop.permute.xlu0 %695
      %vm705 = vcmask 191616
      %706 = vst.msk [vmem:[#allocation4] sm:$0xf] %vm705, %v682
      %707 = vst.msk [vmem:[#allocation4 + $0x4] sm:$0xf] %vm705, %v684
      %708 = vst.msk [vmem:[#allocation4 + $0x8] sm:$0xf] %vm705, %v686
      %709 = vst.msk [vmem:[#allocation4 + $0xc] sm:$0xf] %vm705, %v688
      %710 = vst.msk [vmem:[#allocation4 + $0x10] sm:$0xf] %vm705, %v690
      %711 = vst.msk [vmem:[#allocation4 + $0x14] sm:$0xf] %vm705, %v692
      %712 = vst.msk [vmem:[#allocation4 + $0x18] sm:$0xf] %vm705, %v694
      %713 = vst.msk [vmem:[#allocation4 + $0x1c] sm:$0xf] %vm705, %v696
      %v714 = vld [vmem:[%s534] sm:$0xff]
      %v715 = vld [vmem:[%s534 + $0x10] sm:$0xff]
      %v716 = vld [vmem:[%s534 + $0x20] sm:$0xff]
      %v717 = vld [vmem:[%s534 + $0x30] sm:$0xff]
      %v718 = vld [vmem:[%s534 + $0x40] sm:$0xff]
      %v719 = vld [vmem:[%s534 + $0x50] sm:$0xff]
      %v720 = vld [vmem:[%s534 + $0x60] sm:$0xff]
      %v721 = vld [vmem:[%s534 + $0x70] sm:$0xff]
      %v722 = vpack.c.bf16 %v714, %v714
      %v723 = vpack.c.bf16 %v715, %v715
      %v724 = vpack.c.bf16 %v716, %v716
      %v725 = vpack.c.bf16 %v717, %v717
      %v726 = vpack.c.bf16 %v718, %v718
      %v727 = vpack.c.bf16 %v719, %v719
      %v728 = vpack.c.bf16 %v720, %v720
      %v729 = vpack.c.bf16 %v721, %v721
      %v738 = vunpack.c.l.b16 %v722
      %v739 = vunpack.c.l.b16 %v723
      %v740 = vunpack.c.l.b16 %v724
      %v741 = vunpack.c.l.b16 %v725
      %v742 = vunpack.c.l.b16 %v726
      %v743 = vunpack.c.l.b16 %v727
      %v744 = vunpack.c.l.b16 %v728
      %v745 = vunpack.c.l.b16 %v729
      %v746 = vpack.c.b16 %v738, %v738
      %v747 = vpack.c.b16 %v739, %v739
      %v748 = vpack.c.b16 %v740, %v740
      %v749 = vpack.c.b16 %v741, %v741
      %v750 = vpack.c.b16 %v742, %v742
      %v751 = vpack.c.b16 %v743, %v743
      %v752 = vpack.c.b16 %v744, %v744
      %v753 = vpack.c.b16 %v745, %v745
      %754 = vrot.lane.b32.xlu0 %v746, 24
      %v755 = vpop.permute.xlu0 %754
      %756 = vrot.lane.b32.xlu0 %v747, 24
      %v757 = vpop.permute.xlu0 %756
      %758 = vrot.lane.b32.xlu0 %v748, 24
      %v759 = vpop.permute.xlu0 %758
      %760 = vrot.lane.b32.xlu0 %v749, 24
      %v761 = vpop.permute.xlu0 %760
      %762 = vrot.lane.b32.xlu0 %v750, 24
      %v763 = vpop.permute.xlu0 %762
      %764 = vrot.lane.b32.xlu0 %v751, 24
      %v765 = vpop.permute.xlu0 %764
      %766 = vrot.lane.b32.xlu0 %v752, 24
      %v767 = vpop.permute.xlu0 %766
      %768 = vrot.lane.b32.xlu0 %v753, 24
      %v769 = vpop.permute.xlu0 %768
      %vm778 = vcmask 257216
      %779 = vst.msk [vmem:[#allocation4] sm:$0xf] %vm778, %v755
      %780 = vst.msk [vmem:[#allocation4 + $0x4] sm:$0xf] %vm778, %v757
      %781 = vst.msk [vmem:[#allocation4 + $0x8] sm:$0xf] %vm778, %v759
      %782 = vst.msk [vmem:[#allocation4 + $0xc] sm:$0xf] %vm778, %v761
      %783 = vst.msk [vmem:[#allocation4 + $0x10] sm:$0xf] %vm778, %v763
      %784 = vst.msk [vmem:[#allocation4 + $0x14] sm:$0xf] %vm778, %v765
      %785 = vst.msk [vmem:[#allocation4 + $0x18] sm:$0xf] %vm778, %v767
      %786 = vst.msk [vmem:[#allocation4 + $0x1c] sm:$0xf] %vm778, %v769
      %v787 = vld [vmem:[%s534 + $0x1] sm:$0xff]
      %v788 = vld [vmem:[%s534 + $0x11] sm:$0xff]
      %v789 = vld [vmem:[%s534 + $0x21] sm:$0xff]
      %v790 = vld [vmem:[%s534 + $0x31] sm:$0xff]
      %v791 = vld [vmem:[%s534 + $0x41] sm:$0xff]
      %v792 = vld [vmem:[%s534 + $0x51] sm:$0xff]
      %v793 = vld [vmem:[%s534 + $0x61] sm:$0xff]
      %v794 = vld [vmem:[%s534 + $0x71] sm:$0xff]
      %v795 = vpack.c.bf16 %v787, %v787
      %v796 = vpack.c.bf16 %v788, %v788
      %v797 = vpack.c.bf16 %v789, %v789
      %v798 = vpack.c.bf16 %v790, %v790
      %v799 = vpack.c.bf16 %v791, %v791
      %v800 = vpack.c.bf16 %v792, %v792
      %v801 = vpack.c.bf16 %v793, %v793
      %v802 = vpack.c.bf16 %v794, %v794
      %v811 = vunpack.c.l.b16 %v795
      %v812 = vunpack.c.l.b16 %v796
      %v813 = vunpack.c.l.b16 %v797
      %v814 = vunpack.c.l.b16 %v798
      %v815 = vunpack.c.l.b16 %v799
      %v816 = vunpack.c.l.b16 %v800
      %v817 = vunpack.c.l.b16 %v801
      %v818 = vunpack.c.l.b16 %v802
      %v819 = vpack.c.b16 %v811, %v811
      %v820 = vpack.c.b16 %v812, %v812
      %v821 = vpack.c.b16 %v813, %v813
      %v822 = vpack.c.b16 %v814, %v814
      %v823 = vpack.c.b16 %v815, %v815
      %v824 = vpack.c.b16 %v816, %v816
      %v825 = vpack.c.b16 %v817, %v817
      %v826 = vpack.c.b16 %v818, %v818
      %827 = vrot.lane.b32.xlu0 %v819, 32
      %v828 = vpop.permute.xlu0 %827
      %829 = vrot.lane.b32.xlu0 %v820, 32
      %v830 = vpop.permute.xlu0 %829
      %831 = vrot.lane.b32.xlu0 %v821, 32
      %v832 = vpop.permute.xlu0 %831
      %833 = vrot.lane.b32.xlu0 %v822, 32
      %v834 = vpop.permute.xlu0 %833
      %835 = vrot.lane.b32.xlu0 %v823, 32
      %v836 = vpop.permute.xlu0 %835
      %837 = vrot.lane.b32.xlu0 %v824, 32
      %v838 = vpop.permute.xlu0 %837
      %839 = vrot.lane.b32.xlu0 %v825, 32
      %v840 = vpop.permute.xlu0 %839
      %841 = vrot.lane.b32.xlu0 %v826, 32
      %v842 = vpop.permute.xlu0 %841
      %vm851 = vcmask 322816
      %852 = vst.msk [vmem:[#allocation4] sm:$0xf] %vm851, %v828
      %853 = vst.msk [vmem:[#allocation4 + $0x4] sm:$0xf] %vm851, %v830
      %854 = vst.msk [vmem:[#allocation4 + $0x8] sm:$0xf] %vm851, %v832
      %855 = vst.msk [vmem:[#allocation4 + $0xc] sm:$0xf] %vm851, %v834
      %856 = vst.msk [vmem:[#allocation4 + $0x10] sm:$0xf] %vm851, %v836
      %857 = vst.msk [vmem:[#allocation4 + $0x14] sm:$0xf] %vm851, %v838
      %858 = vst.msk [vmem:[#allocation4 + $0x18] sm:$0xf] %vm851, %v840
      %859 = vst.msk [vmem:[#allocation4 + $0x1c] sm:$0xf] %vm851, %v842
      %v860 = vld [vmem:[%s534 + $0x2] sm:$0xff]
      %v861 = vld [vmem:[%s534 + $0x12] sm:$0xff]
      %v862 = vld [vmem:[%s534 + $0x22] sm:$0xff]
      %v863 = vld [vmem:[%s534 + $0x32] sm:$0xff]
      %v864 = vld [vmem:[%s534 + $0x42] sm:$0xff]
      %v865 = vld [vmem:[%s534 + $0x52] sm:$0xff]
      %v866 = vld [vmem:[%s534 + $0x62] sm:$0xff]
      %v867 = vld [vmem:[%s534 + $0x72] sm:$0xff]
      %v868 = vpack.c.bf16 %v860, %v860
      %v869 = vpack.c.bf16 %v861, %v861
      %v870 = vpack.c.bf16 %v862, %v862
      %v871 = vpack.c.bf16 %v863, %v863
      %v872 = vpack.c.bf16 %v864, %v864
      %v873 = vpack.c.bf16 %v865, %v865
      %v874 = vpack.c.bf16 %v866, %v866
      %v875 = vpack.c.bf16 %v867, %v867
      %v884 = vunpack.c.l.b16 %v868
      %v885 = vunpack.c.l.b16 %v869
      %v886 = vunpack.c.l.b16 %v870
      %v887 = vunpack.c.l.b16 %v871
      %v888 = vunpack.c.l.b16 %v872
      %v889 = vunpack.c.l.b16 %v873
      %v890 = vunpack.c.l.b16 %v874
      %v891 = vunpack.c.l.b16 %v875
      %v892 = vpack.c.b16 %v884, %v884
      %v893 = vpack.c.b16 %v885, %v885
      %v894 = vpack.c.b16 %v886, %v886
      %v895 = vpack.c.b16 %v887, %v887
      %v896 = vpack.c.b16 %v888, %v888
      %v897 = vpack.c.b16 %v889, %v889
      %v898 = vpack.c.b16 %v890, %v890
      %v899 = vpack.c.b16 %v891, %v891
      %900 = vrot.lane.b32.xlu0 %v892, 40
      %v901 = vpop.permute.xlu0 %900
      %902 = vrot.lane.b32.xlu0 %v893, 40
      %v903 = vpop.permute.xlu0 %902
      %904 = vrot.lane.b32.xlu0 %v894, 40
      %v905 = vpop.permute.xlu0 %904
      %906 = vrot.lane.b32.xlu0 %v895, 40
      %v907 = vpop.permute.xlu0 %906
      %908 = vrot.lane.b32.xlu0 %v896, 40
      %v909 = vpop.permute.xlu0 %908
      %910 = vrot.lane.b32.xlu0 %v897, 40
      %v911 = vpop.permute.xlu0 %910
      %912 = vrot.lane.b32.xlu0 %v898, 40
      %v913 = vpop.permute.xlu0 %912
      %914 = vrot.lane.b32.xlu0 %v899, 40
      %v915 = vpop.permute.xlu0 %914
      %vm924 = vcmask 388416
      %925 = vst.msk [vmem:[#allocation4] sm:$0xf] %vm924, %v901
      %926 = vst.msk [vmem:[#allocation4 + $0x4] sm:$0xf] %vm924, %v903
      %927 = vst.msk [vmem:[#allocation4 + $0x8] sm:$0xf] %vm924, %v905
      %928 = vst.msk [vmem:[#allocation4 + $0xc] sm:$0xf] %vm924, %v907
      %929 = vst.msk [vmem:[#allocation4 + $0x10] sm:$0xf] %vm924, %v909
      %930 = vst.msk [vmem:[#allocation4 + $0x14] sm:$0xf] %vm924, %v911
      %931 = vst.msk [vmem:[#allocation4 + $0x18] sm:$0xf] %vm924, %v913
      %932 = vst.msk [vmem:[#allocation4 + $0x1c] sm:$0xf] %vm924, %v915
      %s933 = scalar_lea.vmem [#allocation3], 32
      %v934 = vld [vmem:[%s933] sm:$0xff]
      %v935 = vld [vmem:[%s933 + $0x10] sm:$0xff]
      %v936 = vld [vmem:[%s933 + $0x20] sm:$0xff]
      %v937 = vld [vmem:[%s933 + $0x30] sm:$0xff]
      %v938 = vld [vmem:[%s933 + $0x40] sm:$0xff]
      %v939 = vld [vmem:[%s933 + $0x50] sm:$0xff]
      %v940 = vld [vmem:[%s933 + $0x60] sm:$0xff]
      %v941 = vld [vmem:[%s933 + $0x70] sm:$0xff]
      %v942 = vpack.c.bf16 %v934, %v934
      %v943 = vpack.c.bf16 %v935, %v935
      %v944 = vpack.c.bf16 %v936, %v936
      %v945 = vpack.c.bf16 %v937, %v937
      %v946 = vpack.c.bf16 %v938, %v938
      %v947 = vpack.c.bf16 %v939, %v939
      %v948 = vpack.c.bf16 %v940, %v940
      %v949 = vpack.c.bf16 %v941, %v941
      %v958 = vunpack.c.l.b16 %v942
      %v959 = vunpack.c.l.b16 %v943
      %v960 = vunpack.c.l.b16 %v944
      %v961 = vunpack.c.l.b16 %v945
      %v962 = vunpack.c.l.b16 %v946
      %v963 = vunpack.c.l.b16 %v947
      %v964 = vunpack.c.l.b16 %v948
      %v965 = vunpack.c.l.b16 %v949
      %v966 = vpack.c.b16 %v958, %v958
      %v967 = vpack.c.b16 %v959, %v959
      %v968 = vpack.c.b16 %v960, %v960
      %v969 = vpack.c.b16 %v961, %v961
      %v970 = vpack.c.b16 %v962, %v962
      %v971 = vpack.c.b16 %v963, %v963
      %v972 = vpack.c.b16 %v964, %v964
      %v973 = vpack.c.b16 %v965, %v965
      %974 = vrot.lane.b32.xlu0 %v966, 48
      %v975 = vpop.permute.xlu0 %974
      %976 = vrot.lane.b32.xlu0 %v967, 48
      %v977 = vpop.permute.xlu0 %976
      %978 = vrot.lane.b32.xlu0 %v968, 48
      %v979 = vpop.permute.xlu0 %978
      %980 = vrot.lane.b32.xlu0 %v969, 48
      %v981 = vpop.permute.xlu0 %980
      %982 = vrot.lane.b32.xlu0 %v970, 48
      %v983 = vpop.permute.xlu0 %982
      %984 = vrot.lane.b32.xlu0 %v971, 48
      %v985 = vpop.permute.xlu0 %984
      %986 = vrot.lane.b32.xlu0 %v972, 48
      %v987 = vpop.permute.xlu0 %986
      %988 = vrot.lane.b32.xlu0 %v973, 48
      %v989 = vpop.permute.xlu0 %988
      %vm998 = vcmask 454016
      %999 = vst.msk [vmem:[#allocation4] sm:$0xf] %vm998, %v975
      %1000 = vst.msk [vmem:[#allocation4 + $0x4] sm:$0xf] %vm998, %v977
      %1001 = vst.msk [vmem:[#allocation4 + $0x8] sm:$0xf] %vm998, %v979
      %1002 = vst.msk [vmem:[#allocation4 + $0xc] sm:$0xf] %vm998, %v981
      %1003 = vst.msk [vmem:[#allocation4 + $0x10] sm:$0xf] %vm998, %v983
      %1004 = vst.msk [vmem:[#allocation4 + $0x14] sm:$0xf] %vm998, %v985
      %1005 = vst.msk [vmem:[#allocation4 + $0x18] sm:$0xf] %vm998, %v987
      %1006 = vst.msk [vmem:[#allocation4 + $0x1c] sm:$0xf] %vm998, %v989
      %v1007 = vld [vmem:[%s933 + $0x1] sm:$0xff]
      %v1008 = vld [vmem:[%s933 + $0x11] sm:$0xff]
      %v1009 = vld [vmem:[%s933 + $0x21] sm:$0xff]
      %v1010 = vld [vmem:[%s933 + $0x31] sm:$0xff]
      %v1011 = vld [vmem:[%s933 + $0x41] sm:$0xff]
      %v1012 = vld [vmem:[%s933 + $0x51] sm:$0xff]
      %v1013 = vld [vmem:[%s933 + $0x61] sm:$0xff]
      %v1014 = vld [vmem:[%s933 + $0x71] sm:$0xff]
      %v1015 = vpack.c.bf16 %v1007, %v1007
      %v1016 = vpack.c.bf16 %v1008, %v1008
      %v1017 = vpack.c.bf16 %v1009, %v1009
      %v1018 = vpack.c.bf16 %v1010, %v1010
      %v1019 = vpack.c.bf16 %v1011, %v1011
      %v1020 = vpack.c.bf16 %v1012, %v1012
      %v1021 = vpack.c.bf16 %v1013, %v1013
      %v1022 = vpack.c.bf16 %v1014, %v1014
      %v1031 = vunpack.c.l.b16 %v1015
      %v1032 = vunpack.c.l.b16 %v1016
      %v1033 = vunpack.c.l.b16 %v1017
      %v1034 = vunpack.c.l.b16 %v1018
      %v1035 = vunpack.c.l.b16 %v1019
      %v1036 = vunpack.c.l.b16 %v1020
      %v1037 = vunpack.c.l.b16 %v1021
      %v1038 = vunpack.c.l.b16 %v1022
      %v1039 = vpack.c.b16 %v1031, %v1031
      %v1040 = vpack.c.b16 %v1032, %v1032
      %v1041 = vpack.c.b16 %v1033, %v1033
      %v1042 = vpack.c.b16 %v1034, %v1034
      %v1043 = vpack.c.b16 %v1035, %v1035
      %v1044 = vpack.c.b16 %v1036, %v1036
      %v1045 = vpack.c.b16 %v1037, %v1037
      %v1046 = vpack.c.b16 %v1038, %v1038
      %1047 = vrot.lane.b32.xlu0 %v1039, 56
      %v1048 = vpop.permute.xlu0 %1047
      %1049 = vrot.lane.b32.xlu0 %v1040, 56
      %v1050 = vpop.permute.xlu0 %1049
      %1051 = vrot.lane.b32.xlu0 %v1041, 56
      %v1052 = vpop.permute.xlu0 %1051
      %1053 = vrot.lane.b32.xlu0 %v1042, 56
      %v1054 = vpop.permute.xlu0 %1053
      %1055 = vrot.lane.b32.xlu0 %v1043, 56
      %v1056 = vpop.permute.xlu0 %1055
      %1057 = vrot.lane.b32.xlu0 %v1044, 56
      %v1058 = vpop.permute.xlu0 %1057
      %1059 = vrot.lane.b32.xlu0 %v1045, 56
      %v1060 = vpop.permute.xlu0 %1059
      %1061 = vrot.lane.b32.xlu0 %v1046, 56
      %v1062 = vpop.permute.xlu0 %1061
      %vm1071 = vcmask 519616
      %1072 = vst.msk [vmem:[#allocation4] sm:$0xf] %vm1071, %v1048
      %1073 = vst.msk [vmem:[#allocation4 + $0x4] sm:$0xf] %vm1071, %v1050
      %1074 = vst.msk [vmem:[#allocation4 + $0x8] sm:$0xf] %vm1071, %v1052
      %1075 = vst.msk [vmem:[#allocation4 + $0xc] sm:$0xf] %vm1071, %v1054
      %1076 = vst.msk [vmem:[#allocation4 + $0x10] sm:$0xf] %vm1071, %v1056
      %1077 = vst.msk [vmem:[#allocation4 + $0x14] sm:$0xf] %vm1071, %v1058
      %1078 = vst.msk [vmem:[#allocation4 + $0x18] sm:$0xf] %vm1071, %v1060
      %1079 = vst.msk [vmem:[#allocation4 + $0x1c] sm:$0xf] %vm1071, %v1062
      %v1080 = vld [vmem:[%s933 + $0x2] sm:$0xff]
      %v1081 = vld [vmem:[%s933 + $0x12] sm:$0xff]
      %v1082 = vld [vmem:[%s933 + $0x22] sm:$0xff]
      %v1083 = vld [vmem:[%s933 + $0x32] sm:$0xff]
      %v1084 = vld [vmem:[%s933 + $0x42] sm:$0xff]
      %v1085 = vld [vmem:[%s933 + $0x52] sm:$0xff]
      %v1086 = vld [vmem:[%s933 + $0x62] sm:$0xff]
      %v1087 = vld [vmem:[%s933 + $0x72] sm:$0xff]
      %v1088 = vpack.c.bf16 %v1080, %v1080
      %v1089 = vpack.c.bf16 %v1081, %v1081
      %v1090 = vpack.c.bf16 %v1082, %v1082
      %v1091 = vpack.c.bf16 %v1083, %v1083
      %v1092 = vpack.c.bf16 %v1084, %v1084
      %v1093 = vpack.c.bf16 %v1085, %v1085
      %v1094 = vpack.c.bf16 %v1086, %v1086
      %v1095 = vpack.c.bf16 %v1087, %v1087
      %v1104 = vunpack.c.l.b16 %v1088
      %v1105 = vunpack.c.l.b16 %v1089
      %v1106 = vunpack.c.l.b16 %v1090
      %v1107 = vunpack.c.l.b16 %v1091
      %v1108 = vunpack.c.l.b16 %v1092
      %v1109 = vunpack.c.l.b16 %v1093
      %v1110 = vunpack.c.l.b16 %v1094
      %v1111 = vunpack.c.l.b16 %v1095
      %v1112 = vpack.c.b16 %v1104, %v1104
      %v1113 = vpack.c.b16 %v1105, %v1105
      %v1114 = vpack.c.b16 %v1106, %v1106
      %v1115 = vpack.c.b16 %v1107, %v1107
      %v1116 = vpack.c.b16 %v1108, %v1108
      %v1117 = vpack.c.b16 %v1109, %v1109
      %v1118 = vpack.c.b16 %v1110, %v1110
      %v1119 = vpack.c.b16 %v1111, %v1111
      %1120 = vrot.lane.b32.xlu0 %v1112, 64
      %v1121 = vpop.permute.xlu0 %1120
      %1122 = vrot.lane.b32.xlu0 %v1113, 64
      %v1123 = vpop.permute.xlu0 %1122
      %1124 = vrot.lane.b32.xlu0 %v1114, 64
      %v1125 = vpop.permute.xlu0 %1124
      %1126 = vrot.lane.b32.xlu0 %v1115, 64
      %v1127 = vpop.permute.xlu0 %1126
      %1128 = vrot.lane.b32.xlu0 %v1116, 64
      %v1129 = vpop.permute.xlu0 %1128
      %1130 = vrot.lane.b32.xlu0 %v1117, 64
      %v1131 = vpop.permute.xlu0 %1130
      %1132 = vrot.lane.b32.xlu0 %v1118, 64
      %v1133 = vpop.permute.xlu0 %1132
      %1134 = vrot.lane.b32.xlu0 %v1119, 64
      %v1135 = vpop.permute.xlu0 %1134
      %vm1144 = vcmask 585216
      %1145 = vst.msk [vmem:[#allocation4] sm:$0xf] %vm1144, %v1121
      %1146 = vst.msk [vmem:[#allocation4 + $0x4] sm:$0xf] %vm1144, %v1123
      %1147 = vst.msk [vmem:[#allocation4 + $0x8] sm:$0xf] %vm1144, %v1125
      %1148 = vst.msk [vmem:[#allocation4 + $0xc] sm:$0xf] %vm1144, %v1127
      %1149 = vst.msk [vmem:[#allocation4 + $0x10] sm:$0xf] %vm1144, %v1129
      %1150 = vst.msk [vmem:[#allocation4 + $0x14] sm:$0xf] %vm1144, %v1131
      %1151 = vst.msk [vmem:[#allocation4 + $0x18] sm:$0xf] %vm1144, %v1133
      %1152 = vst.msk [vmem:[#allocation4 + $0x1c] sm:$0xf] %vm1144, %v1135
      %v1153 = vld [vmem:[#allocation4] sm:$0xf]
      %v1154 = vld [vmem:[#allocation4 + $0x4] sm:$0xf]
      %v1155 = vld [vmem:[#allocation4 + $0x8] sm:$0xf]
      %v1156 = vld [vmem:[#allocation4 + $0xc] sm:$0xf]
      %v1157 = vld [vmem:[#allocation4 + $0x10] sm:$0xf]
      %v1158 = vld [vmem:[#allocation4 + $0x14] sm:$0xf]
      %v1159 = vld [vmem:[#allocation4 + $0x18] sm:$0xf]
      %v1160 = vld [vmem:[#allocation4 + $0x1c] sm:$0xf]
      %s1161 = scalar_lea.vmem %s3, 36
      %v1162 = vld [vmem:[%s1161] sm:$0xf]
      %v1163 = vld [vmem:[%s1161 + $0x4] sm:$0xf]
      %v1164 = vld [vmem:[%s1161 + $0x8] sm:$0xf]
      %v1165 = vld [vmem:[%s1161 + $0xc] sm:$0xf]
      %v1166 = vld [vmem:[%s1161 + $0x10] sm:$0xf]
      %v1167 = vld [vmem:[%s1161 + $0x14] sm:$0xf]
      %v1168 = vld [vmem:[%s1161 + $0x18] sm:$0xf]
      %v1169 = vld [vmem:[%s1161 + $0x1c] sm:$0xf]
      %v1170 = vld [vmem:[%s1161 + $0x20] sm:$0xf]
      %v1179 = vunpack.c.l.b16 %v1153
      %v1180 = vunpack.c.l.b16 %v1154
      %v1181 = vunpack.c.l.b16 %v1155
      %v1182 = vunpack.c.l.b16 %v1156
      %v1183 = vunpack.c.l.b16 %v1157
      %v1184 = vunpack.c.l.b16 %v1158
      %v1185 = vunpack.c.l.b16 %v1159
      %v1186 = vunpack.c.l.b16 %v1160
      %v1187 = vpack.c.b16 %v1180, %v1179
      %v1188 = vpack.c.b16 %v1182, %v1181
      %v1189 = vpack.c.b16 %v1184, %v1183
      %v1190 = vpack.c.b16 %v1186, %v1185
      %v1200 = vunpack.c.l.b16 %v1162
      %v1201 = vunpack.c.l.b16 %v1163
      %v1202 = vunpack.c.l.b16 %v1164
      %v1203 = vunpack.c.l.b16 %v1165
      %v1204 = vunpack.c.l.b16 %v1166
      %v1205 = vunpack.c.l.b16 %v1167
      %v1206 = vunpack.c.l.b16 %v1168
      %v1207 = vunpack.c.l.b16 %v1169
      %v1208 = vunpack.c.l.b16 %v1170
      %v1209 = vpack.c.b16 %v1201, %v1200
      %v1210 = vpack.c.b16 %v1203, %v1202
      %v1211 = vpack.c.b16 %v1205, %v1204
      %v1212 = vpack.c.b16 %v1207, %v1206
      %v1213 = vpack.c.b16 %v1208, %v1208
      %vm1218 = vcmask 588800
      %v1220 = vsel %vm1218, %v1187, 0
      %v1223 = vsel %vm1218, %v1188, 0
      %v1226 = vsel %vm1218, %v1189, 0
      %v1229 = vsel %vm1218, %v1190, 0
      %vm1231 = vcmask 1043456
      %v1233 = vsel %vm1231, %v1213, 0
      %1235 = vmatprep.subr.bf16.mxu0 0
      %1236 = vmatpush1.bf16.msra.mxu0 0
      %1237 = vmatprep.subr.bf16.mxu0 0
      %1238 = vmatpush1.bf16.msra.mxu0 0
      %1239 = vmatprep.subr.bf16.mxu0 0
      %1240 = vmatpush1.bf16.msra.mxu0 0
      %1241 = vmatprep.subr.bf16.mxu0 0
      %1242 = vmatpush1.bf16.msra.mxu0 %v1233
      %1243 = vmatprep.subr.bf16.mxu0 0
      %1244 = vmatpush1.bf16.msra.mxu0 %v1212
      %1245 = vmatprep.subr.bf16.mxu0 0
      %1246 = vmatpush1.bf16.msra.mxu0 %v1211
      %1247 = vmatprep.subr.bf16.mxu0 0
      %1248 = vmatpush1.bf16.msra.mxu0 %v1210
      %1249 = vmatprep.subr.bf16.mxu0 0
      %1250 = vmatpush1.bf16.msra.mxu0 %v1209
      %1251 = vmatprep.subr.bf16.mxu0 0
      %1252 = vmatpush2.bf16.msra.mxu0 0
      %1253 = vmatprep.subr.bf16.mxu0 0
      %1254 = vmatpush2.bf16.msra.mxu0 0
      %1255 = vmatprep.subr.bf16.mxu0 0
      %1256 = vmatpush2.bf16.msra.mxu0 0
      %1257 = vmatprep.subr.bf16.mxu0 0
      %1258 = vmatpush2.bf16.msra.mxu0 0
      %1259 = vmatprep.subr.bf16.mxu0 0
      %1260 = vmatpush2.bf16.msra.mxu0 0
      %1261 = vmatprep.subr.bf16.mxu0 0
      %1262 = vmatpush2.bf16.msra.mxu0 0
      %1263 = vmatprep.subr.bf16.mxu0 0
      %1264 = vmatpush2.bf16.msra.mxu0 0
      %1265 = vmatprep.subr.bf16.mxu0 0
      %1266 = vmatpush2.bf16.msra.mxu0 0
      %1267 = vmatprep.mubr.bf16.mxu0 0
      %1268 = vmatmul.mubr.bf16.gmra.mxu0 %v1220
      %v1269 = vpop.f32.mrf.mxu0
      %v1270 = vadd.f32 0.0, %v1269
      %v1271 = vpop.f32.mrf.mxu0
      %v1272 = vpop.f32.mrf.mxu0
      %v1273 = vadd.f32 0.0, %v1272
      %v1274 = vpop.f32.mrf.mxu0
      %1275 = vmatprep.mubr.bf16.mxu0 0
      %1276 = vmatmul.mubr.bf16.gmra.mxu0 %v1223
      %v1277 = vpop.f32.mrf.mxu0
      %v1278 = vadd.f32 0.0, %v1277
      %v1279 = vpop.f32.mrf.mxu0
      %v1280 = vpop.f32.mrf.mxu0
      %v1281 = vadd.f32 0.0, %v1280
      %v1282 = vpop.f32.mrf.mxu0
      %1283 = vmatprep.mubr.bf16.mxu0 0
      %1284 = vmatmul.mubr.bf16.gmra.mxu0 %v1226
      %v1285 = vpop.f32.mrf.mxu0
      %v1286 = vadd.f32 0.0, %v1285
      %v1287 = vpop.f32.mrf.mxu0
      %v1288 = vpop.f32.mrf.mxu0
      %v1289 = vadd.f32 0.0, %v1288
      %v1290 = vpop.f32.mrf.mxu0
      %1291 = vmatprep.mubr.bf16.mxu0 0
      %1292 = vmatmul.mubr.bf16.gmra.mxu0 %v1229
      %v1293 = vpop.f32.mrf.mxu0
      %v1294 = vadd.f32 0.0, %v1293
      %v1295 = vpop.f32.mrf.mxu0
      %v1296 = vpop.f32.mrf.mxu0
      %v1297 = vadd.f32 0.0, %v1296
      %v1298 = vpop.f32.mrf.mxu0
      %1299 = vdwg.mxu0
      %1300 = vst [vmem:[#allocation2] sm:$0xff] %v1270
      %1301 = vst [vmem:[#allocation2 + $0x8] sm:$0xff] %v1273
      %1302 = vst [vmem:[#allocation2 + $0x10] sm:$0xff] %v1278
      %1303 = vst [vmem:[#allocation2 + $0x18] sm:$0xff] %v1281
      %1304 = vst [vmem:[#allocation2 + $0x20] sm:$0xff] %v1286
      %1305 = vst [vmem:[#allocation2 + $0x28] sm:$0xff] %v1289
      %1306 = vst [vmem:[#allocation2 + $0x30] sm:$0xff] %v1294
      %1307 = vst [vmem:[#allocation2 + $0x38] sm:$0xff] %v1297
      %p1308 = scmp.gt.s32.totalorder %s25, 0
      // Predicated region
      $region45: #{basic_block_3d_forward.3} parent=43 // pred_check
        %p1309 = pneg %p1308
      $region46: #{basic_block_3d_forward.3} parent=43 // pred_check_branch
        %1311 = sbr.rel (%p1309) target = $region48
      $region47: #{basic_block_3d_forward.3} parent=43 // pred_region
        %v1312 = vld [vmem:[%s436] sm:$0xf]
        %v1313 = vld [vmem:[%s436 + $0x4] sm:$0xf]
        %v1314 = vld [vmem:[%s436 + $0x8] sm:$0xf]
        %v1315 = vld [vmem:[%s436 + $0xc] sm:$0xf]
        %v1316 = vld [vmem:[%s436 + $0x10] sm:$0xf]
        %v1317 = vld [vmem:[%s436 + $0x14] sm:$0xf]
        %v1318 = vld [vmem:[%s436 + $0x18] sm:$0xf]
        %v1319 = vld [vmem:[%s436 + $0x1c] sm:$0xf]
        %v1320 = vunpack.c.l.bf16 %v1312
        %v1321 = vunpack.c.l.bf16 %v1313
        %v1322 = vunpack.c.l.bf16 %v1314
        %v1323 = vunpack.c.l.bf16 %v1315
        %v1324 = vunpack.c.l.bf16 %v1316
        %v1325 = vunpack.c.l.bf16 %v1317
        %v1326 = vunpack.c.l.bf16 %v1318
        %v1327 = vunpack.c.l.bf16 %v1319
        %1328 = vst.msk [vmem:[%s534 + $0x1] sm:$0xff] %vm490, %v1320
        %1329 = vst.msk [vmem:[%s534 + $0x11] sm:$0xff] %vm490, %v1321
        %1330 = vst.msk [vmem:[%s534 + $0x21] sm:$0xff] %vm490, %v1322
        %1331 = vst.msk [vmem:[%s534 + $0x31] sm:$0xff] %vm490, %v1323
        %1332 = vst.msk [vmem:[%s534 + $0x41] sm:$0xff] %vm490, %v1324
        %1333 = vst.msk [vmem:[%s534 + $0x51] sm:$0xff] %vm490, %v1325
        %1334 = vst.msk [vmem:[%s534 + $0x61] sm:$0xff] %vm490, %v1326
        %1335 = vst.msk [vmem:[%s534 + $0x71] sm:$0xff] %vm490, %v1327
        %v1336 = vld [vmem:[#allocation3] sm:$0xff]
        %v1337 = vld [vmem:[#allocation3 + $0x10] sm:$0xff]
        %v1338 = vld [vmem:[#allocation3 + $0x20] sm:$0xff]
        %v1339 = vld [vmem:[#allocation3 + $0x30] sm:$0xff]
        %v1340 = vld [vmem:[#allocation3 + $0x40] sm:$0xff]
        %v1341 = vld [vmem:[#allocation3 + $0x50] sm:$0xff]
        %v1342 = vld [vmem:[#allocation3 + $0x60] sm:$0xff]
        %v1343 = vld [vmem:[#allocation3 + $0x70] sm:$0xff]
        %v1344 = vpack.c.bf16 %v1336, %v1336
        %v1345 = vpack.c.bf16 %v1337, %v1337
        %v1346 = vpack.c.bf16 %v1338, %v1338
        %v1347 = vpack.c.bf16 %v1339, %v1339
        %v1348 = vpack.c.bf16 %v1340, %v1340
        %v1349 = vpack.c.bf16 %v1341, %v1341
        %v1350 = vpack.c.bf16 %v1342, %v1342
        %v1351 = vpack.c.bf16 %v1343, %v1343
        %1352 = vst.msk [vmem:[#allocation4] sm:$0xf] %vm559, %v1344
        %1353 = vst.msk [vmem:[#allocation4 + $0x4] sm:$0xf] %vm559, %v1345
        %1354 = vst.msk [vmem:[#allocation4 + $0x8] sm:$0xf] %vm559, %v1346
        %1355 = vst.msk [vmem:[#allocation4 + $0xc] sm:$0xf] %vm559, %v1347
        %1356 = vst.msk [vmem:[#allocation4 + $0x10] sm:$0xf] %vm559, %v1348
        %1357 = vst.msk [vmem:[#allocation4 + $0x14] sm:$0xf] %vm559, %v1349
        %1358 = vst.msk [vmem:[#allocation4 + $0x18] sm:$0xf] %vm559, %v1350
        %1359 = vst.msk [vmem:[#allocation4 + $0x1c] sm:$0xf] %vm559, %v1351
        %v1360 = vld [vmem:[#allocation3 + $0x1] sm:$0xff]
        %v1361 = vld [vmem:[#allocation3 + $0x11] sm:$0xff]
        %v1362 = vld [vmem:[#allocation3 + $0x21] sm:$0xff]
        %v1363 = vld [vmem:[#allocation3 + $0x31] sm:$0xff]
        %v1364 = vld [vmem:[#allocation3 + $0x41] sm:$0xff]
        %v1365 = vld [vmem:[#allocation3 + $0x51] sm:$0xff]
        %v1366 = vld [vmem:[#allocation3 + $0x61] sm:$0xff]
        %v1367 = vld [vmem:[#allocation3 + $0x71] sm:$0xff]
        %v1368 = vpack.c.bf16 %v1360, %v1360
        %v1369 = vpack.c.bf16 %v1361, %v1361
        %v1370 = vpack.c.bf16 %v1362, %v1362
        %v1371 = vpack.c.bf16 %v1363, %v1363
        %v1372 = vpack.c.bf16 %v1364, %v1364
        %v1373 = vpack.c.bf16 %v1365, %v1365
        %v1374 = vpack.c.bf16 %v1366, %v1366
        %v1375 = vpack.c.bf16 %v1367, %v1367
        %v1384 = vunpack.c.l.b16 %v1368
        %v1385 = vunpack.c.l.b16 %v1369
        %v1386 = vunpack.c.l.b16 %v1370
        %v1387 = vunpack.c.l.b16 %v1371
        %v1388 = vunpack.c.l.b16 %v1372
        %v1389 = vunpack.c.l.b16 %v1373
        %v1390 = vunpack.c.l.b16 %v1374
        %v1391 = vunpack.c.l.b16 %v1375
        %v1392 = vpack.c.b16 %v1384, %v1384
        %v1393 = vpack.c.b16 %v1385, %v1385
        %v1394 = vpack.c.b16 %v1386, %v1386
        %v1395 = vpack.c.b16 %v1387, %v1387
        %v1396 = vpack.c.b16 %v1388, %v1388
        %v1397 = vpack.c.b16 %v1389, %v1389
        %v1398 = vpack.c.b16 %v1390, %v1390
        %v1399 = vpack.c.b16 %v1391, %v1391
        %1400 = vrot.lane.b32.xlu0 %v1392, 8
        %v1401 = vpop.permute.xlu0 %1400
        %1402 = vrot.lane.b32.xlu0 %v1393, 8
        %v1403 = vpop.permute.xlu0 %1402
        %1404 = vrot.lane.b32.xlu0 %v1394, 8
        %v1405 = vpop.permute.xlu0 %1404
        %1406 = vrot.lane.b32.xlu0 %v1395, 8
        %v1407 = vpop.permute.xlu0 %1406
        %1408 = vrot.lane.b32.xlu0 %v1396, 8
        %v1409 = vpop.permute.xlu0 %1408
        %1410 = vrot.lane.b32.xlu0 %v1397, 8
        %v1411 = vpop.permute.xlu0 %1410
        %1412 = vrot.lane.b32.xlu0 %v1398, 8
        %v1413 = vpop.permute.xlu0 %1412
        %1414 = vrot.lane.b32.xlu0 %v1399, 8
        %v1415 = vpop.permute.xlu0 %1414
        %1424 = vst.msk [vmem:[#allocation4] sm:$0xf] %vm632, %v1401
        %1425 = vst.msk [vmem:[#allocation4 + $0x4] sm:$0xf] %vm632, %v1403
        %1426 = vst.msk [vmem:[#allocation4 + $0x8] sm:$0xf] %vm632, %v1405
        %1427 = vst.msk [vmem:[#allocation4 + $0xc] sm:$0xf] %vm632, %v1407
        %1428 = vst.msk [vmem:[#allocation4 + $0x10] sm:$0xf] %vm632, %v1409
        %1429 = vst.msk [vmem:[#allocation4 + $0x14] sm:$0xf] %vm632, %v1411
        %1430 = vst.msk [vmem:[#allocation4 + $0x18] sm:$0xf] %vm632, %v1413
        %1431 = vst.msk [vmem:[#allocation4 + $0x1c] sm:$0xf] %vm632, %v1415
        %v1432 = vld [vmem:[#allocation3 + $0x2] sm:$0xff]
        %v1433 = vld [vmem:[#allocation3 + $0x12] sm:$0xff]
        %v1434 = vld [vmem:[#allocation3 + $0x22] sm:$0xff]
        %v1435 = vld [vmem:[#allocation3 + $0x32] sm:$0xff]
        %v1436 = vld [vmem:[#allocation3 + $0x42] sm:$0xff]
        %v1437 = vld [vmem:[#allocation3 + $0x52] sm:$0xff]
        %v1438 = vld [vmem:[#allocation3 + $0x62] sm:$0xff]
        %v1439 = vld [vmem:[#allocation3 + $0x72] sm:$0xff]
        %v1440 = vpack.c.bf16 %v1432, %v1432
        %v1441 = vpack.c.bf16 %v1433, %v1433
        %v1442 = vpack.c.bf16 %v1434, %v1434
        %v1443 = vpack.c.bf16 %v1435, %v1435
        %v1444 = vpack.c.bf16 %v1436, %v1436
        %v1445 = vpack.c.bf16 %v1437, %v1437
        %v1446 = vpack.c.bf16 %v1438, %v1438
        %v1447 = vpack.c.bf16 %v1439, %v1439
        %v1456 = vunpack.c.l.b16 %v1440
        %v1457 = vunpack.c.l.b16 %v1441
        %v1458 = vunpack.c.l.b16 %v1442
        %v1459 = vunpack.c.l.b16 %v1443
        %v1460 = vunpack.c.l.b16 %v1444
        %v1461 = vunpack.c.l.b16 %v1445
        %v1462 = vunpack.c.l.b16 %v1446
        %v1463 = vunpack.c.l.b16 %v1447
        %v1464 = vpack.c.b16 %v1456, %v1456
        %v1465 = vpack.c.b16 %v1457, %v1457
        %v1466 = vpack.c.b16 %v1458, %v1458
        %v1467 = vpack.c.b16 %v1459, %v1459
        %v1468 = vpack.c.b16 %v1460, %v1460
        %v1469 = vpack.c.b16 %v1461, %v1461
        %v1470 = vpack.c.b16 %v1462, %v1462
        %v1471 = vpack.c.b16 %v1463, %v1463
        %1472 = vrot.lane.b32.xlu0 %v1464, 16
        %v1473 = vpop.permute.xlu0 %1472
        %1474 = vrot.lane.b32.xlu0 %v1465, 16
        %v1475 = vpop.permute.xlu0 %1474
        %1476 = vrot.lane.b32.xlu0 %v1466, 16
        %v1477 = vpop.permute.xlu0 %1476
        %1478 = vrot.lane.b32.xlu0 %v1467, 16
        %v1479 = vpop.permute.xlu0 %1478
        %1480 = vrot.lane.b32.xlu0 %v1468, 16
        %v1481 = vpop.permute.xlu0 %1480
        %1482 = vrot.lane.b32.xlu0 %v1469, 16
        %v1483 = vpop.permute.xlu0 %1482
        %1484 = vrot.lane.b32.xlu0 %v1470, 16
        %v1485 = vpop.permute.xlu0 %1484
        %1486 = vrot.lane.b32.xlu0 %v1471, 16
        %v1487 = vpop.permute.xlu0 %1486
        %1496 = vst.msk [vmem:[#allocation4] sm:$0xf] %vm705, %v1473
        %1497 = vst.msk [vmem:[#allocation4 + $0x4] sm:$0xf] %vm705, %v1475
        %1498 = vst.msk [vmem:[#allocation4 + $0x8] sm:$0xf] %vm705, %v1477
        %1499 = vst.msk [vmem:[#allocation4 + $0xc] sm:$0xf] %vm705, %v1479
        %1500 = vst.msk [vmem:[#allocation4 + $0x10] sm:$0xf] %vm705, %v1481
        %1501 = vst.msk [vmem:[#allocation4 + $0x14] sm:$0xf] %vm705, %v1483
        %1502 = vst.msk [vmem:[#allocation4 + $0x18] sm:$0xf] %vm705, %v1485
        %1503 = vst.msk [vmem:[#allocation4 + $0x1c] sm:$0xf] %vm705, %v1487
        %v1504 = vld [vmem:[%s534] sm:$0xff]
        %v1505 = vld [vmem:[%s534 + $0x10] sm:$0xff]
        %v1506 = vld [vmem:[%s534 + $0x20] sm:$0xff]
        %v1507 = vld [vmem:[%s534 + $0x30] sm:$0xff]
        %v1508 = vld [vmem:[%s534 + $0x40] sm:$0xff]
        %v1509 = vld [vmem:[%s534 + $0x50] sm:$0xff]
        %v1510 = vld [vmem:[%s534 + $0x60] sm:$0xff]
        %v1511 = vld [vmem:[%s534 + $0x70] sm:$0xff]
        %v1512 = vpack.c.bf16 %v1504, %v1504
        %v1513 = vpack.c.bf16 %v1505, %v1505
        %v1514 = vpack.c.bf16 %v1506, %v1506
        %v1515 = vpack.c.bf16 %v1507, %v1507
        %v1516 = vpack.c.bf16 %v1508, %v1508
        %v1517 = vpack.c.bf16 %v1509, %v1509
        %v1518 = vpack.c.bf16 %v1510, %v1510
        %v1519 = vpack.c.bf16 %v1511, %v1511
        %v1528 = vunpack.c.l.b16 %v1512
        %v1529 = vunpack.c.l.b16 %v1513
        %v1530 = vunpack.c.l.b16 %v1514
        %v1531 = vunpack.c.l.b16 %v1515
        %v1532 = vunpack.c.l.b16 %v1516
        %v1533 = vunpack.c.l.b16 %v1517
        %v1534 = vunpack.c.l.b16 %v1518
        %v1535 = vunpack.c.l.b16 %v1519
        %v1536 = vpack.c.b16 %v1528, %v1528
        %v1537 = vpack.c.b16 %v1529, %v1529
        %v1538 = vpack.c.b16 %v1530, %v1530
        %v1539 = vpack.c.b16 %v1531, %v1531
        %v1540 = vpack.c.b16 %v1532, %v1532
        %v1541 = vpack.c.b16 %v1533, %v1533
        %v1542 = vpack.c.b16 %v1534, %v1534
        %v1543 = vpack.c.b16 %v1535, %v1535
        %1544 = vrot.lane.b32.xlu0 %v1536, 24
        %v1545 = vpop.permute.xlu0 %1544
        %1546 = vrot.lane.b32.xlu0 %v1537, 24
        %v1547 = vpop.permute.xlu0 %1546
        %1548 = vrot.lane.b32.xlu0 %v1538, 24
        %v1549 = vpop.permute.xlu0 %1548
        %1550 = vrot.lane.b32.xlu0 %v1539, 24
        %v1551 = vpop.permute.xlu0 %1550
        %1552 = vrot.lane.b32.xlu0 %v1540, 24
        %v1553 = vpop.permute.xlu0 %1552
        %1554 = vrot.lane.b32.xlu0 %v1541, 24
        %v1555 = vpop.permute.xlu0 %1554
        %1556 = vrot.lane.b32.xlu0 %v1542, 24
        %v1557 = vpop.permute.xlu0 %1556
        %1558 = vrot.lane.b32.xlu0 %v1543, 24
        %v1559 = vpop.permute.xlu0 %1558
        %1568 = vst.msk [vmem:[#allocation4] sm:$0xf] %vm778, %v1545
        %1569 = vst.msk [vmem:[#allocation4 + $0x4] sm:$0xf] %vm778, %v1547
        %1570 = vst.msk [vmem:[#allocation4 + $0x8] sm:$0xf] %vm778, %v1549
        %1571 = vst.msk [vmem:[#allocation4 + $0xc] sm:$0xf] %vm778, %v1551
        %1572 = vst.msk [vmem:[#allocation4 + $0x10] sm:$0xf] %vm778, %v1553
        %1573 = vst.msk [vmem:[#allocation4 + $0x14] sm:$0xf] %vm778, %v1555
        %1574 = vst.msk [vmem:[#allocation4 + $0x18] sm:$0xf] %vm778, %v1557
        %1575 = vst.msk [vmem:[#allocation4 + $0x1c] sm:$0xf] %vm778, %v1559
        %v1576 = vld [vmem:[%s534 + $0x1] sm:$0xff]
        %v1577 = vld [vmem:[%s534 + $0x11] sm:$0xff]
        %v1578 = vld [vmem:[%s534 + $0x21] sm:$0xff]
        %v1579 = vld [vmem:[%s534 + $0x31] sm:$0xff]
        %v1580 = vld [vmem:[%s534 + $0x41] sm:$0xff]
        %v1581 = vld [vmem:[%s534 + $0x51] sm:$0xff]
        %v1582 = vld [vmem:[%s534 + $0x61] sm:$0xff]
        %v1583 = vld [vmem:[%s534 + $0x71] sm:$0xff]
        %v1584 = vpack.c.bf16 %v1576, %v1576
        %v1585 = vpack.c.bf16 %v1577, %v1577
        %v1586 = vpack.c.bf16 %v1578, %v1578
        %v1587 = vpack.c.bf16 %v1579, %v1579
        %v1588 = vpack.c.bf16 %v1580, %v1580
        %v1589 = vpack.c.bf16 %v1581, %v1581
        %v1590 = vpack.c.bf16 %v1582, %v1582
        %v1591 = vpack.c.bf16 %v1583, %v1583
        %v1600 = vunpack.c.l.b16 %v1584
        %v1601 = vunpack.c.l.b16 %v1585
        %v1602 = vunpack.c.l.b16 %v1586
        %v1603 = vunpack.c.l.b16 %v1587
        %v1604 = vunpack.c.l.b16 %v1588
        %v1605 = vunpack.c.l.b16 %v1589
        %v1606 = vunpack.c.l.b16 %v1590
        %v1607 = vunpack.c.l.b16 %v1591
        %v1608 = vpack.c.b16 %v1600, %v1600
        %v1609 = vpack.c.b16 %v1601, %v1601
        %v1610 = vpack.c.b16 %v1602, %v1602
        %v1611 = vpack.c.b16 %v1603, %v1603
        %v1612 = vpack.c.b16 %v1604, %v1604
        %v1613 = vpack.c.b16 %v1605, %v1605
        %v1614 = vpack.c.b16 %v1606, %v1606
        %v1615 = vpack.c.b16 %v1607, %v1607
        %1616 = vrot.lane.b32.xlu0 %v1608, 32
        %v1617 = vpop.permute.xlu0 %1616
        %1618 = vrot.lane.b32.xlu0 %v1609, 32
        %v1619 = vpop.permute.xlu0 %1618
        %1620 = vrot.lane.b32.xlu0 %v1610, 32
        %v1621 = vpop.permute.xlu0 %1620
        %1622 = vrot.lane.b32.xlu0 %v1611, 32
        %v1623 = vpop.permute.xlu0 %1622
        %1624 = vrot.lane.b32.xlu0 %v1612, 32
        %v1625 = vpop.permute.xlu0 %1624
        %1626 = vrot.lane.b32.xlu0 %v1613, 32
        %v1627 = vpop.permute.xlu0 %1626
        %1628 = vrot.lane.b32.xlu0 %v1614, 32
        %v1629 = vpop.permute.xlu0 %1628
        %1630 = vrot.lane.b32.xlu0 %v1615, 32
        %v1631 = vpop.permute.xlu0 %1630
        %1640 = vst.msk [vmem:[#allocation4] sm:$0xf] %vm851, %v1617
        %1641 = vst.msk [vmem:[#allocation4 + $0x4] sm:$0xf] %vm851, %v1619
        %1642 = vst.msk [vmem:[#allocation4 + $0x8] sm:$0xf] %vm851, %v1621
        %1643 = vst.msk [vmem:[#allocation4 + $0xc] sm:$0xf] %vm851, %v1623
        %1644 = vst.msk [vmem:[#allocation4 + $0x10] sm:$0xf] %vm851, %v1625
        %1645 = vst.msk [vmem:[#allocation4 + $0x14] sm:$0xf] %vm851, %v1627
        %1646 = vst.msk [vmem:[#allocation4 + $0x18] sm:$0xf] %vm851, %v1629
        %1647 = vst.msk [vmem:[#allocation4 + $0x1c] sm:$0xf] %vm851, %v1631
        %v1648 = vld [vmem:[%s534 + $0x2] sm:$0xff]
        %v1649 = vld [vmem:[%s534 + $0x12] sm:$0xff]
        %v1650 = vld [vmem:[%s534 + $0x22] sm:$0xff]
        %v1651 = vld [vmem:[%s534 + $0x32] sm:$0xff]
        %v1652 = vld [vmem:[%s534 + $0x42] sm:$0xff]
        %v1653 = vld [vmem:[%s534 + $0x52] sm:$0xff]
        %v1654 = vld [vmem:[%s534 + $0x62] sm:$0xff]
        %v1655 = vld [vmem:[%s534 + $0x72] sm:$0xff]
        %v1656 = vpack.c.bf16 %v1648, %v1648
        %v1657 = vpack.c.bf16 %v1649, %v1649
        %v1658 = vpack.c.bf16 %v1650, %v1650
        %v1659 = vpack.c.bf16 %v1651, %v1651
        %v1660 = vpack.c.bf16 %v1652, %v1652
        %v1661 = vpack.c.bf16 %v1653, %v1653
        %v1662 = vpack.c.bf16 %v1654, %v1654
        %v1663 = vpack.c.bf16 %v1655, %v1655
        %v1672 = vunpack.c.l.b16 %v1656
        %v1673 = vunpack.c.l.b16 %v1657
        %v1674 = vunpack.c.l.b16 %v1658
        %v1675 = vunpack.c.l.b16 %v1659
        %v1676 = vunpack.c.l.b16 %v1660
        %v1677 = vunpack.c.l.b16 %v1661
        %v1678 = vunpack.c.l.b16 %v1662
        %v1679 = vunpack.c.l.b16 %v1663
        %v1680 = vpack.c.b16 %v1672, %v1672
        %v1681 = vpack.c.b16 %v1673, %v1673
        %v1682 = vpack.c.b16 %v1674, %v1674
        %v1683 = vpack.c.b16 %v1675, %v1675
        %v1684 = vpack.c.b16 %v1676, %v1676
        %v1685 = vpack.c.b16 %v1677, %v1677
        %v1686 = vpack.c.b16 %v1678, %v1678
        %v1687 = vpack.c.b16 %v1679, %v1679
        %1688 = vrot.lane.b32.xlu0 %v1680, 40
        %v1689 = vpop.permute.xlu0 %1688
        %1690 = vrot.lane.b32.xlu0 %v1681, 40
        %v1691 = vpop.permute.xlu0 %1690
        %1692 = vrot.lane.b32.xlu0 %v1682, 40
        %v1693 = vpop.permute.xlu0 %1692
        %1694 = vrot.lane.b32.xlu0 %v1683, 40
        %v1695 = vpop.permute.xlu0 %1694
        %1696 = vrot.lane.b32.xlu0 %v1684, 40
        %v1697 = vpop.permute.xlu0 %1696
        %1698 = vrot.lane.b32.xlu0 %v1685, 40
        %v1699 = vpop.permute.xlu0 %1698
        %1700 = vrot.lane.b32.xlu0 %v1686, 40
        %v1701 = vpop.permute.xlu0 %1700
        %1702 = vrot.lane.b32.xlu0 %v1687, 40
        %v1703 = vpop.permute.xlu0 %1702
        %1712 = vst.msk [vmem:[#allocation4] sm:$0xf] %vm924, %v1689
        %1713 = vst.msk [vmem:[#allocation4 + $0x4] sm:$0xf] %vm924, %v1691
        %1714 = vst.msk [vmem:[#allocation4 + $0x8] sm:$0xf] %vm924, %v1693
        %1715 = vst.msk [vmem:[#allocation4 + $0xc] sm:$0xf] %vm924, %v1695
        %1716 = vst.msk [vmem:[#allocation4 + $0x10] sm:$0xf] %vm924, %v1697
        %1717 = vst.msk [vmem:[#allocation4 + $0x14] sm:$0xf] %vm924, %v1699
        %1718 = vst.msk [vmem:[#allocation4 + $0x18] sm:$0xf] %vm924, %v1701
        %1719 = vst.msk [vmem:[#allocation4 + $0x1c] sm:$0xf] %vm924, %v1703
        %v1720 = vld [vmem:[%s933] sm:$0xff]
        %v1721 = vld [vmem:[%s933 + $0x10] sm:$0xff]
        %v1722 = vld [vmem:[%s933 + $0x20] sm:$0xff]
        %v1723 = vld [vmem:[%s933 + $0x30] sm:$0xff]
        %v1724 = vld [vmem:[%s933 + $0x40] sm:$0xff]
        %v1725 = vld [vmem:[%s933 + $0x50] sm:$0xff]
        %v1726 = vld [vmem:[%s933 + $0x60] sm:$0xff]
        %v1727 = vld [vmem:[%s933 + $0x70] sm:$0xff]
        %v1728 = vpack.c.bf16 %v1720, %v1720
        %v1729 = vpack.c.bf16 %v1721, %v1721
        %v1730 = vpack.c.bf16 %v1722, %v1722
        %v1731 = vpack.c.bf16 %v1723, %v1723
        %v1732 = vpack.c.bf16 %v1724, %v1724
        %v1733 = vpack.c.bf16 %v1725, %v1725
        %v1734 = vpack.c.bf16 %v1726, %v1726
        %v1735 = vpack.c.bf16 %v1727, %v1727
        %v1744 = vunpack.c.l.b16 %v1728
        %v1745 = vunpack.c.l.b16 %v1729
        %v1746 = vunpack.c.l.b16 %v1730
        %v1747 = vunpack.c.l.b16 %v1731
        %v1748 = vunpack.c.l.b16 %v1732
        %v1749 = vunpack.c.l.b16 %v1733
        %v1750 = vunpack.c.l.b16 %v1734
        %v1751 = vunpack.c.l.b16 %v1735
        %v1752 = vpack.c.b16 %v1744, %v1744
        %v1753 = vpack.c.b16 %v1745, %v1745
        %v1754 = vpack.c.b16 %v1746, %v1746
        %v1755 = vpack.c.b16 %v1747, %v1747
        %v1756 = vpack.c.b16 %v1748, %v1748
        %v1757 = vpack.c.b16 %v1749, %v1749
        %v1758 = vpack.c.b16 %v1750, %v1750
        %v1759 = vpack.c.b16 %v1751, %v1751
        %1760 = vrot.lane.b32.xlu0 %v1752, 48
        %v1761 = vpop.permute.xlu0 %1760
        %1762 = vrot.lane.b32.xlu0 %v1753, 48
        %v1763 = vpop.permute.xlu0 %1762
        %1764 = vrot.lane.b32.xlu0 %v1754, 48
        %v1765 = vpop.permute.xlu0 %1764
        %1766 = vrot.lane.b32.xlu0 %v1755, 48
        %v1767 = vpop.permute.xlu0 %1766
        %1768 = vrot.lane.b32.xlu0 %v1756, 48
        %v1769 = vpop.permute.xlu0 %1768
        %1770 = vrot.lane.b32.xlu0 %v1757, 48
        %v1771 = vpop.permute.xlu0 %1770
        %1772 = vrot.lane.b32.xlu0 %v1758, 48
        %v1773 = vpop.permute.xlu0 %1772
        %1774 = vrot.lane.b32.xlu0 %v1759, 48
        %v1775 = vpop.permute.xlu0 %1774
        %1784 = vst.msk [vmem:[#allocation4] sm:$0xf] %vm998, %v1761
        %1785 = vst.msk [vmem:[#allocation4 + $0x4] sm:$0xf] %vm998, %v1763
        %1786 = vst.msk [vmem:[#allocation4 + $0x8] sm:$0xf] %vm998, %v1765
        %1787 = vst.msk [vmem:[#allocation4 + $0xc] sm:$0xf] %vm998, %v1767
        %1788 = vst.msk [vmem:[#allocation4 + $0x10] sm:$0xf] %vm998, %v1769
        %1789 = vst.msk [vmem:[#allocation4 + $0x14] sm:$0xf] %vm998, %v1771
        %1790 = vst.msk [vmem:[#allocation4 + $0x18] sm:$0xf] %vm998, %v1773
        %1791 = vst.msk [vmem:[#allocation4 + $0x1c] sm:$0xf] %vm998, %v1775
        %v1792 = vld [vmem:[%s933 + $0x1] sm:$0xff]
        %v1793 = vld [vmem:[%s933 + $0x11] sm:$0xff]
        %v1794 = vld [vmem:[%s933 + $0x21] sm:$0xff]
        %v1795 = vld [vmem:[%s933 + $0x31] sm:$0xff]
        %v1796 = vld [vmem:[%s933 + $0x41] sm:$0xff]
        %v1797 = vld [vmem:[%s933 + $0x51] sm:$0xff]
        %v1798 = vld [vmem:[%s933 + $0x61] sm:$0xff]
        %v1799 = vld [vmem:[%s933 + $0x71] sm:$0xff]
        %v1800 = vpack.c.bf16 %v1792, %v1792
        %v1801 = vpack.c.bf16 %v1793, %v1793
        %v1802 = vpack.c.bf16 %v1794, %v1794
        %v1803 = vpack.c.bf16 %v1795, %v1795
        %v1804 = vpack.c.bf16 %v1796, %v1796
        %v1805 = vpack.c.bf16 %v1797, %v1797
        %v1806 = vpack.c.bf16 %v1798, %v1798
        %v1807 = vpack.c.bf16 %v1799, %v1799
        %v1816 = vunpack.c.l.b16 %v1800
        %v1817 = vunpack.c.l.b16 %v1801
        %v1818 = vunpack.c.l.b16 %v1802
        %v1819 = vunpack.c.l.b16 %v1803
        %v1820 = vunpack.c.l.b16 %v1804
        %v1821 = vunpack.c.l.b16 %v1805
        %v1822 = vunpack.c.l.b16 %v1806
        %v1823 = vunpack.c.l.b16 %v1807
        %v1824 = vpack.c.b16 %v1816, %v1816
        %v1825 = vpack.c.b16 %v1817, %v1817
        %v1826 = vpack.c.b16 %v1818, %v1818
        %v1827 = vpack.c.b16 %v1819, %v1819
        %v1828 = vpack.c.b16 %v1820, %v1820
        %v1829 = vpack.c.b16 %v1821, %v1821
        %v1830 = vpack.c.b16 %v1822, %v1822
        %v1831 = vpack.c.b16 %v1823, %v1823
        %1832 = vrot.lane.b32.xlu0 %v1824, 56
        %v1833 = vpop.permute.xlu0 %1832
        %1834 = vrot.lane.b32.xlu0 %v1825, 56
        %v1835 = vpop.permute.xlu0 %1834
        %1836 = vrot.lane.b32.xlu0 %v1826, 56
        %v1837 = vpop.permute.xlu0 %1836
        %1838 = vrot.lane.b32.xlu0 %v1827, 56
        %v1839 = vpop.permute.xlu0 %1838
        %1840 = vrot.lane.b32.xlu0 %v1828, 56
        %v1841 = vpop.permute.xlu0 %1840
        %1842 = vrot.lane.b32.xlu0 %v1829, 56
        %v1843 = vpop.permute.xlu0 %1842
        %1844 = vrot.lane.b32.xlu0 %v1830, 56
        %v1845 = vpop.permute.xlu0 %1844
        %1846 = vrot.lane.b32.xlu0 %v1831, 56
        %v1847 = vpop.permute.xlu0 %1846
        %1856 = vst.msk [vmem:[#allocation4] sm:$0xf] %vm1071, %v1833
        %1857 = vst.msk [vmem:[#allocation4 + $0x4] sm:$0xf] %vm1071, %v1835
        %1858 = vst.msk [vmem:[#allocation4 + $0x8] sm:$0xf] %vm1071, %v1837
        %1859 = vst.msk [vmem:[#allocation4 + $0xc] sm:$0xf] %vm1071, %v1839
        %1860 = vst.msk [vmem:[#allocation4 + $0x10] sm:$0xf] %vm1071, %v1841
        %1861 = vst.msk [vmem:[#allocation4 + $0x14] sm:$0xf] %vm1071, %v1843
        %1862 = vst.msk [vmem:[#allocation4 + $0x18] sm:$0xf] %vm1071, %v1845
        %1863 = vst.msk [vmem:[#allocation4 + $0x1c] sm:$0xf] %vm1071, %v1847
        %v1864 = vld [vmem:[%s933 + $0x2] sm:$0xff]
        %v1865 = vld [vmem:[%s933 + $0x12] sm:$0xff]
        %v1866 = vld [vmem:[%s933 + $0x22] sm:$0xff]
        %v1867 = vld [vmem:[%s933 + $0x32] sm:$0xff]
        %v1868 = vld [vmem:[%s933 + $0x42] sm:$0xff]
        %v1869 = vld [vmem:[%s933 + $0x52] sm:$0xff]
        %v1870 = vld [vmem:[%s933 + $0x62] sm:$0xff]
        %v1871 = vld [vmem:[%s933 + $0x72] sm:$0xff]
        %v1872 = vpack.c.bf16 %v1864, %v1864
        %v1873 = vpack.c.bf16 %v1865, %v1865
        %v1874 = vpack.c.bf16 %v1866, %v1866
        %v1875 = vpack.c.bf16 %v1867, %v1867
        %v1876 = vpack.c.bf16 %v1868, %v1868
        %v1877 = vpack.c.bf16 %v1869, %v1869
        %v1878 = vpack.c.bf16 %v1870, %v1870
        %v1879 = vpack.c.bf16 %v1871, %v1871
        %v1888 = vunpack.c.l.b16 %v1872
        %v1889 = vunpack.c.l.b16 %v1873
        %v1890 = vunpack.c.l.b16 %v1874
        %v1891 = vunpack.c.l.b16 %v1875
        %v1892 = vunpack.c.l.b16 %v1876
        %v1893 = vunpack.c.l.b16 %v1877
        %v1894 = vunpack.c.l.b16 %v1878
        %v1895 = vunpack.c.l.b16 %v1879
        %v1896 = vpack.c.b16 %v1888, %v1888
        %v1897 = vpack.c.b16 %v1889, %v1889
        %v1898 = vpack.c.b16 %v1890, %v1890
        %v1899 = vpack.c.b16 %v1891, %v1891
        %v1900 = vpack.c.b16 %v1892, %v1892
        %v1901 = vpack.c.b16 %v1893, %v1893
        %v1902 = vpack.c.b16 %v1894, %v1894
        %v1903 = vpack.c.b16 %v1895, %v1895
        %1904 = vrot.lane.b32.xlu0 %v1896, 64
        %v1905 = vpop.permute.xlu0 %1904
        %1906 = vrot.lane.b32.xlu0 %v1897, 64
        %v1907 = vpop.permute.xlu0 %1906
        %1908 = vrot.lane.b32.xlu0 %v1898, 64
        %v1909 = vpop.permute.xlu0 %1908
        %1910 = vrot.lane.b32.xlu0 %v1899, 64
        %v1911 = vpop.permute.xlu0 %1910
        %1912 = vrot.lane.b32.xlu0 %v1900, 64
        %v1913 = vpop.permute.xlu0 %1912
        %1914 = vrot.lane.b32.xlu0 %v1901, 64
        %v1915 = vpop.permute.xlu0 %1914
        %1916 = vrot.lane.b32.xlu0 %v1902, 64
        %v1917 = vpop.permute.xlu0 %1916
        %1918 = vrot.lane.b32.xlu0 %v1903, 64
        %v1919 = vpop.permute.xlu0 %1918
        %1928 = vst.msk [vmem:[#allocation4] sm:$0xf] %vm1144, %v1905
        %1929 = vst.msk [vmem:[#allocation4 + $0x4] sm:$0xf] %vm1144, %v1907
        %1930 = vst.msk [vmem:[#allocation4 + $0x8] sm:$0xf] %vm1144, %v1909
        %1931 = vst.msk [vmem:[#allocation4 + $0xc] sm:$0xf] %vm1144, %v1911
        %1932 = vst.msk [vmem:[#allocation4 + $0x10] sm:$0xf] %vm1144, %v1913
        %1933 = vst.msk [vmem:[#allocation4 + $0x14] sm:$0xf] %vm1144, %v1915
        %1934 = vst.msk [vmem:[#allocation4 + $0x18] sm:$0xf] %vm1144, %v1917
        %1935 = vst.msk [vmem:[#allocation4 + $0x1c] sm:$0xf] %vm1144, %v1919
        %v1936 = vld [vmem:[#allocation4] sm:$0xf]
        %v1937 = vld [vmem:[#allocation4 + $0x4] sm:$0xf]
        %v1938 = vld [vmem:[#allocation4 + $0x8] sm:$0xf]
        %v1939 = vld [vmem:[#allocation4 + $0xc] sm:$0xf]
        %v1940 = vld [vmem:[#allocation4 + $0x10] sm:$0xf]
        %v1941 = vld [vmem:[#allocation4 + $0x14] sm:$0xf]
        %v1942 = vld [vmem:[#allocation4 + $0x18] sm:$0xf]
        %v1943 = vld [vmem:[#allocation4 + $0x1c] sm:$0xf]
        %v1944 = vld [vmem:[%s3] sm:$0xf]
        %v1945 = vld [vmem:[%s3 + $0x4] sm:$0xf]
        %v1946 = vld [vmem:[%s3 + $0x8] sm:$0xf]
        %v1947 = vld [vmem:[%s3 + $0xc] sm:$0xf]
        %v1948 = vld [vmem:[%s3 + $0x10] sm:$0xf]
        %v1949 = vld [vmem:[%s3 + $0x14] sm:$0xf]
        %v1950 = vld [vmem:[%s3 + $0x18] sm:$0xf]
        %v1951 = vld [vmem:[%s3 + $0x1c] sm:$0xf]
        %v1952 = vld [vmem:[%s3 + $0x20] sm:$0xf]
        %v1961 = vunpack.c.l.b16 %v1936
        %v1962 = vunpack.c.l.b16 %v1937
        %v1963 = vunpack.c.l.b16 %v1938
        %v1964 = vunpack.c.l.b16 %v1939
        %v1965 = vunpack.c.l.b16 %v1940
        %v1966 = vunpack.c.l.b16 %v1941
        %v1967 = vunpack.c.l.b16 %v1942
        %v1968 = vunpack.c.l.b16 %v1943
        %v1969 = vpack.c.b16 %v1962, %v1961
        %v1970 = vpack.c.b16 %v1964, %v1963
        %v1971 = vpack.c.b16 %v1966, %v1965
        %v1972 = vpack.c.b16 %v1968, %v1967
        %v1982 = vunpack.c.l.b16 %v1944
        %v1983 = vunpack.c.l.b16 %v1945
        %v1984 = vunpack.c.l.b16 %v1946
        %v1985 = vunpack.c.l.b16 %v1947
        %v1986 = vunpack.c.l.b16 %v1948
        %v1987 = vunpack.c.l.b16 %v1949
        %v1988 = vunpack.c.l.b16 %v1950
        %v1989 = vunpack.c.l.b16 %v1951
        %v1990 = vunpack.c.l.b16 %v1952
        %v1991 = vpack.c.b16 %v1983, %v1982
        %v1992 = vpack.c.b16 %v1985, %v1984
        %v1993 = vpack.c.b16 %v1987, %v1986
        %v1994 = vpack.c.b16 %v1989, %v1988
        %v1995 = vpack.c.b16 %v1990, %v1990
        %v2001 = vsel %vm1218, %v1969, 0
        %v2004 = vsel %vm1218, %v1970, 0
        %v2007 = vsel %vm1218, %v1971, 0
        %v2010 = vsel %vm1218, %v1972, 0
        %v2013 = vsel %vm1231, %v1995, 0
        %2015 = vmatprep.subr.bf16.mxu0 0
        %2016 = vmatpush1.bf16.msra.mxu0 0
        %2017 = vmatprep.subr.bf16.mxu0 0
        %2018 = vmatpush1.bf16.msra.mxu0 0
        %2019 = vmatprep.subr.bf16.mxu0 0
        %2020 = vmatpush1.bf16.msra.mxu0 0
        %2021 = vmatprep.subr.bf16.mxu0 0
        %2022 = vmatpush1.bf16.msra.mxu0 %v2013
        %2023 = vmatprep.subr.bf16.mxu0 0
        %2024 = vmatpush1.bf16.msra.mxu0 %v1994
        %2025 = vmatprep.subr.bf16.mxu0 0
        %2026 = vmatpush1.bf16.msra.mxu0 %v1993
        %2027 = vmatprep.subr.bf16.mxu0 0
        %2028 = vmatpush1.bf16.msra.mxu0 %v1992
        %2029 = vmatprep.subr.bf16.mxu0 0
        %2030 = vmatpush1.bf16.msra.mxu0 %v1991
        %2031 = vmatprep.subr.bf16.mxu0 0
        %2032 = vmatpush2.bf16.msra.mxu0 0
        %2033 = vmatprep.subr.bf16.mxu0 0
        %2034 = vmatpush2.bf16.msra.mxu0 0
        %2035 = vmatprep.subr.bf16.mxu0 0
        %2036 = vmatpush2.bf16.msra.mxu0 0
        %2037 = vmatprep.subr.bf16.mxu0 0
        %2038 = vmatpush2.bf16.msra.mxu0 0
        %2039 = vmatprep.subr.bf16.mxu0 0
        %2040 = vmatpush2.bf16.msra.mxu0 0
        %2041 = vmatprep.subr.bf16.mxu0 0
        %2042 = vmatpush2.bf16.msra.mxu0 0
        %2043 = vmatprep.subr.bf16.mxu0 0
        %2044 = vmatpush2.bf16.msra.mxu0 0
        %2045 = vmatprep.subr.bf16.mxu0 0
        %2046 = vmatpush2.bf16.msra.mxu0 0
        %2047 = vmatprep.mubr.bf16.mxu0 0
        %2048 = vmatmul.mubr.bf16.gmra.mxu0 %v2001
        %v2049 = vpop.f32.mrf.mxu0
        %v2050 = vadd.f32 0.0, %v2049
        %v2051 = vpop.f32.mrf.mxu0
        %v2052 = vpop.f32.mrf.mxu0
        %v2053 = vadd.f32 0.0, %v2052
        %v2054 = vpop.f32.mrf.mxu0
        %2055 = vmatprep.mubr.bf16.mxu0 0
        %2056 = vmatmul.mubr.bf16.gmra.mxu0 %v2004
        %v2057 = vpop.f32.mrf.mxu0
        %v2058 = vadd.f32 0.0, %v2057
        %v2059 = vpop.f32.mrf.mxu0
        %v2060 = vpop.f32.mrf.mxu0
        %v2061 = vadd.f32 0.0, %v2060
        %v2062 = vpop.f32.mrf.mxu0
        %2063 = vmatprep.mubr.bf16.mxu0 0
        %2064 = vmatmul.mubr.bf16.gmra.mxu0 %v2007
        %v2065 = vpop.f32.mrf.mxu0
        %v2066 = vadd.f32 0.0, %v2065
        %v2067 = vpop.f32.mrf.mxu0
        %v2068 = vpop.f32.mrf.mxu0
        %v2069 = vadd.f32 0.0, %v2068
        %v2070 = vpop.f32.mrf.mxu0
        %2071 = vmatprep.mubr.bf16.mxu0 0
        %2072 = vmatmul.mubr.bf16.gmra.mxu0 %v2010
        %v2073 = vpop.f32.mrf.mxu0
        %v2074 = vadd.f32 0.0, %v2073
        %v2075 = vpop.f32.mrf.mxu0
        %v2076 = vpop.f32.mrf.mxu0
        %v2077 = vadd.f32 0.0, %v2076
        %v2078 = vpop.f32.mrf.mxu0
        %2079 = vdwg.mxu0
        %v2080 = vld [vmem:[#allocation2] sm:$0xff]
        %v2081 = vld [vmem:[#allocation2 + $0x8] sm:$0xff]
        %v2082 = vld [vmem:[#allocation2 + $0x10] sm:$0xff]
        %v2083 = vld [vmem:[#allocation2 + $0x18] sm:$0xff]
        %v2084 = vld [vmem:[#allocation2 + $0x20] sm:$0xff]
        %v2085 = vld [vmem:[#allocation2 + $0x28] sm:$0xff]
        %v2086 = vld [vmem:[#allocation2 + $0x30] sm:$0xff]
        %v2087 = vld [vmem:[#allocation2 + $0x38] sm:$0xff]
        %v2088 = vadd.f32 %v2080, %v2050
        %v2089 = vadd.f32 %v2081, %v2053
        %v2090 = vadd.f32 %v2082, %v2058
        %v2091 = vadd.f32 %v2083, %v2061
        %v2092 = vadd.f32 %v2084, %v2066
        %v2093 = vadd.f32 %v2085, %v2069
        %v2094 = vadd.f32 %v2086, %v2074
        %v2095 = vadd.f32 %v2087, %v2077
        %2096 = vst [vmem:[#allocation2] sm:$0xff] %v2088
        %2097 = vst [vmem:[#allocation2 + $0x8] sm:$0xff] %v2089
        %2098 = vst [vmem:[#allocation2 + $0x10] sm:$0xff] %v2090
        %2099 = vst [vmem:[#allocation2 + $0x18] sm:$0xff] %v2091
        %2100 = vst [vmem:[#allocation2 + $0x20] sm:$0xff] %v2092
        %2101 = vst [vmem:[#allocation2 + $0x28] sm:$0xff] %v2093
        %2102 = vst [vmem:[#allocation2 + $0x30] sm:$0xff] %v2094
        %2103 = vst [vmem:[#allocation2 + $0x38] sm:$0xff] %v2095
      $region48: #{basic_block_3d_forward.3} parent=43 // pred_fallthru
        _
      %p2104 = scmp.lt.s32.totalorder %s25, 3
      // Predicated region
      $region49: #{basic_block_3d_forward.3} parent=43 // pred_check
        %p2105 = pneg %p2104
      $region50: #{basic_block_3d_forward.3} parent=43 // pred_check_branch
        %2107 = sbr.rel (%p2105) target = $region52
      $region51: #{basic_block_3d_forward.3} parent=43 // pred_region
        %v2108 = vld [vmem:[%s460] sm:$0xf]
        %v2109 = vld [vmem:[%s460 + $0x4] sm:$0xf]
        %v2110 = vld [vmem:[%s460 + $0x8] sm:$0xf]
        %v2111 = vld [vmem:[%s460 + $0xc] sm:$0xf]
        %v2112 = vld [vmem:[%s460 + $0x10] sm:$0xf]
        %v2113 = vld [vmem:[%s460 + $0x14] sm:$0xf]
        %v2114 = vld [vmem:[%s460 + $0x18] sm:$0xf]
        %v2115 = vld [vmem:[%s460 + $0x1c] sm:$0xf]
        %v2116 = vunpack.c.l.bf16 %v2108
        %v2117 = vunpack.c.l.bf16 %v2109
        %v2118 = vunpack.c.l.bf16 %v2110
        %v2119 = vunpack.c.l.bf16 %v2111
        %v2120 = vunpack.c.l.bf16 %v2112
        %v2121 = vunpack.c.l.bf16 %v2113
        %v2122 = vunpack.c.l.bf16 %v2114
        %v2123 = vunpack.c.l.bf16 %v2115
        %2124 = vst.msk [vmem:[%s534 + $0x1] sm:$0xff] %vm490, %v2116
        %2125 = vst.msk [vmem:[%s534 + $0x11] sm:$0xff] %vm490, %v2117
        %2126 = vst.msk [vmem:[%s534 + $0x21] sm:$0xff] %vm490, %v2118
        %2127 = vst.msk [vmem:[%s534 + $0x31] sm:$0xff] %vm490, %v2119
        %2128 = vst.msk [vmem:[%s534 + $0x41] sm:$0xff] %vm490, %v2120
        %2129 = vst.msk [vmem:[%s534 + $0x51] sm:$0xff] %vm490, %v2121
        %2130 = vst.msk [vmem:[%s534 + $0x61] sm:$0xff] %vm490, %v2122
        %2131 = vst.msk [vmem:[%s534 + $0x71] sm:$0xff] %vm490, %v2123
        %v2132 = vld [vmem:[#allocation3] sm:$0xff]
        %v2133 = vld [vmem:[#allocation3 + $0x10] sm:$0xff]
        %v2134 = vld [vmem:[#allocation3 + $0x20] sm:$0xff]
        %v2135 = vld [vmem:[#allocation3 + $0x30] sm:$0xff]
        %v2136 = vld [vmem:[#allocation3 + $0x40] sm:$0xff]
        %v2137 = vld [vmem:[#allocation3 + $0x50] sm:$0xff]
        %v2138 = vld [vmem:[#allocation3 + $0x60] sm:$0xff]
        %v2139 = vld [vmem:[#allocation3 + $0x70] sm:$0xff]
        %v2140 = vpack.c.bf16 %v2132, %v2132
        %v2141 = vpack.c.bf16 %v2133, %v2133
        %v2142 = vpack.c.bf16 %v2134, %v2134
        %v2143 = vpack.c.bf16 %v2135, %v2135
        %v2144 = vpack.c.bf16 %v2136, %v2136
        %v2145 = vpack.c.bf16 %v2137, %v2137
        %v2146 = vpack.c.bf16 %v2138, %v2138
        %v2147 = vpack.c.bf16 %v2139, %v2139
        %2148 = vst.msk [vmem:[#allocation4] sm:$0xf] %vm559, %v2140
        %2149 = vst.msk [vmem:[#allocation4 + $0x4] sm:$0xf] %vm559, %v2141
        %2150 = vst.msk [vmem:[#allocation4 + $0x8] sm:$0xf] %vm559, %v2142
        %2151 = vst.msk [vmem:[#allocation4 + $0xc] sm:$0xf] %vm559, %v2143
        %2152 = vst.msk [vmem:[#allocation4 + $0x10] sm:$0xf] %vm559, %v2144
        %2153 = vst.msk [vmem:[#allocation4 + $0x14] sm:$0xf] %vm559, %v2145
        %2154 = vst.msk [vmem:[#allocation4 + $0x18] sm:$0xf] %vm559, %v2146
        %2155 = vst.msk [vmem:[#allocation4 + $0x1c] sm:$0xf] %vm559, %v2147
        %v2156 = vld [vmem:[#allocation3 + $0x1] sm:$0xff]
        %v2157 = vld [vmem:[#allocation3 + $0x11] sm:$0xff]
        %v2158 = vld [vmem:[#allocation3 + $0x21] sm:$0xff]
        %v2159 = vld [vmem:[#allocation3 + $0x31] sm:$0xff]
        %v2160 = vld [vmem:[#allocation3 + $0x41] sm:$0xff]
        %v2161 = vld [vmem:[#allocation3 + $0x51] sm:$0xff]
        %v2162 = vld [vmem:[#allocation3 + $0x61] sm:$0xff]
        %v2163 = vld [vmem:[#allocation3 + $0x71] sm:$0xff]
        %v2164 = vpack.c.bf16 %v2156, %v2156
        %v2165 = vpack.c.bf16 %v2157, %v2157
        %v2166 = vpack.c.bf16 %v2158, %v2158
        %v2167 = vpack.c.bf16 %v2159, %v2159
        %v2168 = vpack.c.bf16 %v2160, %v2160
        %v2169 = vpack.c.bf16 %v2161, %v2161
        %v2170 = vpack.c.bf16 %v2162, %v2162
        %v2171 = vpack.c.bf16 %v2163, %v2163
        %v2180 = vunpack.c.l.b16 %v2164
        %v2181 = vunpack.c.l.b16 %v2165
        %v2182 = vunpack.c.l.b16 %v2166
        %v2183 = vunpack.c.l.b16 %v2167
        %v2184 = vunpack.c.l.b16 %v2168
        %v2185 = vunpack.c.l.b16 %v2169
        %v2186 = vunpack.c.l.b16 %v2170
        %v2187 = vunpack.c.l.b16 %v2171
        %v2188 = vpack.c.b16 %v2180, %v2180
        %v2189 = vpack.c.b16 %v2181, %v2181
        %v2190 = vpack.c.b16 %v2182, %v2182
        %v2191 = vpack.c.b16 %v2183, %v2183
        %v2192 = vpack.c.b16 %v2184, %v2184
        %v2193 = vpack.c.b16 %v2185, %v2185
        %v2194 = vpack.c.b16 %v2186, %v2186
        %v2195 = vpack.c.b16 %v2187, %v2187
        %2196 = vrot.lane.b32.xlu0 %v2188, 8
        %v2197 = vpop.permute.xlu0 %2196
        %2198 = vrot.lane.b32.xlu0 %v2189, 8
        %v2199 = vpop.permute.xlu0 %2198
        %2200 = vrot.lane.b32.xlu0 %v2190, 8
        %v2201 = vpop.permute.xlu0 %2200
        %2202 = vrot.lane.b32.xlu0 %v2191, 8
        %v2203 = vpop.permute.xlu0 %2202
        %2204 = vrot.lane.b32.xlu0 %v2192, 8
        %v2205 = vpop.permute.xlu0 %2204
        %2206 = vrot.lane.b32.xlu0 %v2193, 8
        %v2207 = vpop.permute.xlu0 %2206
        %2208 = vrot.lane.b32.xlu0 %v2194, 8
        %v2209 = vpop.permute.xlu0 %2208
        %2210 = vrot.lane.b32.xlu0 %v2195, 8
        %v2211 = vpop.permute.xlu0 %2210
        %2220 = vst.msk [vmem:[#allocation4] sm:$0xf] %vm632, %v2197
        %2221 = vst.msk [vmem:[#allocation4 + $0x4] sm:$0xf] %vm632, %v2199
        %2222 = vst.msk [vmem:[#allocation4 + $0x8] sm:$0xf] %vm632, %v2201
        %2223 = vst.msk [vmem:[#allocation4 + $0xc] sm:$0xf] %vm632, %v2203
        %2224 = vst.msk [vmem:[#allocation4 + $0x10] sm:$0xf] %vm632, %v2205
        %2225 = vst.msk [vmem:[#allocation4 + $0x14] sm:$0xf] %vm632, %v2207
        %2226 = vst.msk [vmem:[#allocation4 + $0x18] sm:$0xf] %vm632, %v2209
        %2227 = vst.msk [vmem:[#allocation4 + $0x1c] sm:$0xf] %vm632, %v2211
        %v2228 = vld [vmem:[#allocation3 + $0x2] sm:$0xff]
        %v2229 = vld [vmem:[#allocation3 + $0x12] sm:$0xff]
        %v2230 = vld [vmem:[#allocation3 + $0x22] sm:$0xff]
        %v2231 = vld [vmem:[#allocation3 + $0x32] sm:$0xff]
        %v2232 = vld [vmem:[#allocation3 + $0x42] sm:$0xff]
        %v2233 = vld [vmem:[#allocation3 + $0x52] sm:$0xff]
        %v2234 = vld [vmem:[#allocation3 + $0x62] sm:$0xff]
        %v2235 = vld [vmem:[#allocation3 + $0x72] sm:$0xff]
        %v2236 = vpack.c.bf16 %v2228, %v2228
        %v2237 = vpack.c.bf16 %v2229, %v2229
        %v2238 = vpack.c.bf16 %v2230, %v2230
        %v2239 = vpack.c.bf16 %v2231, %v2231
        %v2240 = vpack.c.bf16 %v2232, %v2232
        %v2241 = vpack.c.bf16 %v2233, %v2233
        %v2242 = vpack.c.bf16 %v2234, %v2234
        %v2243 = vpack.c.bf16 %v2235, %v2235
        %v2252 = vunpack.c.l.b16 %v2236
        %v2253 = vunpack.c.l.b16 %v2237
        %v2254 = vunpack.c.l.b16 %v2238
        %v2255 = vunpack.c.l.b16 %v2239
        %v2256 = vunpack.c.l.b16 %v2240
        %v2257 = vunpack.c.l.b16 %v2241
        %v2258 = vunpack.c.l.b16 %v2242
        %v2259 = vunpack.c.l.b16 %v2243
        %v2260 = vpack.c.b16 %v2252, %v2252
        %v2261 = vpack.c.b16 %v2253, %v2253
        %v2262 = vpack.c.b16 %v2254, %v2254
        %v2263 = vpack.c.b16 %v2255, %v2255
        %v2264 = vpack.c.b16 %v2256, %v2256
        %v2265 = vpack.c.b16 %v2257, %v2257
        %v2266 = vpack.c.b16 %v2258, %v2258
        %v2267 = vpack.c.b16 %v2259, %v2259
        %2268 = vrot.lane.b32.xlu0 %v2260, 16
        %v2269 = vpop.permute.xlu0 %2268
        %2270 = vrot.lane.b32.xlu0 %v2261, 16
        %v2271 = vpop.permute.xlu0 %2270
        %2272 = vrot.lane.b32.xlu0 %v2262, 16
        %v2273 = vpop.permute.xlu0 %2272
        %2274 = vrot.lane.b32.xlu0 %v2263, 16
        %v2275 = vpop.permute.xlu0 %2274
        %2276 = vrot.lane.b32.xlu0 %v2264, 16
        %v2277 = vpop.permute.xlu0 %2276
        %2278 = vrot.lane.b32.xlu0 %v2265, 16
        %v2279 = vpop.permute.xlu0 %2278
        %2280 = vrot.lane.b32.xlu0 %v2266, 16
        %v2281 = vpop.permute.xlu0 %2280
        %2282 = vrot.lane.b32.xlu0 %v2267, 16
        %v2283 = vpop.permute.xlu0 %2282
        %2292 = vst.msk [vmem:[#allocation4] sm:$0xf] %vm705, %v2269
        %2293 = vst.msk [vmem:[#allocation4 + $0x4] sm:$0xf] %vm705, %v2271
        %2294 = vst.msk [vmem:[#allocation4 + $0x8] sm:$0xf] %vm705, %v2273
        %2295 = vst.msk [vmem:[#allocation4 + $0xc] sm:$0xf] %vm705, %v2275
        %2296 = vst.msk [vmem:[#allocation4 + $0x10] sm:$0xf] %vm705, %v2277
        %2297 = vst.msk [vmem:[#allocation4 + $0x14] sm:$0xf] %vm705, %v2279
        %2298 = vst.msk [vmem:[#allocation4 + $0x18] sm:$0xf] %vm705, %v2281
        %2299 = vst.msk [vmem:[#allocation4 + $0x1c] sm:$0xf] %vm705, %v2283
        %v2300 = vld [vmem:[%s534] sm:$0xff]
        %v2301 = vld [vmem:[%s534 + $0x10] sm:$0xff]
        %v2302 = vld [vmem:[%s534 + $0x20] sm:$0xff]
        %v2303 = vld [vmem:[%s534 + $0x30] sm:$0xff]
        %v2304 = vld [vmem:[%s534 + $0x40] sm:$0xff]
        %v2305 = vld [vmem:[%s534 + $0x50] sm:$0xff]
        %v2306 = vld [vmem:[%s534 + $0x60] sm:$0xff]
        %v2307 = vld [vmem:[%s534 + $0x70] sm:$0xff]
        %v2308 = vpack.c.bf16 %v2300, %v2300
        %v2309 = vpack.c.bf16 %v2301, %v2301
        %v2310 = vpack.c.bf16 %v2302, %v2302
        %v2311 = vpack.c.bf16 %v2303, %v2303
        %v2312 = vpack.c.bf16 %v2304, %v2304
        %v2313 = vpack.c.bf16 %v2305, %v2305
        %v2314 = vpack.c.bf16 %v2306, %v2306
        %v2315 = vpack.c.bf16 %v2307, %v2307
        %v2324 = vunpack.c.l.b16 %v2308
        %v2325 = vunpack.c.l.b16 %v2309
        %v2326 = vunpack.c.l.b16 %v2310
        %v2327 = vunpack.c.l.b16 %v2311
        %v2328 = vunpack.c.l.b16 %v2312
        %v2329 = vunpack.c.l.b16 %v2313
        %v2330 = vunpack.c.l.b16 %v2314
        %v2331 = vunpack.c.l.b16 %v2315
        %v2332 = vpack.c.b16 %v2324, %v2324
        %v2333 = vpack.c.b16 %v2325, %v2325
        %v2334 = vpack.c.b16 %v2326, %v2326
        %v2335 = vpack.c.b16 %v2327, %v2327
        %v2336 = vpack.c.b16 %v2328, %v2328
        %v2337 = vpack.c.b16 %v2329, %v2329
        %v2338 = vpack.c.b16 %v2330, %v2330
        %v2339 = vpack.c.b16 %v2331, %v2331
        %2340 = vrot.lane.b32.xlu0 %v2332, 24
        %v2341 = vpop.permute.xlu0 %2340
        %2342 = vrot.lane.b32.xlu0 %v2333, 24
        %v2343 = vpop.permute.xlu0 %2342
        %2344 = vrot.lane.b32.xlu0 %v2334, 24
        %v2345 = vpop.permute.xlu0 %2344
        %2346 = vrot.lane.b32.xlu0 %v2335, 24
        %v2347 = vpop.permute.xlu0 %2346
        %2348 = vrot.lane.b32.xlu0 %v2336, 24
        %v2349 = vpop.permute.xlu0 %2348
        %2350 = vrot.lane.b32.xlu0 %v2337, 24
        %v2351 = vpop.permute.xlu0 %2350
        %2352 = vrot.lane.b32.xlu0 %v2338, 24
        %v2353 = vpop.permute.xlu0 %2352
        %2354 = vrot.lane.b32.xlu0 %v2339, 24
        %v2355 = vpop.permute.xlu0 %2354
        %2364 = vst.msk [vmem:[#allocation4] sm:$0xf] %vm778, %v2341
        %2365 = vst.msk [vmem:[#allocation4 + $0x4] sm:$0xf] %vm778, %v2343
        %2366 = vst.msk [vmem:[#allocation4 + $0x8] sm:$0xf] %vm778, %v2345
        %2367 = vst.msk [vmem:[#allocation4 + $0xc] sm:$0xf] %vm778, %v2347
        %2368 = vst.msk [vmem:[#allocation4 + $0x10] sm:$0xf] %vm778, %v2349
        %2369 = vst.msk [vmem:[#allocation4 + $0x14] sm:$0xf] %vm778, %v2351
        %2370 = vst.msk [vmem:[#allocation4 + $0x18] sm:$0xf] %vm778, %v2353
        %2371 = vst.msk [vmem:[#allocation4 + $0x1c] sm:$0xf] %vm778, %v2355
        %v2372 = vld [vmem:[%s534 + $0x1] sm:$0xff]
        %v2373 = vld [vmem:[%s534 + $0x11] sm:$0xff]
        %v2374 = vld [vmem:[%s534 + $0x21] sm:$0xff]
        %v2375 = vld [vmem:[%s534 + $0x31] sm:$0xff]
        %v2376 = vld [vmem:[%s534 + $0x41] sm:$0xff]
        %v2377 = vld [vmem:[%s534 + $0x51] sm:$0xff]
        %v2378 = vld [vmem:[%s534 + $0x61] sm:$0xff]
        %v2379 = vld [vmem:[%s534 + $0x71] sm:$0xff]
        %v2380 = vpack.c.bf16 %v2372, %v2372
        %v2381 = vpack.c.bf16 %v2373, %v2373
        %v2382 = vpack.c.bf16 %v2374, %v2374
        %v2383 = vpack.c.bf16 %v2375, %v2375
        %v2384 = vpack.c.bf16 %v2376, %v2376
        %v2385 = vpack.c.bf16 %v2377, %v2377
        %v2386 = vpack.c.bf16 %v2378, %v2378
        %v2387 = vpack.c.bf16 %v2379, %v2379
        %v2396 = vunpack.c.l.b16 %v2380
        %v2397 = vunpack.c.l.b16 %v2381
        %v2398 = vunpack.c.l.b16 %v2382
        %v2399 = vunpack.c.l.b16 %v2383
        %v2400 = vunpack.c.l.b16 %v2384
        %v2401 = vunpack.c.l.b16 %v2385
        %v2402 = vunpack.c.l.b16 %v2386
        %v2403 = vunpack.c.l.b16 %v2387
        %v2404 = vpack.c.b16 %v2396, %v2396
        %v2405 = vpack.c.b16 %v2397, %v2397
        %v2406 = vpack.c.b16 %v2398, %v2398
        %v2407 = vpack.c.b16 %v2399, %v2399
        %v2408 = vpack.c.b16 %v2400, %v2400
        %v2409 = vpack.c.b16 %v2401, %v2401
        %v2410 = vpack.c.b16 %v2402, %v2402
        %v2411 = vpack.c.b16 %v2403, %v2403
        %2412 = vrot.lane.b32.xlu0 %v2404, 32
        %v2413 = vpop.permute.xlu0 %2412
        %2414 = vrot.lane.b32.xlu0 %v2405, 32
        %v2415 = vpop.permute.xlu0 %2414
        %2416 = vrot.lane.b32.xlu0 %v2406, 32
        %v2417 = vpop.permute.xlu0 %2416
        %2418 = vrot.lane.b32.xlu0 %v2407, 32
        %v2419 = vpop.permute.xlu0 %2418
        %2420 = vrot.lane.b32.xlu0 %v2408, 32
        %v2421 = vpop.permute.xlu0 %2420
        %2422 = vrot.lane.b32.xlu0 %v2409, 32
        %v2423 = vpop.permute.xlu0 %2422
        %2424 = vrot.lane.b32.xlu0 %v2410, 32
        %v2425 = vpop.permute.xlu0 %2424
        %2426 = vrot.lane.b32.xlu0 %v2411, 32
        %v2427 = vpop.permute.xlu0 %2426
        %2436 = vst.msk [vmem:[#allocation4] sm:$0xf] %vm851, %v2413
        %2437 = vst.msk [vmem:[#allocation4 + $0x4] sm:$0xf] %vm851, %v2415
        %2438 = vst.msk [vmem:[#allocation4 + $0x8] sm:$0xf] %vm851, %v2417
        %2439 = vst.msk [vmem:[#allocation4 + $0xc] sm:$0xf] %vm851, %v2419
        %2440 = vst.msk [vmem:[#allocation4 + $0x10] sm:$0xf] %vm851, %v2421
        %2441 = vst.msk [vmem:[#allocation4 + $0x14] sm:$0xf] %vm851, %v2423
        %2442 = vst.msk [vmem:[#allocation4 + $0x18] sm:$0xf] %vm851, %v2425
        %2443 = vst.msk [vmem:[#allocation4 + $0x1c] sm:$0xf] %vm851, %v2427
        %v2444 = vld [vmem:[%s534 + $0x2] sm:$0xff]
        %v2445 = vld [vmem:[%s534 + $0x12] sm:$0xff]
        %v2446 = vld [vmem:[%s534 + $0x22] sm:$0xff]
        %v2447 = vld [vmem:[%s534 + $0x32] sm:$0xff]
        %v2448 = vld [vmem:[%s534 + $0x42] sm:$0xff]
        %v2449 = vld [vmem:[%s534 + $0x52] sm:$0xff]
        %v2450 = vld [vmem:[%s534 + $0x62] sm:$0xff]
        %v2451 = vld [vmem:[%s534 + $0x72] sm:$0xff]
        %v2452 = vpack.c.bf16 %v2444, %v2444
        %v2453 = vpack.c.bf16 %v2445, %v2445
        %v2454 = vpack.c.bf16 %v2446, %v2446
        %v2455 = vpack.c.bf16 %v2447, %v2447
        %v2456 = vpack.c.bf16 %v2448, %v2448
        %v2457 = vpack.c.bf16 %v2449, %v2449
        %v2458 = vpack.c.bf16 %v2450, %v2450
        %v2459 = vpack.c.bf16 %v2451, %v2451
        %v2468 = vunpack.c.l.b16 %v2452
        %v2469 = vunpack.c.l.b16 %v2453
        %v2470 = vunpack.c.l.b16 %v2454
        %v2471 = vunpack.c.l.b16 %v2455
        %v2472 = vunpack.c.l.b16 %v2456
        %v2473 = vunpack.c.l.b16 %v2457
        %v2474 = vunpack.c.l.b16 %v2458
        %v2475 = vunpack.c.l.b16 %v2459
        %v2476 = vpack.c.b16 %v2468, %v2468
        %v2477 = vpack.c.b16 %v2469, %v2469
        %v2478 = vpack.c.b16 %v2470, %v2470
        %v2479 = vpack.c.b16 %v2471, %v2471
        %v2480 = vpack.c.b16 %v2472, %v2472
        %v2481 = vpack.c.b16 %v2473, %v2473
        %v2482 = vpack.c.b16 %v2474, %v2474
        %v2483 = vpack.c.b16 %v2475, %v2475
        %2484 = vrot.lane.b32.xlu0 %v2476, 40
        %v2485 = vpop.permute.xlu0 %2484
        %2486 = vrot.lane.b32.xlu0 %v2477, 40
        %v2487 = vpop.permute.xlu0 %2486
        %2488 = vrot.lane.b32.xlu0 %v2478, 40
        %v2489 = vpop.permute.xlu0 %2488
        %2490 = vrot.lane.b32.xlu0 %v2479, 40
        %v2491 = vpop.permute.xlu0 %2490
        %2492 = vrot.lane.b32.xlu0 %v2480, 40
        %v2493 = vpop.permute.xlu0 %2492
        %2494 = vrot.lane.b32.xlu0 %v2481, 40
        %v2495 = vpop.permute.xlu0 %2494
        %2496 = vrot.lane.b32.xlu0 %v2482, 40
        %v2497 = vpop.permute.xlu0 %2496
        %2498 = vrot.lane.b32.xlu0 %v2483, 40
        %v2499 = vpop.permute.xlu0 %2498
        %2508 = vst.msk [vmem:[#allocation4] sm:$0xf] %vm924, %v2485
        %2509 = vst.msk [vmem:[#allocation4 + $0x4] sm:$0xf] %vm924, %v2487
        %2510 = vst.msk [vmem:[#allocation4 + $0x8] sm:$0xf] %vm924, %v2489
        %2511 = vst.msk [vmem:[#allocation4 + $0xc] sm:$0xf] %vm924, %v2491
        %2512 = vst.msk [vmem:[#allocation4 + $0x10] sm:$0xf] %vm924, %v2493
        %2513 = vst.msk [vmem:[#allocation4 + $0x14] sm:$0xf] %vm924, %v2495
        %2514 = vst.msk [vmem:[#allocation4 + $0x18] sm:$0xf] %vm924, %v2497
        %2515 = vst.msk [vmem:[#allocation4 + $0x1c] sm:$0xf] %vm924, %v2499
        %v2516 = vld [vmem:[%s933] sm:$0xff]
        %v2517 = vld [vmem:[%s933 + $0x10] sm:$0xff]
        %v2518 = vld [vmem:[%s933 + $0x20] sm:$0xff]
        %v2519 = vld [vmem:[%s933 + $0x30] sm:$0xff]
        %v2520 = vld [vmem:[%s933 + $0x40] sm:$0xff]
        %v2521 = vld [vmem:[%s933 + $0x50] sm:$0xff]
        %v2522 = vld [vmem:[%s933 + $0x60] sm:$0xff]
        %v2523 = vld [vmem:[%s933 + $0x70] sm:$0xff]
        %v2524 = vpack.c.bf16 %v2516, %v2516
        %v2525 = vpack.c.bf16 %v2517, %v2517
        %v2526 = vpack.c.bf16 %v2518, %v2518
        %v2527 = vpack.c.bf16 %v2519, %v2519
        %v2528 = vpack.c.bf16 %v2520, %v2520
        %v2529 = vpack.c.bf16 %v2521, %v2521
        %v2530 = vpack.c.bf16 %v2522, %v2522
        %v2531 = vpack.c.bf16 %v2523, %v2523
        %v2540 = vunpack.c.l.b16 %v2524
        %v2541 = vunpack.c.l.b16 %v2525
        %v2542 = vunpack.c.l.b16 %v2526
        %v2543 = vunpack.c.l.b16 %v2527
        %v2544 = vunpack.c.l.b16 %v2528
        %v2545 = vunpack.c.l.b16 %v2529
        %v2546 = vunpack.c.l.b16 %v2530
        %v2547 = vunpack.c.l.b16 %v2531
        %v2548 = vpack.c.b16 %v2540, %v2540
        %v2549 = vpack.c.b16 %v2541, %v2541
        %v2550 = vpack.c.b16 %v2542, %v2542
        %v2551 = vpack.c.b16 %v2543, %v2543
        %v2552 = vpack.c.b16 %v2544, %v2544
        %v2553 = vpack.c.b16 %v2545, %v2545
        %v2554 = vpack.c.b16 %v2546, %v2546
        %v2555 = vpack.c.b16 %v2547, %v2547
        %2556 = vrot.lane.b32.xlu0 %v2548, 48
        %v2557 = vpop.permute.xlu0 %2556
        %2558 = vrot.lane.b32.xlu0 %v2549, 48
        %v2559 = vpop.permute.xlu0 %2558
        %2560 = vrot.lane.b32.xlu0 %v2550, 48
        %v2561 = vpop.permute.xlu0 %2560
        %2562 = vrot.lane.b32.xlu0 %v2551, 48
        %v2563 = vpop.permute.xlu0 %2562
        %2564 = vrot.lane.b32.xlu0 %v2552, 48
        %v2565 = vpop.permute.xlu0 %2564
        %2566 = vrot.lane.b32.xlu0 %v2553, 48
        %v2567 = vpop.permute.xlu0 %2566
        %2568 = vrot.lane.b32.xlu0 %v2554, 48
        %v2569 = vpop.permute.xlu0 %2568
        %2570 = vrot.lane.b32.xlu0 %v2555, 48
        %v2571 = vpop.permute.xlu0 %2570
        %2580 = vst.msk [vmem:[#allocation4] sm:$0xf] %vm998, %v2557
        %2581 = vst.msk [vmem:[#allocation4 + $0x4] sm:$0xf] %vm998, %v2559
        %2582 = vst.msk [vmem:[#allocation4 + $0x8] sm:$0xf] %vm998, %v2561
        %2583 = vst.msk [vmem:[#allocation4 + $0xc] sm:$0xf] %vm998, %v2563
        %2584 = vst.msk [vmem:[#allocation4 + $0x10] sm:$0xf] %vm998, %v2565
        %2585 = vst.msk [vmem:[#allocation4 + $0x14] sm:$0xf] %vm998, %v2567
        %2586 = vst.msk [vmem:[#allocation4 + $0x18] sm:$0xf] %vm998, %v2569
        %2587 = vst.msk [vmem:[#allocation4 + $0x1c] sm:$0xf] %vm998, %v2571
        %v2588 = vld [vmem:[%s933 + $0x1] sm:$0xff]
        %v2589 = vld [vmem:[%s933 + $0x11] sm:$0xff]
        %v2590 = vld [vmem:[%s933 + $0x21] sm:$0xff]
        %v2591 = vld [vmem:[%s933 + $0x31] sm:$0xff]
        %v2592 = vld [vmem:[%s933 + $0x41] sm:$0xff]
        %v2593 = vld [vmem:[%s933 + $0x51] sm:$0xff]
        %v2594 = vld [vmem:[%s933 + $0x61] sm:$0xff]
        %v2595 = vld [vmem:[%s933 + $0x71] sm:$0xff]
        %v2596 = vpack.c.bf16 %v2588, %v2588
        %v2597 = vpack.c.bf16 %v2589, %v2589
        %v2598 = vpack.c.bf16 %v2590, %v2590
        %v2599 = vpack.c.bf16 %v2591, %v2591
        %v2600 = vpack.c.bf16 %v2592, %v2592
        %v2601 = vpack.c.bf16 %v2593, %v2593
        %v2602 = vpack.c.bf16 %v2594, %v2594
        %v2603 = vpack.c.bf16 %v2595, %v2595
        %v2612 = vunpack.c.l.b16 %v2596
        %v2613 = vunpack.c.l.b16 %v2597
        %v2614 = vunpack.c.l.b16 %v2598
        %v2615 = vunpack.c.l.b16 %v2599
        %v2616 = vunpack.c.l.b16 %v2600
        %v2617 = vunpack.c.l.b16 %v2601
        %v2618 = vunpack.c.l.b16 %v2602
        %v2619 = vunpack.c.l.b16 %v2603
        %v2620 = vpack.c.b16 %v2612, %v2612
        %v2621 = vpack.c.b16 %v2613, %v2613
        %v2622 = vpack.c.b16 %v2614, %v2614
        %v2623 = vpack.c.b16 %v2615, %v2615
        %v2624 = vpack.c.b16 %v2616, %v2616
        %v2625 = vpack.c.b16 %v2617, %v2617
        %v2626 = vpack.c.b16 %v2618, %v2618
        %v2627 = vpack.c.b16 %v2619, %v2619
        %2628 = vrot.lane.b32.xlu0 %v2620, 56
        %v2629 = vpop.permute.xlu0 %2628
        %2630 = vrot.lane.b32.xlu0 %v2621, 56
        %v2631 = vpop.permute.xlu0 %2630
        %2632 = vrot.lane.b32.xlu0 %v2622, 56
        %v2633 = vpop.permute.xlu0 %2632
        %2634 = vrot.lane.b32.xlu0 %v2623, 56
        %v2635 = vpop.permute.xlu0 %2634
        %2636 = vrot.lane.b32.xlu0 %v2624, 56
        %v2637 = vpop.permute.xlu0 %2636
        %2638 = vrot.lane.b32.xlu0 %v2625, 56
        %v2639 = vpop.permute.xlu0 %2638
        %2640 = vrot.lane.b32.xlu0 %v2626, 56
        %v2641 = vpop.permute.xlu0 %2640
        %2642 = vrot.lane.b32.xlu0 %v2627, 56
        %v2643 = vpop.permute.xlu0 %2642
        %2652 = vst.msk [vmem:[#allocation4] sm:$0xf] %vm1071, %v2629
        %2653 = vst.msk [vmem:[#allocation4 + $0x4] sm:$0xf] %vm1071, %v2631
        %2654 = vst.msk [vmem:[#allocation4 + $0x8] sm:$0xf] %vm1071, %v2633
        %2655 = vst.msk [vmem:[#allocation4 + $0xc] sm:$0xf] %vm1071, %v2635
        %2656 = vst.msk [vmem:[#allocation4 + $0x10] sm:$0xf] %vm1071, %v2637
        %2657 = vst.msk [vmem:[#allocation4 + $0x14] sm:$0xf] %vm1071, %v2639
        %2658 = vst.msk [vmem:[#allocation4 + $0x18] sm:$0xf] %vm1071, %v2641
        %2659 = vst.msk [vmem:[#allocation4 + $0x1c] sm:$0xf] %vm1071, %v2643
        %v2660 = vld [vmem:[%s933 + $0x2] sm:$0xff]
        %v2661 = vld [vmem:[%s933 + $0x12] sm:$0xff]
        %v2662 = vld [vmem:[%s933 + $0x22] sm:$0xff]
        %v2663 = vld [vmem:[%s933 + $0x32] sm:$0xff]
        %v2664 = vld [vmem:[%s933 + $0x42] sm:$0xff]
        %v2665 = vld [vmem:[%s933 + $0x52] sm:$0xff]
        %v2666 = vld [vmem:[%s933 + $0x62] sm:$0xff]
        %v2667 = vld [vmem:[%s933 + $0x72] sm:$0xff]
        %v2668 = vpack.c.bf16 %v2660, %v2660
        %v2669 = vpack.c.bf16 %v2661, %v2661
        %v2670 = vpack.c.bf16 %v2662, %v2662
        %v2671 = vpack.c.bf16 %v2663, %v2663
        %v2672 = vpack.c.bf16 %v2664, %v2664
        %v2673 = vpack.c.bf16 %v2665, %v2665
        %v2674 = vpack.c.bf16 %v2666, %v2666
        %v2675 = vpack.c.bf16 %v2667, %v2667
        %v2684 = vunpack.c.l.b16 %v2668
        %v2685 = vunpack.c.l.b16 %v2669
        %v2686 = vunpack.c.l.b16 %v2670
        %v2687 = vunpack.c.l.b16 %v2671
        %v2688 = vunpack.c.l.b16 %v2672
        %v2689 = vunpack.c.l.b16 %v2673
        %v2690 = vunpack.c.l.b16 %v2674
        %v2691 = vunpack.c.l.b16 %v2675
        %v2692 = vpack.c.b16 %v2684, %v2684
        %v2693 = vpack.c.b16 %v2685, %v2685
        %v2694 = vpack.c.b16 %v2686, %v2686
        %v2695 = vpack.c.b16 %v2687, %v2687
        %v2696 = vpack.c.b16 %v2688, %v2688
        %v2697 = vpack.c.b16 %v2689, %v2689
        %v2698 = vpack.c.b16 %v2690, %v2690
        %v2699 = vpack.c.b16 %v2691, %v2691
        %2700 = vrot.lane.b32.xlu0 %v2692, 64
        %v2701 = vpop.permute.xlu0 %2700
        %2702 = vrot.lane.b32.xlu0 %v2693, 64
        %v2703 = vpop.permute.xlu0 %2702
        %2704 = vrot.lane.b32.xlu0 %v2694, 64
        %v2705 = vpop.permute.xlu0 %2704
        %2706 = vrot.lane.b32.xlu0 %v2695, 64
        %v2707 = vpop.permute.xlu0 %2706
        %2708 = vrot.lane.b32.xlu0 %v2696, 64
        %v2709 = vpop.permute.xlu0 %2708
        %2710 = vrot.lane.b32.xlu0 %v2697, 64
        %v2711 = vpop.permute.xlu0 %2710
        %2712 = vrot.lane.b32.xlu0 %v2698, 64
        %v2713 = vpop.permute.xlu0 %2712
        %2714 = vrot.lane.b32.xlu0 %v2699, 64
        %v2715 = vpop.permute.xlu0 %2714
        %2724 = vst.msk [vmem:[#allocation4] sm:$0xf] %vm1144, %v2701
        %2725 = vst.msk [vmem:[#allocation4 + $0x4] sm:$0xf] %vm1144, %v2703
        %2726 = vst.msk [vmem:[#allocation4 + $0x8] sm:$0xf] %vm1144, %v2705
        %2727 = vst.msk [vmem:[#allocation4 + $0xc] sm:$0xf] %vm1144, %v2707
        %2728 = vst.msk [vmem:[#allocation4 + $0x10] sm:$0xf] %vm1144, %v2709
        %2729 = vst.msk [vmem:[#allocation4 + $0x14] sm:$0xf] %vm1144, %v2711
        %2730 = vst.msk [vmem:[#allocation4 + $0x18] sm:$0xf] %vm1144, %v2713
        %2731 = vst.msk [vmem:[#allocation4 + $0x1c] sm:$0xf] %vm1144, %v2715
        %v2732 = vld [vmem:[#allocation4] sm:$0xf]
        %v2733 = vld [vmem:[#allocation4 + $0x4] sm:$0xf]
        %v2734 = vld [vmem:[#allocation4 + $0x8] sm:$0xf]
        %v2735 = vld [vmem:[#allocation4 + $0xc] sm:$0xf]
        %v2736 = vld [vmem:[#allocation4 + $0x10] sm:$0xf]
        %v2737 = vld [vmem:[#allocation4 + $0x14] sm:$0xf]
        %v2738 = vld [vmem:[#allocation4 + $0x18] sm:$0xf]
        %v2739 = vld [vmem:[#allocation4 + $0x1c] sm:$0xf]
        %s2740 = scalar_lea.vmem %s3, 72
        %v2741 = vld [vmem:[%s2740] sm:$0xf]
        %v2742 = vld [vmem:[%s2740 + $0x4] sm:$0xf]
        %v2743 = vld [vmem:[%s2740 + $0x8] sm:$0xf]
        %v2744 = vld [vmem:[%s2740 + $0xc] sm:$0xf]
        %v2745 = vld [vmem:[%s2740 + $0x10] sm:$0xf]
        %v2746 = vld [vmem:[%s2740 + $0x14] sm:$0xf]
        %v2747 = vld [vmem:[%s2740 + $0x18] sm:$0xf]
        %v2748 = vld [vmem:[%s2740 + $0x1c] sm:$0xf]
        %v2749 = vld [vmem:[%s2740 + $0x20] sm:$0xf]
        %v2758 = vunpack.c.l.b16 %v2732
        %v2759 = vunpack.c.l.b16 %v2733
        %v2760 = vunpack.c.l.b16 %v2734
        %v2761 = vunpack.c.l.b16 %v2735
        %v2762 = vunpack.c.l.b16 %v2736
        %v2763 = vunpack.c.l.b16 %v2737
        %v2764 = vunpack.c.l.b16 %v2738
        %v2765 = vunpack.c.l.b16 %v2739
        %v2766 = vpack.c.b16 %v2759, %v2758
        %v2767 = vpack.c.b16 %v2761, %v2760
        %v2768 = vpack.c.b16 %v2763, %v2762
        %v2769 = vpack.c.b16 %v2765, %v2764
        %v2779 = vunpack.c.l.b16 %v2741
        %v2780 = vunpack.c.l.b16 %v2742
        %v2781 = vunpack.c.l.b16 %v2743
        %v2782 = vunpack.c.l.b16 %v2744
        %v2783 = vunpack.c.l.b16 %v2745
        %v2784 = vunpack.c.l.b16 %v2746
        %v2785 = vunpack.c.l.b16 %v2747
        %v2786 = vunpack.c.l.b16 %v2748
        %v2787 = vunpack.c.l.b16 %v2749
        %v2788 = vpack.c.b16 %v2780, %v2779
        %v2789 = vpack.c.b16 %v2782, %v2781
        %v2790 = vpack.c.b16 %v2784, %v2783
        %v2791 = vpack.c.b16 %v2786, %v2785
        %v2792 = vpack.c.b16 %v2787, %v2787
        %v2798 = vsel %vm1218, %v2766, 0
        %v2801 = vsel %vm1218, %v2767, 0
        %v2804 = vsel %vm1218, %v2768, 0
        %v2807 = vsel %vm1218, %v2769, 0
        %v2810 = vsel %vm1231, %v2792, 0
        %2812 = vmatprep.subr.bf16.mxu0 0
        %2813 = vmatpush1.bf16.msra.mxu0 0
        %2814 = vmatprep.subr.bf16.mxu0 0
        %2815 = vmatpush1.bf16.msra.mxu0 0
        %2816 = vmatprep.subr.bf16.mxu0 0
        %2817 = vmatpush1.bf16.msra.mxu0 0
        %2818 = vmatprep.subr.bf16.mxu0 0
        %2819 = vmatpush1.bf16.msra.mxu0 %v2810
        %2820 = vmatprep.subr.bf16.mxu0 0
        %2821 = vmatpush1.bf16.msra.mxu0 %v2791
        %2822 = vmatprep.subr.bf16.mxu0 0
        %2823 = vmatpush1.bf16.msra.mxu0 %v2790
        %2824 = vmatprep.subr.bf16.mxu0 0
        %2825 = vmatpush1.bf16.msra.mxu0 %v2789
        %2826 = vmatprep.subr.bf16.mxu0 0
        %2827 = vmatpush1.bf16.msra.mxu0 %v2788
        %2828 = vmatprep.subr.bf16.mxu0 0
        %2829 = vmatpush2.bf16.msra.mxu0 0
        %2830 = vmatprep.subr.bf16.mxu0 0
        %2831 = vmatpush2.bf16.msra.mxu0 0
        %2832 = vmatprep.subr.bf16.mxu0 0
        %2833 = vmatpush2.bf16.msra.mxu0 0
        %2834 = vmatprep.subr.bf16.mxu0 0
        %2835 = vmatpush2.bf16.msra.mxu0 0
        %2836 = vmatprep.subr.bf16.mxu0 0
        %2837 = vmatpush2.bf16.msra.mxu0 0
        %2838 = vmatprep.subr.bf16.mxu0 0
        %2839 = vmatpush2.bf16.msra.mxu0 0
        %2840 = vmatprep.subr.bf16.mxu0 0
        %2841 = vmatpush2.bf16.msra.mxu0 0
        %2842 = vmatprep.subr.bf16.mxu0 0
        %2843 = vmatpush2.bf16.msra.mxu0 0
        %2844 = vmatprep.mubr.bf16.mxu0 0
        %2845 = vmatmul.mubr.bf16.gmra.mxu0 %v2798
        %v2846 = vpop.f32.mrf.mxu0
        %v2847 = vadd.f32 0.0, %v2846
        %v2848 = vpop.f32.mrf.mxu0
        %v2849 = vpop.f32.mrf.mxu0
        %v2850 = vadd.f32 0.0, %v2849
        %v2851 = vpop.f32.mrf.mxu0
        %2852 = vmatprep.mubr.bf16.mxu0 0
        %2853 = vmatmul.mubr.bf16.gmra.mxu0 %v2801
        %v2854 = vpop.f32.mrf.mxu0
        %v2855 = vadd.f32 0.0, %v2854
        %v2856 = vpop.f32.mrf.mxu0
        %v2857 = vpop.f32.mrf.mxu0
        %v2858 = vadd.f32 0.0, %v2857
        %v2859 = vpop.f32.mrf.mxu0
        %2860 = vmatprep.mubr.bf16.mxu0 0
        %2861 = vmatmul.mubr.bf16.gmra.mxu0 %v2804
        %v2862 = vpop.f32.mrf.mxu0
        %v2863 = vadd.f32 0.0, %v2862
        %v2864 = vpop.f32.mrf.mxu0
        %v2865 = vpop.f32.mrf.mxu0
        %v2866 = vadd.f32 0.0, %v2865
        %v2867 = vpop.f32.mrf.mxu0
        %2868 = vmatprep.mubr.bf16.mxu0 0
        %2869 = vmatmul.mubr.bf16.gmra.mxu0 %v2807
        %v2870 = vpop.f32.mrf.mxu0
        %v2871 = vadd.f32 0.0, %v2870
        %v2872 = vpop.f32.mrf.mxu0
        %v2873 = vpop.f32.mrf.mxu0
        %v2874 = vadd.f32 0.0, %v2873
        %v2875 = vpop.f32.mrf.mxu0
        %2876 = vdwg.mxu0
        %v2877 = vld [vmem:[#allocation2] sm:$0xff]
        %v2878 = vld [vmem:[#allocation2 + $0x8] sm:$0xff]
        %v2879 = vld [vmem:[#allocation2 + $0x10] sm:$0xff]
        %v2880 = vld [vmem:[#allocation2 + $0x18] sm:$0xff]
        %v2881 = vld [vmem:[#allocation2 + $0x20] sm:$0xff]
        %v2882 = vld [vmem:[#allocation2 + $0x28] sm:$0xff]
        %v2883 = vld [vmem:[#allocation2 + $0x30] sm:$0xff]
        %v2884 = vld [vmem:[#allocation2 + $0x38] sm:$0xff]
        %v2885 = vadd.f32 %v2877, %v2847
        %v2886 = vadd.f32 %v2878, %v2850
        %v2887 = vadd.f32 %v2879, %v2855
        %v2888 = vadd.f32 %v2880, %v2858
        %v2889 = vadd.f32 %v2881, %v2863
        %v2890 = vadd.f32 %v2882, %v2866
        %v2891 = vadd.f32 %v2883, %v2871
        %v2892 = vadd.f32 %v2884, %v2874
        %2893 = vst [vmem:[#allocation2] sm:$0xff] %v2885
        %2894 = vst [vmem:[#allocation2 + $0x8] sm:$0xff] %v2886
        %2895 = vst [vmem:[#allocation2 + $0x10] sm:$0xff] %v2887
        %2896 = vst [vmem:[#allocation2 + $0x18] sm:$0xff] %v2888
        %2897 = vst [vmem:[#allocation2 + $0x20] sm:$0xff] %v2889
        %2898 = vst [vmem:[#allocation2 + $0x28] sm:$0xff] %v2890
        %2899 = vst [vmem:[#allocation2 + $0x30] sm:$0xff] %v2891
        %2900 = vst [vmem:[#allocation2 + $0x38] sm:$0xff] %v2892
      $region52: #{basic_block_3d_forward.3} parent=43 // pred_fallthru
        _
      %v2901 = vld [vmem:[#allocation2] sm:$0xff]
      %v2902 = vld [vmem:[#allocation2 + $0x8] sm:$0xff]
      %v2903 = vld [vmem:[#allocation2 + $0x10] sm:$0xff]
      %v2904 = vld [vmem:[#allocation2 + $0x18] sm:$0xff]
      %v2905 = vld [vmem:[#allocation2 + $0x20] sm:$0xff]
      %v2906 = vld [vmem:[#allocation2 + $0x28] sm:$0xff]
      %v2907 = vld [vmem:[#allocation2 + $0x30] sm:$0xff]
      %v2908 = vld [vmem:[#allocation2 + $0x38] sm:$0xff]
      %v2909 = vadd.f32 %v2901, %v2902
      %v2910 = vadd.f32 %v2909, %v2903
      %v2911 = vadd.f32 %v2910, %v2904
      %v2912 = vadd.f32 %v2911, %v2905
      %v2913 = vadd.f32 %v2912, %v2906
      %v2914 = vadd.f32 %v2913, %v2907
      %v2915 = vadd.f32 %v2914, %v2908
      %v2916 = vrot.slane %v2915, 4
      %v2917 = vadd.f32 %v2915, %v2916
      %v2918 = vrot.slane %v2917, 2
      %v2919 = vadd.f32 %v2917, %v2918
      %v2920 = vrot.slane %v2919, 1
      %v2921 = vadd.f32 %v2919, %v2920
      %2922 = vst [vmem:[%s479] sm:$0x1] %v2921
      %v2923 = vmul.f32 %v2901, %v2901
      %v2924 = vmul.f32 %v2902, %v2902
      %v2925 = vmul.f32 %v2903, %v2903
      %v2926 = vmul.f32 %v2904, %v2904
      %v2927 = vmul.f32 %v2905, %v2905
      %v2928 = vmul.f32 %v2906, %v2906
      %v2929 = vmul.f32 %v2907, %v2907
      %v2930 = vmul.f32 %v2908, %v2908
      %v2931 = vadd.f32 %v2923, %v2924
      %v2932 = vadd.f32 %v2931, %v2925
      %v2933 = vadd.f32 %v2932, %v2926
      %v2934 = vadd.f32 %v2933, %v2927
      %v2935 = vadd.f32 %v2934, %v2928
      %v2936 = vadd.f32 %v2935, %v2929
      %v2937 = vadd.f32 %v2936, %v2930
      %v2938 = vrot.slane %v2937, 4
      %v2939 = vadd.f32 %v2937, %v2938
      %v2940 = vrot.slane %v2939, 2
      %v2941 = vadd.f32 %v2939, %v2940
      %v2942 = vrot.slane %v2941, 1
      %v2943 = vadd.f32 %v2941, %v2942
      %2944 = vst [vmem:[%s486] sm:$0x1] %v2943
      %v2945 = vpack.c.bf16 %v2901, %v2901
      %v2946 = vpack.c.bf16 %v2902, %v2902
      %v2947 = vpack.c.bf16 %v2903, %v2903
      %v2948 = vpack.c.bf16 %v2904, %v2904
      %v2949 = vpack.c.bf16 %v2905, %v2905
      %v2950 = vpack.c.bf16 %v2906, %v2906
      %v2951 = vpack.c.bf16 %v2907, %v2907
      %v2952 = vpack.c.bf16 %v2908, %v2908
      %2953 = vst [vmem:[%s472] sm:$0xf] %v2945
      %2954 = vst [vmem:[%s472 + $0x4] sm:$0xf] %v2946
      %2955 = vst [vmem:[%s472 + $0x8] sm:$0xf] %v2947
      %2956 = vst [vmem:[%s472 + $0xc] sm:$0xf] %v2948
      %2957 = vst [vmem:[%s472 + $0x10] sm:$0xf] %v2949
      %2958 = vst [vmem:[%s472 + $0x14] sm:$0xf] %v2950
      %2959 = vst [vmem:[%s472 + $0x18] sm:$0xf] %v2951
      %2960 = vst [vmem:[%s472 + $0x1c] sm:$0xf] %v2952
      %s2961 = smul.u32 %s24, 4
      %s2962 = sadd.s32 %s2961, %s25
      %p2963 = scmp.lt.s32.totalorder %s2962, 7
      %s2964 = scalar_select %p2963, %s2962, 7
      %s2965 = smul.addr %s2964, 8
      %s2966 = smul.addr %s2965, 4
      %s2967 = scalar_lea.vmem %s6, %s2966
      %s2968 = smul.u32 %s24, 4
      %s2969 = sadd.s32 %s2968, %s25
      %p2970 = scmp.lt.s32.totalorder %s2969, 7
      %s2971 = scalar_select %p2970, %s2969, 7
      %s2972 = scalar_lea.vmem %s7, %s2971
      %s2973 = smul.u32 %s24, 4
      %s2974 = sadd.s32 %s2973, %s25
      %p2975 = scmp.lt.s32.totalorder %s2974, 7
      %s2976 = scalar_select %p2975, %s2974, 7
      %s2977 = scalar_lea.vmem %s8, %s2976
      // Predicated region
      $region53: #{basic_block_3d_forward.3} parent=43 // pred_check
        %p2978 = pneg %p219
      $region54: #{basic_block_3d_forward.3} parent=43 // pred_check_branch
        %2980 = sbr.rel (%p2978) target = $region56
      $region55: #{basic_block_3d_forward.3} parent=43 // pred_region
        %s2981 = smul.u32 %s24, 4
        %s2982 = sadd.s32 %s2981, %s25
      $region56: #{basic_block_3d_forward.3} parent=43 // pred_fallthru
        _
      // Predicated region
      $region57: #{basic_block_3d_forward.3} parent=43 // pred_check
        %p2983 = pneg %p249
      $region58: #{basic_block_3d_forward.3} parent=43 // pred_check_branch
        %2985 = sbr.rel (%p2983) target = $region60
      $region59: #{basic_block_3d_forward.3} parent=43 // pred_region
        %s2986 = smul.u32 %s24, 4
        %s2987 = sadd.s32 %s2986, %s25
      $region60: #{basic_block_3d_forward.3} parent=43 // pred_fallthru
        _
      // Predicated region
      $region61: #{basic_block_3d_forward.3} parent=43 // pred_check
        %p2988 = pneg %p279
      $region62: #{basic_block_3d_forward.3} parent=43 // pred_check_branch
        %2990 = sbr.rel (%p2988) target = $region64
      $region63: #{basic_block_3d_forward.3} parent=43 // pred_region
        %s2991 = smul.u32 %s24, 4
        %s2992 = sadd.s32 %s2991, %s25
      $region64: #{basic_block_3d_forward.3} parent=43 // pred_fallthru
        _
    $region44: #{basic_block_3d_forward.3} parent=5 // pred_fallthru
      _
    %p2993 = scmp.le.s32.totalorder 2, %s15
    // Predicated region
    $region65: #{basic_block_3d_forward.3} parent=5 // pred_check
      %p2994 = pneg %p2993
    $region66: #{basic_block_3d_forward.3} parent=5 // pred_check_branch
      %2996 = sbr.rel (%p2994) target = $region68
    $region67: #{basic_block_3d_forward.3} parent=5 // pred_region
      %s2997 = ssub.s32 %s15, 2
      // Predicated region
      $region69: #{basic_block_3d_forward.3} parent=67 // pred_check
        %p2998 = pneg %p225
      $region70: #{basic_block_3d_forward.3} parent=67 // pred_check_branch
        %3000 = sbr.rel (%p2998) target = $region72
      $region71: #{basic_block_3d_forward.3} parent=67 // pred_region
        %s3001 = smul.u32 %s26, 4
        %s3002 = sadd.s32 %s3001, %s27
        %p3003 = scmp.lt.s32.totalorder %s3002, 7
        %s3004 = scalar_select %p3003, %s3002, 7
        %s3005 = smul.addr %s3004, 8
        %s3006 = smul.addr %s3005, 4
        %s3007 = scalar_lea.vmem %s6, %s3006
      $region72: #{basic_block_3d_forward.3} parent=67 // pred_fallthru
        _
      // Predicated region
      $region73: #{basic_block_3d_forward.3} parent=67 // pred_check
        %p3008 = pneg %p255
      $region74: #{basic_block_3d_forward.3} parent=67 // pred_check_branch
        %3010 = sbr.rel (%p3008) target = $region76
      $region75: #{basic_block_3d_forward.3} parent=67 // pred_region
        %s3011 = smul.u32 %s26, 4
        %s3012 = sadd.s32 %s3011, %s27
        %p3013 = scmp.lt.s32.totalorder %s3012, 7
        %s3014 = scalar_select %p3013, %s3012, 7
        %s3015 = scalar_lea.vmem %s7, %s3014
      $region76: #{basic_block_3d_forward.3} parent=67 // pred_fallthru
        _
      // Predicated region
      $region77: #{basic_block_3d_forward.3} parent=67 // pred_check
        %p3016 = pneg %p285
      $region78: #{basic_block_3d_forward.3} parent=67 // pred_check_branch
        %3018 = sbr.rel (%p3016) target = $region80
      $region79: #{basic_block_3d_forward.3} parent=67 // pred_region
        %s3019 = smul.u32 %s26, 4
        %s3020 = sadd.s32 %s3019, %s27
        %p3021 = scmp.lt.s32.totalorder %s3020, 7
        %s3022 = scalar_select %p3021, %s3020, 7
        %s3023 = scalar_lea.vmem %s8, %s3022
      $region80: #{basic_block_3d_forward.3} parent=67 // pred_fallthru
        _
    $region68: #{basic_block_3d_forward.3} parent=5 // pred_fallthru
      _
  $region6: #{basic_block_3d_forward.3} parent=0 // loop_footer
    %s19 = sadd.s32 1, %s15
  $region7: #{basic_block_3d_forward.3} parent=0 // loop_footer_branch
    %14 = sbr.rel target = $region3
  $region8: #{basic_block_3d_forward.3} parent=0 // loop_exit
    _

// kernel: basic_block_3d_forward.5
$region0: #{basic_block_3d_forward.5}
  #allocation0 [shape = 'u32[]', space=smem, size = 0x4, offset = 0x4, fixed_abs, tag = 'smem constant byte address 0x4 - core index']
  #allocation1 [shape = 'u32[144,128]{1,0:T(1,128)}', space=vmem, size = 0x12000, scoped, tag = 'internal scratch']
  %s0 = inlined_call_operand.vmem [shape: f32[512,128], index: 0, kind: input, shape index: {}]
  %s1 = inlined_call_operand.vmem [shape: f32[512,128], index: 1, kind: input, shape index: {}]
  %s2 = inlined_call_operand.vmem [shape: f32[1,128], index: 2, kind: input, shape index: {}]
  %s3 = inlined_call_operand.vmem [shape: f32[1,128], index: 3, kind: input, shape index: {}]
  %s4 = inlined_call_operand.vmem [shape: f32[512,128], index: 4, kind: output, shape index: {}]
  %s5 = sld [smem:[#allocation0]]
  $region26: #{basic_block_3d_forward.5} parent=0
    _
  %s7 = ssub.s32 1, %s5
  %s8 = scalar_select 0, %s7, %s5
  // Predicated region
  $region2: #{basic_block_3d_forward.5} parent=0 // pred_check
    _
  $region3: #{basic_block_3d_forward.5} parent=0 // pred_check_branch
    %10 = sbr.rel (0) target = $region5
  $region4: #{basic_block_3d_forward.5} parent=0 // pred_region
    _
  $region5: #{basic_block_3d_forward.5} parent=0 // pred_fallthru
    _
  // Predicated region
  $region6: #{basic_block_3d_forward.5} parent=0 // pred_check
    _
  $region7: #{basic_block_3d_forward.5} parent=0 // pred_check_branch
    %12 = sbr.rel (0) target = $region9
  $region8: #{basic_block_3d_forward.5} parent=0 // pred_region
    _
  $region9: #{basic_block_3d_forward.5} parent=0 // pred_fallthru
    _
  // Predicated region
  $region10: #{basic_block_3d_forward.5} parent=0 // pred_check
    _
  $region11: #{basic_block_3d_forward.5} parent=0 // pred_check_branch
    %14 = sbr.rel (0) target = $region13
  $region12: #{basic_block_3d_forward.5} parent=0 // pred_region
    _
  $region13: #{basic_block_3d_forward.5} parent=0 // pred_fallthru
    _
  // Predicated region
  $region14: #{basic_block_3d_forward.5} parent=0 // pred_check
    _
  $region15: #{basic_block_3d_forward.5} parent=0 // pred_check_branch
    %16 = sbr.rel (0) target = $region17
  $region16: #{basic_block_3d_forward.5} parent=0 // pred_region
    _
  $region17: #{basic_block_3d_forward.5} parent=0 // pred_fallthru
    _
  %v17 = vld [vmem:[%s0] sm:$0xff]
  %v18 = vld [vmem:[%s0 + $0x8] sm:$0xff]
  %v19 = vld [vmem:[%s0 + $0x10] sm:$0xff]
  %v20 = vld [vmem:[%s0 + $0x18] sm:$0xff]
  %v21 = vld [vmem:[%s0 + $0x20] sm:$0xff]
  %v22 = vld [vmem:[%s0 + $0x28] sm:$0xff]
  %v23 = vld [vmem:[%s0 + $0x30] sm:$0xff]
  %v24 = vld [vmem:[%s0 + $0x38] sm:$0xff]
  %v25 = vld [vmem:[%s0 + $0x40] sm:$0xff]
  %v26 = vld [vmem:[%s0 + $0x48] sm:$0xff]
  %v27 = vld [vmem:[%s0 + $0x50] sm:$0xff]
  %v28 = vld [vmem:[%s0 + $0x58] sm:$0xff]
  %v29 = vld [vmem:[%s0 + $0x60] sm:$0xff]
  %v30 = vld [vmem:[%s0 + $0x68] sm:$0xff]
  %v31 = vld [vmem:[%s0 + $0x70] sm:$0xff]
  %v32 = vld [vmem:[%s0 + $0x78] sm:$0xff]
  %v33 = vld [vmem:[%s0 + $0x80] sm:$0xff]
  %v34 = vld [vmem:[%s0 + $0x88] sm:$0xff]
  %v35 = vld [vmem:[%s0 + $0x90] sm:$0xff]
  %v36 = vld [vmem:[%s0 + $0x98] sm:$0xff]
  %v37 = vld [vmem:[%s0 + $0xa0] sm:$0xff]
  %v38 = vld [vmem:[%s0 + $0xa8] sm:$0xff]
  %v39 = vld [vmem:[%s0 + $0xb0] sm:$0xff]
  %v40 = vld [vmem:[%s0 + $0xb8] sm:$0xff]
  %v41 = vld [vmem:[%s0 + $0xc0] sm:$0xff]
  %v42 = vld [vmem:[%s0 + $0xc8] sm:$0xff]
  %v43 = vld [vmem:[%s0 + $0xd0] sm:$0xff]
  %v44 = vld [vmem:[%s0 + $0xd8] sm:$0xff]
  %v45 = vld [vmem:[%s0 + $0xe0] sm:$0xff]
  %v46 = vld [vmem:[%s0 + $0xe8] sm:$0xff]
  %v47 = vld [vmem:[%s0 + $0xf0] sm:$0xff]
  %v48 = vld [vmem:[%s0 + $0xf8] sm:$0xff]
  %v49 = vld [vmem:[%s0 + $0x100] sm:$0xff]
  %v50 = vld [vmem:[%s0 + $0x108] sm:$0xff]
  %v51 = vld [vmem:[%s0 + $0x110] sm:$0xff]
  %v52 = vld [vmem:[%s0 + $0x118] sm:$0xff]
  %v53 = vld [vmem:[%s0 + $0x120] sm:$0xff]
  %v54 = vld [vmem:[%s0 + $0x128] sm:$0xff]
  %v55 = vld [vmem:[%s0 + $0x130] sm:$0xff]
  %v56 = vld [vmem:[%s0 + $0x138] sm:$0xff]
  %v57 = vld [vmem:[%s0 + $0x140] sm:$0xff]
  %v58 = vld [vmem:[%s0 + $0x148] sm:$0xff]
  %v59 = vld [vmem:[%s0 + $0x150] sm:$0xff]
  %v60 = vld [vmem:[%s0 + $0x158] sm:$0xff]
  %v61 = vld [vmem:[%s0 + $0x160] sm:$0xff]
  %v62 = vld [vmem:[%s0 + $0x168] sm:$0xff]
  %v63 = vld [vmem:[%s0 + $0x170] sm:$0xff]
  %v64 = vld [vmem:[%s0 + $0x178] sm:$0xff]
  %v65 = vld [vmem:[%s0 + $0x180] sm:$0xff]
  %v66 = vld [vmem:[%s0 + $0x188] sm:$0xff]
  %v67 = vld [vmem:[%s0 + $0x190] sm:$0xff]
  %v68 = vld [vmem:[%s0 + $0x198] sm:$0xff]
  %v69 = vld [vmem:[%s0 + $0x1a0] sm:$0xff]
  %v70 = vld [vmem:[%s0 + $0x1a8] sm:$0xff]
  %v71 = vld [vmem:[%s0 + $0x1b0] sm:$0xff]
  %v72 = vld [vmem:[%s0 + $0x1b8] sm:$0xff]
  %v73 = vld [vmem:[%s0 + $0x1c0] sm:$0xff]
  %v74 = vld [vmem:[%s0 + $0x1c8] sm:$0xff]
  %v75 = vld [vmem:[%s0 + $0x1d0] sm:$0xff]
  %v76 = vld [vmem:[%s0 + $0x1d8] sm:$0xff]
  %v77 = vld [vmem:[%s0 + $0x1e0] sm:$0xff]
  %v78 = vld [vmem:[%s0 + $0x1e8] sm:$0xff]
  %v79 = vld [vmem:[%s0 + $0x1f0] sm:$0xff]
  %v80 = vld [vmem:[%s0 + $0x1f8] sm:$0xff]
  %v81 = vld [vmem:[%s2] sm:$0x1]
  %v83 = vlaneseq
  %v84 = vshrl.u32 %v83, 7
  %v85 = vsub.s32 0, %v84
  %v86 = vrot.slane %v81, %v85
  %v88 = vmul.f32 %v17, %v86
  %v89 = vmul.f32 %v18, %v86
  %v90 = vmul.f32 %v19, %v86
  %v91 = vmul.f32 %v20, %v86
  %v92 = vmul.f32 %v21, %v86
  %v93 = vmul.f32 %v22, %v86
  %v94 = vmul.f32 %v23, %v86
  %v95 = vmul.f32 %v24, %v86
  %v96 = vmul.f32 %v25, %v86
  %v97 = vmul.f32 %v26, %v86
  %v98 = vmul.f32 %v27, %v86
  %v99 = vmul.f32 %v28, %v86
  %v100 = vmul.f32 %v29, %v86
  %v101 = vmul.f32 %v30, %v86
  %v102 = vmul.f32 %v31, %v86
  %v103 = vmul.f32 %v32, %v86
  %v104 = vmul.f32 %v33, %v86
  %v105 = vmul.f32 %v34, %v86
  %v106 = vmul.f32 %v35, %v86
  %v107 = vmul.f32 %v36, %v86
  %v108 = vmul.f32 %v37, %v86
  %v109 = vmul.f32 %v38, %v86
  %v110 = vmul.f32 %v39, %v86
  %v111 = vmul.f32 %v40, %v86
  %v112 = vmul.f32 %v41, %v86
  %v113 = vmul.f32 %v42, %v86
  %v114 = vmul.f32 %v43, %v86
  %v115 = vmul.f32 %v44, %v86
  %v116 = vmul.f32 %v45, %v86
  %v117 = vmul.f32 %v46, %v86
  %v118 = vmul.f32 %v47, %v86
  %v119 = vmul.f32 %v48, %v86
  %v120 = vmul.f32 %v49, %v86
  %v121 = vmul.f32 %v50, %v86
  %v122 = vmul.f32 %v51, %v86
  %v123 = vmul.f32 %v52, %v86
  %v124 = vmul.f32 %v53, %v86
  %v125 = vmul.f32 %v54, %v86
  %v126 = vmul.f32 %v55, %v86
  %v127 = vmul.f32 %v56, %v86
  %v128 = vmul.f32 %v57, %v86
  %v129 = vmul.f32 %v58, %v86
  %v130 = vmul.f32 %v59, %v86
  %v131 = vmul.f32 %v60, %v86
  %v132 = vmul.f32 %v61, %v86
  %v133 = vmul.f32 %v62, %v86
  %v134 = vmul.f32 %v63, %v86
  %v135 = vmul.f32 %v64, %v86
  %v136 = vmul.f32 %v65, %v86
  %v137 = vmul.f32 %v66, %v86
  %v138 = vmul.f32 %v67, %v86
  %v139 = vmul.f32 %v68, %v86
  %v140 = vmul.f32 %v69, %v86
  %v141 = vmul.f32 %v70, %v86
  %v142 = vmul.f32 %v71, %v86
  %v143 = vmul.f32 %v72, %v86
  %v144 = vmul.f32 %v73, %v86
  %v145 = vmul.f32 %v74, %v86
  %v146 = vmul.f32 %v75, %v86
  %v147 = vmul.f32 %v76, %v86
  %v148 = vmul.f32 %v77, %v86
  %v149 = vmul.f32 %v78, %v86
  %v150 = vmul.f32 %v79, %v86
  %v151 = vmul.f32 %v80, %v86
  %v152 = vld [vmem:[%s3] sm:$0x1]
  %v154 = vlaneseq
  %v155 = vshrl.u32 %v154, 7
  %v156 = vsub.s32 0, %v155
  %v157 = vrot.slane %v152, %v156
  %v159 = vadd.f32 %v88, %v157
  %v160 = vadd.f32 %v89, %v157
  %v161 = vadd.f32 %v90, %v157
  %v162 = vadd.f32 %v91, %v157
  %v163 = vadd.f32 %v92, %v157
  %v164 = vadd.f32 %v93, %v157
  %v165 = vadd.f32 %v94, %v157
  %v166 = vadd.f32 %v95, %v157
  %v167 = vadd.f32 %v96, %v157
  %v168 = vadd.f32 %v97, %v157
  %v169 = vadd.f32 %v98, %v157
  %v170 = vadd.f32 %v99, %v157
  %v171 = vadd.f32 %v100, %v157
  %v172 = vadd.f32 %v101, %v157
  %v173 = vadd.f32 %v102, %v157
  %v174 = vadd.f32 %v103, %v157
  %v175 = vadd.f32 %v104, %v157
  %v176 = vadd.f32 %v105, %v157
  %v177 = vadd.f32 %v106, %v157
  %v178 = vadd.f32 %v107, %v157
  %v179 = vadd.f32 %v108, %v157
  %v180 = vadd.f32 %v109, %v157
  %v181 = vadd.f32 %v110, %v157
  %v182 = vadd.f32 %v111, %v157
  %v183 = vadd.f32 %v112, %v157
  %v184 = vadd.f32 %v113, %v157
  %v185 = vadd.f32 %v114, %v157
  %v186 = vadd.f32 %v115, %v157
  %v187 = vadd.f32 %v116, %v157
  %v188 = vadd.f32 %v117, %v157
  %v189 = vadd.f32 %v118, %v157
  %v190 = vadd.f32 %v119, %v157
  %v191 = vadd.f32 %v120, %v157
  %v192 = vadd.f32 %v121, %v157
  %v193 = vadd.f32 %v122, %v157
  %v194 = vadd.f32 %v123, %v157
  %v195 = vadd.f32 %v124, %v157
  %v196 = vadd.f32 %v125, %v157
  %v197 = vadd.f32 %v126, %v157
  %v198 = vadd.f32 %v127, %v157
  %v199 = vadd.f32 %v128, %v157
  %v200 = vadd.f32 %v129, %v157
  %v201 = vadd.f32 %v130, %v157
  %v202 = vadd.f32 %v131, %v157
  %v203 = vadd.f32 %v132, %v157
  %v204 = vadd.f32 %v133, %v157
  %v205 = vadd.f32 %v134, %v157
  %v206 = vadd.f32 %v135, %v157
  %v207 = vadd.f32 %v136, %v157
  %v208 = vadd.f32 %v137, %v157
  %v209 = vadd.f32 %v138, %v157
  %v210 = vadd.f32 %v139, %v157
  %v211 = vadd.f32 %v140, %v157
  %v212 = vadd.f32 %v141, %v157
  %v213 = vadd.f32 %v142, %v157
  %v214 = vadd.f32 %v143, %v157
  %v215 = vadd.f32 %v144, %v157
  %v216 = vadd.f32 %v145, %v157
  %v217 = vadd.f32 %v146, %v157
  %v218 = vadd.f32 %v147, %v157
  %v219 = vadd.f32 %v148, %v157
  %v220 = vadd.f32 %v149, %v157
  %v221 = vadd.f32 %v150, %v157
  %v222 = vadd.f32 %v151, %v157
  %v223 = vld [vmem:[%s1] sm:$0xff]
  %v224 = vld [vmem:[%s1 + $0x8] sm:$0xff]
  %v225 = vld [vmem:[%s1 + $0x10] sm:$0xff]
  %v226 = vld [vmem:[%s1 + $0x18] sm:$0xff]
  %v227 = vld [vmem:[%s1 + $0x20] sm:$0xff]
  %v228 = vld [vmem:[%s1 + $0x28] sm:$0xff]
  %v229 = vld [vmem:[%s1 + $0x30] sm:$0xff]
  %v230 = vld [vmem:[%s1 + $0x38] sm:$0xff]
  %v231 = vld [vmem:[%s1 + $0x40] sm:$0xff]
  %v232 = vld [vmem:[%s1 + $0x48] sm:$0xff]
  %v233 = vld [vmem:[%s1 + $0x50] sm:$0xff]
  %v234 = vld [vmem:[%s1 + $0x58] sm:$0xff]
  %v235 = vld [vmem:[%s1 + $0x60] sm:$0xff]
  %v236 = vld [vmem:[%s1 + $0x68] sm:$0xff]
  %v237 = vld [vmem:[%s1 + $0x70] sm:$0xff]
  %v238 = vld [vmem:[%s1 + $0x78] sm:$0xff]
  %v239 = vld [vmem:[%s1 + $0x80] sm:$0xff]
  %v240 = vld [vmem:[%s1 + $0x88] sm:$0xff]
  %v241 = vld [vmem:[%s1 + $0x90] sm:$0xff]
  %v242 = vld [vmem:[%s1 + $0x98] sm:$0xff]
  %v243 = vld [vmem:[%s1 + $0xa0] sm:$0xff]
  %v244 = vld [vmem:[%s1 + $0xa8] sm:$0xff]
  %v245 = vld [vmem:[%s1 + $0xb0] sm:$0xff]
  %v246 = vld [vmem:[%s1 + $0xb8] sm:$0xff]
  %v247 = vld [vmem:[%s1 + $0xc0] sm:$0xff]
  %v248 = vld [vmem:[%s1 + $0xc8] sm:$0xff]
  %v249 = vld [vmem:[%s1 + $0xd0] sm:$0xff]
  %v250 = vld [vmem:[%s1 + $0xd8] sm:$0xff]
  %v251 = vld [vmem:[%s1 + $0xe0] sm:$0xff]
  %v252 = vld [vmem:[%s1 + $0xe8] sm:$0xff]
  %v253 = vld [vmem:[%s1 + $0xf0] sm:$0xff]
  %v254 = vld [vmem:[%s1 + $0xf8] sm:$0xff]
  %v255 = vld [vmem:[%s1 + $0x100] sm:$0xff]
  %v256 = vld [vmem:[%s1 + $0x108] sm:$0xff]
  %v257 = vld [vmem:[%s1 + $0x110] sm:$0xff]
  %v258 = vld [vmem:[%s1 + $0x118] sm:$0xff]
  %v259 = vld [vmem:[%s1 + $0x120] sm:$0xff]
  %v260 = vld [vmem:[%s1 + $0x128] sm:$0xff]
  %v261 = vld [vmem:[%s1 + $0x130] sm:$0xff]
  %v262 = vld [vmem:[%s1 + $0x138] sm:$0xff]
  %v263 = vld [vmem:[%s1 + $0x140] sm:$0xff]
  %v264 = vld [vmem:[%s1 + $0x148] sm:$0xff]
  %v265 = vld [vmem:[%s1 + $0x150] sm:$0xff]
  %v266 = vld [vmem:[%s1 + $0x158] sm:$0xff]
  %v267 = vld [vmem:[%s1 + $0x160] sm:$0xff]
  %v268 = vld [vmem:[%s1 + $0x168] sm:$0xff]
  %v269 = vld [vmem:[%s1 + $0x170] sm:$0xff]
  %v270 = vld [vmem:[%s1 + $0x178] sm:$0xff]
  %v271 = vld [vmem:[%s1 + $0x180] sm:$0xff]
  %v272 = vld [vmem:[%s1 + $0x188] sm:$0xff]
  %v273 = vld [vmem:[%s1 + $0x190] sm:$0xff]
  %v274 = vld [vmem:[%s1 + $0x198] sm:$0xff]
  %v275 = vld [vmem:[%s1 + $0x1a0] sm:$0xff]
  %v276 = vld [vmem:[%s1 + $0x1a8] sm:$0xff]
  %v277 = vld [vmem:[%s1 + $0x1b0] sm:$0xff]
  %v278 = vld [vmem:[%s1 + $0x1b8] sm:$0xff]
  %v279 = vld [vmem:[%s1 + $0x1c0] sm:$0xff]
  %v280 = vld [vmem:[%s1 + $0x1c8] sm:$0xff]
  %v281 = vld [vmem:[%s1 + $0x1d0] sm:$0xff]
  %v282 = vld [vmem:[%s1 + $0x1d8] sm:$0xff]
  %v283 = vld [vmem:[%s1 + $0x1e0] sm:$0xff]
  %v284 = vld [vmem:[%s1 + $0x1e8] sm:$0xff]
  %v285 = vld [vmem:[%s1 + $0x1f0] sm:$0xff]
  %v286 = vld [vmem:[%s1 + $0x1f8] sm:$0xff]
  %v287 = vadd.f32 %v159, %v223
  %v288 = vadd.f32 %v160, %v224
  %v289 = vadd.f32 %v161, %v225
  %v290 = vadd.f32 %v162, %v226
  %v291 = vadd.f32 %v163, %v227
  %v292 = vadd.f32 %v164, %v228
  %v293 = vadd.f32 %v165, %v229
  %v294 = vadd.f32 %v166, %v230
  %v295 = vadd.f32 %v167, %v231
  %v296 = vadd.f32 %v168, %v232
  %v297 = vadd.f32 %v169, %v233
  %v298 = vadd.f32 %v170, %v234
  %v299 = vadd.f32 %v171, %v235
  %v300 = vadd.f32 %v172, %v236
  %v301 = vadd.f32 %v173, %v237
  %v302 = vadd.f32 %v174, %v238
  %v303 = vadd.f32 %v175, %v239
  %v304 = vadd.f32 %v176, %v240
  %v305 = vadd.f32 %v177, %v241
  %v306 = vadd.f32 %v178, %v242
  %v307 = vadd.f32 %v179, %v243
  %v308 = vadd.f32 %v180, %v244
  %v309 = vadd.f32 %v181, %v245
  %v310 = vadd.f32 %v182, %v246
  %v311 = vadd.f32 %v183, %v247
  %v312 = vadd.f32 %v184, %v248
  %v313 = vadd.f32 %v185, %v249
  %v314 = vadd.f32 %v186, %v250
  %v315 = vadd.f32 %v187, %v251
  %v316 = vadd.f32 %v188, %v252
  %v317 = vadd.f32 %v189, %v253
  %v318 = vadd.f32 %v190, %v254
  %v319 = vadd.f32 %v191, %v255
  %v320 = vadd.f32 %v192, %v256
  %v321 = vadd.f32 %v193, %v257
  %v322 = vadd.f32 %v194, %v258
  %v323 = vadd.f32 %v195, %v259
  %v324 = vadd.f32 %v196, %v260
  %v325 = vadd.f32 %v197, %v261
  %v326 = vadd.f32 %v198, %v262
  %v327 = vadd.f32 %v199, %v263
  %v328 = vadd.f32 %v200, %v264
  %v329 = vadd.f32 %v201, %v265
  %v330 = vadd.f32 %v202, %v266
  %v331 = vadd.f32 %v203, %v267
  %v332 = vadd.f32 %v204, %v268
  %v333 = vadd.f32 %v205, %v269
  %v334 = vadd.f32 %v206, %v270
  %v335 = vadd.f32 %v207, %v271
  %v336 = vadd.f32 %v208, %v272
  %v337 = vadd.f32 %v209, %v273
  %v338 = vadd.f32 %v210, %v274
  %v339 = vadd.f32 %v211, %v275
  %v340 = vadd.f32 %v212, %v276
  %v341 = vadd.f32 %v213, %v277
  %v342 = vadd.f32 %v214, %v278
  %v343 = vadd.f32 %v215, %v279
  %v344 = vadd.f32 %v216, %v280
  %v345 = vadd.f32 %v217, %v281
  %v346 = vadd.f32 %v218, %v282
  %v347 = vadd.f32 %v219, %v283
  %v348 = vadd.f32 %v220, %v284
  %v349 = vadd.f32 %v221, %v285
  %v350 = vadd.f32 %v222, %v286
  %351 = vst [vmem:[%s4] sm:$0xff] %v287
  %352 = vst [vmem:[%s4 + $0x8] sm:$0xff] %v288
  %353 = vst [vmem:[%s4 + $0x10] sm:$0xff] %v289
  %354 = vst [vmem:[%s4 + $0x18] sm:$0xff] %v290
  %355 = vst [vmem:[%s4 + $0x20] sm:$0xff] %v291
  %356 = vst [vmem:[%s4 + $0x28] sm:$0xff] %v292
  %357 = vst [vmem:[%s4 + $0x30] sm:$0xff] %v293
  %358 = vst [vmem:[%s4 + $0x38] sm:$0xff] %v294
  %359 = vst [vmem:[%s4 + $0x40] sm:$0xff] %v295
  %360 = vst [vmem:[%s4 + $0x48] sm:$0xff] %v296
  %361 = vst [vmem:[%s4 + $0x50] sm:$0xff] %v297
  %362 = vst [vmem:[%s4 + $0x58] sm:$0xff] %v298
  %363 = vst [vmem:[%s4 + $0x60] sm:$0xff] %v299
  %364 = vst [vmem:[%s4 + $0x68] sm:$0xff] %v300
  %365 = vst [vmem:[%s4 + $0x70] sm:$0xff] %v301
  %366 = vst [vmem:[%s4 + $0x78] sm:$0xff] %v302
  %367 = vst [vmem:[%s4 + $0x80] sm:$0xff] %v303
  %368 = vst [vmem:[%s4 + $0x88] sm:$0xff] %v304
  %369 = vst [vmem:[%s4 + $0x90] sm:$0xff] %v305
  %370 = vst [vmem:[%s4 + $0x98] sm:$0xff] %v306
  %371 = vst [vmem:[%s4 + $0xa0] sm:$0xff] %v307
  %372 = vst [vmem:[%s4 + $0xa8] sm:$0xff] %v308
  %373 = vst [vmem:[%s4 + $0xb0] sm:$0xff] %v309
  %374 = vst [vmem:[%s4 + $0xb8] sm:$0xff] %v310
  %375 = vst [vmem:[%s4 + $0xc0] sm:$0xff] %v311
  %376 = vst [vmem:[%s4 + $0xc8] sm:$0xff] %v312
  %377 = vst [vmem:[%s4 + $0xd0] sm:$0xff] %v313
  %378 = vst [vmem:[%s4 + $0xd8] sm:$0xff] %v314
  %379 = vst [vmem:[%s4 + $0xe0] sm:$0xff] %v315
  %380 = vst [vmem:[%s4 + $0xe8] sm:$0xff] %v316
  %381 = vst [vmem:[%s4 + $0xf0] sm:$0xff] %v317
  %382 = vst [vmem:[%s4 + $0xf8] sm:$0xff] %v318
  %383 = vst [vmem:[%s4 + $0x100] sm:$0xff] %v319
  %384 = vst [vmem:[%s4 + $0x108] sm:$0xff] %v320
  %385 = vst [vmem:[%s4 + $0x110] sm:$0xff] %v321
  %386 = vst [vmem:[%s4 + $0x118] sm:$0xff] %v322
  %387 = vst [vmem:[%s4 + $0x120] sm:$0xff] %v323
  %388 = vst [vmem:[%s4 + $0x128] sm:$0xff] %v324
  %389 = vst [vmem:[%s4 + $0x130] sm:$0xff] %v325
  %390 = vst [vmem:[%s4 + $0x138] sm:$0xff] %v326
  %391 = vst [vmem:[%s4 + $0x140] sm:$0xff] %v327
  %392 = vst [vmem:[%s4 + $0x148] sm:$0xff] %v328
  %393 = vst [vmem:[%s4 + $0x150] sm:$0xff] %v329
  %394 = vst [vmem:[%s4 + $0x158] sm:$0xff] %v330
  %395 = vst [vmem:[%s4 + $0x160] sm:$0xff] %v331
  %396 = vst [vmem:[%s4 + $0x168] sm:$0xff] %v332
  %397 = vst [vmem:[%s4 + $0x170] sm:$0xff] %v333
  %398 = vst [vmem:[%s4 + $0x178] sm:$0xff] %v334
  %399 = vst [vmem:[%s4 + $0x180] sm:$0xff] %v335
  %400 = vst [vmem:[%s4 + $0x188] sm:$0xff] %v336
  %401 = vst [vmem:[%s4 + $0x190] sm:$0xff] %v337
  %402 = vst [vmem:[%s4 + $0x198] sm:$0xff] %v338
  %403 = vst [vmem:[%s4 + $0x1a0] sm:$0xff] %v339
  %404 = vst [vmem:[%s4 + $0x1a8] sm:$0xff] %v340
  %405 = vst [vmem:[%s4 + $0x1b0] sm:$0xff] %v341
  %406 = vst [vmem:[%s4 + $0x1b8] sm:$0xff] %v342
  %407 = vst [vmem:[%s4 + $0x1c0] sm:$0xff] %v343
  %408 = vst [vmem:[%s4 + $0x1c8] sm:$0xff] %v344
  %409 = vst [vmem:[%s4 + $0x1d0] sm:$0xff] %v345
  %410 = vst [vmem:[%s4 + $0x1d8] sm:$0xff] %v346
  %411 = vst [vmem:[%s4 + $0x1e0] sm:$0xff] %v347
  %412 = vst [vmem:[%s4 + $0x1e8] sm:$0xff] %v348
  %413 = vst [vmem:[%s4 + $0x1f0] sm:$0xff] %v349
  %414 = vst [vmem:[%s4 + $0x1f8] sm:$0xff] %v350
  // Predicated region
  $region18: #{basic_block_3d_forward.5} parent=0 // pred_check
    _
  $region19: #{basic_block_3d_forward.5} parent=0 // pred_check_branch
    %416 = sbr.rel (0) target = $region21
  $region20: #{basic_block_3d_forward.5} parent=0 // pred_region
    _
  $region21: #{basic_block_3d_forward.5} parent=0 // pred_fallthru
    _
  // Predicated region
  $region22: #{basic_block_3d_forward.5} parent=0 // pred_check
    _
  $region23: #{basic_block_3d_forward.5} parent=0 // pred_check_branch
    %418 = sbr.rel (0) target = $region25
  $region24: #{basic_block_3d_forward.5} parent=0 // pred_region
    _
  $region25: #{basic_block_3d_forward.5} parent=0 // pred_fallthru
    _

// kernel: basic_block_3d_forward.4
$region0: #{basic_block_3d_forward.4}
  #allocation0 [shape = 'u32[]', space=smem, size = 0x4, offset = 0x4, fixed_abs, tag = 'smem constant byte address 0x4 - core index']
  #allocation1 [shape = 'u32[144,128]{1,0:T(1,128)}', space=vmem, size = 0x12000, scoped, tag = 'internal scratch']
  #allocation2 [shape = 'f32[64,128]{1,0:T(8,128)}', space=vmem, size = 0x8000, scoped, tag = 'scratch operand']
  #allocation3 [shape = 'f32[10,10,128]{2,1,0:T(8,128)}', space=vmem, size = 0x14000, scoped, tag = 'scratch operand']
  #allocation4 [shape = 'bf16[8,8,1152]{2,1,0:T(8,128)(2,1)}', space=vmem, size = 0x24000, scoped, tag = 'scratch operand']
  %s0 = inlined_call_operand.vmem [shape: bf16[8,8,8,128], index: 0, kind: input, shape index: {}, may-alias: {0,1,2}]
  %s1 = inlined_call_operand.vmem [shape: bf16[8,8,8,128], index: 1, kind: input, shape index: {}, may-alias: {0,1,2}]
  %s2 = inlined_call_operand.vmem [shape: bf16[8,8,8,128], index: 2, kind: input, shape index: {}, may-alias: {0,1,2}]
  %s3 = inlined_call_operand.vmem [shape: bf16[3,1152,128], index: 3, kind: input, shape index: {}]
  %s4 = inlined_call_operand.vmem [shape: f32[1,128], index: 4, kind: input, shape index: {}]
  %s5 = inlined_call_operand.vmem [shape: f32[1,128], index: 5, kind: input, shape index: {}]
  %s6 = inlined_call_operand.vmem [shape: f32[8,8,8,128], index: 6, kind: output, shape index: {0}]
  %s7 = inlined_call_operand.vmem [shape: f32[8,1,128], index: 7, kind: output, shape index: {1}]
  %s8 = inlined_call_operand.vmem [shape: f32[8,1,128], index: 8, kind: output, shape index: {2}]
  %9 = xla_tuple %s6, %s7, %s8
  %s10 = sld [smem:[#allocation0]]
  $region81: #{basic_block_3d_forward.4} parent=0
    _
  %s12 = ssub.s32 1, %s10
  %s13 = scalar_select 0, %s12, %s10
  loop: start=0, step=1, limit=10
  $region2: #{basic_block_3d_forward.4} parent=0 // loop_pre_header
    _
  $region3: #{basic_block_3d_forward.4} parent=0 // loop_header
    %s15 = sphi 0, %s19
    %p16 = scmp.ge.s32.totalorder %s15, 10
    %s22 = sphi 0, %s34
    %s23 = sphi 0, %s30
    %s24 = sphi 0, %s22
    %s25 = sphi 0, %s23
    %s26 = sphi 0, %s24
    %s27 = sphi 0, %s25
    %s47 = sphi 0, %s49
    %s50 = sphi 0, %s47
    %s51 = sphi 0, %s50
    %s67 = sphi 0, %s51
    %s77 = sphi 0, %s79
    %s80 = sphi 0, %s77
    %s81 = sphi 0, %s80
    %s97 = sphi 0, %s81
    %s113 = sphi 0, %s115
    %s116 = sphi 0, %s113
    %s117 = sphi 0, %s116
    %s133 = sphi 0, %s117
    %s137 = sphi 0, %s137
    %s139 = sphi 0, %s137
    %s140 = sphi 0, %s139
    %s154 = sphi 0, %s140
    %s158 = sphi 0, %s158
    %s160 = sphi 0, %s158
    %s161 = sphi 0, %s160
    %s175 = sphi 0, %s161
    %s179 = sphi 0, %s179
    %s181 = sphi 0, %s179
    %s182 = sphi 0, %s181
    %s196 = sphi 0, %s182
    %s206 = sphi 0, %s208
    %s209 = sphi 0, %s206
    %s210 = sphi 0, %s209
    %s226 = sphi 0, %s210
    %s236 = sphi 0, %s238
    %s239 = sphi 0, %s236
    %s240 = sphi 0, %s239
    %s256 = sphi 0, %s240
    %s266 = sphi 0, %s268
    %s269 = sphi 0, %s266
    %s270 = sphi 0, %s269
    %s286 = sphi 0, %s270
  $region4: #{basic_block_3d_forward.4} parent=0 // loop_header_branch
    %18 = sbr.rel (%p16) target = $region8
  $region5: #{basic_block_3d_forward.4} parent=0 // loop_body
    %s20 = ssub.s32 %s15, 1
    %s21 = ssub.s32 %s15, 2
    %s28 = sadd.s32 1, %s23
    %p29 = scmp.ge.s32.totalorder %s28, 4
    %s30 = scalar_select %p29, 0, %s28
    %s31 = sadd.s32 1, %s22
    %s32 = scalar_select %p29, %s31, %s22
    %p33 = scmp.ge.s32.totalorder %s32, 2
    %s34 = scalar_select %p33, 0, %s32
    %s35 = smul.u32 %s22, 4
    %s36 = ssub.s32 %s23, 1
    %p37 = scmp.gt.s32.totalorder %s36, 0
    %s38 = scalar_select %p37, %s36, 0
    %s39 = sadd.s32 %s35, %s38
    %s40 = smul.u32 %s34, 4
    %s41 = ssub.s32 %s30, 1
    %p42 = scmp.gt.s32.totalorder %s41, 0
    %s43 = scalar_select %p42, %s41, 0
    %s44 = sadd.s32 %s40, %s43
    %s45 = ssub.s32 %s39, %s44
    %p46 = scmp.eq.s32.totalorder %s45, 0
    %s48 = sadd.s32 %s47, 1
    %s49 = scalar_select %p46, %s47, %s48
    %p52 = pneg %p46
    %p53 = scmp.eq.s32.totalorder %s15, 7
    %p54 = por %p52, %p53
    %p55 = scmp.ne.s32.totalorder %s47, %s50
    %p56 = scmp.eq.s32.totalorder %s15, 0
    %p57 = por %p55, %p56
    %p58 = scmp.ne.s32.totalorder %s47, %s50
    %p59 = scmp.eq.s32.totalorder %s20, 7
    %p60 = por %p58, %p59
    %p61 = scmp.ne.s32.totalorder %s50, %s51
    %p62 = scmp.eq.s32.totalorder %s20, 0
    %p63 = por %p61, %p62
    %p64 = scmp.ne.s32.totalorder %s50, %s51
    %p65 = scmp.eq.s32.totalorder %s21, 7
    %p66 = por %p64, %p65
    %p68 = scmp.ne.s32.totalorder %s51, %s67
    %p69 = scmp.eq.s32.totalorder %s21, 0
    %p70 = por %p68, %p69
    %s71 = smul.u32 %s22, 4
    %s72 = sadd.s32 %s71, %s23
    %s73 = smul.u32 %s34, 4
    %s74 = sadd.s32 %s73, %s30
    %s75 = ssub.s32 %s72, %s74
    %p76 = scmp.eq.s32.totalorder %s75, 0
    %s78 = sadd.s32 %s77, 1
    %s79 = scalar_select %p76, %s77, %s78
    %p82 = pneg %p76
    %p83 = scmp.eq.s32.totalorder %s15, 7
    %p84 = por %p82, %p83
    %p85 = scmp.ne.s32.totalorder %s77, %s80
    %p86 = scmp.eq.s32.totalorder %s15, 0
    %p87 = por %p85, %p86
    %p88 = scmp.ne.s32.totalorder %s77, %s80
    %p89 = scmp.eq.s32.totalorder %s20, 7
    %p90 = por %p88, %p89
    %p91 = scmp.ne.s32.totalorder %s80, %s81
    %p92 = scmp.eq.s32.totalorder %s20, 0
    %p93 = por %p91, %p92
    %p94 = scmp.ne.s32.totalorder %s80, %s81
    %p95 = scmp.eq.s32.totalorder %s21, 7
    %p96 = por %p94, %p95
    %p98 = scmp.ne.s32.totalorder %s81, %s97
    %p99 = scmp.eq.s32.totalorder %s21, 0
    %p100 = por %p98, %p99
    %s101 = smul.u32 %s22, 4
    %s102 = sadd.s32 %s23, 1
    %p103 = scmp.lt.s32.totalorder %s102, 3
    %s104 = scalar_select %p103, %s102, 3
    %s105 = sadd.s32 %s101, %s104
    %s106 = smul.u32 %s34, 4
    %s107 = sadd.s32 %s30, 1
    %p108 = scmp.lt.s32.totalorder %s107, 3
    %s109 = scalar_select %p108, %s107, 3
    %s110 = sadd.s32 %s106, %s109
    %s111 = ssub.s32 %s105, %s110
    %p112 = scmp.eq.s32.totalorder %s111, 0
    %s114 = sadd.s32 %s113, 1
    %s115 = scalar_select %p112, %s113, %s114
    %p118 = pneg %p112
    %p119 = scmp.eq.s32.totalorder %s15, 7
    %p120 = por %p118, %p119
    %p121 = scmp.ne.s32.totalorder %s113, %s116
    %p122 = scmp.eq.s32.totalorder %s15, 0
    %p123 = por %p121, %p122
    %p124 = scmp.ne.s32.totalorder %s113, %s116
    %p125 = scmp.eq.s32.totalorder %s20, 7
    %p126 = por %p124, %p125
    %p127 = scmp.ne.s32.totalorder %s116, %s117
    %p128 = scmp.eq.s32.totalorder %s20, 0
    %p129 = por %p127, %p128
    %p130 = scmp.ne.s32.totalorder %s116, %s117
    %p131 = scmp.eq.s32.totalorder %s21, 7
    %p132 = por %p130, %p131
    %p134 = scmp.ne.s32.totalorder %s117, %s133
    %p135 = scmp.eq.s32.totalorder %s21, 0
    %p136 = por %p134, %p135
    %s138 = sadd.s32 %s137, 1
    %p141 = scmp.eq.s32.totalorder %s15, 7
    %p142 = scmp.ne.s32.totalorder %s137, %s139
    %p143 = scmp.eq.s32.totalorder %s15, 0
    %p144 = por %p142, %p143
    %p145 = scmp.ne.s32.totalorder %s137, %s139
    %p146 = scmp.eq.s32.totalorder %s20, 7
    %p147 = por %p145, %p146
    %p148 = scmp.ne.s32.totalorder %s139, %s140
    %p149 = scmp.eq.s32.totalorder %s20, 0
    %p150 = por %p148, %p149
    %p151 = scmp.ne.s32.totalorder %s139, %s140
    %p152 = scmp.eq.s32.totalorder %s21, 7
    %p153 = por %p151, %p152
    %p155 = scmp.ne.s32.totalorder %s140, %s154
    %p156 = scmp.eq.s32.totalorder %s21, 0
    %p157 = por %p155, %p156
    %s159 = sadd.s32 %s158, 1
    %p162 = scmp.eq.s32.totalorder %s15, 7
    %p163 = scmp.ne.s32.totalorder %s158, %s160
    %p164 = scmp.eq.s32.totalorder %s15, 0
    %p165 = por %p163, %p164
    %p166 = scmp.ne.s32.totalorder %s158, %s160
    %p167 = scmp.eq.s32.totalorder %s20, 7
    %p168 = por %p166, %p167
    %p169 = scmp.ne.s32.totalorder %s160, %s161
    %p170 = scmp.eq.s32.totalorder %s20, 0
    %p171 = por %p169, %p170
    %p172 = scmp.ne.s32.totalorder %s160, %s161
    %p173 = scmp.eq.s32.totalorder %s21, 7
    %p174 = por %p172, %p173
    %p176 = scmp.ne.s32.totalorder %s161, %s175
    %p177 = scmp.eq.s32.totalorder %s21, 0
    %p178 = por %p176, %p177
    %s180 = sadd.s32 %s179, 1
    %p183 = scmp.eq.s32.totalorder %s15, 7
    %p184 = scmp.ne.s32.totalorder %s179, %s181
    %p185 = scmp.eq.s32.totalorder %s15, 0
    %p186 = por %p184, %p185
    %p187 = scmp.ne.s32.totalorder %s179, %s181
    %p188 = scmp.eq.s32.totalorder %s20, 7
    %p189 = por %p187, %p188
    %p190 = scmp.ne.s32.totalorder %s181, %s182
    %p191 = scmp.eq.s32.totalorder %s20, 0
    %p192 = por %p190, %p191
    %p193 = scmp.ne.s32.totalorder %s181, %s182
    %p194 = scmp.eq.s32.totalorder %s21, 7
    %p195 = por %p193, %p194
    %p197 = scmp.ne.s32.totalorder %s182, %s196
    %p198 = scmp.eq.s32.totalorder %s21, 0
    %p199 = por %p197, %p198
    %s200 = smul.u32 %s22, 4
    %s201 = sadd.s32 %s200, %s23
    %s202 = smul.u32 %s34, 4
    %s203 = sadd.s32 %s202, %s30
    %s204 = ssub.s32 %s201, %s203
    %p205 = scmp.eq.s32.totalorder %s204, 0
    %s207 = sadd.s32 %s206, 1
    %s208 = scalar_select %p205, %s206, %s207
    %p211 = pneg %p205
    %p212 = scmp.eq.s32.totalorder %s15, 7
    %p213 = por %p211, %p212
    %p214 = scmp.ne.s32.totalorder %s206, %s209
    %p215 = scmp.eq.s32.totalorder %s15, 0
    %p216 = por %p214, %p215
    %p217 = scmp.ne.s32.totalorder %s206, %s209
    %p218 = scmp.eq.s32.totalorder %s20, 7
    %p219 = por %p217, %p218
    %p220 = scmp.ne.s32.totalorder %s209, %s210
    %p221 = scmp.eq.s32.totalorder %s20, 0
    %p222 = por %p220, %p221
    %p223 = scmp.ne.s32.totalorder %s209, %s210
    %p224 = scmp.eq.s32.totalorder %s21, 7
    %p225 = por %p223, %p224
    %p227 = scmp.ne.s32.totalorder %s210, %s226
    %p228 = scmp.eq.s32.totalorder %s21, 0
    %p229 = por %p227, %p228
    %s230 = smul.u32 %s22, 4
    %s231 = sadd.s32 %s230, %s23
    %s232 = smul.u32 %s34, 4
    %s233 = sadd.s32 %s232, %s30
    %s234 = ssub.s32 %s231, %s233
    %p235 = scmp.eq.s32.totalorder %s234, 0
    %s237 = sadd.s32 %s236, 1
    %s238 = scalar_select %p235, %s236, %s237
    %p241 = pneg %p235
    %p242 = scmp.eq.s32.totalorder %s15, 7
    %p243 = por %p241, %p242
    %p244 = scmp.ne.s32.totalorder %s236, %s239
    %p245 = scmp.eq.s32.totalorder %s15, 0
    %p246 = por %p244, %p245
    %p247 = scmp.ne.s32.totalorder %s236, %s239
    %p248 = scmp.eq.s32.totalorder %s20, 7
    %p249 = por %p247, %p248
    %p250 = scmp.ne.s32.totalorder %s239, %s240
    %p251 = scmp.eq.s32.totalorder %s20, 0
    %p252 = por %p250, %p251
    %p253 = scmp.ne.s32.totalorder %s239, %s240
    %p254 = scmp.eq.s32.totalorder %s21, 7
    %p255 = por %p253, %p254
    %p257 = scmp.ne.s32.totalorder %s240, %s256
    %p258 = scmp.eq.s32.totalorder %s21, 0
    %p259 = por %p257, %p258
    %s260 = smul.u32 %s22, 4
    %s261 = sadd.s32 %s260, %s23
    %s262 = smul.u32 %s34, 4
    %s263 = sadd.s32 %s262, %s30
    %s264 = ssub.s32 %s261, %s263
    %p265 = scmp.eq.s32.totalorder %s264, 0
    %s267 = sadd.s32 %s266, 1
    %s268 = scalar_select %p265, %s266, %s267
    %p271 = pneg %p265
    %p272 = scmp.eq.s32.totalorder %s15, 7
    %p273 = por %p271, %p272
    %p274 = scmp.ne.s32.totalorder %s266, %s269
    %p275 = scmp.eq.s32.totalorder %s15, 0
    %p276 = por %p274, %p275
    %p277 = scmp.ne.s32.totalorder %s266, %s269
    %p278 = scmp.eq.s32.totalorder %s20, 7
    %p279 = por %p277, %p278
    %p280 = scmp.ne.s32.totalorder %s269, %s270
    %p281 = scmp.eq.s32.totalorder %s20, 0
    %p282 = por %p280, %p281
    %p283 = scmp.ne.s32.totalorder %s269, %s270
    %p284 = scmp.eq.s32.totalorder %s21, 7
    %p285 = por %p283, %p284
    %p287 = scmp.ne.s32.totalorder %s270, %s286
    %p288 = scmp.eq.s32.totalorder %s21, 0
    %p289 = por %p287, %p288
    %p290 = scmp.le.s32.totalorder 1, %s15
    %p291 = scmp.lt.s32.totalorder %s15, 9
    %p292 = pnand %p290, %p291
    %p293 = pneg %p292
    // Predicated region
    $region9: #{basic_block_3d_forward.4} parent=5 // pred_check
      _
    $region10: #{basic_block_3d_forward.4} parent=5 // pred_check_branch
      %295 = sbr.rel (%p292) target = $region12
    $region11: #{basic_block_3d_forward.4} parent=5 // pred_region
      %s296 = ssub.s32 %s15, 1
      // Predicated region
      $region13: #{basic_block_3d_forward.4} parent=11 // pred_check
        %p297 = pneg %p150
      $region14: #{basic_block_3d_forward.4} parent=11 // pred_check_branch
        %299 = sbr.rel (%p297) target = $region16
      $region15: #{basic_block_3d_forward.4} parent=11 // pred_region
        _
      $region16: #{basic_block_3d_forward.4} parent=11 // pred_fallthru
        _
      // Predicated region
      $region17: #{basic_block_3d_forward.4} parent=11 // pred_check
        %p300 = pneg %p171
      $region18: #{basic_block_3d_forward.4} parent=11 // pred_check_branch
        %302 = sbr.rel (%p300) target = $region20
      $region19: #{basic_block_3d_forward.4} parent=11 // pred_region
        _
      $region20: #{basic_block_3d_forward.4} parent=11 // pred_fallthru
        _
      // Predicated region
      $region21: #{basic_block_3d_forward.4} parent=11 // pred_check
        %p303 = pneg %p192
      $region22: #{basic_block_3d_forward.4} parent=11 // pred_check_branch
        %305 = sbr.rel (%p303) target = $region24
      $region23: #{basic_block_3d_forward.4} parent=11 // pred_region
        _
      $region24: #{basic_block_3d_forward.4} parent=11 // pred_fallthru
        _
    $region12: #{basic_block_3d_forward.4} parent=5 // pred_fallthru
      _
    %p306 = scmp.lt.s32.totalorder %s15, 8
    // Predicated region
    $region25: #{basic_block_3d_forward.4} parent=5 // pred_check
      %p307 = pneg %p306
    $region26: #{basic_block_3d_forward.4} parent=5 // pred_check_branch
      %309 = sbr.rel (%p307) target = $region28
    $region27: #{basic_block_3d_forward.4} parent=5 // pred_region
      // Predicated region
      $region29: #{basic_block_3d_forward.4} parent=27 // pred_check
        %p310 = pneg %p57
      $region30: #{basic_block_3d_forward.4} parent=27 // pred_check_branch
        %312 = sbr.rel (%p310) target = $region32
      $region31: #{basic_block_3d_forward.4} parent=27 // pred_region
        %s313 = smul.u32 %s22, 4
        %s314 = ssub.s32 %s23, 1
        %p315 = scmp.gt.s32.totalorder %s314, 0
        %s316 = scalar_select %p315, %s314, 0
        %s317 = sadd.s32 %s313, %s316
        %p318 = scmp.lt.s32.totalorder %s317, 7
        %s319 = scalar_select %p318, %s317, 7
        %s320 = smul.addr %s319, 8
        %s321 = smul.addr %s320, 4
        %s322 = scalar_lea.vmem %s0, %s321
        %s323 = smul.u32 %s22, 4
        %s324 = ssub.s32 %s23, 1
        %p325 = scmp.gt.s32.totalorder %s324, 0
        %s326 = scalar_select %p325, %s324, 0
        %s327 = sadd.s32 %s323, %s326
      $region32: #{basic_block_3d_forward.4} parent=27 // pred_fallthru
        _
      // Predicated region
      $region33: #{basic_block_3d_forward.4} parent=27 // pred_check
        %p328 = pneg %p87
      $region34: #{basic_block_3d_forward.4} parent=27 // pred_check_branch
        %330 = sbr.rel (%p328) target = $region36
      $region35: #{basic_block_3d_forward.4} parent=27 // pred_region
        %s331 = smul.u32 %s22, 4
        %s332 = sadd.s32 %s331, %s23
        %p333 = scmp.lt.s32.totalorder %s332, 7
        %s334 = scalar_select %p333, %s332, 7
        %s335 = smul.addr %s334, 8
        %s336 = smul.addr %s335, 4
        %s337 = scalar_lea.vmem %s1, %s336
        %s338 = smul.u32 %s22, 4
        %s339 = sadd.s32 %s338, %s23
      $region36: #{basic_block_3d_forward.4} parent=27 // pred_fallthru
        _
      // Predicated region
      $region37: #{basic_block_3d_forward.4} parent=27 // pred_check
        %p340 = pneg %p123
      $region38: #{basic_block_3d_forward.4} parent=27 // pred_check_branch
        %342 = sbr.rel (%p340) target = $region40
      $region39: #{basic_block_3d_forward.4} parent=27 // pred_region
        %s343 = smul.u32 %s22, 4
        %s344 = sadd.s32 %s23, 1
        %p345 = scmp.lt.s32.totalorder %s344, 3
        %s346 = scalar_select %p345, %s344, 3
        %s347 = sadd.s32 %s343, %s346
        %p348 = scmp.lt.s32.totalorder %s347, 7
        %s349 = scalar_select %p348, %s347, 7
        %s350 = smul.addr %s349, 8
        %s351 = smul.addr %s350, 4
        %s352 = scalar_lea.vmem %s2, %s351
        %s353 = smul.u32 %s22, 4
        %s354 = sadd.s32 %s23, 1
        %p355 = scmp.lt.s32.totalorder %s354, 3
        %s356 = scalar_select %p355, %s354, 3
        %s357 = sadd.s32 %s353, %s356
      $region40: #{basic_block_3d_forward.4} parent=27 // pred_fallthru
        _
    $region28: #{basic_block_3d_forward.4} parent=5 // pred_fallthru
      _
    %p358 = scmp.le.s32.totalorder 1, %s15
    %p359 = scmp.lt.s32.totalorder %s15, 9
    %p360 = pnand %p358, %p359
    %p361 = pneg %p360
    // Predicated region
    $region41: #{basic_block_3d_forward.4} parent=5 // pred_check
      _
    $region42: #{basic_block_3d_forward.4} parent=5 // pred_check_branch
      %363 = sbr.rel (%p360) target = $region44
    $region43: #{basic_block_3d_forward.4} parent=5 // pred_region
      %s364 = ssub.s32 %s15, 1
      %s365 = smul.u32 %s24, 4
      %s366 = ssub.s32 %s25, 1
      %p367 = scmp.gt.s32.totalorder %s366, 0
      %s368 = scalar_select %p367, %s366, 0
      %s369 = sadd.s32 %s365, %s368
      %p370 = scmp.lt.s32.totalorder %s369, 7
      %s371 = scalar_select %p370, %s369, 7
      %s372 = smul.addr %s371, 8
      %s373 = smul.addr %s372, 4
      %s374 = scalar_lea.vmem %s0, %s373
      %p375 = pneg %p63
      %p376 = pneg %p60
      %s377 = smul.u32 %s24, 4
      %s378 = sadd.s32 %s377, %s25
      %p379 = scmp.lt.s32.totalorder %s378, 7
      %s380 = scalar_select %p379, %s378, 7
      %s381 = smul.addr %s380, 8
      %s382 = smul.addr %s381, 4
      %s383 = scalar_lea.vmem %s1, %s382
      %p384 = pneg %p93
      %p385 = pneg %p90
      %s386 = smul.u32 %s24, 4
      %s387 = sadd.s32 %s25, 1
      %p388 = scmp.lt.s32.totalorder %s387, 3
      %s389 = scalar_select %p388, %s387, 3
      %s390 = sadd.s32 %s386, %s389
      %p391 = scmp.lt.s32.totalorder %s390, 7
      %s392 = scalar_select %p391, %s390, 7
      %s393 = smul.addr %s392, 8
      %s394 = smul.addr %s393, 4
      %s395 = scalar_lea.vmem %s2, %s394
      %p396 = pneg %p129
      %p397 = pneg %p126
      %p398 = pneg %p150
      %p399 = pneg %p147
      %p400 = pneg %p171
      %p401 = pneg %p168
      %p402 = pneg %p192
      %p403 = pneg %p189
      %p404 = pneg %p222
      %p405 = pneg %p219
      %s406 = smul.u32 %s24, 4
      %s407 = sadd.s32 %s406, %s25
      %p408 = scmp.lt.s32.totalorder %s407, 7
      %s409 = scalar_select %p408, %s407, 7
      %s410 = smul.addr %s409, 8
      %s411 = smul.addr %s410, 8
      %s412 = scalar_lea.vmem %s6, %s411
      %p413 = pneg %p252
      %p414 = pneg %p249
      %s415 = smul.u32 %s24, 4
      %s416 = sadd.s32 %s415, %s25
      %p417 = scmp.lt.s32.totalorder %s416, 7
      %s418 = scalar_select %p417, %s416, 7
      %s419 = scalar_lea.vmem %s7, %s418
      %p420 = pneg %p282
      %p421 = pneg %p279
      %s422 = smul.u32 %s24, 4
      %s423 = sadd.s32 %s422, %s25
      %p424 = scmp.lt.s32.totalorder %s423, 7
      %s425 = scalar_select %p424, %s423, 7
      %s426 = scalar_lea.vmem %s8, %s425
      %s427 = smul.u32 %s24, 4
      %s428 = ssub.s32 %s25, 1
      %p429 = scmp.gt.s32.totalorder %s428, 0
      %s430 = scalar_select %p429, %s428, 0
      %s431 = sadd.s32 %s427, %s430
      %p432 = scmp.lt.s32.totalorder %s431, 7
      %s433 = scalar_select %p432, %s431, 7
      %s434 = smul.addr %s433, 8
      %s435 = smul.addr %s434, 4
      %s436 = scalar_lea.vmem %s0, %s435
      %s437 = smul.u32 %s24, 4
      %s438 = ssub.s32 %s25, 1
      %p439 = scmp.gt.s32.totalorder %s438, 0
      %s440 = scalar_select %p439, %s438, 0
      %s441 = sadd.s32 %s437, %s440
      %s442 = smul.u32 %s24, 4
      %s443 = sadd.s32 %s442, %s25
      %p444 = scmp.lt.s32.totalorder %s443, 7
      %s445 = scalar_select %p444, %s443, 7
      %s446 = smul.addr %s445, 8
      %s447 = smul.addr %s446, 4
      %s448 = scalar_lea.vmem %s1, %s447
      %s449 = smul.u32 %s24, 4
      %s450 = sadd.s32 %s449, %s25
      %s451 = smul.u32 %s24, 4
      %s452 = sadd.s32 %s25, 1
      %p453 = scmp.lt.s32.totalorder %s452, 3
      %s454 = scalar_select %p453, %s452, 3
      %s455 = sadd.s32 %s451, %s454
      %p456 = scmp.lt.s32.totalorder %s455, 7
      %s457 = scalar_select %p456, %s455, 7
      %s458 = smul.addr %s457, 8
      %s459 = smul.addr %s458, 4
      %s460 = scalar_lea.vmem %s2, %s459
      %s461 = smul.u32 %s24, 4
      %s462 = sadd.s32 %s25, 1
      %p463 = scmp.lt.s32.totalorder %s462, 3
      %s464 = scalar_select %p463, %s462, 3
      %s465 = sadd.s32 %s461, %s464
      %s466 = smul.u32 %s24, 4
      %s467 = sadd.s32 %s466, %s25
      %p468 = scmp.lt.s32.totalorder %s467, 7
      %s469 = scalar_select %p468, %s467, 7
      %s470 = smul.addr %s469, 8
      %s471 = smul.addr %s470, 8
      %s472 = scalar_lea.vmem %s6, %s471
      %s473 = smul.u32 %s24, 4
      %s474 = sadd.s32 %s473, %s25
      %s475 = smul.u32 %s24, 4
      %s476 = sadd.s32 %s475, %s25
      %p477 = scmp.lt.s32.totalorder %s476, 7
      %s478 = scalar_select %p477, %s476, 7
      %s479 = scalar_lea.vmem %s7, %s478
      %s480 = smul.u32 %s24, 4
      %s481 = sadd.s32 %s480, %s25
      %s482 = smul.u32 %s24, 4
      %s483 = sadd.s32 %s482, %s25
      %p484 = scmp.lt.s32.totalorder %s483, 7
      %s485 = scalar_select %p484, %s483, 7
      %s486 = scalar_lea.vmem %s8, %s485
      %s487 = smul.u32 %s24, 4
      %s488 = sadd.s32 %s487, %s25
      %490 = vst [vmem:[#allocation3] sm:$0xff] 0.0
      %491 = vst [vmem:[#allocation3 + $0x8] sm:$0x3] 0.0
      %s492 = scalar_lea.vmem [#allocation3], 144
      %493 = vst [vmem:[%s492] sm:$0xff] 0.0
      %494 = vst [vmem:[%s492 + $0x8] sm:$0x3] 0.0
      %495 = vst [vmem:[#allocation3] sm:$0x1] 0.0
      %496 = vst [vmem:[#allocation3 + $0x10] sm:$0x1] 0.0
      %497 = vst [vmem:[#allocation3 + $0x20] sm:$0x1] 0.0
      %498 = vst [vmem:[#allocation3 + $0x30] sm:$0x1] 0.0
      %499 = vst [vmem:[#allocation3 + $0x40] sm:$0x1] 0.0
      %500 = vst [vmem:[#allocation3 + $0x50] sm:$0x1] 0.0
      %501 = vst [vmem:[#allocation3 + $0x60] sm:$0x1] 0.0
      %502 = vst [vmem:[#allocation3 + $0x70] sm:$0x1] 0.0
      %503 = vst [vmem:[#allocation3 + $0x80] sm:$0x1] 0.0
      %504 = vst [vmem:[#allocation3 + $0x90] sm:$0x1] 0.0
      %505 = vst [vmem:[#allocation3 + $0x9] sm:$0x1] 0.0
      %506 = vst [vmem:[#allocation3 + $0x19] sm:$0x1] 0.0
      %507 = vst [vmem:[#allocation3 + $0x29] sm:$0x1] 0.0
      %508 = vst [vmem:[#allocation3 + $0x39] sm:$0x1] 0.0
      %509 = vst [vmem:[#allocation3 + $0x49] sm:$0x1] 0.0
      %510 = vst [vmem:[#allocation3 + $0x59] sm:$0x1] 0.0
      %511 = vst [vmem:[#allocation3 + $0x69] sm:$0x1] 0.0
      %512 = vst [vmem:[#allocation3 + $0x79] sm:$0x1] 0.0
      %513 = vst [vmem:[#allocation3 + $0x89] sm:$0x1] 0.0
      %514 = vst [vmem:[#allocation3 + $0x99] sm:$0x1] 0.0
      %v515 = vld [vmem:[%s448] sm:$0xf]
      %v516 = vld [vmem:[%s448 + $0x4] sm:$0xf]
      %v517 = vld [vmem:[%s448 + $0x8] sm:$0xf]
      %v518 = vld [vmem:[%s448 + $0xc] sm:$0xf]
      %v519 = vld [vmem:[%s448 + $0x10] sm:$0xf]
      %v520 = vld [vmem:[%s448 + $0x14] sm:$0xf]
      %v521 = vld [vmem:[%s448 + $0x18] sm:$0xf]
      %v522 = vld [vmem:[%s448 + $0x1c] sm:$0xf]
      %v523 = vunpack.c.l.bf16 %v515
      %v524 = vunpack.c.l.bf16 %v516
      %v525 = vunpack.c.l.bf16 %v517
      %v526 = vunpack.c.l.bf16 %v518
      %v527 = vunpack.c.l.bf16 %v519
      %v528 = vunpack.c.l.bf16 %v520
      %v529 = vunpack.c.l.bf16 %v521
      %v530 = vunpack.c.l.bf16 %v522
      %v531 = vld [vmem:[%s4] sm:$0x1]
      %v533 = vlaneseq
      %v534 = vshrl.u32 %v533, 7
      %v535 = vsub.s32 0, %v534
      %v536 = vrot.slane %v531, %v535
      %v538 = vmul.f32 %v523, %v536
      %v539 = vmul.f32 %v524, %v536
      %v540 = vmul.f32 %v525, %v536
      %v541 = vmul.f32 %v526, %v536
      %v542 = vmul.f32 %v527, %v536
      %v543 = vmul.f32 %v528, %v536
      %v544 = vmul.f32 %v529, %v536
      %v545 = vmul.f32 %v530, %v536
      %v546 = vld [vmem:[%s5] sm:$0x1]
      %v548 = vlaneseq
      %v549 = vshrl.u32 %v548, 7
      %v550 = vsub.s32 0, %v549
      %v551 = vrot.slane %v546, %v550
      %v553 = vadd.f32 %v538, %v551
      %v554 = vadd.f32 %v539, %v551
      %v555 = vadd.f32 %v540, %v551
      %v556 = vadd.f32 %v541, %v551
      %v557 = vadd.f32 %v542, %v551
      %v558 = vadd.f32 %v543, %v551
      %v559 = vadd.f32 %v544, %v551
      %v560 = vadd.f32 %v545, %v551
      %v561 = vmax.f32 %v553, 0.0
      %v562 = vmax.f32 %v554, 0.0
      %v563 = vmax.f32 %v555, 0.0
      %v564 = vmax.f32 %v556, 0.0
      %v565 = vmax.f32 %v557, 0.0
      %v566 = vmax.f32 %v558, 0.0
      %v567 = vmax.f32 %v559, 0.0
      %v568 = vmax.f32 %v560, 0.0
      %s569 = scalar_lea.vmem [#allocation3], 16
      %570 = vst [vmem:[%s569 + $0x1] sm:$0xff] %v561
      %571 = vst [vmem:[%s569 + $0x11] sm:$0xff] %v562
      %572 = vst [vmem:[%s569 + $0x21] sm:$0xff] %v563
      %573 = vst [vmem:[%s569 + $0x31] sm:$0xff] %v564
      %574 = vst [vmem:[%s569 + $0x41] sm:$0xff] %v565
      %575 = vst [vmem:[%s569 + $0x51] sm:$0xff] %v566
      %576 = vst [vmem:[%s569 + $0x61] sm:$0xff] %v567
      %577 = vst [vmem:[%s569 + $0x71] sm:$0xff] %v568
      %v578 = vld [vmem:[#allocation3] sm:$0xff]
      %v579 = vld [vmem:[#allocation3 + $0x10] sm:$0xff]
      %v580 = vld [vmem:[#allocation3 + $0x20] sm:$0xff]
      %v581 = vld [vmem:[#allocation3 + $0x30] sm:$0xff]
      %v582 = vld [vmem:[#allocation3 + $0x40] sm:$0xff]
      %v583 = vld [vmem:[#allocation3 + $0x50] sm:$0xff]
      %v584 = vld [vmem:[#allocation3 + $0x60] sm:$0xff]
      %v585 = vld [vmem:[#allocation3 + $0x70] sm:$0xff]
      %v586 = vpack.c.bf16 %v578, %v578
      %v587 = vpack.c.bf16 %v579, %v579
      %v588 = vpack.c.bf16 %v580, %v580
      %v589 = vpack.c.bf16 %v581, %v581
      %v590 = vpack.c.bf16 %v582, %v582
      %v591 = vpack.c.bf16 %v583, %v583
      %v592 = vpack.c.bf16 %v584, %v584
      %v593 = vpack.c.bf16 %v585, %v585
      %594 = vst [vmem:[#allocation4] sm:$0xf] %v586
      %595 = vst [vmem:[#allocation4 + $0x24] sm:$0xf] %v587
      %596 = vst [vmem:[#allocation4 + $0x48] sm:$0xf] %v588
      %597 = vst [vmem:[#allocation4 + $0x6c] sm:$0xf] %v589
      %598 = vst [vmem:[#allocation4 + $0x90] sm:$0xf] %v590
      %599 = vst [vmem:[#allocation4 + $0xb4] sm:$0xf] %v591
      %600 = vst [vmem:[#allocation4 + $0xd8] sm:$0xf] %v592
      %601 = vst [vmem:[#allocation4 + $0xfc] sm:$0xf] %v593
      %v602 = vld [vmem:[#allocation3 + $0x1] sm:$0xff]
      %v603 = vld [vmem:[#allocation3 + $0x11] sm:$0xff]
      %v604 = vld [vmem:[#allocation3 + $0x21] sm:$0xff]
      %v605 = vld [vmem:[#allocation3 + $0x31] sm:$0xff]
      %v606 = vld [vmem:[#allocation3 + $0x41] sm:$0xff]
      %v607 = vld [vmem:[#allocation3 + $0x51] sm:$0xff]
      %v608 = vld [vmem:[#allocation3 + $0x61] sm:$0xff]
      %v609 = vld [vmem:[#allocation3 + $0x71] sm:$0xff]
      %v610 = vpack.c.bf16 %v602, %v602
      %v611 = vpack.c.bf16 %v603, %v603
      %v612 = vpack.c.bf16 %v604, %v604
      %v613 = vpack.c.bf16 %v605, %v605
      %v614 = vpack.c.bf16 %v606, %v606
      %v615 = vpack.c.bf16 %v607, %v607
      %v616 = vpack.c.bf16 %v608, %v608
      %v617 = vpack.c.bf16 %v609, %v609
      %618 = vst [vmem:[#allocation4 + $0x4] sm:$0xf] %v610
      %619 = vst [vmem:[#allocation4 + $0x28] sm:$0xf] %v611
      %620 = vst [vmem:[#allocation4 + $0x4c] sm:$0xf] %v612
      %621 = vst [vmem:[#allocation4 + $0x70] sm:$0xf] %v613
      %622 = vst [vmem:[#allocation4 + $0x94] sm:$0xf] %v614
      %623 = vst [vmem:[#allocation4 + $0xb8] sm:$0xf] %v615
      %624 = vst [vmem:[#allocation4 + $0xdc] sm:$0xf] %v616
      %625 = vst [vmem:[#allocation4 + $0x100] sm:$0xf] %v617
      %v626 = vld [vmem:[#allocation3 + $0x2] sm:$0xff]
      %v627 = vld [vmem:[#allocation3 + $0x12] sm:$0xff]
      %v628 = vld [vmem:[#allocation3 + $0x22] sm:$0xff]
      %v629 = vld [vmem:[#allocation3 + $0x32] sm:$0xff]
      %v630 = vld [vmem:[#allocation3 + $0x42] sm:$0xff]
      %v631 = vld [vmem:[#allocation3 + $0x52] sm:$0xff]
      %v632 = vld [vmem:[#allocation3 + $0x62] sm:$0xff]
      %v633 = vld [vmem:[#allocation3 + $0x72] sm:$0xff]
      %v634 = vpack.c.bf16 %v626, %v626
      %v635 = vpack.c.bf16 %v627, %v627
      %v636 = vpack.c.bf16 %v628, %v628
      %v637 = vpack.c.bf16 %v629, %v629
      %v638 = vpack.c.bf16 %v630, %v630
      %v639 = vpack.c.bf16 %v631, %v631
      %v640 = vpack.c.bf16 %v632, %v632
      %v641 = vpack.c.bf16 %v633, %v633
      %642 = vst [vmem:[#allocation4 + $0x8] sm:$0xf] %v634
      %643 = vst [vmem:[#allocation4 + $0x2c] sm:$0xf] %v635
      %644 = vst [vmem:[#allocation4 + $0x50] sm:$0xf] %v636
      %645 = vst [vmem:[#allocation4 + $0x74] sm:$0xf] %v637
      %646 = vst [vmem:[#allocation4 + $0x98] sm:$0xf] %v638
      %647 = vst [vmem:[#allocation4 + $0xbc] sm:$0xf] %v639
      %648 = vst [vmem:[#allocation4 + $0xe0] sm:$0xf] %v640
      %649 = vst [vmem:[#allocation4 + $0x104] sm:$0xf] %v641
      %v650 = vld [vmem:[%s569] sm:$0xff]
      %v651 = vld [vmem:[%s569 + $0x10] sm:$0xff]
      %v652 = vld [vmem:[%s569 + $0x20] sm:$0xff]
      %v653 = vld [vmem:[%s569 + $0x30] sm:$0xff]
      %v654 = vld [vmem:[%s569 + $0x40] sm:$0xff]
      %v655 = vld [vmem:[%s569 + $0x50] sm:$0xff]
      %v656 = vld [vmem:[%s569 + $0x60] sm:$0xff]
      %v657 = vld [vmem:[%s569 + $0x70] sm:$0xff]
      %v658 = vpack.c.bf16 %v650, %v650
      %v659 = vpack.c.bf16 %v651, %v651
      %v660 = vpack.c.bf16 %v652, %v652
      %v661 = vpack.c.bf16 %v653, %v653
      %v662 = vpack.c.bf16 %v654, %v654
      %v663 = vpack.c.bf16 %v655, %v655
      %v664 = vpack.c.bf16 %v656, %v656
      %v665 = vpack.c.bf16 %v657, %v657
      %666 = vst [vmem:[#allocation4 + $0xc] sm:$0xf] %v658
      %667 = vst [vmem:[#allocation4 + $0x30] sm:$0xf] %v659
      %668 = vst [vmem:[#allocation4 + $0x54] sm:$0xf] %v660
      %669 = vst [vmem:[#allocation4 + $0x78] sm:$0xf] %v661
      %670 = vst [vmem:[#allocation4 + $0x9c] sm:$0xf] %v662
      %671 = vst [vmem:[#allocation4 + $0xc0] sm:$0xf] %v663
      %672 = vst [vmem:[#allocation4 + $0xe4] sm:$0xf] %v664
      %673 = vst [vmem:[#allocation4 + $0x108] sm:$0xf] %v665
      %v674 = vld [vmem:[%s569 + $0x1] sm:$0xff]
      %v675 = vld [vmem:[%s569 + $0x11] sm:$0xff]
      %v676 = vld [vmem:[%s569 + $0x21] sm:$0xff]
      %v677 = vld [vmem:[%s569 + $0x31] sm:$0xff]
      %v678 = vld [vmem:[%s569 + $0x41] sm:$0xff]
      %v679 = vld [vmem:[%s569 + $0x51] sm:$0xff]
      %v680 = vld [vmem:[%s569 + $0x61] sm:$0xff]
      %v681 = vld [vmem:[%s569 + $0x71] sm:$0xff]
      %v682 = vpack.c.bf16 %v674, %v674
      %v683 = vpack.c.bf16 %v675, %v675
      %v684 = vpack.c.bf16 %v676, %v676
      %v685 = vpack.c.bf16 %v677, %v677
      %v686 = vpack.c.bf16 %v678, %v678
      %v687 = vpack.c.bf16 %v679, %v679
      %v688 = vpack.c.bf16 %v680, %v680
      %v689 = vpack.c.bf16 %v681, %v681
      %690 = vst [vmem:[#allocation4 + $0x10] sm:$0xf] %v682
      %691 = vst [vmem:[#allocation4 + $0x34] sm:$0xf] %v683
      %692 = vst [vmem:[#allocation4 + $0x58] sm:$0xf] %v684
      %693 = vst [vmem:[#allocation4 + $0x7c] sm:$0xf] %v685
      %694 = vst [vmem:[#allocation4 + $0xa0] sm:$0xf] %v686
      %695 = vst [vmem:[#allocation4 + $0xc4] sm:$0xf] %v687
      %696 = vst [vmem:[#allocation4 + $0xe8] sm:$0xf] %v688
      %697 = vst [vmem:[#allocation4 + $0x10c] sm:$0xf] %v689
      %v698 = vld [vmem:[%s569 + $0x2] sm:$0xff]
      %v699 = vld [vmem:[%s569 + $0x12] sm:$0xff]
      %v700 = vld [vmem:[%s569 + $0x22] sm:$0xff]
      %v701 = vld [vmem:[%s569 + $0x32] sm:$0xff]
      %v702 = vld [vmem:[%s569 + $0x42] sm:$0xff]
      %v703 = vld [vmem:[%s569 + $0x52] sm:$0xff]
      %v704 = vld [vmem:[%s569 + $0x62] sm:$0xff]
      %v705 = vld [vmem:[%s569 + $0x72] sm:$0xff]
      %v706 = vpack.c.bf16 %v698, %v698
      %v707 = vpack.c.bf16 %v699, %v699
      %v708 = vpack.c.bf16 %v700, %v700
      %v709 = vpack.c.bf16 %v701, %v701
      %v710 = vpack.c.bf16 %v702, %v702
      %v711 = vpack.c.bf16 %v703, %v703
      %v712 = vpack.c.bf16 %v704, %v704
      %v713 = vpack.c.bf16 %v705, %v705
      %714 = vst [vmem:[#allocation4 + $0x14] sm:$0xf] %v706
      %715 = vst [vmem:[#allocation4 + $0x38] sm:$0xf] %v707
      %716 = vst [vmem:[#allocation4 + $0x5c] sm:$0xf] %v708
      %717 = vst [vmem:[#allocation4 + $0x80] sm:$0xf] %v709
      %718 = vst [vmem:[#allocation4 + $0xa4] sm:$0xf] %v710
      %719 = vst [vmem:[#allocation4 + $0xc8] sm:$0xf] %v711
      %720 = vst [vmem:[#allocation4 + $0xec] sm:$0xf] %v712
      %721 = vst [vmem:[#allocation4 + $0x110] sm:$0xf] %v713
      %s722 = scalar_lea.vmem [#allocation3], 32
      %v723 = vld [vmem:[%s722] sm:$0xff]
      %v724 = vld [vmem:[%s722 + $0x10] sm:$0xff]
      %v725 = vld [vmem:[%s722 + $0x20] sm:$0xff]
      %v726 = vld [vmem:[%s722 + $0x30] sm:$0xff]
      %v727 = vld [vmem:[%s722 + $0x40] sm:$0xff]
      %v728 = vld [vmem:[%s722 + $0x50] sm:$0xff]
      %v729 = vld [vmem:[%s722 + $0x60] sm:$0xff]
      %v730 = vld [vmem:[%s722 + $0x70] sm:$0xff]
      %v731 = vpack.c.bf16 %v723, %v723
      %v732 = vpack.c.bf16 %v724, %v724
      %v733 = vpack.c.bf16 %v725, %v725
      %v734 = vpack.c.bf16 %v726, %v726
      %v735 = vpack.c.bf16 %v727, %v727
      %v736 = vpack.c.bf16 %v728, %v728
      %v737 = vpack.c.bf16 %v729, %v729
      %v738 = vpack.c.bf16 %v730, %v730
      %739 = vst [vmem:[#allocation4 + $0x18] sm:$0xf] %v731
      %740 = vst [vmem:[#allocation4 + $0x3c] sm:$0xf] %v732
      %741 = vst [vmem:[#allocation4 + $0x60] sm:$0xf] %v733
      %742 = vst [vmem:[#allocation4 + $0x84] sm:$0xf] %v734
      %743 = vst [vmem:[#allocation4 + $0xa8] sm:$0xf] %v735
      %744 = vst [vmem:[#allocation4 + $0xcc] sm:$0xf] %v736
      %745 = vst [vmem:[#allocation4 + $0xf0] sm:$0xf] %v737
      %746 = vst [vmem:[#allocation4 + $0x114] sm:$0xf] %v738
      %v747 = vld [vmem:[%s722 + $0x1] sm:$0xff]
      %v748 = vld [vmem:[%s722 + $0x11] sm:$0xff]
      %v749 = vld [vmem:[%s722 + $0x21] sm:$0xff]
      %v750 = vld [vmem:[%s722 + $0x31] sm:$0xff]
      %v751 = vld [vmem:[%s722 + $0x41] sm:$0xff]
      %v752 = vld [vmem:[%s722 + $0x51] sm:$0xff]
      %v753 = vld [vmem:[%s722 + $0x61] sm:$0xff]
      %v754 = vld [vmem:[%s722 + $0x71] sm:$0xff]
      %v755 = vpack.c.bf16 %v747, %v747
      %v756 = vpack.c.bf16 %v748, %v748
      %v757 = vpack.c.bf16 %v749, %v749
      %v758 = vpack.c.bf16 %v750, %v750
      %v759 = vpack.c.bf16 %v751, %v751
      %v760 = vpack.c.bf16 %v752, %v752
      %v761 = vpack.c.bf16 %v753, %v753
      %v762 = vpack.c.bf16 %v754, %v754
      %763 = vst [vmem:[#allocation4 + $0x1c] sm:$0xf] %v755
      %764 = vst [vmem:[#allocation4 + $0x40] sm:$0xf] %v756
      %765 = vst [vmem:[#allocation4 + $0x64] sm:$0xf] %v757
      %766 = vst [vmem:[#allocation4 + $0x88] sm:$0xf] %v758
      %767 = vst [vmem:[#allocation4 + $0xac] sm:$0xf] %v759
      %768 = vst [vmem:[#allocation4 + $0xd0] sm:$0xf] %v760
      %769 = vst [vmem:[#allocation4 + $0xf4] sm:$0xf] %v761
      %770 = vst [vmem:[#allocation4 + $0x118] sm:$0xf] %v762
      %v771 = vld [vmem:[%s722 + $0x2] sm:$0xff]
      %v772 = vld [vmem:[%s722 + $0x12] sm:$0xff]
      %v773 = vld [vmem:[%s722 + $0x22] sm:$0xff]
      %v774 = vld [vmem:[%s722 + $0x32] sm:$0xff]
      %v775 = vld [vmem:[%s722 + $0x42] sm:$0xff]
      %v776 = vld [vmem:[%s722 + $0x52] sm:$0xff]
      %v777 = vld [vmem:[%s722 + $0x62] sm:$0xff]
      %v778 = vld [vmem:[%s722 + $0x72] sm:$0xff]
      %v779 = vpack.c.bf16 %v771, %v771
      %v780 = vpack.c.bf16 %v772, %v772
      %v781 = vpack.c.bf16 %v773, %v773
      %v782 = vpack.c.bf16 %v774, %v774
      %v783 = vpack.c.bf16 %v775, %v775
      %v784 = vpack.c.bf16 %v776, %v776
      %v785 = vpack.c.bf16 %v777, %v777
      %v786 = vpack.c.bf16 %v778, %v778
      %787 = vst [vmem:[#allocation4 + $0x20] sm:$0xf] %v779
      %788 = vst [vmem:[#allocation4 + $0x44] sm:$0xf] %v780
      %789 = vst [vmem:[#allocation4 + $0x68] sm:$0xf] %v781
      %790 = vst [vmem:[#allocation4 + $0x8c] sm:$0xf] %v782
      %791 = vst [vmem:[#allocation4 + $0xb0] sm:$0xf] %v783
      %792 = vst [vmem:[#allocation4 + $0xd4] sm:$0xf] %v784
      %793 = vst [vmem:[#allocation4 + $0xf8] sm:$0xf] %v785
      %794 = vst [vmem:[#allocation4 + $0x11c] sm:$0xf] %v786
      %v795 = vld [vmem:[#allocation4] sm:$0xff]
      %v796 = vld [vmem:[#allocation4 + $0x8] sm:$0xff]
      %v797 = vld [vmem:[#allocation4 + $0x10] sm:$0xff]
      %v798 = vld [vmem:[#allocation4 + $0x18] sm:$0xff]
      %v799 = vld [vmem:[#allocation4 + $0x20] sm:$0xf]
      %v800 = vld [vmem:[#allocation4 + $0x24] sm:$0xff]
      %v801 = vld [vmem:[#allocation4 + $0x2c] sm:$0xff]
      %v802 = vld [vmem:[#allocation4 + $0x34] sm:$0xff]
      %v803 = vld [vmem:[#allocation4 + $0x3c] sm:$0xff]
      %v804 = vld [vmem:[#allocation4 + $0x44] sm:$0xf]
      %v805 = vld [vmem:[#allocation4 + $0x48] sm:$0xff]
      %v806 = vld [vmem:[#allocation4 + $0x50] sm:$0xff]
      %v807 = vld [vmem:[#allocation4 + $0x58] sm:$0xff]
      %v808 = vld [vmem:[#allocation4 + $0x60] sm:$0xff]
      %v809 = vld [vmem:[#allocation4 + $0x68] sm:$0xf]
      %v810 = vld [vmem:[#allocation4 + $0x6c] sm:$0xff]
      %v811 = vld [vmem:[#allocation4 + $0x74] sm:$0xff]
      %v812 = vld [vmem:[#allocation4 + $0x7c] sm:$0xff]
      %v813 = vld [vmem:[#allocation4 + $0x84] sm:$0xff]
      %v814 = vld [vmem:[#allocation4 + $0x8c] sm:$0xf]
      %v815 = vld [vmem:[#allocation4 + $0x90] sm:$0xff]
      %v816 = vld [vmem:[#allocation4 + $0x98] sm:$0xff]
      %v817 = vld [vmem:[#allocation4 + $0xa0] sm:$0xff]
      %v818 = vld [vmem:[#allocation4 + $0xa8] sm:$0xff]
      %v819 = vld [vmem:[#allocation4 + $0xb0] sm:$0xf]
      %v820 = vld [vmem:[#allocation4 + $0xb4] sm:$0xff]
      %v821 = vld [vmem:[#allocation4 + $0xbc] sm:$0xff]
      %v822 = vld [vmem:[#allocation4 + $0xc4] sm:$0xff]
      %v823 = vld [vmem:[#allocation4 + $0xcc] sm:$0xff]
      %v824 = vld [vmem:[#allocation4 + $0xd4] sm:$0xf]
      %v825 = vld [vmem:[#allocation4 + $0xd8] sm:$0xff]
      %v826 = vld [vmem:[#allocation4 + $0xe0] sm:$0xff]
      %v827 = vld [vmem:[#allocation4 + $0xe8] sm:$0xff]
      %v828 = vld [vmem:[#allocation4 + $0xf0] sm:$0xff]
      %v829 = vld [vmem:[#allocation4 + $0xf8] sm:$0xf]
      %v830 = vld [vmem:[#allocation4 + $0xfc] sm:$0xff]
      %v831 = vld [vmem:[#allocation4 + $0x104] sm:$0xff]
      %v832 = vld [vmem:[#allocation4 + $0x10c] sm:$0xff]
      %v833 = vld [vmem:[#allocation4 + $0x114] sm:$0xff]
      %v834 = vld [vmem:[#allocation4 + $0x11c] sm:$0xf]
      %s835 = scalar_lea.vmem %s3, 576
      %v836 = vld [vmem:[%s835] sm:$0xf]
      %v837 = vld [vmem:[%s835 + $0x4] sm:$0xf]
      %v838 = vld [vmem:[%s835 + $0x8] sm:$0xf]
      %v839 = vld [vmem:[%s835 + $0xc] sm:$0xf]
      %v840 = vld [vmem:[%s835 + $0x10] sm:$0xf]
      %v841 = vld [vmem:[%s835 + $0x14] sm:$0xf]
      %v842 = vld [vmem:[%s835 + $0x18] sm:$0xf]
      %v843 = vld [vmem:[%s835 + $0x1c] sm:$0xf]
      %v844 = vld [vmem:[%s835 + $0x20] sm:$0xf]
      %v845 = vld [vmem:[%s835 + $0x24] sm:$0xf]
      %v846 = vld [vmem:[%s835 + $0x28] sm:$0xf]
      %v847 = vld [vmem:[%s835 + $0x2c] sm:$0xf]
      %v848 = vld [vmem:[%s835 + $0x30] sm:$0xf]
      %v849 = vld [vmem:[%s835 + $0x34] sm:$0xf]
      %v850 = vld [vmem:[%s835 + $0x38] sm:$0xf]
      %v851 = vld [vmem:[%s835 + $0x3c] sm:$0xf]
      %v852 = vld [vmem:[%s835 + $0x40] sm:$0xf]
      %v853 = vld [vmem:[%s835 + $0x44] sm:$0xf]
      %v854 = vld [vmem:[%s835 + $0x48] sm:$0xf]
      %v855 = vld [vmem:[%s835 + $0x4c] sm:$0xf]
      %v856 = vld [vmem:[%s835 + $0x50] sm:$0xf]
      %v857 = vld [vmem:[%s835 + $0x54] sm:$0xf]
      %v858 = vld [vmem:[%s835 + $0x58] sm:$0xf]
      %v859 = vld [vmem:[%s835 + $0x5c] sm:$0xf]
      %v860 = vld [vmem:[%s835 + $0x60] sm:$0xf]
      %v861 = vld [vmem:[%s835 + $0x64] sm:$0xf]
      %v862 = vld [vmem:[%s835 + $0x68] sm:$0xf]
      %v863 = vld [vmem:[%s835 + $0x6c] sm:$0xf]
      %v864 = vld [vmem:[%s835 + $0x70] sm:$0xf]
      %v865 = vld [vmem:[%s835 + $0x74] sm:$0xf]
      %v866 = vld [vmem:[%s835 + $0x78] sm:$0xf]
      %v867 = vld [vmem:[%s835 + $0x7c] sm:$0xf]
      %v868 = vld [vmem:[%s835 + $0x80] sm:$0xf]
      %v869 = vld [vmem:[%s835 + $0x84] sm:$0xf]
      %v870 = vld [vmem:[%s835 + $0x88] sm:$0xf]
      %v871 = vld [vmem:[%s835 + $0x8c] sm:$0xf]
      %v872 = vld [vmem:[%s835 + $0x90] sm:$0xf]
      %v873 = vld [vmem:[%s835 + $0x94] sm:$0xf]
      %v874 = vld [vmem:[%s835 + $0x98] sm:$0xf]
      %v875 = vld [vmem:[%s835 + $0x9c] sm:$0xf]
      %v876 = vld [vmem:[%s835 + $0xa0] sm:$0xf]
      %v877 = vld [vmem:[%s835 + $0xa4] sm:$0xf]
      %v878 = vld [vmem:[%s835 + $0xa8] sm:$0xf]
      %v879 = vld [vmem:[%s835 + $0xac] sm:$0xf]
      %v880 = vld [vmem:[%s835 + $0xb0] sm:$0xf]
      %v881 = vld [vmem:[%s835 + $0xb4] sm:$0xf]
      %v882 = vld [vmem:[%s835 + $0xb8] sm:$0xf]
      %v883 = vld [vmem:[%s835 + $0xbc] sm:$0xf]
      %v884 = vld [vmem:[%s835 + $0xc0] sm:$0xf]
      %v885 = vld [vmem:[%s835 + $0xc4] sm:$0xf]
      %v886 = vld [vmem:[%s835 + $0xc8] sm:$0xf]
      %v887 = vld [vmem:[%s835 + $0xcc] sm:$0xf]
      %v888 = vld [vmem:[%s835 + $0xd0] sm:$0xf]
      %v889 = vld [vmem:[%s835 + $0xd4] sm:$0xf]
      %v890 = vld [vmem:[%s835 + $0xd8] sm:$0xf]
      %v891 = vld [vmem:[%s835 + $0xdc] sm:$0xf]
      %v892 = vld [vmem:[%s835 + $0xe0] sm:$0xf]
      %v893 = vld [vmem:[%s835 + $0xe4] sm:$0xf]
      %v894 = vld [vmem:[%s835 + $0xe8] sm:$0xf]
      %v895 = vld [vmem:[%s835 + $0xec] sm:$0xf]
      %v896 = vld [vmem:[%s835 + $0xf0] sm:$0xf]
      %v897 = vld [vmem:[%s835 + $0xf4] sm:$0xf]
      %v898 = vld [vmem:[%s835 + $0xf8] sm:$0xf]
      %v899 = vld [vmem:[%s835 + $0xfc] sm:$0xf]
      %v900 = vld [vmem:[%s835 + $0x100] sm:$0xf]
      %v901 = vld [vmem:[%s835 + $0x104] sm:$0xf]
      %v902 = vld [vmem:[%s835 + $0x108] sm:$0xf]
      %v903 = vld [vmem:[%s835 + $0x10c] sm:$0xf]
      %v904 = vld [vmem:[%s835 + $0x110] sm:$0xf]
      %v905 = vld [vmem:[%s835 + $0x114] sm:$0xf]
      %v906 = vld [vmem:[%s835 + $0x118] sm:$0xf]
      %v907 = vld [vmem:[%s835 + $0x11c] sm:$0xf]
      %v908 = vld [vmem:[%s835 + $0x120] sm:$0xf]
      %v909 = vld [vmem:[%s835 + $0x124] sm:$0xf]
      %v910 = vld [vmem:[%s835 + $0x128] sm:$0xf]
      %v911 = vld [vmem:[%s835 + $0x12c] sm:$0xf]
      %v912 = vld [vmem:[%s835 + $0x130] sm:$0xf]
      %v913 = vld [vmem:[%s835 + $0x134] sm:$0xf]
      %v914 = vld [vmem:[%s835 + $0x138] sm:$0xf]
      %v915 = vld [vmem:[%s835 + $0x13c] sm:$0xf]
      %v916 = vld [vmem:[%s835 + $0x140] sm:$0xf]
      %v917 = vld [vmem:[%s835 + $0x144] sm:$0xf]
      %v918 = vld [vmem:[%s835 + $0x148] sm:$0xf]
      %v919 = vld [vmem:[%s835 + $0x14c] sm:$0xf]
      %v920 = vld [vmem:[%s835 + $0x150] sm:$0xf]
      %v921 = vld [vmem:[%s835 + $0x154] sm:$0xf]
      %v922 = vld [vmem:[%s835 + $0x158] sm:$0xf]
      %v923 = vld [vmem:[%s835 + $0x15c] sm:$0xf]
      %v924 = vld [vmem:[%s835 + $0x160] sm:$0xf]
      %v925 = vld [vmem:[%s835 + $0x164] sm:$0xf]
      %v926 = vld [vmem:[%s835 + $0x168] sm:$0xf]
      %v927 = vld [vmem:[%s835 + $0x16c] sm:$0xf]
      %v928 = vld [vmem:[%s835 + $0x170] sm:$0xf]
      %v929 = vld [vmem:[%s835 + $0x174] sm:$0xf]
      %v930 = vld [vmem:[%s835 + $0x178] sm:$0xf]
      %v931 = vld [vmem:[%s835 + $0x17c] sm:$0xf]
      %v932 = vld [vmem:[%s835 + $0x180] sm:$0xf]
      %v933 = vld [vmem:[%s835 + $0x184] sm:$0xf]
      %v934 = vld [vmem:[%s835 + $0x188] sm:$0xf]
      %v935 = vld [vmem:[%s835 + $0x18c] sm:$0xf]
      %v936 = vld [vmem:[%s835 + $0x190] sm:$0xf]
      %v937 = vld [vmem:[%s835 + $0x194] sm:$0xf]
      %v938 = vld [vmem:[%s835 + $0x198] sm:$0xf]
      %v939 = vld [vmem:[%s835 + $0x19c] sm:$0xf]
      %v940 = vld [vmem:[%s835 + $0x1a0] sm:$0xf]
      %v941 = vld [vmem:[%s835 + $0x1a4] sm:$0xf]
      %v942 = vld [vmem:[%s835 + $0x1a8] sm:$0xf]
      %v943 = vld [vmem:[%s835 + $0x1ac] sm:$0xf]
      %v944 = vld [vmem:[%s835 + $0x1b0] sm:$0xf]
      %v945 = vld [vmem:[%s835 + $0x1b4] sm:$0xf]
      %v946 = vld [vmem:[%s835 + $0x1b8] sm:$0xf]
      %v947 = vld [vmem:[%s835 + $0x1bc] sm:$0xf]
      %v948 = vld [vmem:[%s835 + $0x1c0] sm:$0xf]
      %v949 = vld [vmem:[%s835 + $0x1c4] sm:$0xf]
      %v950 = vld [vmem:[%s835 + $0x1c8] sm:$0xf]
      %v951 = vld [vmem:[%s835 + $0x1cc] sm:$0xf]
      %v952 = vld [vmem:[%s835 + $0x1d0] sm:$0xf]
      %v953 = vld [vmem:[%s835 + $0x1d4] sm:$0xf]
      %v954 = vld [vmem:[%s835 + $0x1d8] sm:$0xf]
      %v955 = vld [vmem:[%s835 + $0x1dc] sm:$0xf]
      %v956 = vld [vmem:[%s835 + $0x1e0] sm:$0xf]
      %v957 = vld [vmem:[%s835 + $0x1e4] sm:$0xf]
      %v958 = vld [vmem:[%s835 + $0x1e8] sm:$0xf]
      %v959 = vld [vmem:[%s835 + $0x1ec] sm:$0xf]
      %v960 = vld [vmem:[%s835 + $0x1f0] sm:$0xf]
      %v961 = vld [vmem:[%s835 + $0x1f4] sm:$0xf]
      %v962 = vld [vmem:[%s835 + $0x1f8] sm:$0xf]
      %v963 = vld [vmem:[%s835 + $0x1fc] sm:$0xf]
      %v964 = vld [vmem:[%s835 + $0x200] sm:$0xf]
      %v965 = vld [vmem:[%s835 + $0x204] sm:$0xf]
      %v966 = vld [vmem:[%s835 + $0x208] sm:$0xf]
      %v967 = vld [vmem:[%s835 + $0x20c] sm:$0xf]
      %v968 = vld [vmem:[%s835 + $0x210] sm:$0xf]
      %v969 = vld [vmem:[%s835 + $0x214] sm:$0xf]
      %v970 = vld [vmem:[%s835 + $0x218] sm:$0xf]
      %v971 = vld [vmem:[%s835 + $0x21c] sm:$0xf]
      %v972 = vld [vmem:[%s835 + $0x220] sm:$0xf]
      %v973 = vld [vmem:[%s835 + $0x224] sm:$0xf]
      %v974 = vld [vmem:[%s835 + $0x228] sm:$0xf]
      %v975 = vld [vmem:[%s835 + $0x22c] sm:$0xf]
      %v976 = vld [vmem:[%s835 + $0x230] sm:$0xf]
      %v977 = vld [vmem:[%s835 + $0x234] sm:$0xf]
      %v978 = vld [vmem:[%s835 + $0x238] sm:$0xf]
      %v979 = vld [vmem:[%s835 + $0x23c] sm:$0xf]
      %v1020 = vunpack.c.l.b16 %v795
      %v1021 = vunpack.c.h.b16 %v795
      %v1022 = vunpack.c.l.b16 %v796
      %v1023 = vunpack.c.h.b16 %v796
      %v1024 = vunpack.c.l.b16 %v797
      %v1025 = vunpack.c.h.b16 %v797
      %v1026 = vunpack.c.l.b16 %v798
      %v1027 = vunpack.c.h.b16 %v798
      %v1028 = vunpack.c.l.b16 %v799
      %v1029 = vunpack.c.l.b16 %v800
      %v1030 = vunpack.c.h.b16 %v800
      %v1031 = vunpack.c.l.b16 %v801
      %v1032 = vunpack.c.h.b16 %v801
      %v1033 = vunpack.c.l.b16 %v802
      %v1034 = vunpack.c.h.b16 %v802
      %v1035 = vunpack.c.l.b16 %v803
      %v1036 = vunpack.c.h.b16 %v803
      %v1037 = vunpack.c.l.b16 %v804
      %v1038 = vunpack.c.l.b16 %v805
      %v1039 = vunpack.c.h.b16 %v805
      %v1040 = vunpack.c.l.b16 %v806
      %v1041 = vunpack.c.h.b16 %v806
      %v1042 = vunpack.c.l.b16 %v807
      %v1043 = vunpack.c.h.b16 %v807
      %v1044 = vunpack.c.l.b16 %v808
      %v1045 = vunpack.c.h.b16 %v808
      %v1046 = vunpack.c.l.b16 %v809
      %v1047 = vunpack.c.l.b16 %v810
      %v1048 = vunpack.c.h.b16 %v810
      %v1049 = vunpack.c.l.b16 %v811
      %v1050 = vunpack.c.h.b16 %v811
      %v1051 = vunpack.c.l.b16 %v812
      %v1052 = vunpack.c.h.b16 %v812
      %v1053 = vunpack.c.l.b16 %v813
      %v1054 = vunpack.c.h.b16 %v813
      %v1055 = vunpack.c.l.b16 %v814
      %v1056 = vunpack.c.l.b16 %v815
      %v1057 = vunpack.c.h.b16 %v815
      %v1058 = vunpack.c.l.b16 %v816
      %v1059 = vunpack.c.h.b16 %v816
      %v1060 = vunpack.c.l.b16 %v817
      %v1061 = vunpack.c.h.b16 %v817
      %v1062 = vunpack.c.l.b16 %v818
      %v1063 = vunpack.c.h.b16 %v818
      %v1064 = vunpack.c.l.b16 %v819
      %v1065 = vunpack.c.l.b16 %v820
      %v1066 = vunpack.c.h.b16 %v820
      %v1067 = vunpack.c.l.b16 %v821
      %v1068 = vunpack.c.h.b16 %v821
      %v1069 = vunpack.c.l.b16 %v822
      %v1070 = vunpack.c.h.b16 %v822
      %v1071 = vunpack.c.l.b16 %v823
      %v1072 = vunpack.c.h.b16 %v823
      %v1073 = vunpack.c.l.b16 %v824
      %v1074 = vunpack.c.l.b16 %v825
      %v1075 = vunpack.c.h.b16 %v825
      %v1076 = vunpack.c.l.b16 %v826
      %v1077 = vunpack.c.h.b16 %v826
      %v1078 = vunpack.c.l.b16 %v827
      %v1079 = vunpack.c.h.b16 %v827
      %v1080 = vunpack.c.l.b16 %v828
      %v1081 = vunpack.c.h.b16 %v828
      %v1082 = vunpack.c.l.b16 %v829
      %v1083 = vunpack.c.l.b16 %v830
      %v1084 = vunpack.c.h.b16 %v830
      %v1085 = vunpack.c.l.b16 %v831
      %v1086 = vunpack.c.h.b16 %v831
      %v1087 = vunpack.c.l.b16 %v832
      %v1088 = vunpack.c.h.b16 %v832
      %v1089 = vunpack.c.l.b16 %v833
      %v1090 = vunpack.c.h.b16 %v833
      %v1091 = vunpack.c.l.b16 %v834
      %v1092 = vpack.c.b16 %v1029, %v1020
      %v1093 = vpack.c.b16 %v1030, %v1021
      %v1094 = vpack.c.b16 %v1031, %v1022
      %v1095 = vpack.c.b16 %v1032, %v1023
      %v1096 = vpack.c.b16 %v1033, %v1024
      %v1097 = vpack.c.b16 %v1034, %v1025
      %v1098 = vpack.c.b16 %v1035, %v1026
      %v1099 = vpack.c.b16 %v1036, %v1027
      %v1100 = vpack.c.b16 %v1037, %v1028
      %v1101 = vpack.c.b16 %v1047, %v1038
      %v1102 = vpack.c.b16 %v1048, %v1039
      %v1103 = vpack.c.b16 %v1049, %v1040
      %v1104 = vpack.c.b16 %v1050, %v1041
      %v1105 = vpack.c.b16 %v1051, %v1042
      %v1106 = vpack.c.b16 %v1052, %v1043
      %v1107 = vpack.c.b16 %v1053, %v1044
      %v1108 = vpack.c.b16 %v1054, %v1045
      %v1109 = vpack.c.b16 %v1055, %v1046
      %v1110 = vpack.c.b16 %v1065, %v1056
      %v1111 = vpack.c.b16 %v1066, %v1057
      %v1112 = vpack.c.b16 %v1067, %v1058
      %v1113 = vpack.c.b16 %v1068, %v1059
      %v1114 = vpack.c.b16 %v1069, %v1060
      %v1115 = vpack.c.b16 %v1070, %v1061
      %v1116 = vpack.c.b16 %v1071, %v1062
      %v1117 = vpack.c.b16 %v1072, %v1063
      %v1118 = vpack.c.b16 %v1073, %v1064
      %v1119 = vpack.c.b16 %v1083, %v1074
      %v1120 = vpack.c.b16 %v1084, %v1075
      %v1121 = vpack.c.b16 %v1085, %v1076
      %v1122 = vpack.c.b16 %v1086, %v1077
      %v1123 = vpack.c.b16 %v1087, %v1078
      %v1124 = vpack.c.b16 %v1088, %v1079
      %v1125 = vpack.c.b16 %v1089, %v1080
      %v1126 = vpack.c.b16 %v1090, %v1081
      %v1127 = vpack.c.b16 %v1091, %v1082
      %v1308 = vunpack.c.l.b16 %v836
      %v1309 = vunpack.c.l.b16 %v837
      %v1310 = vunpack.c.l.b16 %v838
      %v1311 = vunpack.c.l.b16 %v839
      %v1312 = vunpack.c.l.b16 %v840
      %v1313 = vunpack.c.l.b16 %v841
      %v1314 = vunpack.c.l.b16 %v842
      %v1315 = vunpack.c.l.b16 %v843
      %v1316 = vunpack.c.l.b16 %v844
      %v1317 = vunpack.c.l.b16 %v845
      %v1318 = vunpack.c.l.b16 %v846
      %v1319 = vunpack.c.l.b16 %v847
      %v1320 = vunpack.c.l.b16 %v848
      %v1321 = vunpack.c.l.b16 %v849
      %v1322 = vunpack.c.l.b16 %v850
      %v1323 = vunpack.c.l.b16 %v851
      %v1324 = vunpack.c.l.b16 %v852
      %v1325 = vunpack.c.l.b16 %v853
      %v1326 = vunpack.c.l.b16 %v854
      %v1327 = vunpack.c.l.b16 %v855
      %v1328 = vunpack.c.l.b16 %v856
      %v1329 = vunpack.c.l.b16 %v857
      %v1330 = vunpack.c.l.b16 %v858
      %v1331 = vunpack.c.l.b16 %v859
      %v1332 = vunpack.c.l.b16 %v860
      %v1333 = vunpack.c.l.b16 %v861
      %v1334 = vunpack.c.l.b16 %v862
      %v1335 = vunpack.c.l.b16 %v863
      %v1336 = vunpack.c.l.b16 %v864
      %v1337 = vunpack.c.l.b16 %v865
      %v1338 = vunpack.c.l.b16 %v866
      %v1339 = vunpack.c.l.b16 %v867
      %v1340 = vunpack.c.l.b16 %v868
      %v1341 = vunpack.c.l.b16 %v869
      %v1342 = vunpack.c.l.b16 %v870
      %v1343 = vunpack.c.l.b16 %v871
      %v1344 = vunpack.c.l.b16 %v872
      %v1345 = vunpack.c.l.b16 %v873
      %v1346 = vunpack.c.l.b16 %v874
      %v1347 = vunpack.c.l.b16 %v875
      %v1348 = vunpack.c.l.b16 %v876
      %v1349 = vunpack.c.l.b16 %v877
      %v1350 = vunpack.c.l.b16 %v878
      %v1351 = vunpack.c.l.b16 %v879
      %v1352 = vunpack.c.l.b16 %v880
      %v1353 = vunpack.c.l.b16 %v881
      %v1354 = vunpack.c.l.b16 %v882
      %v1355 = vunpack.c.l.b16 %v883
      %v1356 = vunpack.c.l.b16 %v884
      %v1357 = vunpack.c.l.b16 %v885
      %v1358 = vunpack.c.l.b16 %v886
      %v1359 = vunpack.c.l.b16 %v887
      %v1360 = vunpack.c.l.b16 %v888
      %v1361 = vunpack.c.l.b16 %v889
      %v1362 = vunpack.c.l.b16 %v890
      %v1363 = vunpack.c.l.b16 %v891
      %v1364 = vunpack.c.l.b16 %v892
      %v1365 = vunpack.c.l.b16 %v893
      %v1366 = vunpack.c.l.b16 %v894
      %v1367 = vunpack.c.l.b16 %v895
      %v1368 = vunpack.c.l.b16 %v896
      %v1369 = vunpack.c.l.b16 %v897
      %v1370 = vunpack.c.l.b16 %v898
      %v1371 = vunpack.c.l.b16 %v899
      %v1372 = vunpack.c.l.b16 %v900
      %v1373 = vunpack.c.l.b16 %v901
      %v1374 = vunpack.c.l.b16 %v902
      %v1375 = vunpack.c.l.b16 %v903
      %v1376 = vunpack.c.l.b16 %v904
      %v1377 = vunpack.c.l.b16 %v905
      %v1378 = vunpack.c.l.b16 %v906
      %v1379 = vunpack.c.l.b16 %v907
      %v1380 = vunpack.c.l.b16 %v908
      %v1381 = vunpack.c.l.b16 %v909
      %v1382 = vunpack.c.l.b16 %v910
      %v1383 = vunpack.c.l.b16 %v911
      %v1384 = vunpack.c.l.b16 %v912
      %v1385 = vunpack.c.l.b16 %v913
      %v1386 = vunpack.c.l.b16 %v914
      %v1387 = vunpack.c.l.b16 %v915
      %v1388 = vunpack.c.l.b16 %v916
      %v1389 = vunpack.c.l.b16 %v917
      %v1390 = vunpack.c.l.b16 %v918
      %v1391 = vunpack.c.l.b16 %v919
      %v1392 = vunpack.c.l.b16 %v920
      %v1393 = vunpack.c.l.b16 %v921
      %v1394 = vunpack.c.l.b16 %v922
      %v1395 = vunpack.c.l.b16 %v923
      %v1396 = vunpack.c.l.b16 %v924
      %v1397 = vunpack.c.l.b16 %v925
      %v1398 = vunpack.c.l.b16 %v926
      %v1399 = vunpack.c.l.b16 %v927
      %v1400 = vunpack.c.l.b16 %v928
      %v1401 = vunpack.c.l.b16 %v929
      %v1402 = vunpack.c.l.b16 %v930
      %v1403 = vunpack.c.l.b16 %v931
      %v1404 = vunpack.c.l.b16 %v932
      %v1405 = vunpack.c.l.b16 %v933
      %v1406 = vunpack.c.l.b16 %v934
      %v1407 = vunpack.c.l.b16 %v935
      %v1408 = vunpack.c.l.b16 %v936
      %v1409 = vunpack.c.l.b16 %v937
      %v1410 = vunpack.c.l.b16 %v938
      %v1411 = vunpack.c.l.b16 %v939
      %v1412 = vunpack.c.l.b16 %v940
      %v1413 = vunpack.c.l.b16 %v941
      %v1414 = vunpack.c.l.b16 %v942
      %v1415 = vunpack.c.l.b16 %v943
      %v1416 = vunpack.c.l.b16 %v944
      %v1417 = vunpack.c.l.b16 %v945
      %v1418 = vunpack.c.l.b16 %v946
      %v1419 = vunpack.c.l.b16 %v947
      %v1420 = vunpack.c.l.b16 %v948
      %v1421 = vunpack.c.l.b16 %v949
      %v1422 = vunpack.c.l.b16 %v950
      %v1423 = vunpack.c.l.b16 %v951
      %v1424 = vunpack.c.l.b16 %v952
      %v1425 = vunpack.c.l.b16 %v953
      %v1426 = vunpack.c.l.b16 %v954
      %v1427 = vunpack.c.l.b16 %v955
      %v1428 = vunpack.c.l.b16 %v956
      %v1429 = vunpack.c.l.b16 %v957
      %v1430 = vunpack.c.l.b16 %v958
      %v1431 = vunpack.c.l.b16 %v959
      %v1432 = vunpack.c.l.b16 %v960
      %v1433 = vunpack.c.l.b16 %v961
      %v1434 = vunpack.c.l.b16 %v962
      %v1435 = vunpack.c.l.b16 %v963
      %v1436 = vunpack.c.l.b16 %v964
      %v1437 = vunpack.c.l.b16 %v965
      %v1438 = vunpack.c.l.b16 %v966
      %v1439 = vunpack.c.l.b16 %v967
      %v1440 = vunpack.c.l.b16 %v968
      %v1441 = vunpack.c.l.b16 %v969
      %v1442 = vunpack.c.l.b16 %v970
      %v1443 = vunpack.c.l.b16 %v971
      %v1444 = vunpack.c.l.b16 %v972
      %v1445 = vunpack.c.l.b16 %v973
      %v1446 = vunpack.c.l.b16 %v974
      %v1447 = vunpack.c.l.b16 %v975
      %v1448 = vunpack.c.l.b16 %v976
      %v1449 = vunpack.c.l.b16 %v977
      %v1450 = vunpack.c.l.b16 %v978
      %v1451 = vunpack.c.l.b16 %v979
      %v1452 = vpack.c.b16 %v1309, %v1308
      %v1453 = vpack.c.b16 %v1311, %v1310
      %v1454 = vpack.c.b16 %v1313, %v1312
      %v1455 = vpack.c.b16 %v1315, %v1314
      %v1456 = vpack.c.b16 %v1317, %v1316
      %v1457 = vpack.c.b16 %v1319, %v1318
      %v1458 = vpack.c.b16 %v1321, %v1320
      %v1459 = vpack.c.b16 %v1323, %v1322
      %v1460 = vpack.c.b16 %v1325, %v1324
      %v1461 = vpack.c.b16 %v1327, %v1326
      %v1462 = vpack.c.b16 %v1329, %v1328
      %v1463 = vpack.c.b16 %v1331, %v1330
      %v1464 = vpack.c.b16 %v1333, %v1332
      %v1465 = vpack.c.b16 %v1335, %v1334
      %v1466 = vpack.c.b16 %v1337, %v1336
      %v1467 = vpack.c.b16 %v1339, %v1338
      %v1468 = vpack.c.b16 %v1341, %v1340
      %v1469 = vpack.c.b16 %v1343, %v1342
      %v1470 = vpack.c.b16 %v1345, %v1344
      %v1471 = vpack.c.b16 %v1347, %v1346
      %v1472 = vpack.c.b16 %v1349, %v1348
      %v1473 = vpack.c.b16 %v1351, %v1350
      %v1474 = vpack.c.b16 %v1353, %v1352
      %v1475 = vpack.c.b16 %v1355, %v1354
      %v1476 = vpack.c.b16 %v1357, %v1356
      %v1477 = vpack.c.b16 %v1359, %v1358
      %v1478 = vpack.c.b16 %v1361, %v1360
      %v1479 = vpack.c.b16 %v1363, %v1362
      %v1480 = vpack.c.b16 %v1365, %v1364
      %v1481 = vpack.c.b16 %v1367, %v1366
      %v1482 = vpack.c.b16 %v1369, %v1368
      %v1483 = vpack.c.b16 %v1371, %v1370
      %v1484 = vpack.c.b16 %v1373, %v1372
      %v1485 = vpack.c.b16 %v1375, %v1374
      %v1486 = vpack.c.b16 %v1377, %v1376
      %v1487 = vpack.c.b16 %v1379, %v1378
      %v1488 = vpack.c.b16 %v1381, %v1380
      %v1489 = vpack.c.b16 %v1383, %v1382
      %v1490 = vpack.c.b16 %v1385, %v1384
      %v1491 = vpack.c.b16 %v1387, %v1386
      %v1492 = vpack.c.b16 %v1389, %v1388
      %v1493 = vpack.c.b16 %v1391, %v1390
      %v1494 = vpack.c.b16 %v1393, %v1392
      %v1495 = vpack.c.b16 %v1395, %v1394
      %v1496 = vpack.c.b16 %v1397, %v1396
      %v1497 = vpack.c.b16 %v1399, %v1398
      %v1498 = vpack.c.b16 %v1401, %v1400
      %v1499 = vpack.c.b16 %v1403, %v1402
      %v1500 = vpack.c.b16 %v1405, %v1404
      %v1501 = vpack.c.b16 %v1407, %v1406
      %v1502 = vpack.c.b16 %v1409, %v1408
      %v1503 = vpack.c.b16 %v1411, %v1410
      %v1504 = vpack.c.b16 %v1413, %v1412
      %v1505 = vpack.c.b16 %v1415, %v1414
      %v1506 = vpack.c.b16 %v1417, %v1416
      %v1507 = vpack.c.b16 %v1419, %v1418
      %v1508 = vpack.c.b16 %v1421, %v1420
      %v1509 = vpack.c.b16 %v1423, %v1422
      %v1510 = vpack.c.b16 %v1425, %v1424
      %v1511 = vpack.c.b16 %v1427, %v1426
      %v1512 = vpack.c.b16 %v1429, %v1428
      %v1513 = vpack.c.b16 %v1431, %v1430
      %v1514 = vpack.c.b16 %v1433, %v1432
      %v1515 = vpack.c.b16 %v1435, %v1434
      %v1516 = vpack.c.b16 %v1437, %v1436
      %v1517 = vpack.c.b16 %v1439, %v1438
      %v1518 = vpack.c.b16 %v1441, %v1440
      %v1519 = vpack.c.b16 %v1443, %v1442
      %v1520 = vpack.c.b16 %v1445, %v1444
      %v1521 = vpack.c.b16 %v1447, %v1446
      %v1522 = vpack.c.b16 %v1449, %v1448
      %v1523 = vpack.c.b16 %v1451, %v1450
      %1596 = vmatprep.subr.bf16.mxu0 0
      %1597 = vmatpush1.bf16.msra.mxu0 %v1459
      %1598 = vmatprep.subr.bf16.mxu0 0
      %1599 = vmatpush1.bf16.msra.mxu0 %v1458
      %1600 = vmatprep.subr.bf16.mxu0 0
      %1601 = vmatpush1.bf16.msra.mxu0 %v1457
      %1602 = vmatprep.subr.bf16.mxu0 0
      %1603 = vmatpush1.bf16.msra.mxu0 %v1456
      %1604 = vmatprep.subr.bf16.mxu0 0
      %1605 = vmatpush1.bf16.msra.mxu0 %v1455
      %1606 = vmatprep.subr.bf16.mxu0 0
      %1607 = vmatpush1.bf16.msra.mxu0 %v1454
      %1608 = vmatprep.subr.bf16.mxu0 0
      %1609 = vmatpush1.bf16.msra.mxu0 %v1453
      %1610 = vmatprep.subr.bf16.mxu0 0
      %1611 = vmatpush1.bf16.msra.mxu0 %v1452
      %1612 = vmatprep.subr.bf16.mxu0 0
      %1613 = vmatpush2.bf16.msra.mxu0 %v1467
      %1614 = vmatprep.subr.bf16.mxu0 0
      %1615 = vmatpush2.bf16.msra.mxu0 %v1466
      %1616 = vmatprep.subr.bf16.mxu0 0
      %1617 = vmatpush2.bf16.msra.mxu0 %v1465
      %1618 = vmatprep.subr.bf16.mxu0 0
      %1619 = vmatpush2.bf16.msra.mxu0 %v1464
      %1620 = vmatprep.subr.bf16.mxu0 0
      %1621 = vmatpush2.bf16.msra.mxu0 %v1463
      %1622 = vmatprep.subr.bf16.mxu0 0
      %1623 = vmatpush2.bf16.msra.mxu0 %v1462
      %1624 = vmatprep.subr.bf16.mxu0 0
      %1625 = vmatpush2.bf16.msra.mxu0 %v1461
      %1626 = vmatprep.subr.bf16.mxu0 0
      %1627 = vmatpush2.bf16.msra.mxu0 %v1460
      %1628 = vmatprep.mubr.bf16.mxu0 %v1093
      %1629 = vmatmul.mubr.bf16.gmra.mxu0 %v1092
      %v1630 = vpop.f32.mrf.mxu0
      %v1631 = vadd.f32 0.0, %v1630
      %v1632 = vpop.f32.mrf.mxu0
      %v1633 = vpop.f32.mrf.mxu0
      %v1634 = vadd.f32 0.0, %v1633
      %v1635 = vpop.f32.mrf.mxu0
      %1636 = vmatprep.mubr.bf16.mxu0 %v1102
      %1637 = vmatmul.mubr.bf16.gmra.mxu0 %v1101
      %v1638 = vpop.f32.mrf.mxu0
      %v1639 = vadd.f32 0.0, %v1638
      %v1640 = vpop.f32.mrf.mxu0
      %v1641 = vpop.f32.mrf.mxu0
      %v1642 = vadd.f32 0.0, %v1641
      %v1643 = vpop.f32.mrf.mxu0
      %1644 = vmatprep.mubr.bf16.mxu0 %v1111
      %1645 = vmatmul.mubr.bf16.gmra.mxu0 %v1110
      %v1646 = vpop.f32.mrf.mxu0
      %v1647 = vadd.f32 0.0, %v1646
      %v1648 = vpop.f32.mrf.mxu0
      %v1649 = vpop.f32.mrf.mxu0
      %v1650 = vadd.f32 0.0, %v1649
      %v1651 = vpop.f32.mrf.mxu0
      %1652 = vmatprep.mubr.bf16.mxu0 %v1120
      %1653 = vmatmul.mubr.bf16.gmra.mxu0 %v1119
      %v1654 = vpop.f32.mrf.mxu0
      %v1655 = vadd.f32 0.0, %v1654
      %v1656 = vpop.f32.mrf.mxu0
      %v1657 = vpop.f32.mrf.mxu0
      %v1658 = vadd.f32 0.0, %v1657
      %v1659 = vpop.f32.mrf.mxu0
      %1660 = vdwg.mxu0
      %1661 = vmatprep.subr.bf16.mxu0 0
      %1662 = vmatpush1.bf16.msra.mxu0 %v1475
      %1663 = vmatprep.subr.bf16.mxu0 0
      %1664 = vmatpush1.bf16.msra.mxu0 %v1474
      %1665 = vmatprep.subr.bf16.mxu0 0
      %1666 = vmatpush1.bf16.msra.mxu0 %v1473
      %1667 = vmatprep.subr.bf16.mxu0 0
      %1668 = vmatpush1.bf16.msra.mxu0 %v1472
      %1669 = vmatprep.subr.bf16.mxu0 0
      %1670 = vmatpush1.bf16.msra.mxu0 %v1471
      %1671 = vmatprep.subr.bf16.mxu0 0
      %1672 = vmatpush1.bf16.msra.mxu0 %v1470
      %1673 = vmatprep.subr.bf16.mxu0 0
      %1674 = vmatpush1.bf16.msra.mxu0 %v1469
      %1675 = vmatprep.subr.bf16.mxu0 0
      %1676 = vmatpush1.bf16.msra.mxu0 %v1468
      %1677 = vmatprep.subr.bf16.mxu0 0
      %1678 = vmatpush2.bf16.msra.mxu0 %v1483
      %1679 = vmatprep.subr.bf16.mxu0 0
      %1680 = vmatpush2.bf16.msra.mxu0 %v1482
      %1681 = vmatprep.subr.bf16.mxu0 0
      %1682 = vmatpush2.bf16.msra.mxu0 %v1481
      %1683 = vmatprep.subr.bf16.mxu0 0
      %1684 = vmatpush2.bf16.msra.mxu0 %v1480
      %1685 = vmatprep.subr.bf16.mxu0 0
      %1686 = vmatpush2.bf16.msra.mxu0 %v1479
      %1687 = vmatprep.subr.bf16.mxu0 0
      %1688 = vmatpush2.bf16.msra.mxu0 %v1478
      %1689 = vmatprep.subr.bf16.mxu0 0
      %1690 = vmatpush2.bf16.msra.mxu0 %v1477
      %1691 = vmatprep.subr.bf16.mxu0 0
      %1692 = vmatpush2.bf16.msra.mxu0 %v1476
      %1693 = vmatprep.mubr.bf16.mxu0 %v1095
      %1694 = vmatmul.mubr.bf16.gmra.mxu0 %v1094
      %v1695 = vpop.f32.mrf.mxu0
      %v1696 = vadd.f32 %v1631, %v1695
      %v1697 = vpop.f32.mrf.mxu0
      %v1698 = vpop.f32.mrf.mxu0
      %v1699 = vadd.f32 %v1634, %v1698
      %v1700 = vpop.f32.mrf.mxu0
      %1701 = vmatprep.mubr.bf16.mxu0 %v1104
      %1702 = vmatmul.mubr.bf16.gmra.mxu0 %v1103
      %v1703 = vpop.f32.mrf.mxu0
      %v1704 = vadd.f32 %v1639, %v1703
      %v1705 = vpop.f32.mrf.mxu0
      %v1706 = vpop.f32.mrf.mxu0
      %v1707 = vadd.f32 %v1642, %v1706
      %v1708 = vpop.f32.mrf.mxu0
      %1709 = vmatprep.mubr.bf16.mxu0 %v1113
      %1710 = vmatmul.mubr.bf16.gmra.mxu0 %v1112
      %v1711 = vpop.f32.mrf.mxu0
      %v1712 = vadd.f32 %v1647, %v1711
      %v1713 = vpop.f32.mrf.mxu0
      %v1714 = vpop.f32.mrf.mxu0
      %v1715 = vadd.f32 %v1650, %v1714
      %v1716 = vpop.f32.mrf.mxu0
      %1717 = vmatprep.mubr.bf16.mxu0 %v1122
      %1718 = vmatmul.mubr.bf16.gmra.mxu0 %v1121
      %v1719 = vpop.f32.mrf.mxu0
      %v1720 = vadd.f32 %v1655, %v1719
      %v1721 = vpop.f32.mrf.mxu0
      %v1722 = vpop.f32.mrf.mxu0
      %v1723 = vadd.f32 %v1658, %v1722
      %v1724 = vpop.f32.mrf.mxu0
      %1725 = vdwg.mxu0
      %1726 = vmatprep.subr.bf16.mxu0 0
      %1727 = vmatpush1.bf16.msra.mxu0 %v1491
      %1728 = vmatprep.subr.bf16.mxu0 0
      %1729 = vmatpush1.bf16.msra.mxu0 %v1490
      %1730 = vmatprep.subr.bf16.mxu0 0
      %1731 = vmatpush1.bf16.msra.mxu0 %v1489
      %1732 = vmatprep.subr.bf16.mxu0 0
      %1733 = vmatpush1.bf16.msra.mxu0 %v1488
      %1734 = vmatprep.subr.bf16.mxu0 0
      %1735 = vmatpush1.bf16.msra.mxu0 %v1487
      %1736 = vmatprep.subr.bf16.mxu0 0
      %1737 = vmatpush1.bf16.msra.mxu0 %v1486
      %1738 = vmatprep.subr.bf16.mxu0 0
      %1739 = vmatpush1.bf16.msra.mxu0 %v1485
      %1740 = vmatprep.subr.bf16.mxu0 0
      %1741 = vmatpush1.bf16.msra.mxu0 %v1484
      %1742 = vmatprep.subr.bf16.mxu0 0
      %1743 = vmatpush2.bf16.msra.mxu0 %v1499
      %1744 = vmatprep.subr.bf16.mxu0 0
      %1745 = vmatpush2.bf16.msra.mxu0 %v1498
      %1746 = vmatprep.subr.bf16.mxu0 0
      %1747 = vmatpush2.bf16.msra.mxu0 %v1497
      %1748 = vmatprep.subr.bf16.mxu0 0
      %1749 = vmatpush2.bf16.msra.mxu0 %v1496
      %1750 = vmatprep.subr.bf16.mxu0 0
      %1751 = vmatpush2.bf16.msra.mxu0 %v1495
      %1752 = vmatprep.subr.bf16.mxu0 0
      %1753 = vmatpush2.bf16.msra.mxu0 %v1494
      %1754 = vmatprep.subr.bf16.mxu0 0
      %1755 = vmatpush2.bf16.msra.mxu0 %v1493
      %1756 = vmatprep.subr.bf16.mxu0 0
      %1757 = vmatpush2.bf16.msra.mxu0 %v1492
      %1758 = vmatprep.mubr.bf16.mxu0 %v1097
      %1759 = vmatmul.mubr.bf16.gmra.mxu0 %v1096
      %v1760 = vpop.f32.mrf.mxu0
      %v1761 = vadd.f32 %v1696, %v1760
      %v1762 = vpop.f32.mrf.mxu0
      %v1763 = vpop.f32.mrf.mxu0
      %v1764 = vadd.f32 %v1699, %v1763
      %v1765 = vpop.f32.mrf.mxu0
      %1766 = vmatprep.mubr.bf16.mxu0 %v1106
      %1767 = vmatmul.mubr.bf16.gmra.mxu0 %v1105
      %v1768 = vpop.f32.mrf.mxu0
      %v1769 = vadd.f32 %v1704, %v1768
      %v1770 = vpop.f32.mrf.mxu0
      %v1771 = vpop.f32.mrf.mxu0
      %v1772 = vadd.f32 %v1707, %v1771
      %v1773 = vpop.f32.mrf.mxu0
      %1774 = vmatprep.mubr.bf16.mxu0 %v1115
      %1775 = vmatmul.mubr.bf16.gmra.mxu0 %v1114
      %v1776 = vpop.f32.mrf.mxu0
      %v1777 = vadd.f32 %v1712, %v1776
      %v1778 = vpop.f32.mrf.mxu0
      %v1779 = vpop.f32.mrf.mxu0
      %v1780 = vadd.f32 %v1715, %v1779
      %v1781 = vpop.f32.mrf.mxu0
      %1782 = vmatprep.mubr.bf16.mxu0 %v1124
      %1783 = vmatmul.mubr.bf16.gmra.mxu0 %v1123
      %v1784 = vpop.f32.mrf.mxu0
      %v1785 = vadd.f32 %v1720, %v1784
      %v1786 = vpop.f32.mrf.mxu0
      %v1787 = vpop.f32.mrf.mxu0
      %v1788 = vadd.f32 %v1723, %v1787
      %v1789 = vpop.f32.mrf.mxu0
      %1790 = vdwg.mxu0
      %1791 = vmatprep.subr.bf16.mxu0 0
      %1792 = vmatpush1.bf16.msra.mxu0 %v1507
      %1793 = vmatprep.subr.bf16.mxu0 0
      %1794 = vmatpush1.bf16.msra.mxu0 %v1506
      %1795 = vmatprep.subr.bf16.mxu0 0
      %1796 = vmatpush1.bf16.msra.mxu0 %v1505
      %1797 = vmatprep.subr.bf16.mxu0 0
      %1798 = vmatpush1.bf16.msra.mxu0 %v1504
      %1799 = vmatprep.subr.bf16.mxu0 0
      %1800 = vmatpush1.bf16.msra.mxu0 %v1503
      %1801 = vmatprep.subr.bf16.mxu0 0
      %1802 = vmatpush1.bf16.msra.mxu0 %v1502
      %1803 = vmatprep.subr.bf16.mxu0 0
      %1804 = vmatpush1.bf16.msra.mxu0 %v1501
      %1805 = vmatprep.subr.bf16.mxu0 0
      %1806 = vmatpush1.bf16.msra.mxu0 %v1500
      %1807 = vmatprep.subr.bf16.mxu0 0
      %1808 = vmatpush2.bf16.msra.mxu0 %v1515
      %1809 = vmatprep.subr.bf16.mxu0 0
      %1810 = vmatpush2.bf16.msra.mxu0 %v1514
      %1811 = vmatprep.subr.bf16.mxu0 0
      %1812 = vmatpush2.bf16.msra.mxu0 %v1513
      %1813 = vmatprep.subr.bf16.mxu0 0
      %1814 = vmatpush2.bf16.msra.mxu0 %v1512
      %1815 = vmatprep.subr.bf16.mxu0 0
      %1816 = vmatpush2.bf16.msra.mxu0 %v1511
      %1817 = vmatprep.subr.bf16.mxu0 0
      %1818 = vmatpush2.bf16.msra.mxu0 %v1510
      %1819 = vmatprep.subr.bf16.mxu0 0
      %1820 = vmatpush2.bf16.msra.mxu0 %v1509
      %1821 = vmatprep.subr.bf16.mxu0 0
      %1822 = vmatpush2.bf16.msra.mxu0 %v1508
      %1823 = vmatprep.mubr.bf16.mxu0 %v1099
      %1824 = vmatmul.mubr.bf16.gmra.mxu0 %v1098
      %v1825 = vpop.f32.mrf.mxu0
      %v1826 = vadd.f32 %v1761, %v1825
      %v1827 = vpop.f32.mrf.mxu0
      %v1828 = vpop.f32.mrf.mxu0
      %v1829 = vadd.f32 %v1764, %v1828
      %v1830 = vpop.f32.mrf.mxu0
      %1831 = vmatprep.mubr.bf16.mxu0 %v1108
      %1832 = vmatmul.mubr.bf16.gmra.mxu0 %v1107
      %v1833 = vpop.f32.mrf.mxu0
      %v1834 = vadd.f32 %v1769, %v1833
      %v1835 = vpop.f32.mrf.mxu0
      %v1836 = vpop.f32.mrf.mxu0
      %v1837 = vadd.f32 %v1772, %v1836
      %v1838 = vpop.f32.mrf.mxu0
      %1839 = vmatprep.mubr.bf16.mxu0 %v1117
      %1840 = vmatmul.mubr.bf16.gmra.mxu0 %v1116
      %v1841 = vpop.f32.mrf.mxu0
      %v1842 = vadd.f32 %v1777, %v1841
      %v1843 = vpop.f32.mrf.mxu0
      %v1844 = vpop.f32.mrf.mxu0
      %v1845 = vadd.f32 %v1780, %v1844
      %v1846 = vpop.f32.mrf.mxu0
      %1847 = vmatprep.mubr.bf16.mxu0 %v1126
      %1848 = vmatmul.mubr.bf16.gmra.mxu0 %v1125
      %v1849 = vpop.f32.mrf.mxu0
      %v1850 = vadd.f32 %v1785, %v1849
      %v1851 = vpop.f32.mrf.mxu0
      %v1852 = vpop.f32.mrf.mxu0
      %v1853 = vadd.f32 %v1788, %v1852
      %v1854 = vpop.f32.mrf.mxu0
      %1855 = vdwg.mxu0
      %1856 = vmatprep.subr.bf16.mxu0 0
      %1857 = vmatpush1.bf16.msra.mxu0 %v1523
      %1858 = vmatprep.subr.bf16.mxu0 0
      %1859 = vmatpush1.bf16.msra.mxu0 %v1522
      %1860 = vmatprep.subr.bf16.mxu0 0
      %1861 = vmatpush1.bf16.msra.mxu0 %v1521
      %1862 = vmatprep.subr.bf16.mxu0 0
      %1863 = vmatpush1.bf16.msra.mxu0 %v1520
      %1864 = vmatprep.subr.bf16.mxu0 0
      %1865 = vmatpush1.bf16.msra.mxu0 %v1519
      %1866 = vmatprep.subr.bf16.mxu0 0
      %1867 = vmatpush1.bf16.msra.mxu0 %v1518
      %1868 = vmatprep.subr.bf16.mxu0 0
      %1869 = vmatpush1.bf16.msra.mxu0 %v1517
      %1870 = vmatprep.subr.bf16.mxu0 0
      %1871 = vmatpush1.bf16.msra.mxu0 %v1516
      %1872 = vmatprep.subr.bf16.mxu0 0
      %1873 = vmatpush2.bf16.msra.mxu0 0
      %1874 = vmatprep.subr.bf16.mxu0 0
      %1875 = vmatpush2.bf16.msra.mxu0 0
      %1876 = vmatprep.subr.bf16.mxu0 0
      %1877 = vmatpush2.bf16.msra.mxu0 0
      %1878 = vmatprep.subr.bf16.mxu0 0
      %1879 = vmatpush2.bf16.msra.mxu0 0
      %1880 = vmatprep.subr.bf16.mxu0 0
      %1881 = vmatpush2.bf16.msra.mxu0 0
      %1882 = vmatprep.subr.bf16.mxu0 0
      %1883 = vmatpush2.bf16.msra.mxu0 0
      %1884 = vmatprep.subr.bf16.mxu0 0
      %1885 = vmatpush2.bf16.msra.mxu0 0
      %1886 = vmatprep.subr.bf16.mxu0 0
      %1887 = vmatpush2.bf16.msra.mxu0 0
      %1888 = vmatprep.mubr.bf16.mxu0 0
      %1889 = vmatmul.mubr.bf16.gmra.mxu0 %v1100
      %v1890 = vpop.f32.mrf.mxu0
      %v1891 = vadd.f32 %v1826, %v1890
      %v1892 = vpop.f32.mrf.mxu0
      %v1893 = vpop.f32.mrf.mxu0
      %v1894 = vadd.f32 %v1829, %v1893
      %v1895 = vpop.f32.mrf.mxu0
      %1896 = vmatprep.mubr.bf16.mxu0 0
      %1897 = vmatmul.mubr.bf16.gmra.mxu0 %v1109
      %v1898 = vpop.f32.mrf.mxu0
      %v1899 = vadd.f32 %v1834, %v1898
      %v1900 = vpop.f32.mrf.mxu0
      %v1901 = vpop.f32.mrf.mxu0
      %v1902 = vadd.f32 %v1837, %v1901
      %v1903 = vpop.f32.mrf.mxu0
      %1904 = vmatprep.mubr.bf16.mxu0 0
      %1905 = vmatmul.mubr.bf16.gmra.mxu0 %v1118
      %v1906 = vpop.f32.mrf.mxu0
      %v1907 = vadd.f32 %v1842, %v1906
      %v1908 = vpop.f32.mrf.mxu0
      %v1909 = vpop.f32.mrf.mxu0
      %v1910 = vadd.f32 %v1845, %v1909
      %v1911 = vpop.f32.mrf.mxu0
      %1912 = vmatprep.mubr.bf16.mxu0 0
      %1913 = vmatmul.mubr.bf16.gmra.mxu0 %v1127
      %v1914 = vpop.f32.mrf.mxu0
      %v1915 = vadd.f32 %v1850, %v1914
      %v1916 = vpop.f32.mrf.mxu0
      %v1917 = vpop.f32.mrf.mxu0
      %v1918 = vadd.f32 %v1853, %v1917
      %v1919 = vpop.f32.mrf.mxu0
      %1920 = vdwg.mxu0
      %1921 = vst [vmem:[#allocation2] sm:$0xff] %v1891
      %1922 = vst [vmem:[#allocation2 + $0x8] sm:$0xff] %v1894
      %1923 = vst [vmem:[#allocation2 + $0x10] sm:$0xff] %v1899
      %1924 = vst [vmem:[#allocation2 + $0x18] sm:$0xff] %v1902
      %1925 = vst [vmem:[#allocation2 + $0x20] sm:$0xff] %v1907
      %1926 = vst [vmem:[#allocation2 + $0x28] sm:$0xff] %v1910
      %1927 = vst [vmem:[#allocation2 + $0x30] sm:$0xff] %v1915
      %1928 = vst [vmem:[#allocation2 + $0x38] sm:$0xff] %v1918
      %p1929 = scmp.gt.s32.totalorder %s25, 0
      // Predicated region
      $region45: #{basic_block_3d_forward.4} parent=43 // pred_check
        %p1930 = pneg %p1929
      $region46: #{basic_block_3d_forward.4} parent=43 // pred_check_branch
        %1932 = sbr.rel (%p1930) target = $region48
      $region47: #{basic_block_3d_forward.4} parent=43 // pred_region
        %v1933 = vld [vmem:[%s436] sm:$0xf]
        %v1934 = vld [vmem:[%s436 + $0x4] sm:$0xf]
        %v1935 = vld [vmem:[%s436 + $0x8] sm:$0xf]
        %v1936 = vld [vmem:[%s436 + $0xc] sm:$0xf]
        %v1937 = vld [vmem:[%s436 + $0x10] sm:$0xf]
        %v1938 = vld [vmem:[%s436 + $0x14] sm:$0xf]
        %v1939 = vld [vmem:[%s436 + $0x18] sm:$0xf]
        %v1940 = vld [vmem:[%s436 + $0x1c] sm:$0xf]
        %v1941 = vunpack.c.l.bf16 %v1933
        %v1942 = vunpack.c.l.bf16 %v1934
        %v1943 = vunpack.c.l.bf16 %v1935
        %v1944 = vunpack.c.l.bf16 %v1936
        %v1945 = vunpack.c.l.bf16 %v1937
        %v1946 = vunpack.c.l.bf16 %v1938
        %v1947 = vunpack.c.l.bf16 %v1939
        %v1948 = vunpack.c.l.bf16 %v1940
        %v1949 = vld [vmem:[%s4] sm:$0x1]
        %v1951 = vlaneseq
        %v1952 = vshrl.u32 %v1951, 7
        %v1953 = vsub.s32 0, %v1952
        %v1954 = vrot.slane %v1949, %v1953
        %v1956 = vmul.f32 %v1941, %v1954
        %v1957 = vmul.f32 %v1942, %v1954
        %v1958 = vmul.f32 %v1943, %v1954
        %v1959 = vmul.f32 %v1944, %v1954
        %v1960 = vmul.f32 %v1945, %v1954
        %v1961 = vmul.f32 %v1946, %v1954
        %v1962 = vmul.f32 %v1947, %v1954
        %v1963 = vmul.f32 %v1948, %v1954
        %v1964 = vld [vmem:[%s5] sm:$0x1]
        %v1966 = vlaneseq
        %v1967 = vshrl.u32 %v1966, 7
        %v1968 = vsub.s32 0, %v1967
        %v1969 = vrot.slane %v1964, %v1968
        %v1971 = vadd.f32 %v1956, %v1969
        %v1972 = vadd.f32 %v1957, %v1969
        %v1973 = vadd.f32 %v1958, %v1969
        %v1974 = vadd.f32 %v1959, %v1969
        %v1975 = vadd.f32 %v1960, %v1969
        %v1976 = vadd.f32 %v1961, %v1969
        %v1977 = vadd.f32 %v1962, %v1969
        %v1978 = vadd.f32 %v1963, %v1969
        %v1979 = vmax.f32 %v1971, 0.0
        %v1980 = vmax.f32 %v1972, 0.0
        %v1981 = vmax.f32 %v1973, 0.0
        %v1982 = vmax.f32 %v1974, 0.0
        %v1983 = vmax.f32 %v1975, 0.0
        %v1984 = vmax.f32 %v1976, 0.0
        %v1985 = vmax.f32 %v1977, 0.0
        %v1986 = vmax.f32 %v1978, 0.0
        %1987 = vst [vmem:[%s569 + $0x1] sm:$0xff] %v1979
        %1988 = vst [vmem:[%s569 + $0x11] sm:$0xff] %v1980
        %1989 = vst [vmem:[%s569 + $0x21] sm:$0xff] %v1981
        %1990 = vst [vmem:[%s569 + $0x31] sm:$0xff] %v1982
        %1991 = vst [vmem:[%s569 + $0x41] sm:$0xff] %v1983
        %1992 = vst [vmem:[%s569 + $0x51] sm:$0xff] %v1984
        %1993 = vst [vmem:[%s569 + $0x61] sm:$0xff] %v1985
        %1994 = vst [vmem:[%s569 + $0x71] sm:$0xff] %v1986
        %v1995 = vld [vmem:[#allocation3] sm:$0xff]
        %v1996 = vld [vmem:[#allocation3 + $0x10] sm:$0xff]
        %v1997 = vld [vmem:[#allocation3 + $0x20] sm:$0xff]
        %v1998 = vld [vmem:[#allocation3 + $0x30] sm:$0xff]
        %v1999 = vld [vmem:[#allocation3 + $0x40] sm:$0xff]
        %v2000 = vld [vmem:[#allocation3 + $0x50] sm:$0xff]
        %v2001 = vld [vmem:[#allocation3 + $0x60] sm:$0xff]
        %v2002 = vld [vmem:[#allocation3 + $0x70] sm:$0xff]
        %v2003 = vpack.c.bf16 %v1995, %v1995
        %v2004 = vpack.c.bf16 %v1996, %v1996
        %v2005 = vpack.c.bf16 %v1997, %v1997
        %v2006 = vpack.c.bf16 %v1998, %v1998
        %v2007 = vpack.c.bf16 %v1999, %v1999
        %v2008 = vpack.c.bf16 %v2000, %v2000
        %v2009 = vpack.c.bf16 %v2001, %v2001
        %v2010 = vpack.c.bf16 %v2002, %v2002
        %2011 = vst [vmem:[#allocation4] sm:$0xf] %v2003
        %2012 = vst [vmem:[#allocation4 + $0x24] sm:$0xf] %v2004
        %2013 = vst [vmem:[#allocation4 + $0x48] sm:$0xf] %v2005
        %2014 = vst [vmem:[#allocation4 + $0x6c] sm:$0xf] %v2006
        %2015 = vst [vmem:[#allocation4 + $0x90] sm:$0xf] %v2007
        %2016 = vst [vmem:[#allocation4 + $0xb4] sm:$0xf] %v2008
        %2017 = vst [vmem:[#allocation4 + $0xd8] sm:$0xf] %v2009
        %2018 = vst [vmem:[#allocation4 + $0xfc] sm:$0xf] %v2010
        %v2019 = vld [vmem:[#allocation3 + $0x1] sm:$0xff]
        %v2020 = vld [vmem:[#allocation3 + $0x11] sm:$0xff]
        %v2021 = vld [vmem:[#allocation3 + $0x21] sm:$0xff]
        %v2022 = vld [vmem:[#allocation3 + $0x31] sm:$0xff]
        %v2023 = vld [vmem:[#allocation3 + $0x41] sm:$0xff]
        %v2024 = vld [vmem:[#allocation3 + $0x51] sm:$0xff]
        %v2025 = vld [vmem:[#allocation3 + $0x61] sm:$0xff]
        %v2026 = vld [vmem:[#allocation3 + $0x71] sm:$0xff]
        %v2027 = vpack.c.bf16 %v2019, %v2019
        %v2028 = vpack.c.bf16 %v2020, %v2020
        %v2029 = vpack.c.bf16 %v2021, %v2021
        %v2030 = vpack.c.bf16 %v2022, %v2022
        %v2031 = vpack.c.bf16 %v2023, %v2023
        %v2032 = vpack.c.bf16 %v2024, %v2024
        %v2033 = vpack.c.bf16 %v2025, %v2025
        %v2034 = vpack.c.bf16 %v2026, %v2026
        %2035 = vst [vmem:[#allocation4 + $0x4] sm:$0xf] %v2027
        %2036 = vst [vmem:[#allocation4 + $0x28] sm:$0xf] %v2028
        %2037 = vst [vmem:[#allocation4 + $0x4c] sm:$0xf] %v2029
        %2038 = vst [vmem:[#allocation4 + $0x70] sm:$0xf] %v2030
        %2039 = vst [vmem:[#allocation4 + $0x94] sm:$0xf] %v2031
        %2040 = vst [vmem:[#allocation4 + $0xb8] sm:$0xf] %v2032
        %2041 = vst [vmem:[#allocation4 + $0xdc] sm:$0xf] %v2033
        %2042 = vst [vmem:[#allocation4 + $0x100] sm:$0xf] %v2034
        %v2043 = vld [vmem:[#allocation3 + $0x2] sm:$0xff]
        %v2044 = vld [vmem:[#allocation3 + $0x12] sm:$0xff]
        %v2045 = vld [vmem:[#allocation3 + $0x22] sm:$0xff]
        %v2046 = vld [vmem:[#allocation3 + $0x32] sm:$0xff]
        %v2047 = vld [vmem:[#allocation3 + $0x42] sm:$0xff]
        %v2048 = vld [vmem:[#allocation3 + $0x52] sm:$0xff]
        %v2049 = vld [vmem:[#allocation3 + $0x62] sm:$0xff]
        %v2050 = vld [vmem:[#allocation3 + $0x72] sm:$0xff]
        %v2051 = vpack.c.bf16 %v2043, %v2043
        %v2052 = vpack.c.bf16 %v2044, %v2044
        %v2053 = vpack.c.bf16 %v2045, %v2045
        %v2054 = vpack.c.bf16 %v2046, %v2046
        %v2055 = vpack.c.bf16 %v2047, %v2047
        %v2056 = vpack.c.bf16 %v2048, %v2048
        %v2057 = vpack.c.bf16 %v2049, %v2049
        %v2058 = vpack.c.bf16 %v2050, %v2050
        %2059 = vst [vmem:[#allocation4 + $0x8] sm:$0xf] %v2051
        %2060 = vst [vmem:[#allocation4 + $0x2c] sm:$0xf] %v2052
        %2061 = vst [vmem:[#allocation4 + $0x50] sm:$0xf] %v2053
        %2062 = vst [vmem:[#allocation4 + $0x74] sm:$0xf] %v2054
        %2063 = vst [vmem:[#allocation4 + $0x98] sm:$0xf] %v2055
        %2064 = vst [vmem:[#allocation4 + $0xbc] sm:$0xf] %v2056
        %2065 = vst [vmem:[#allocation4 + $0xe0] sm:$0xf] %v2057
        %2066 = vst [vmem:[#allocation4 + $0x104] sm:$0xf] %v2058
        %v2067 = vld [vmem:[%s569] sm:$0xff]
        %v2068 = vld [vmem:[%s569 + $0x10] sm:$0xff]
        %v2069 = vld [vmem:[%s569 + $0x20] sm:$0xff]
        %v2070 = vld [vmem:[%s569 + $0x30] sm:$0xff]
        %v2071 = vld [vmem:[%s569 + $0x40] sm:$0xff]
        %v2072 = vld [vmem:[%s569 + $0x50] sm:$0xff]
        %v2073 = vld [vmem:[%s569 + $0x60] sm:$0xff]
        %v2074 = vld [vmem:[%s569 + $0x70] sm:$0xff]
        %v2075 = vpack.c.bf16 %v2067, %v2067
        %v2076 = vpack.c.bf16 %v2068, %v2068
        %v2077 = vpack.c.bf16 %v2069, %v2069
        %v2078 = vpack.c.bf16 %v2070, %v2070
        %v2079 = vpack.c.bf16 %v2071, %v2071
        %v2080 = vpack.c.bf16 %v2072, %v2072
        %v2081 = vpack.c.bf16 %v2073, %v2073
        %v2082 = vpack.c.bf16 %v2074, %v2074
        %2083 = vst [vmem:[#allocation4 + $0xc] sm:$0xf] %v2075
        %2084 = vst [vmem:[#allocation4 + $0x30] sm:$0xf] %v2076
        %2085 = vst [vmem:[#allocation4 + $0x54] sm:$0xf] %v2077
        %2086 = vst [vmem:[#allocation4 + $0x78] sm:$0xf] %v2078
        %2087 = vst [vmem:[#allocation4 + $0x9c] sm:$0xf] %v2079
        %2088 = vst [vmem:[#allocation4 + $0xc0] sm:$0xf] %v2080
        %2089 = vst [vmem:[#allocation4 + $0xe4] sm:$0xf] %v2081
        %2090 = vst [vmem:[#allocation4 + $0x108] sm:$0xf] %v2082
        %v2091 = vld [vmem:[%s569 + $0x1] sm:$0xff]
        %v2092 = vld [vmem:[%s569 + $0x11] sm:$0xff]
        %v2093 = vld [vmem:[%s569 + $0x21] sm:$0xff]
        %v2094 = vld [vmem:[%s569 + $0x31] sm:$0xff]
        %v2095 = vld [vmem:[%s569 + $0x41] sm:$0xff]
        %v2096 = vld [vmem:[%s569 + $0x51] sm:$0xff]
        %v2097 = vld [vmem:[%s569 + $0x61] sm:$0xff]
        %v2098 = vld [vmem:[%s569 + $0x71] sm:$0xff]
        %v2099 = vpack.c.bf16 %v2091, %v2091
        %v2100 = vpack.c.bf16 %v2092, %v2092
        %v2101 = vpack.c.bf16 %v2093, %v2093
        %v2102 = vpack.c.bf16 %v2094, %v2094
        %v2103 = vpack.c.bf16 %v2095, %v2095
        %v2104 = vpack.c.bf16 %v2096, %v2096
        %v2105 = vpack.c.bf16 %v2097, %v2097
        %v2106 = vpack.c.bf16 %v2098, %v2098
        %2107 = vst [vmem:[#allocation4 + $0x10] sm:$0xf] %v2099
        %2108 = vst [vmem:[#allocation4 + $0x34] sm:$0xf] %v2100
        %2109 = vst [vmem:[#allocation4 + $0x58] sm:$0xf] %v2101
        %2110 = vst [vmem:[#allocation4 + $0x7c] sm:$0xf] %v2102
        %2111 = vst [vmem:[#allocation4 + $0xa0] sm:$0xf] %v2103
        %2112 = vst [vmem:[#allocation4 + $0xc4] sm:$0xf] %v2104
        %2113 = vst [vmem:[#allocation4 + $0xe8] sm:$0xf] %v2105
        %2114 = vst [vmem:[#allocation4 + $0x10c] sm:$0xf] %v2106
        %v2115 = vld [vmem:[%s569 + $0x2] sm:$0xff]
        %v2116 = vld [vmem:[%s569 + $0x12] sm:$0xff]
        %v2117 = vld [vmem:[%s569 + $0x22] sm:$0xff]
        %v2118 = vld [vmem:[%s569 + $0x32] sm:$0xff]
        %v2119 = vld [vmem:[%s569 + $0x42] sm:$0xff]
        %v2120 = vld [vmem:[%s569 + $0x52] sm:$0xff]
        %v2121 = vld [vmem:[%s569 + $0x62] sm:$0xff]
        %v2122 = vld [vmem:[%s569 + $0x72] sm:$0xff]
        %v2123 = vpack.c.bf16 %v2115, %v2115
        %v2124 = vpack.c.bf16 %v2116, %v2116
        %v2125 = vpack.c.bf16 %v2117, %v2117
        %v2126 = vpack.c.bf16 %v2118, %v2118
        %v2127 = vpack.c.bf16 %v2119, %v2119
        %v2128 = vpack.c.bf16 %v2120, %v2120
        %v2129 = vpack.c.bf16 %v2121, %v2121
        %v2130 = vpack.c.bf16 %v2122, %v2122
        %2131 = vst [vmem:[#allocation4 + $0x14] sm:$0xf] %v2123
        %2132 = vst [vmem:[#allocation4 + $0x38] sm:$0xf] %v2124
        %2133 = vst [vmem:[#allocation4 + $0x5c] sm:$0xf] %v2125
        %2134 = vst [vmem:[#allocation4 + $0x80] sm:$0xf] %v2126
        %2135 = vst [vmem:[#allocation4 + $0xa4] sm:$0xf] %v2127
        %2136 = vst [vmem:[#allocation4 + $0xc8] sm:$0xf] %v2128
        %2137 = vst [vmem:[#allocation4 + $0xec] sm:$0xf] %v2129
        %2138 = vst [vmem:[#allocation4 + $0x110] sm:$0xf] %v2130
        %v2139 = vld [vmem:[%s722] sm:$0xff]
        %v2140 = vld [vmem:[%s722 + $0x10] sm:$0xff]
        %v2141 = vld [vmem:[%s722 + $0x20] sm:$0xff]
        %v2142 = vld [vmem:[%s722 + $0x30] sm:$0xff]
        %v2143 = vld [vmem:[%s722 + $0x40] sm:$0xff]
        %v2144 = vld [vmem:[%s722 + $0x50] sm:$0xff]
        %v2145 = vld [vmem:[%s722 + $0x60] sm:$0xff]
        %v2146 = vld [vmem:[%s722 + $0x70] sm:$0xff]
        %v2147 = vpack.c.bf16 %v2139, %v2139
        %v2148 = vpack.c.bf16 %v2140, %v2140
        %v2149 = vpack.c.bf16 %v2141, %v2141
        %v2150 = vpack.c.bf16 %v2142, %v2142
        %v2151 = vpack.c.bf16 %v2143, %v2143
        %v2152 = vpack.c.bf16 %v2144, %v2144
        %v2153 = vpack.c.bf16 %v2145, %v2145
        %v2154 = vpack.c.bf16 %v2146, %v2146
        %2155 = vst [vmem:[#allocation4 + $0x18] sm:$0xf] %v2147
        %2156 = vst [vmem:[#allocation4 + $0x3c] sm:$0xf] %v2148
        %2157 = vst [vmem:[#allocation4 + $0x60] sm:$0xf] %v2149
        %2158 = vst [vmem:[#allocation4 + $0x84] sm:$0xf] %v2150
        %2159 = vst [vmem:[#allocation4 + $0xa8] sm:$0xf] %v2151
        %2160 = vst [vmem:[#allocation4 + $0xcc] sm:$0xf] %v2152
        %2161 = vst [vmem:[#allocation4 + $0xf0] sm:$0xf] %v2153
        %2162 = vst [vmem:[#allocation4 + $0x114] sm:$0xf] %v2154
        %v2163 = vld [vmem:[%s722 + $0x1] sm:$0xff]
        %v2164 = vld [vmem:[%s722 + $0x11] sm:$0xff]
        %v2165 = vld [vmem:[%s722 + $0x21] sm:$0xff]
        %v2166 = vld [vmem:[%s722 + $0x31] sm:$0xff]
        %v2167 = vld [vmem:[%s722 + $0x41] sm:$0xff]
        %v2168 = vld [vmem:[%s722 + $0x51] sm:$0xff]
        %v2169 = vld [vmem:[%s722 + $0x61] sm:$0xff]
        %v2170 = vld [vmem:[%s722 + $0x71] sm:$0xff]
        %v2171 = vpack.c.bf16 %v2163, %v2163
        %v2172 = vpack.c.bf16 %v2164, %v2164
        %v2173 = vpack.c.bf16 %v2165, %v2165
        %v2174 = vpack.c.bf16 %v2166, %v2166
        %v2175 = vpack.c.bf16 %v2167, %v2167
        %v2176 = vpack.c.bf16 %v2168, %v2168
        %v2177 = vpack.c.bf16 %v2169, %v2169
        %v2178 = vpack.c.bf16 %v2170, %v2170
        %2179 = vst [vmem:[#allocation4 + $0x1c] sm:$0xf] %v2171
        %2180 = vst [vmem:[#allocation4 + $0x40] sm:$0xf] %v2172
        %2181 = vst [vmem:[#allocation4 + $0x64] sm:$0xf] %v2173
        %2182 = vst [vmem:[#allocation4 + $0x88] sm:$0xf] %v2174
        %2183 = vst [vmem:[#allocation4 + $0xac] sm:$0xf] %v2175
        %2184 = vst [vmem:[#allocation4 + $0xd0] sm:$0xf] %v2176
        %2185 = vst [vmem:[#allocation4 + $0xf4] sm:$0xf] %v2177
        %2186 = vst [vmem:[#allocation4 + $0x118] sm:$0xf] %v2178
        %v2187 = vld [vmem:[%s722 + $0x2] sm:$0xff]
        %v2188 = vld [vmem:[%s722 + $0x12] sm:$0xff]
        %v2189 = vld [vmem:[%s722 + $0x22] sm:$0xff]
        %v2190 = vld [vmem:[%s722 + $0x32] sm:$0xff]
        %v2191 = vld [vmem:[%s722 + $0x42] sm:$0xff]
        %v2192 = vld [vmem:[%s722 + $0x52] sm:$0xff]
        %v2193 = vld [vmem:[%s722 + $0x62] sm:$0xff]
        %v2194 = vld [vmem:[%s722 + $0x72] sm:$0xff]
        %v2195 = vpack.c.bf16 %v2187, %v2187
        %v2196 = vpack.c.bf16 %v2188, %v2188
        %v2197 = vpack.c.bf16 %v2189, %v2189
        %v2198 = vpack.c.bf16 %v2190, %v2190
        %v2199 = vpack.c.bf16 %v2191, %v2191
        %v2200 = vpack.c.bf16 %v2192, %v2192
        %v2201 = vpack.c.bf16 %v2193, %v2193
        %v2202 = vpack.c.bf16 %v2194, %v2194
        %2203 = vst [vmem:[#allocation4 + $0x20] sm:$0xf] %v2195
        %2204 = vst [vmem:[#allocation4 + $0x44] sm:$0xf] %v2196
        %2205 = vst [vmem:[#allocation4 + $0x68] sm:$0xf] %v2197
        %2206 = vst [vmem:[#allocation4 + $0x8c] sm:$0xf] %v2198
        %2207 = vst [vmem:[#allocation4 + $0xb0] sm:$0xf] %v2199
        %2208 = vst [vmem:[#allocation4 + $0xd4] sm:$0xf] %v2200
        %2209 = vst [vmem:[#allocation4 + $0xf8] sm:$0xf] %v2201
        %2210 = vst [vmem:[#allocation4 + $0x11c] sm:$0xf] %v2202
        %v2211 = vld [vmem:[#allocation4] sm:$0xff]
        %v2212 = vld [vmem:[#allocation4 + $0x8] sm:$0xff]
        %v2213 = vld [vmem:[#allocation4 + $0x10] sm:$0xff]
        %v2214 = vld [vmem:[#allocation4 + $0x18] sm:$0xff]
        %v2215 = vld [vmem:[#allocation4 + $0x20] sm:$0xf]
        %v2216 = vld [vmem:[#allocation4 + $0x24] sm:$0xff]
        %v2217 = vld [vmem:[#allocation4 + $0x2c] sm:$0xff]
        %v2218 = vld [vmem:[#allocation4 + $0x34] sm:$0xff]
        %v2219 = vld [vmem:[#allocation4 + $0x3c] sm:$0xff]
        %v2220 = vld [vmem:[#allocation4 + $0x44] sm:$0xf]
        %v2221 = vld [vmem:[#allocation4 + $0x48] sm:$0xff]
        %v2222 = vld [vmem:[#allocation4 + $0x50] sm:$0xff]
        %v2223 = vld [vmem:[#allocation4 + $0x58] sm:$0xff]
        %v2224 = vld [vmem:[#allocation4 + $0x60] sm:$0xff]
        %v2225 = vld [vmem:[#allocation4 + $0x68] sm:$0xf]
        %v2226 = vld [vmem:[#allocation4 + $0x6c] sm:$0xff]
        %v2227 = vld [vmem:[#allocation4 + $0x74] sm:$0xff]
        %v2228 = vld [vmem:[#allocation4 + $0x7c] sm:$0xff]
        %v2229 = vld [vmem:[#allocation4 + $0x84] sm:$0xff]
        %v2230 = vld [vmem:[#allocation4 + $0x8c] sm:$0xf]
        %v2231 = vld [vmem:[#allocation4 + $0x90] sm:$0xff]
        %v2232 = vld [vmem:[#allocation4 + $0x98] sm:$0xff]
        %v2233 = vld [vmem:[#allocation4 + $0xa0] sm:$0xff]
        %v2234 = vld [vmem:[#allocation4 + $0xa8] sm:$0xff]
        %v2235 = vld [vmem:[#allocation4 + $0xb0] sm:$0xf]
        %v2236 = vld [vmem:[#allocation4 + $0xb4] sm:$0xff]
        %v2237 = vld [vmem:[#allocation4 + $0xbc] sm:$0xff]
        %v2238 = vld [vmem:[#allocation4 + $0xc4] sm:$0xff]
        %v2239 = vld [vmem:[#allocation4 + $0xcc] sm:$0xff]
        %v2240 = vld [vmem:[#allocation4 + $0xd4] sm:$0xf]
        %v2241 = vld [vmem:[#allocation4 + $0xd8] sm:$0xff]
        %v2242 = vld [vmem:[#allocation4 + $0xe0] sm:$0xff]
        %v2243 = vld [vmem:[#allocation4 + $0xe8] sm:$0xff]
        %v2244 = vld [vmem:[#allocation4 + $0xf0] sm:$0xff]
        %v2245 = vld [vmem:[#allocation4 + $0xf8] sm:$0xf]
        %v2246 = vld [vmem:[#allocation4 + $0xfc] sm:$0xff]
        %v2247 = vld [vmem:[#allocation4 + $0x104] sm:$0xff]
        %v2248 = vld [vmem:[#allocation4 + $0x10c] sm:$0xff]
        %v2249 = vld [vmem:[#allocation4 + $0x114] sm:$0xff]
        %v2250 = vld [vmem:[#allocation4 + $0x11c] sm:$0xf]
        %v2251 = vld [vmem:[%s3] sm:$0xf]
        %v2252 = vld [vmem:[%s3 + $0x4] sm:$0xf]
        %v2253 = vld [vmem:[%s3 + $0x8] sm:$0xf]
        %v2254 = vld [vmem:[%s3 + $0xc] sm:$0xf]
        %v2255 = vld [vmem:[%s3 + $0x10] sm:$0xf]
        %v2256 = vld [vmem:[%s3 + $0x14] sm:$0xf]
        %v2257 = vld [vmem:[%s3 + $0x18] sm:$0xf]
        %v2258 = vld [vmem:[%s3 + $0x1c] sm:$0xf]
        %v2259 = vld [vmem:[%s3 + $0x20] sm:$0xf]
        %v2260 = vld [vmem:[%s3 + $0x24] sm:$0xf]
        %v2261 = vld [vmem:[%s3 + $0x28] sm:$0xf]
        %v2262 = vld [vmem:[%s3 + $0x2c] sm:$0xf]
        %v2263 = vld [vmem:[%s3 + $0x30] sm:$0xf]
        %v2264 = vld [vmem:[%s3 + $0x34] sm:$0xf]
        %v2265 = vld [vmem:[%s3 + $0x38] sm:$0xf]
        %v2266 = vld [vmem:[%s3 + $0x3c] sm:$0xf]
        %v2267 = vld [vmem:[%s3 + $0x40] sm:$0xf]
        %v2268 = vld [vmem:[%s3 + $0x44] sm:$0xf]
        %v2269 = vld [vmem:[%s3 + $0x48] sm:$0xf]
        %v2270 = vld [vmem:[%s3 + $0x4c] sm:$0xf]
        %v2271 = vld [vmem:[%s3 + $0x50] sm:$0xf]
        %v2272 = vld [vmem:[%s3 + $0x54] sm:$0xf]
        %v2273 = vld [vmem:[%s3 + $0x58] sm:$0xf]
        %v2274 = vld [vmem:[%s3 + $0x5c] sm:$0xf]
        %v2275 = vld [vmem:[%s3 + $0x60] sm:$0xf]
        %v2276 = vld [vmem:[%s3 + $0x64] sm:$0xf]
        %v2277 = vld [vmem:[%s3 + $0x68] sm:$0xf]
        %v2278 = vld [vmem:[%s3 + $0x6c] sm:$0xf]
        %v2279 = vld [vmem:[%s3 + $0x70] sm:$0xf]
        %v2280 = vld [vmem:[%s3 + $0x74] sm:$0xf]
        %v2281 = vld [vmem:[%s3 + $0x78] sm:$0xf]
        %v2282 = vld [vmem:[%s3 + $0x7c] sm:$0xf]
        %v2283 = vld [vmem:[%s3 + $0x80] sm:$0xf]
        %v2284 = vld [vmem:[%s3 + $0x84] sm:$0xf]
        %v2285 = vld [vmem:[%s3 + $0x88] sm:$0xf]
        %v2286 = vld [vmem:[%s3 + $0x8c] sm:$0xf]
        %v2287 = vld [vmem:[%s3 + $0x90] sm:$0xf]
        %v2288 = vld [vmem:[%s3 + $0x94] sm:$0xf]
        %v2289 = vld [vmem:[%s3 + $0x98] sm:$0xf]
        %v2290 = vld [vmem:[%s3 + $0x9c] sm:$0xf]
        %v2291 = vld [vmem:[%s3 + $0xa0] sm:$0xf]
        %v2292 = vld [vmem:[%s3 + $0xa4] sm:$0xf]
        %v2293 = vld [vmem:[%s3 + $0xa8] sm:$0xf]
        %v2294 = vld [vmem:[%s3 + $0xac] sm:$0xf]
        %v2295 = vld [vmem:[%s3 + $0xb0] sm:$0xf]
        %v2296 = vld [vmem:[%s3 + $0xb4] sm:$0xf]
        %v2297 = vld [vmem:[%s3 + $0xb8] sm:$0xf]
        %v2298 = vld [vmem:[%s3 + $0xbc] sm:$0xf]
        %v2299 = vld [vmem:[%s3 + $0xc0] sm:$0xf]
        %v2300 = vld [vmem:[%s3 + $0xc4] sm:$0xf]
        %v2301 = vld [vmem:[%s3 + $0xc8] sm:$0xf]
        %v2302 = vld [vmem:[%s3 + $0xcc] sm:$0xf]
        %v2303 = vld [vmem:[%s3 + $0xd0] sm:$0xf]
        %v2304 = vld [vmem:[%s3 + $0xd4] sm:$0xf]
        %v2305 = vld [vmem:[%s3 + $0xd8] sm:$0xf]
        %v2306 = vld [vmem:[%s3 + $0xdc] sm:$0xf]
        %v2307 = vld [vmem:[%s3 + $0xe0] sm:$0xf]
        %v2308 = vld [vmem:[%s3 + $0xe4] sm:$0xf]
        %v2309 = vld [vmem:[%s3 + $0xe8] sm:$0xf]
        %v2310 = vld [vmem:[%s3 + $0xec] sm:$0xf]
        %v2311 = vld [vmem:[%s3 + $0xf0] sm:$0xf]
        %v2312 = vld [vmem:[%s3 + $0xf4] sm:$0xf]
        %v2313 = vld [vmem:[%s3 + $0xf8] sm:$0xf]
        %v2314 = vld [vmem:[%s3 + $0xfc] sm:$0xf]
        %v2315 = vld [vmem:[%s3 + $0x100] sm:$0xf]
        %v2316 = vld [vmem:[%s3 + $0x104] sm:$0xf]
        %v2317 = vld [vmem:[%s3 + $0x108] sm:$0xf]
        %v2318 = vld [vmem:[%s3 + $0x10c] sm:$0xf]
        %v2319 = vld [vmem:[%s3 + $0x110] sm:$0xf]
        %v2320 = vld [vmem:[%s3 + $0x114] sm:$0xf]
        %v2321 = vld [vmem:[%s3 + $0x118] sm:$0xf]
        %v2322 = vld [vmem:[%s3 + $0x11c] sm:$0xf]
        %v2323 = vld [vmem:[%s3 + $0x120] sm:$0xf]
        %v2324 = vld [vmem:[%s3 + $0x124] sm:$0xf]
        %v2325 = vld [vmem:[%s3 + $0x128] sm:$0xf]
        %v2326 = vld [vmem:[%s3 + $0x12c] sm:$0xf]
        %v2327 = vld [vmem:[%s3 + $0x130] sm:$0xf]
        %v2328 = vld [vmem:[%s3 + $0x134] sm:$0xf]
        %v2329 = vld [vmem:[%s3 + $0x138] sm:$0xf]
        %v2330 = vld [vmem:[%s3 + $0x13c] sm:$0xf]
        %v2331 = vld [vmem:[%s3 + $0x140] sm:$0xf]
        %v2332 = vld [vmem:[%s3 + $0x144] sm:$0xf]
        %v2333 = vld [vmem:[%s3 + $0x148] sm:$0xf]
        %v2334 = vld [vmem:[%s3 + $0x14c] sm:$0xf]
        %v2335 = vld [vmem:[%s3 + $0x150] sm:$0xf]
        %v2336 = vld [vmem:[%s3 + $0x154] sm:$0xf]
        %v2337 = vld [vmem:[%s3 + $0x158] sm:$0xf]
        %v2338 = vld [vmem:[%s3 + $0x15c] sm:$0xf]
        %v2339 = vld [vmem:[%s3 + $0x160] sm:$0xf]
        %v2340 = vld [vmem:[%s3 + $0x164] sm:$0xf]
        %v2341 = vld [vmem:[%s3 + $0x168] sm:$0xf]
        %v2342 = vld [vmem:[%s3 + $0x16c] sm:$0xf]
        %v2343 = vld [vmem:[%s3 + $0x170] sm:$0xf]
        %v2344 = vld [vmem:[%s3 + $0x174] sm:$0xf]
        %v2345 = vld [vmem:[%s3 + $0x178] sm:$0xf]
        %v2346 = vld [vmem:[%s3 + $0x17c] sm:$0xf]
        %v2347 = vld [vmem:[%s3 + $0x180] sm:$0xf]
        %v2348 = vld [vmem:[%s3 + $0x184] sm:$0xf]
        %v2349 = vld [vmem:[%s3 + $0x188] sm:$0xf]
        %v2350 = vld [vmem:[%s3 + $0x18c] sm:$0xf]
        %v2351 = vld [vmem:[%s3 + $0x190] sm:$0xf]
        %v2352 = vld [vmem:[%s3 + $0x194] sm:$0xf]
        %v2353 = vld [vmem:[%s3 + $0x198] sm:$0xf]
        %v2354 = vld [vmem:[%s3 + $0x19c] sm:$0xf]
        %v2355 = vld [vmem:[%s3 + $0x1a0] sm:$0xf]
        %v2356 = vld [vmem:[%s3 + $0x1a4] sm:$0xf]
        %v2357 = vld [vmem:[%s3 + $0x1a8] sm:$0xf]
        %v2358 = vld [vmem:[%s3 + $0x1ac] sm:$0xf]
        %v2359 = vld [vmem:[%s3 + $0x1b0] sm:$0xf]
        %v2360 = vld [vmem:[%s3 + $0x1b4] sm:$0xf]
        %v2361 = vld [vmem:[%s3 + $0x1b8] sm:$0xf]
        %v2362 = vld [vmem:[%s3 + $0x1bc] sm:$0xf]
        %v2363 = vld [vmem:[%s3 + $0x1c0] sm:$0xf]
        %v2364 = vld [vmem:[%s3 + $0x1c4] sm:$0xf]
        %v2365 = vld [vmem:[%s3 + $0x1c8] sm:$0xf]
        %v2366 = vld [vmem:[%s3 + $0x1cc] sm:$0xf]
        %v2367 = vld [vmem:[%s3 + $0x1d0] sm:$0xf]
        %v2368 = vld [vmem:[%s3 + $0x1d4] sm:$0xf]
        %v2369 = vld [vmem:[%s3 + $0x1d8] sm:$0xf]
        %v2370 = vld [vmem:[%s3 + $0x1dc] sm:$0xf]
        %v2371 = vld [vmem:[%s3 + $0x1e0] sm:$0xf]
        %v2372 = vld [vmem:[%s3 + $0x1e4] sm:$0xf]
        %v2373 = vld [vmem:[%s3 + $0x1e8] sm:$0xf]
        %v2374 = vld [vmem:[%s3 + $0x1ec] sm:$0xf]
        %v2375 = vld [vmem:[%s3 + $0x1f0] sm:$0xf]
        %v2376 = vld [vmem:[%s3 + $0x1f4] sm:$0xf]
        %v2377 = vld [vmem:[%s3 + $0x1f8] sm:$0xf]
        %v2378 = vld [vmem:[%s3 + $0x1fc] sm:$0xf]
        %v2379 = vld [vmem:[%s3 + $0x200] sm:$0xf]
        %v2380 = vld [vmem:[%s3 + $0x204] sm:$0xf]
        %v2381 = vld [vmem:[%s3 + $0x208] sm:$0xf]
        %v2382 = vld [vmem:[%s3 + $0x20c] sm:$0xf]
        %v2383 = vld [vmem:[%s3 + $0x210] sm:$0xf]
        %v2384 = vld [vmem:[%s3 + $0x214] sm:$0xf]
        %v2385 = vld [vmem:[%s3 + $0x218] sm:$0xf]
        %v2386 = vld [vmem:[%s3 + $0x21c] sm:$0xf]
        %v2387 = vld [vmem:[%s3 + $0x220] sm:$0xf]
        %v2388 = vld [vmem:[%s3 + $0x224] sm:$0xf]
        %v2389 = vld [vmem:[%s3 + $0x228] sm:$0xf]
        %v2390 = vld [vmem:[%s3 + $0x22c] sm:$0xf]
        %v2391 = vld [vmem:[%s3 + $0x230] sm:$0xf]
        %v2392 = vld [vmem:[%s3 + $0x234] sm:$0xf]
        %v2393 = vld [vmem:[%s3 + $0x238] sm:$0xf]
        %v2394 = vld [vmem:[%s3 + $0x23c] sm:$0xf]
        %v2435 = vunpack.c.l.b16 %v2211
        %v2436 = vunpack.c.h.b16 %v2211
        %v2437 = vunpack.c.l.b16 %v2212
        %v2438 = vunpack.c.h.b16 %v2212
        %v2439 = vunpack.c.l.b16 %v2213
        %v2440 = vunpack.c.h.b16 %v2213
        %v2441 = vunpack.c.l.b16 %v2214
        %v2442 = vunpack.c.h.b16 %v2214
        %v2443 = vunpack.c.l.b16 %v2215
        %v2444 = vunpack.c.l.b16 %v2216
        %v2445 = vunpack.c.h.b16 %v2216
        %v2446 = vunpack.c.l.b16 %v2217
        %v2447 = vunpack.c.h.b16 %v2217
        %v2448 = vunpack.c.l.b16 %v2218
        %v2449 = vunpack.c.h.b16 %v2218
        %v2450 = vunpack.c.l.b16 %v2219
        %v2451 = vunpack.c.h.b16 %v2219
        %v2452 = vunpack.c.l.b16 %v2220
        %v2453 = vunpack.c.l.b16 %v2221
        %v2454 = vunpack.c.h.b16 %v2221
        %v2455 = vunpack.c.l.b16 %v2222
        %v2456 = vunpack.c.h.b16 %v2222
        %v2457 = vunpack.c.l.b16 %v2223
        %v2458 = vunpack.c.h.b16 %v2223
        %v2459 = vunpack.c.l.b16 %v2224
        %v2460 = vunpack.c.h.b16 %v2224
        %v2461 = vunpack.c.l.b16 %v2225
        %v2462 = vunpack.c.l.b16 %v2226
        %v2463 = vunpack.c.h.b16 %v2226
        %v2464 = vunpack.c.l.b16 %v2227
        %v2465 = vunpack.c.h.b16 %v2227
        %v2466 = vunpack.c.l.b16 %v2228
        %v2467 = vunpack.c.h.b16 %v2228
        %v2468 = vunpack.c.l.b16 %v2229
        %v2469 = vunpack.c.h.b16 %v2229
        %v2470 = vunpack.c.l.b16 %v2230
        %v2471 = vunpack.c.l.b16 %v2231
        %v2472 = vunpack.c.h.b16 %v2231
        %v2473 = vunpack.c.l.b16 %v2232
        %v2474 = vunpack.c.h.b16 %v2232
        %v2475 = vunpack.c.l.b16 %v2233
        %v2476 = vunpack.c.h.b16 %v2233
        %v2477 = vunpack.c.l.b16 %v2234
        %v2478 = vunpack.c.h.b16 %v2234
        %v2479 = vunpack.c.l.b16 %v2235
        %v2480 = vunpack.c.l.b16 %v2236
        %v2481 = vunpack.c.h.b16 %v2236
        %v2482 = vunpack.c.l.b16 %v2237
        %v2483 = vunpack.c.h.b16 %v2237
        %v2484 = vunpack.c.l.b16 %v2238
        %v2485 = vunpack.c.h.b16 %v2238
        %v2486 = vunpack.c.l.b16 %v2239
        %v2487 = vunpack.c.h.b16 %v2239
        %v2488 = vunpack.c.l.b16 %v2240
        %v2489 = vunpack.c.l.b16 %v2241
        %v2490 = vunpack.c.h.b16 %v2241
        %v2491 = vunpack.c.l.b16 %v2242
        %v2492 = vunpack.c.h.b16 %v2242
        %v2493 = vunpack.c.l.b16 %v2243
        %v2494 = vunpack.c.h.b16 %v2243
        %v2495 = vunpack.c.l.b16 %v2244
        %v2496 = vunpack.c.h.b16 %v2244
        %v2497 = vunpack.c.l.b16 %v2245
        %v2498 = vunpack.c.l.b16 %v2246
        %v2499 = vunpack.c.h.b16 %v2246
        %v2500 = vunpack.c.l.b16 %v2247
        %v2501 = vunpack.c.h.b16 %v2247
        %v2502 = vunpack.c.l.b16 %v2248
        %v2503 = vunpack.c.h.b16 %v2248
        %v2504 = vunpack.c.l.b16 %v2249
        %v2505 = vunpack.c.h.b16 %v2249
        %v2506 = vunpack.c.l.b16 %v2250
        %v2507 = vpack.c.b16 %v2444, %v2435
        %v2508 = vpack.c.b16 %v2445, %v2436
        %v2509 = vpack.c.b16 %v2446, %v2437
        %v2510 = vpack.c.b16 %v2447, %v2438
        %v2511 = vpack.c.b16 %v2448, %v2439
        %v2512 = vpack.c.b16 %v2449, %v2440
        %v2513 = vpack.c.b16 %v2450, %v2441
        %v2514 = vpack.c.b16 %v2451, %v2442
        %v2515 = vpack.c.b16 %v2452, %v2443
        %v2516 = vpack.c.b16 %v2462, %v2453
        %v2517 = vpack.c.b16 %v2463, %v2454
        %v2518 = vpack.c.b16 %v2464, %v2455
        %v2519 = vpack.c.b16 %v2465, %v2456
        %v2520 = vpack.c.b16 %v2466, %v2457
        %v2521 = vpack.c.b16 %v2467, %v2458
        %v2522 = vpack.c.b16 %v2468, %v2459
        %v2523 = vpack.c.b16 %v2469, %v2460
        %v2524 = vpack.c.b16 %v2470, %v2461
        %v2525 = vpack.c.b16 %v2480, %v2471
        %v2526 = vpack.c.b16 %v2481, %v2472
        %v2527 = vpack.c.b16 %v2482, %v2473
        %v2528 = vpack.c.b16 %v2483, %v2474
        %v2529 = vpack.c.b16 %v2484, %v2475
        %v2530 = vpack.c.b16 %v2485, %v2476
        %v2531 = vpack.c.b16 %v2486, %v2477
        %v2532 = vpack.c.b16 %v2487, %v2478
        %v2533 = vpack.c.b16 %v2488, %v2479
        %v2534 = vpack.c.b16 %v2498, %v2489
        %v2535 = vpack.c.b16 %v2499, %v2490
        %v2536 = vpack.c.b16 %v2500, %v2491
        %v2537 = vpack.c.b16 %v2501, %v2492
        %v2538 = vpack.c.b16 %v2502, %v2493
        %v2539 = vpack.c.b16 %v2503, %v2494
        %v2540 = vpack.c.b16 %v2504, %v2495
        %v2541 = vpack.c.b16 %v2505, %v2496
        %v2542 = vpack.c.b16 %v2506, %v2497
        %v2723 = vunpack.c.l.b16 %v2251
        %v2724 = vunpack.c.l.b16 %v2252
        %v2725 = vunpack.c.l.b16 %v2253
        %v2726 = vunpack.c.l.b16 %v2254
        %v2727 = vunpack.c.l.b16 %v2255
        %v2728 = vunpack.c.l.b16 %v2256
        %v2729 = vunpack.c.l.b16 %v2257
        %v2730 = vunpack.c.l.b16 %v2258
        %v2731 = vunpack.c.l.b16 %v2259
        %v2732 = vunpack.c.l.b16 %v2260
        %v2733 = vunpack.c.l.b16 %v2261
        %v2734 = vunpack.c.l.b16 %v2262
        %v2735 = vunpack.c.l.b16 %v2263
        %v2736 = vunpack.c.l.b16 %v2264
        %v2737 = vunpack.c.l.b16 %v2265
        %v2738 = vunpack.c.l.b16 %v2266
        %v2739 = vunpack.c.l.b16 %v2267
        %v2740 = vunpack.c.l.b16 %v2268
        %v2741 = vunpack.c.l.b16 %v2269
        %v2742 = vunpack.c.l.b16 %v2270
        %v2743 = vunpack.c.l.b16 %v2271
        %v2744 = vunpack.c.l.b16 %v2272
        %v2745 = vunpack.c.l.b16 %v2273
        %v2746 = vunpack.c.l.b16 %v2274
        %v2747 = vunpack.c.l.b16 %v2275
        %v2748 = vunpack.c.l.b16 %v2276
        %v2749 = vunpack.c.l.b16 %v2277
        %v2750 = vunpack.c.l.b16 %v2278
        %v2751 = vunpack.c.l.b16 %v2279
        %v2752 = vunpack.c.l.b16 %v2280
        %v2753 = vunpack.c.l.b16 %v2281
        %v2754 = vunpack.c.l.b16 %v2282
        %v2755 = vunpack.c.l.b16 %v2283
        %v2756 = vunpack.c.l.b16 %v2284
        %v2757 = vunpack.c.l.b16 %v2285
        %v2758 = vunpack.c.l.b16 %v2286
        %v2759 = vunpack.c.l.b16 %v2287
        %v2760 = vunpack.c.l.b16 %v2288
        %v2761 = vunpack.c.l.b16 %v2289
        %v2762 = vunpack.c.l.b16 %v2290
        %v2763 = vunpack.c.l.b16 %v2291
        %v2764 = vunpack.c.l.b16 %v2292
        %v2765 = vunpack.c.l.b16 %v2293
        %v2766 = vunpack.c.l.b16 %v2294
        %v2767 = vunpack.c.l.b16 %v2295
        %v2768 = vunpack.c.l.b16 %v2296
        %v2769 = vunpack.c.l.b16 %v2297
        %v2770 = vunpack.c.l.b16 %v2298
        %v2771 = vunpack.c.l.b16 %v2299
        %v2772 = vunpack.c.l.b16 %v2300
        %v2773 = vunpack.c.l.b16 %v2301
        %v2774 = vunpack.c.l.b16 %v2302
        %v2775 = vunpack.c.l.b16 %v2303
        %v2776 = vunpack.c.l.b16 %v2304
        %v2777 = vunpack.c.l.b16 %v2305
        %v2778 = vunpack.c.l.b16 %v2306
        %v2779 = vunpack.c.l.b16 %v2307
        %v2780 = vunpack.c.l.b16 %v2308
        %v2781 = vunpack.c.l.b16 %v2309
        %v2782 = vunpack.c.l.b16 %v2310
        %v2783 = vunpack.c.l.b16 %v2311
        %v2784 = vunpack.c.l.b16 %v2312
        %v2785 = vunpack.c.l.b16 %v2313
        %v2786 = vunpack.c.l.b16 %v2314
        %v2787 = vunpack.c.l.b16 %v2315
        %v2788 = vunpack.c.l.b16 %v2316
        %v2789 = vunpack.c.l.b16 %v2317
        %v2790 = vunpack.c.l.b16 %v2318
        %v2791 = vunpack.c.l.b16 %v2319
        %v2792 = vunpack.c.l.b16 %v2320
        %v2793 = vunpack.c.l.b16 %v2321
        %v2794 = vunpack.c.l.b16 %v2322
        %v2795 = vunpack.c.l.b16 %v2323
        %v2796 = vunpack.c.l.b16 %v2324
        %v2797 = vunpack.c.l.b16 %v2325
        %v2798 = vunpack.c.l.b16 %v2326
        %v2799 = vunpack.c.l.b16 %v2327
        %v2800 = vunpack.c.l.b16 %v2328
        %v2801 = vunpack.c.l.b16 %v2329
        %v2802 = vunpack.c.l.b16 %v2330
        %v2803 = vunpack.c.l.b16 %v2331
        %v2804 = vunpack.c.l.b16 %v2332
        %v2805 = vunpack.c.l.b16 %v2333
        %v2806 = vunpack.c.l.b16 %v2334
        %v2807 = vunpack.c.l.b16 %v2335
        %v2808 = vunpack.c.l.b16 %v2336
        %v2809 = vunpack.c.l.b16 %v2337
        %v2810 = vunpack.c.l.b16 %v2338
        %v2811 = vunpack.c.l.b16 %v2339
        %v2812 = vunpack.c.l.b16 %v2340
        %v2813 = vunpack.c.l.b16 %v2341
        %v2814 = vunpack.c.l.b16 %v2342
        %v2815 = vunpack.c.l.b16 %v2343
        %v2816 = vunpack.c.l.b16 %v2344
        %v2817 = vunpack.c.l.b16 %v2345
        %v2818 = vunpack.c.l.b16 %v2346
        %v2819 = vunpack.c.l.b16 %v2347
        %v2820 = vunpack.c.l.b16 %v2348
        %v2821 = vunpack.c.l.b16 %v2349
        %v2822 = vunpack.c.l.b16 %v2350
        %v2823 = vunpack.c.l.b16 %v2351
        %v2824 = vunpack.c.l.b16 %v2352
        %v2825 = vunpack.c.l.b16 %v2353
        %v2826 = vunpack.c.l.b16 %v2354
        %v2827 = vunpack.c.l.b16 %v2355
        %v2828 = vunpack.c.l.b16 %v2356
        %v2829 = vunpack.c.l.b16 %v2357
        %v2830 = vunpack.c.l.b16 %v2358
        %v2831 = vunpack.c.l.b16 %v2359
        %v2832 = vunpack.c.l.b16 %v2360
        %v2833 = vunpack.c.l.b16 %v2361
        %v2834 = vunpack.c.l.b16 %v2362
        %v2835 = vunpack.c.l.b16 %v2363
        %v2836 = vunpack.c.l.b16 %v2364
        %v2837 = vunpack.c.l.b16 %v2365
        %v2838 = vunpack.c.l.b16 %v2366
        %v2839 = vunpack.c.l.b16 %v2367
        %v2840 = vunpack.c.l.b16 %v2368
        %v2841 = vunpack.c.l.b16 %v2369
        %v2842 = vunpack.c.l.b16 %v2370
        %v2843 = vunpack.c.l.b16 %v2371
        %v2844 = vunpack.c.l.b16 %v2372
        %v2845 = vunpack.c.l.b16 %v2373
        %v2846 = vunpack.c.l.b16 %v2374
        %v2847 = vunpack.c.l.b16 %v2375
        %v2848 = vunpack.c.l.b16 %v2376
        %v2849 = vunpack.c.l.b16 %v2377
        %v2850 = vunpack.c.l.b16 %v2378
        %v2851 = vunpack.c.l.b16 %v2379
        %v2852 = vunpack.c.l.b16 %v2380
        %v2853 = vunpack.c.l.b16 %v2381
        %v2854 = vunpack.c.l.b16 %v2382
        %v2855 = vunpack.c.l.b16 %v2383
        %v2856 = vunpack.c.l.b16 %v2384
        %v2857 = vunpack.c.l.b16 %v2385
        %v2858 = vunpack.c.l.b16 %v2386
        %v2859 = vunpack.c.l.b16 %v2387
        %v2860 = vunpack.c.l.b16 %v2388
        %v2861 = vunpack.c.l.b16 %v2389
        %v2862 = vunpack.c.l.b16 %v2390
        %v2863 = vunpack.c.l.b16 %v2391
        %v2864 = vunpack.c.l.b16 %v2392
        %v2865 = vunpack.c.l.b16 %v2393
        %v2866 = vunpack.c.l.b16 %v2394
        %v2867 = vpack.c.b16 %v2724, %v2723
        %v2868 = vpack.c.b16 %v2726, %v2725
        %v2869 = vpack.c.b16 %v2728, %v2727
        %v2870 = vpack.c.b16 %v2730, %v2729
        %v2871 = vpack.c.b16 %v2732, %v2731
        %v2872 = vpack.c.b16 %v2734, %v2733
        %v2873 = vpack.c.b16 %v2736, %v2735
        %v2874 = vpack.c.b16 %v2738, %v2737
        %v2875 = vpack.c.b16 %v2740, %v2739
        %v2876 = vpack.c.b16 %v2742, %v2741
        %v2877 = vpack.c.b16 %v2744, %v2743
        %v2878 = vpack.c.b16 %v2746, %v2745
        %v2879 = vpack.c.b16 %v2748, %v2747
        %v2880 = vpack.c.b16 %v2750, %v2749
        %v2881 = vpack.c.b16 %v2752, %v2751
        %v2882 = vpack.c.b16 %v2754, %v2753
        %v2883 = vpack.c.b16 %v2756, %v2755
        %v2884 = vpack.c.b16 %v2758, %v2757
        %v2885 = vpack.c.b16 %v2760, %v2759
        %v2886 = vpack.c.b16 %v2762, %v2761
        %v2887 = vpack.c.b16 %v2764, %v2763
        %v2888 = vpack.c.b16 %v2766, %v2765
        %v2889 = vpack.c.b16 %v2768, %v2767
        %v2890 = vpack.c.b16 %v2770, %v2769
        %v2891 = vpack.c.b16 %v2772, %v2771
        %v2892 = vpack.c.b16 %v2774, %v2773
        %v2893 = vpack.c.b16 %v2776, %v2775
        %v2894 = vpack.c.b16 %v2778, %v2777
        %v2895 = vpack.c.b16 %v2780, %v2779
        %v2896 = vpack.c.b16 %v2782, %v2781
        %v2897 = vpack.c.b16 %v2784, %v2783
        %v2898 = vpack.c.b16 %v2786, %v2785
        %v2899 = vpack.c.b16 %v2788, %v2787
        %v2900 = vpack.c.b16 %v2790, %v2789
        %v2901 = vpack.c.b16 %v2792, %v2791
        %v2902 = vpack.c.b16 %v2794, %v2793
        %v2903 = vpack.c.b16 %v2796, %v2795
        %v2904 = vpack.c.b16 %v2798, %v2797
        %v2905 = vpack.c.b16 %v2800, %v2799
        %v2906 = vpack.c.b16 %v2802, %v2801
        %v2907 = vpack.c.b16 %v2804, %v2803
        %v2908 = vpack.c.b16 %v2806, %v2805
        %v2909 = vpack.c.b16 %v2808, %v2807
        %v2910 = vpack.c.b16 %v2810, %v2809
        %v2911 = vpack.c.b16 %v2812, %v2811
        %v2912 = vpack.c.b16 %v2814, %v2813
        %v2913 = vpack.c.b16 %v2816, %v2815
        %v2914 = vpack.c.b16 %v2818, %v2817
        %v2915 = vpack.c.b16 %v2820, %v2819
        %v2916 = vpack.c.b16 %v2822, %v2821
        %v2917 = vpack.c.b16 %v2824, %v2823
        %v2918 = vpack.c.b16 %v2826, %v2825
        %v2919 = vpack.c.b16 %v2828, %v2827
        %v2920 = vpack.c.b16 %v2830, %v2829
        %v2921 = vpack.c.b16 %v2832, %v2831
        %v2922 = vpack.c.b16 %v2834, %v2833
        %v2923 = vpack.c.b16 %v2836, %v2835
        %v2924 = vpack.c.b16 %v2838, %v2837
        %v2925 = vpack.c.b16 %v2840, %v2839
        %v2926 = vpack.c.b16 %v2842, %v2841
        %v2927 = vpack.c.b16 %v2844, %v2843
        %v2928 = vpack.c.b16 %v2846, %v2845
        %v2929 = vpack.c.b16 %v2848, %v2847
        %v2930 = vpack.c.b16 %v2850, %v2849
        %v2931 = vpack.c.b16 %v2852, %v2851
        %v2932 = vpack.c.b16 %v2854, %v2853
        %v2933 = vpack.c.b16 %v2856, %v2855
        %v2934 = vpack.c.b16 %v2858, %v2857
        %v2935 = vpack.c.b16 %v2860, %v2859
        %v2936 = vpack.c.b16 %v2862, %v2861
        %v2937 = vpack.c.b16 %v2864, %v2863
        %v2938 = vpack.c.b16 %v2866, %v2865
        %3011 = vmatprep.subr.bf16.mxu0 0
        %3012 = vmatpush1.bf16.msra.mxu0 %v2874
        %3013 = vmatprep.subr.bf16.mxu0 0
        %3014 = vmatpush1.bf16.msra.mxu0 %v2873
        %3015 = vmatprep.subr.bf16.mxu0 0
        %3016 = vmatpush1.bf16.msra.mxu0 %v2872
        %3017 = vmatprep.subr.bf16.mxu0 0
        %3018 = vmatpush1.bf16.msra.mxu0 %v2871
        %3019 = vmatprep.subr.bf16.mxu0 0
        %3020 = vmatpush1.bf16.msra.mxu0 %v2870
        %3021 = vmatprep.subr.bf16.mxu0 0
        %3022 = vmatpush1.bf16.msra.mxu0 %v2869
        %3023 = vmatprep.subr.bf16.mxu0 0
        %3024 = vmatpush1.bf16.msra.mxu0 %v2868
        %3025 = vmatprep.subr.bf16.mxu0 0
        %3026 = vmatpush1.bf16.msra.mxu0 %v2867
        %3027 = vmatprep.subr.bf16.mxu0 0
        %3028 = vmatpush2.bf16.msra.mxu0 %v2882
        %3029 = vmatprep.subr.bf16.mxu0 0
        %3030 = vmatpush2.bf16.msra.mxu0 %v2881
        %3031 = vmatprep.subr.bf16.mxu0 0
        %3032 = vmatpush2.bf16.msra.mxu0 %v2880
        %3033 = vmatprep.subr.bf16.mxu0 0
        %3034 = vmatpush2.bf16.msra.mxu0 %v2879
        %3035 = vmatprep.subr.bf16.mxu0 0
        %3036 = vmatpush2.bf16.msra.mxu0 %v2878
        %3037 = vmatprep.subr.bf16.mxu0 0
        %3038 = vmatpush2.bf16.msra.mxu0 %v2877
        %3039 = vmatprep.subr.bf16.mxu0 0
        %3040 = vmatpush2.bf16.msra.mxu0 %v2876
        %3041 = vmatprep.subr.bf16.mxu0 0
        %3042 = vmatpush2.bf16.msra.mxu0 %v2875
        %3043 = vmatprep.mubr.bf16.mxu0 %v2508
        %3044 = vmatmul.mubr.bf16.gmra.mxu0 %v2507
        %v3045 = vpop.f32.mrf.mxu0
        %v3046 = vadd.f32 0.0, %v3045
        %v3047 = vpop.f32.mrf.mxu0
        %v3048 = vpop.f32.mrf.mxu0
        %v3049 = vadd.f32 0.0, %v3048
        %v3050 = vpop.f32.mrf.mxu0
        %3051 = vmatprep.mubr.bf16.mxu0 %v2517
        %3052 = vmatmul.mubr.bf16.gmra.mxu0 %v2516
        %v3053 = vpop.f32.mrf.mxu0
        %v3054 = vadd.f32 0.0, %v3053
        %v3055 = vpop.f32.mrf.mxu0
        %v3056 = vpop.f32.mrf.mxu0
        %v3057 = vadd.f32 0.0, %v3056
        %v3058 = vpop.f32.mrf.mxu0
        %3059 = vmatprep.mubr.bf16.mxu0 %v2526
        %3060 = vmatmul.mubr.bf16.gmra.mxu0 %v2525
        %v3061 = vpop.f32.mrf.mxu0
        %v3062 = vadd.f32 0.0, %v3061
        %v3063 = vpop.f32.mrf.mxu0
        %v3064 = vpop.f32.mrf.mxu0
        %v3065 = vadd.f32 0.0, %v3064
        %v3066 = vpop.f32.mrf.mxu0
        %3067 = vmatprep.mubr.bf16.mxu0 %v2535
        %3068 = vmatmul.mubr.bf16.gmra.mxu0 %v2534
        %v3069 = vpop.f32.mrf.mxu0
        %v3070 = vadd.f32 0.0, %v3069
        %v3071 = vpop.f32.mrf.mxu0
        %v3072 = vpop.f32.mrf.mxu0
        %v3073 = vadd.f32 0.0, %v3072
        %v3074 = vpop.f32.mrf.mxu0
        %3075 = vdwg.mxu0
        %3076 = vmatprep.subr.bf16.mxu0 0
        %3077 = vmatpush1.bf16.msra.mxu0 %v2890
        %3078 = vmatprep.subr.bf16.mxu0 0
        %3079 = vmatpush1.bf16.msra.mxu0 %v2889
        %3080 = vmatprep.subr.bf16.mxu0 0
        %3081 = vmatpush1.bf16.msra.mxu0 %v2888
        %3082 = vmatprep.subr.bf16.mxu0 0
        %3083 = vmatpush1.bf16.msra.mxu0 %v2887
        %3084 = vmatprep.subr.bf16.mxu0 0
        %3085 = vmatpush1.bf16.msra.mxu0 %v2886
        %3086 = vmatprep.subr.bf16.mxu0 0
        %3087 = vmatpush1.bf16.msra.mxu0 %v2885
        %3088 = vmatprep.subr.bf16.mxu0 0
        %3089 = vmatpush1.bf16.msra.mxu0 %v2884
        %3090 = vmatprep.subr.bf16.mxu0 0
        %3091 = vmatpush1.bf16.msra.mxu0 %v2883
        %3092 = vmatprep.subr.bf16.mxu0 0
        %3093 = vmatpush2.bf16.msra.mxu0 %v2898
        %3094 = vmatprep.subr.bf16.mxu0 0
        %3095 = vmatpush2.bf16.msra.mxu0 %v2897
        %3096 = vmatprep.subr.bf16.mxu0 0
        %3097 = vmatpush2.bf16.msra.mxu0 %v2896
        %3098 = vmatprep.subr.bf16.mxu0 0
        %3099 = vmatpush2.bf16.msra.mxu0 %v2895
        %3100 = vmatprep.subr.bf16.mxu0 0
        %3101 = vmatpush2.bf16.msra.mxu0 %v2894
        %3102 = vmatprep.subr.bf16.mxu0 0
        %3103 = vmatpush2.bf16.msra.mxu0 %v2893
        %3104 = vmatprep.subr.bf16.mxu0 0
        %3105 = vmatpush2.bf16.msra.mxu0 %v2892
        %3106 = vmatprep.subr.bf16.mxu0 0
        %3107 = vmatpush2.bf16.msra.mxu0 %v2891
        %3108 = vmatprep.mubr.bf16.mxu0 %v2510
        %3109 = vmatmul.mubr.bf16.gmra.mxu0 %v2509
        %v3110 = vpop.f32.mrf.mxu0
        %v3111 = vadd.f32 %v3046, %v3110
        %v3112 = vpop.f32.mrf.mxu0
        %v3113 = vpop.f32.mrf.mxu0
        %v3114 = vadd.f32 %v3049, %v3113
        %v3115 = vpop.f32.mrf.mxu0
        %3116 = vmatprep.mubr.bf16.mxu0 %v2519
        %3117 = vmatmul.mubr.bf16.gmra.mxu0 %v2518
        %v3118 = vpop.f32.mrf.mxu0
        %v3119 = vadd.f32 %v3054, %v3118
        %v3120 = vpop.f32.mrf.mxu0
        %v3121 = vpop.f32.mrf.mxu0
        %v3122 = vadd.f32 %v3057, %v3121
        %v3123 = vpop.f32.mrf.mxu0
        %3124 = vmatprep.mubr.bf16.mxu0 %v2528
        %3125 = vmatmul.mubr.bf16.gmra.mxu0 %v2527
        %v3126 = vpop.f32.mrf.mxu0
        %v3127 = vadd.f32 %v3062, %v3126
        %v3128 = vpop.f32.mrf.mxu0
        %v3129 = vpop.f32.mrf.mxu0
        %v3130 = vadd.f32 %v3065, %v3129
        %v3131 = vpop.f32.mrf.mxu0
        %3132 = vmatprep.mubr.bf16.mxu0 %v2537
        %3133 = vmatmul.mubr.bf16.gmra.mxu0 %v2536
        %v3134 = vpop.f32.mrf.mxu0
        %v3135 = vadd.f32 %v3070, %v3134
        %v3136 = vpop.f32.mrf.mxu0
        %v3137 = vpop.f32.mrf.mxu0
        %v3138 = vadd.f32 %v3073, %v3137
        %v3139 = vpop.f32.mrf.mxu0
        %3140 = vdwg.mxu0
        %3141 = vmatprep.subr.bf16.mxu0 0
        %3142 = vmatpush1.bf16.msra.mxu0 %v2906
        %3143 = vmatprep.subr.bf16.mxu0 0
        %3144 = vmatpush1.bf16.msra.mxu0 %v2905
        %3145 = vmatprep.subr.bf16.mxu0 0
        %3146 = vmatpush1.bf16.msra.mxu0 %v2904
        %3147 = vmatprep.subr.bf16.mxu0 0
        %3148 = vmatpush1.bf16.msra.mxu0 %v2903
        %3149 = vmatprep.subr.bf16.mxu0 0
        %3150 = vmatpush1.bf16.msra.mxu0 %v2902
        %3151 = vmatprep.subr.bf16.mxu0 0
        %3152 = vmatpush1.bf16.msra.mxu0 %v2901
        %3153 = vmatprep.subr.bf16.mxu0 0
        %3154 = vmatpush1.bf16.msra.mxu0 %v2900
        %3155 = vmatprep.subr.bf16.mxu0 0
        %3156 = vmatpush1.bf16.msra.mxu0 %v2899
        %3157 = vmatprep.subr.bf16.mxu0 0
        %3158 = vmatpush2.bf16.msra.mxu0 %v2914
        %3159 = vmatprep.subr.bf16.mxu0 0
        %3160 = vmatpush2.bf16.msra.mxu0 %v2913
        %3161 = vmatprep.subr.bf16.mxu0 0
        %3162 = vmatpush2.bf16.msra.mxu0 %v2912
        %3163 = vmatprep.subr.bf16.mxu0 0
        %3164 = vmatpush2.bf16.msra.mxu0 %v2911
        %3165 = vmatprep.subr.bf16.mxu0 0
        %3166 = vmatpush2.bf16.msra.mxu0 %v2910
        %3167 = vmatprep.subr.bf16.mxu0 0
        %3168 = vmatpush2.bf16.msra.mxu0 %v2909
        %3169 = vmatprep.subr.bf16.mxu0 0
        %3170 = vmatpush2.bf16.msra.mxu0 %v2908
        %3171 = vmatprep.subr.bf16.mxu0 0
        %3172 = vmatpush2.bf16.msra.mxu0 %v2907
        %3173 = vmatprep.mubr.bf16.mxu0 %v2512
        %3174 = vmatmul.mubr.bf16.gmra.mxu0 %v2511
        %v3175 = vpop.f32.mrf.mxu0
        %v3176 = vadd.f32 %v3111, %v3175
        %v3177 = vpop.f32.mrf.mxu0
        %v3178 = vpop.f32.mrf.mxu0
        %v3179 = vadd.f32 %v3114, %v3178
        %v3180 = vpop.f32.mrf.mxu0
        %3181 = vmatprep.mubr.bf16.mxu0 %v2521
        %3182 = vmatmul.mubr.bf16.gmra.mxu0 %v2520
        %v3183 = vpop.f32.mrf.mxu0
        %v3184 = vadd.f32 %v3119, %v3183
        %v3185 = vpop.f32.mrf.mxu0
        %v3186 = vpop.f32.mrf.mxu0
        %v3187 = vadd.f32 %v3122, %v3186
        %v3188 = vpop.f32.mrf.mxu0
        %3189 = vmatprep.mubr.bf16.mxu0 %v2530
        %3190 = vmatmul.mubr.bf16.gmra.mxu0 %v2529
        %v3191 = vpop.f32.mrf.mxu0
        %v3192 = vadd.f32 %v3127, %v3191
        %v3193 = vpop.f32.mrf.mxu0
        %v3194 = vpop.f32.mrf.mxu0
        %v3195 = vadd.f32 %v3130, %v3194
        %v3196 = vpop.f32.mrf.mxu0
        %3197 = vmatprep.mubr.bf16.mxu0 %v2539
        %3198 = vmatmul.mubr.bf16.gmra.mxu0 %v2538
        %v3199 = vpop.f32.mrf.mxu0
        %v3200 = vadd.f32 %v3135, %v3199
        %v3201 = vpop.f32.mrf.mxu0
        %v3202 = vpop.f32.mrf.mxu0
        %v3203 = vadd.f32 %v3138, %v3202
        %v3204 = vpop.f32.mrf.mxu0
        %3205 = vdwg.mxu0
        %3206 = vmatprep.subr.bf16.mxu0 0
        %3207 = vmatpush1.bf16.msra.mxu0 %v2922
        %3208 = vmatprep.subr.bf16.mxu0 0
        %3209 = vmatpush1.bf16.msra.mxu0 %v2921
        %3210 = vmatprep.subr.bf16.mxu0 0
        %3211 = vmatpush1.bf16.msra.mxu0 %v2920
        %3212 = vmatprep.subr.bf16.mxu0 0
        %3213 = vmatpush1.bf16.msra.mxu0 %v2919
        %3214 = vmatprep.subr.bf16.mxu0 0
        %3215 = vmatpush1.bf16.msra.mxu0 %v2918
        %3216 = vmatprep.subr.bf16.mxu0 0
        %3217 = vmatpush1.bf16.msra.mxu0 %v2917
        %3218 = vmatprep.subr.bf16.mxu0 0
        %3219 = vmatpush1.bf16.msra.mxu0 %v2916
        %3220 = vmatprep.subr.bf16.mxu0 0
        %3221 = vmatpush1.bf16.msra.mxu0 %v2915
        %3222 = vmatprep.subr.bf16.mxu0 0
        %3223 = vmatpush2.bf16.msra.mxu0 %v2930
        %3224 = vmatprep.subr.bf16.mxu0 0
        %3225 = vmatpush2.bf16.msra.mxu0 %v2929
        %3226 = vmatprep.subr.bf16.mxu0 0
        %3227 = vmatpush2.bf16.msra.mxu0 %v2928
        %3228 = vmatprep.subr.bf16.mxu0 0
        %3229 = vmatpush2.bf16.msra.mxu0 %v2927
        %3230 = vmatprep.subr.bf16.mxu0 0
        %3231 = vmatpush2.bf16.msra.mxu0 %v2926
        %3232 = vmatprep.subr.bf16.mxu0 0
        %3233 = vmatpush2.bf16.msra.mxu0 %v2925
        %3234 = vmatprep.subr.bf16.mxu0 0
        %3235 = vmatpush2.bf16.msra.mxu0 %v2924
        %3236 = vmatprep.subr.bf16.mxu0 0
        %3237 = vmatpush2.bf16.msra.mxu0 %v2923
        %3238 = vmatprep.mubr.bf16.mxu0 %v2514
        %3239 = vmatmul.mubr.bf16.gmra.mxu0 %v2513
        %v3240 = vpop.f32.mrf.mxu0
        %v3241 = vadd.f32 %v3176, %v3240
        %v3242 = vpop.f32.mrf.mxu0
        %v3243 = vpop.f32.mrf.mxu0
        %v3244 = vadd.f32 %v3179, %v3243
        %v3245 = vpop.f32.mrf.mxu0
        %3246 = vmatprep.mubr.bf16.mxu0 %v2523
        %3247 = vmatmul.mubr.bf16.gmra.mxu0 %v2522
        %v3248 = vpop.f32.mrf.mxu0
        %v3249 = vadd.f32 %v3184, %v3248
        %v3250 = vpop.f32.mrf.mxu0
        %v3251 = vpop.f32.mrf.mxu0
        %v3252 = vadd.f32 %v3187, %v3251
        %v3253 = vpop.f32.mrf.mxu0
        %3254 = vmatprep.mubr.bf16.mxu0 %v2532
        %3255 = vmatmul.mubr.bf16.gmra.mxu0 %v2531
        %v3256 = vpop.f32.mrf.mxu0
        %v3257 = vadd.f32 %v3192, %v3256
        %v3258 = vpop.f32.mrf.mxu0
        %v3259 = vpop.f32.mrf.mxu0
        %v3260 = vadd.f32 %v3195, %v3259
        %v3261 = vpop.f32.mrf.mxu0
        %3262 = vmatprep.mubr.bf16.mxu0 %v2541
        %3263 = vmatmul.mubr.bf16.gmra.mxu0 %v2540
        %v3264 = vpop.f32.mrf.mxu0
        %v3265 = vadd.f32 %v3200, %v3264
        %v3266 = vpop.f32.mrf.mxu0
        %v3267 = vpop.f32.mrf.mxu0
        %v3268 = vadd.f32 %v3203, %v3267
        %v3269 = vpop.f32.mrf.mxu0
        %3270 = vdwg.mxu0
        %3271 = vmatprep.subr.bf16.mxu0 0
        %3272 = vmatpush1.bf16.msra.mxu0 %v2938
        %3273 = vmatprep.subr.bf16.mxu0 0
        %3274 = vmatpush1.bf16.msra.mxu0 %v2937
        %3275 = vmatprep.subr.bf16.mxu0 0
        %3276 = vmatpush1.bf16.msra.mxu0 %v2936
        %3277 = vmatprep.subr.bf16.mxu0 0
        %3278 = vmatpush1.bf16.msra.mxu0 %v2935
        %3279 = vmatprep.subr.bf16.mxu0 0
        %3280 = vmatpush1.bf16.msra.mxu0 %v2934
        %3281 = vmatprep.subr.bf16.mxu0 0
        %3282 = vmatpush1.bf16.msra.mxu0 %v2933
        %3283 = vmatprep.subr.bf16.mxu0 0
        %3284 = vmatpush1.bf16.msra.mxu0 %v2932
        %3285 = vmatprep.subr.bf16.mxu0 0
        %3286 = vmatpush1.bf16.msra.mxu0 %v2931
        %3287 = vmatprep.subr.bf16.mxu0 0
        %3288 = vmatpush2.bf16.msra.mxu0 0
        %3289 = vmatprep.subr.bf16.mxu0 0
        %3290 = vmatpush2.bf16.msra.mxu0 0
        %3291 = vmatprep.subr.bf16.mxu0 0
        %3292 = vmatpush2.bf16.msra.mxu0 0
        %3293 = vmatprep.subr.bf16.mxu0 0
        %3294 = vmatpush2.bf16.msra.mxu0 0
        %3295 = vmatprep.subr.bf16.mxu0 0
        %3296 = vmatpush2.bf16.msra.mxu0 0
        %3297 = vmatprep.subr.bf16.mxu0 0
        %3298 = vmatpush2.bf16.msra.mxu0 0
        %3299 = vmatprep.subr.bf16.mxu0 0
        %3300 = vmatpush2.bf16.msra.mxu0 0
        %3301 = vmatprep.subr.bf16.mxu0 0
        %3302 = vmatpush2.bf16.msra.mxu0 0
        %3303 = vmatprep.mubr.bf16.mxu0 0
        %3304 = vmatmul.mubr.bf16.gmra.mxu0 %v2515
        %v3305 = vpop.f32.mrf.mxu0
        %v3306 = vadd.f32 %v3241, %v3305
        %v3307 = vpop.f32.mrf.mxu0
        %v3308 = vpop.f32.mrf.mxu0
        %v3309 = vadd.f32 %v3244, %v3308
        %v3310 = vpop.f32.mrf.mxu0
        %3311 = vmatprep.mubr.bf16.mxu0 0
        %3312 = vmatmul.mubr.bf16.gmra.mxu0 %v2524
        %v3313 = vpop.f32.mrf.mxu0
        %v3314 = vadd.f32 %v3249, %v3313
        %v3315 = vpop.f32.mrf.mxu0
        %v3316 = vpop.f32.mrf.mxu0
        %v3317 = vadd.f32 %v3252, %v3316
        %v3318 = vpop.f32.mrf.mxu0
        %3319 = vmatprep.mubr.bf16.mxu0 0
        %3320 = vmatmul.mubr.bf16.gmra.mxu0 %v2533
        %v3321 = vpop.f32.mrf.mxu0
        %v3322 = vadd.f32 %v3257, %v3321
        %v3323 = vpop.f32.mrf.mxu0
        %v3324 = vpop.f32.mrf.mxu0
        %v3325 = vadd.f32 %v3260, %v3324
        %v3326 = vpop.f32.mrf.mxu0
        %3327 = vmatprep.mubr.bf16.mxu0 0
        %3328 = vmatmul.mubr.bf16.gmra.mxu0 %v2542
        %v3329 = vpop.f32.mrf.mxu0
        %v3330 = vadd.f32 %v3265, %v3329
        %v3331 = vpop.f32.mrf.mxu0
        %v3332 = vpop.f32.mrf.mxu0
        %v3333 = vadd.f32 %v3268, %v3332
        %v3334 = vpop.f32.mrf.mxu0
        %3335 = vdwg.mxu0
        %v3336 = vld [vmem:[#allocation2] sm:$0xff]
        %v3337 = vld [vmem:[#allocation2 + $0x8] sm:$0xff]
        %v3338 = vld [vmem:[#allocation2 + $0x10] sm:$0xff]
        %v3339 = vld [vmem:[#allocation2 + $0x18] sm:$0xff]
        %v3340 = vld [vmem:[#allocation2 + $0x20] sm:$0xff]
        %v3341 = vld [vmem:[#allocation2 + $0x28] sm:$0xff]
        %v3342 = vld [vmem:[#allocation2 + $0x30] sm:$0xff]
        %v3343 = vld [vmem:[#allocation2 + $0x38] sm:$0xff]
        %v3344 = vadd.f32 %v3336, %v3306
        %v3345 = vadd.f32 %v3337, %v3309
        %v3346 = vadd.f32 %v3338, %v3314
        %v3347 = vadd.f32 %v3339, %v3317
        %v3348 = vadd.f32 %v3340, %v3322
        %v3349 = vadd.f32 %v3341, %v3325
        %v3350 = vadd.f32 %v3342, %v3330
        %v3351 = vadd.f32 %v3343, %v3333
        %3352 = vst [vmem:[#allocation2] sm:$0xff] %v3344
        %3353 = vst [vmem:[#allocation2 + $0x8] sm:$0xff] %v3345
        %3354 = vst [vmem:[#allocation2 + $0x10] sm:$0xff] %v3346
        %3355 = vst [vmem:[#allocation2 + $0x18] sm:$0xff] %v3347
        %3356 = vst [vmem:[#allocation2 + $0x20] sm:$0xff] %v3348
        %3357 = vst [vmem:[#allocation2 + $0x28] sm:$0xff] %v3349
        %3358 = vst [vmem:[#allocation2 + $0x30] sm:$0xff] %v3350
        %3359 = vst [vmem:[#allocation2 + $0x38] sm:$0xff] %v3351
      $region48: #{basic_block_3d_forward.4} parent=43 // pred_fallthru
        _
      %p3360 = scmp.lt.s32.totalorder %s25, 3
      // Predicated region
      $region49: #{basic_block_3d_forward.4} parent=43 // pred_check
        %p3361 = pneg %p3360
      $region50: #{basic_block_3d_forward.4} parent=43 // pred_check_branch
        %3363 = sbr.rel (%p3361) target = $region52
      $region51: #{basic_block_3d_forward.4} parent=43 // pred_region
        %v3364 = vld [vmem:[%s460] sm:$0xf]
        %v3365 = vld [vmem:[%s460 + $0x4] sm:$0xf]
        %v3366 = vld [vmem:[%s460 + $0x8] sm:$0xf]
        %v3367 = vld [vmem:[%s460 + $0xc] sm:$0xf]
        %v3368 = vld [vmem:[%s460 + $0x10] sm:$0xf]
        %v3369 = vld [vmem:[%s460 + $0x14] sm:$0xf]
        %v3370 = vld [vmem:[%s460 + $0x18] sm:$0xf]
        %v3371 = vld [vmem:[%s460 + $0x1c] sm:$0xf]
        %v3372 = vunpack.c.l.bf16 %v3364
        %v3373 = vunpack.c.l.bf16 %v3365
        %v3374 = vunpack.c.l.bf16 %v3366
        %v3375 = vunpack.c.l.bf16 %v3367
        %v3376 = vunpack.c.l.bf16 %v3368
        %v3377 = vunpack.c.l.bf16 %v3369
        %v3378 = vunpack.c.l.bf16 %v3370
        %v3379 = vunpack.c.l.bf16 %v3371
        %v3380 = vld [vmem:[%s4] sm:$0x1]
        %v3382 = vlaneseq
        %v3383 = vshrl.u32 %v3382, 7
        %v3384 = vsub.s32 0, %v3383
        %v3385 = vrot.slane %v3380, %v3384
        %v3387 = vmul.f32 %v3372, %v3385
        %v3388 = vmul.f32 %v3373, %v3385
        %v3389 = vmul.f32 %v3374, %v3385
        %v3390 = vmul.f32 %v3375, %v3385
        %v3391 = vmul.f32 %v3376, %v3385
        %v3392 = vmul.f32 %v3377, %v3385
        %v3393 = vmul.f32 %v3378, %v3385
        %v3394 = vmul.f32 %v3379, %v3385
        %v3395 = vld [vmem:[%s5] sm:$0x1]
        %v3397 = vlaneseq
        %v3398 = vshrl.u32 %v3397, 7
        %v3399 = vsub.s32 0, %v3398
        %v3400 = vrot.slane %v3395, %v3399
        %v3402 = vadd.f32 %v3387, %v3400
        %v3403 = vadd.f32 %v3388, %v3400
        %v3404 = vadd.f32 %v3389, %v3400
        %v3405 = vadd.f32 %v3390, %v3400
        %v3406 = vadd.f32 %v3391, %v3400
        %v3407 = vadd.f32 %v3392, %v3400
        %v3408 = vadd.f32 %v3393, %v3400
        %v3409 = vadd.f32 %v3394, %v3400
        %v3410 = vmax.f32 %v3402, 0.0
        %v3411 = vmax.f32 %v3403, 0.0
        %v3412 = vmax.f32 %v3404, 0.0
        %v3413 = vmax.f32 %v3405, 0.0
        %v3414 = vmax.f32 %v3406, 0.0
        %v3415 = vmax.f32 %v3407, 0.0
        %v3416 = vmax.f32 %v3408, 0.0
        %v3417 = vmax.f32 %v3409, 0.0
        %3418 = vst [vmem:[%s569 + $0x1] sm:$0xff] %v3410
        %3419 = vst [vmem:[%s569 + $0x11] sm:$0xff] %v3411
        %3420 = vst [vmem:[%s569 + $0x21] sm:$0xff] %v3412
        %3421 = vst [vmem:[%s569 + $0x31] sm:$0xff] %v3413
        %3422 = vst [vmem:[%s569 + $0x41] sm:$0xff] %v3414
        %3423 = vst [vmem:[%s569 + $0x51] sm:$0xff] %v3415
        %3424 = vst [vmem:[%s569 + $0x61] sm:$0xff] %v3416
        %3425 = vst [vmem:[%s569 + $0x71] sm:$0xff] %v3417
        %v3426 = vld [vmem:[#allocation3] sm:$0xff]
        %v3427 = vld [vmem:[#allocation3 + $0x10] sm:$0xff]
        %v3428 = vld [vmem:[#allocation3 + $0x20] sm:$0xff]
        %v3429 = vld [vmem:[#allocation3 + $0x30] sm:$0xff]
        %v3430 = vld [vmem:[#allocation3 + $0x40] sm:$0xff]
        %v3431 = vld [vmem:[#allocation3 + $0x50] sm:$0xff]
        %v3432 = vld [vmem:[#allocation3 + $0x60] sm:$0xff]
        %v3433 = vld [vmem:[#allocation3 + $0x70] sm:$0xff]
        %v3434 = vpack.c.bf16 %v3426, %v3426
        %v3435 = vpack.c.bf16 %v3427, %v3427
        %v3436 = vpack.c.bf16 %v3428, %v3428
        %v3437 = vpack.c.bf16 %v3429, %v3429
        %v3438 = vpack.c.bf16 %v3430, %v3430
        %v3439 = vpack.c.bf16 %v3431, %v3431
        %v3440 = vpack.c.bf16 %v3432, %v3432
        %v3441 = vpack.c.bf16 %v3433, %v3433
        %3442 = vst [vmem:[#allocation4] sm:$0xf] %v3434
        %3443 = vst [vmem:[#allocation4 + $0x24] sm:$0xf] %v3435
        %3444 = vst [vmem:[#allocation4 + $0x48] sm:$0xf] %v3436
        %3445 = vst [vmem:[#allocation4 + $0x6c] sm:$0xf] %v3437
        %3446 = vst [vmem:[#allocation4 + $0x90] sm:$0xf] %v3438
        %3447 = vst [vmem:[#allocation4 + $0xb4] sm:$0xf] %v3439
        %3448 = vst [vmem:[#allocation4 + $0xd8] sm:$0xf] %v3440
        %3449 = vst [vmem:[#allocation4 + $0xfc] sm:$0xf] %v3441
        %v3450 = vld [vmem:[#allocation3 + $0x1] sm:$0xff]
        %v3451 = vld [vmem:[#allocation3 + $0x11] sm:$0xff]
        %v3452 = vld [vmem:[#allocation3 + $0x21] sm:$0xff]
        %v3453 = vld [vmem:[#allocation3 + $0x31] sm:$0xff]
        %v3454 = vld [vmem:[#allocation3 + $0x41] sm:$0xff]
        %v3455 = vld [vmem:[#allocation3 + $0x51] sm:$0xff]
        %v3456 = vld [vmem:[#allocation3 + $0x61] sm:$0xff]
        %v3457 = vld [vmem:[#allocation3 + $0x71] sm:$0xff]
        %v3458 = vpack.c.bf16 %v3450, %v3450
        %v3459 = vpack.c.bf16 %v3451, %v3451
        %v3460 = vpack.c.bf16 %v3452, %v3452
        %v3461 = vpack.c.bf16 %v3453, %v3453
        %v3462 = vpack.c.bf16 %v3454, %v3454
        %v3463 = vpack.c.bf16 %v3455, %v3455
        %v3464 = vpack.c.bf16 %v3456, %v3456
        %v3465 = vpack.c.bf16 %v3457, %v3457
        %3466 = vst [vmem:[#allocation4 + $0x4] sm:$0xf] %v3458
        %3467 = vst [vmem:[#allocation4 + $0x28] sm:$0xf] %v3459
        %3468 = vst [vmem:[#allocation4 + $0x4c] sm:$0xf] %v3460
        %3469 = vst [vmem:[#allocation4 + $0x70] sm:$0xf] %v3461
        %3470 = vst [vmem:[#allocation4 + $0x94] sm:$0xf] %v3462
        %3471 = vst [vmem:[#allocation4 + $0xb8] sm:$0xf] %v3463
        %3472 = vst [vmem:[#allocation4 + $0xdc] sm:$0xf] %v3464
        %3473 = vst [vmem:[#allocation4 + $0x100] sm:$0xf] %v3465
        %v3474 = vld [vmem:[#allocation3 + $0x2] sm:$0xff]
        %v3475 = vld [vmem:[#allocation3 + $0x12] sm:$0xff]
        %v3476 = vld [vmem:[#allocation3 + $0x22] sm:$0xff]
        %v3477 = vld [vmem:[#allocation3 + $0x32] sm:$0xff]
        %v3478 = vld [vmem:[#allocation3 + $0x42] sm:$0xff]
        %v3479 = vld [vmem:[#allocation3 + $0x52] sm:$0xff]
        %v3480 = vld [vmem:[#allocation3 + $0x62] sm:$0xff]
        %v3481 = vld [vmem:[#allocation3 + $0x72] sm:$0xff]
        %v3482 = vpack.c.bf16 %v3474, %v3474
        %v3483 = vpack.c.bf16 %v3475, %v3475
        %v3484 = vpack.c.bf16 %v3476, %v3476
        %v3485 = vpack.c.bf16 %v3477, %v3477
        %v3486 = vpack.c.bf16 %v3478, %v3478
        %v3487 = vpack.c.bf16 %v3479, %v3479
        %v3488 = vpack.c.bf16 %v3480, %v3480
        %v3489 = vpack.c.bf16 %v3481, %v3481
        %3490 = vst [vmem:[#allocation4 + $0x8] sm:$0xf] %v3482
        %3491 = vst [vmem:[#allocation4 + $0x2c] sm:$0xf] %v3483
        %3492 = vst [vmem:[#allocation4 + $0x50] sm:$0xf] %v3484
        %3493 = vst [vmem:[#allocation4 + $0x74] sm:$0xf] %v3485
        %3494 = vst [vmem:[#allocation4 + $0x98] sm:$0xf] %v3486
        %3495 = vst [vmem:[#allocation4 + $0xbc] sm:$0xf] %v3487
        %3496 = vst [vmem:[#allocation4 + $0xe0] sm:$0xf] %v3488
        %3497 = vst [vmem:[#allocation4 + $0x104] sm:$0xf] %v3489
        %v3498 = vld [vmem:[%s569] sm:$0xff]
        %v3499 = vld [vmem:[%s569 + $0x10] sm:$0xff]
        %v3500 = vld [vmem:[%s569 + $0x20] sm:$0xff]
        %v3501 = vld [vmem:[%s569 + $0x30] sm:$0xff]
        %v3502 = vld [vmem:[%s569 + $0x40] sm:$0xff]
        %v3503 = vld [vmem:[%s569 + $0x50] sm:$0xff]
        %v3504 = vld [vmem:[%s569 + $0x60] sm:$0xff]
        %v3505 = vld [vmem:[%s569 + $0x70] sm:$0xff]
        %v3506 = vpack.c.bf16 %v3498, %v3498
        %v3507 = vpack.c.bf16 %v3499, %v3499
        %v3508 = vpack.c.bf16 %v3500, %v3500
        %v3509 = vpack.c.bf16 %v3501, %v3501
        %v3510 = vpack.c.bf16 %v3502, %v3502
        %v3511 = vpack.c.bf16 %v3503, %v3503
        %v3512 = vpack.c.bf16 %v3504, %v3504
        %v3513 = vpack.c.bf16 %v3505, %v3505
        %3514 = vst [vmem:[#allocation4 + $0xc] sm:$0xf] %v3506
        %3515 = vst [vmem:[#allocation4 + $0x30] sm:$0xf] %v3507
        %3516 = vst [vmem:[#allocation4 + $0x54] sm:$0xf] %v3508
        %3517 = vst [vmem:[#allocation4 + $0x78] sm:$0xf] %v3509
        %3518 = vst [vmem:[#allocation4 + $0x9c] sm:$0xf] %v3510
        %3519 = vst [vmem:[#allocation4 + $0xc0] sm:$0xf] %v3511
        %3520 = vst [vmem:[#allocation4 + $0xe4] sm:$0xf] %v3512
        %3521 = vst [vmem:[#allocation4 + $0x108] sm:$0xf] %v3513
        %v3522 = vld [vmem:[%s569 + $0x1] sm:$0xff]
        %v3523 = vld [vmem:[%s569 + $0x11] sm:$0xff]
        %v3524 = vld [vmem:[%s569 + $0x21] sm:$0xff]
        %v3525 = vld [vmem:[%s569 + $0x31] sm:$0xff]
        %v3526 = vld [vmem:[%s569 + $0x41] sm:$0xff]
        %v3527 = vld [vmem:[%s569 + $0x51] sm:$0xff]
        %v3528 = vld [vmem:[%s569 + $0x61] sm:$0xff]
        %v3529 = vld [vmem:[%s569 + $0x71] sm:$0xff]
        %v3530 = vpack.c.bf16 %v3522, %v3522
        %v3531 = vpack.c.bf16 %v3523, %v3523
        %v3532 = vpack.c.bf16 %v3524, %v3524
        %v3533 = vpack.c.bf16 %v3525, %v3525
        %v3534 = vpack.c.bf16 %v3526, %v3526
        %v3535 = vpack.c.bf16 %v3527, %v3527
        %v3536 = vpack.c.bf16 %v3528, %v3528
        %v3537 = vpack.c.bf16 %v3529, %v3529
        %3538 = vst [vmem:[#allocation4 + $0x10] sm:$0xf] %v3530
        %3539 = vst [vmem:[#allocation4 + $0x34] sm:$0xf] %v3531
        %3540 = vst [vmem:[#allocation4 + $0x58] sm:$0xf] %v3532
        %3541 = vst [vmem:[#allocation4 + $0x7c] sm:$0xf] %v3533
        %3542 = vst [vmem:[#allocation4 + $0xa0] sm:$0xf] %v3534
        %3543 = vst [vmem:[#allocation4 + $0xc4] sm:$0xf] %v3535
        %3544 = vst [vmem:[#allocation4 + $0xe8] sm:$0xf] %v3536
        %3545 = vst [vmem:[#allocation4 + $0x10c] sm:$0xf] %v3537
        %v3546 = vld [vmem:[%s569 + $0x2] sm:$0xff]
        %v3547 = vld [vmem:[%s569 + $0x12] sm:$0xff]
        %v3548 = vld [vmem:[%s569 + $0x22] sm:$0xff]
        %v3549 = vld [vmem:[%s569 + $0x32] sm:$0xff]
        %v3550 = vld [vmem:[%s569 + $0x42] sm:$0xff]
        %v3551 = vld [vmem:[%s569 + $0x52] sm:$0xff]
        %v3552 = vld [vmem:[%s569 + $0x62] sm:$0xff]
        %v3553 = vld [vmem:[%s569 + $0x72] sm:$0xff]
        %v3554 = vpack.c.bf16 %v3546, %v3546
        %v3555 = vpack.c.bf16 %v3547, %v3547
        %v3556 = vpack.c.bf16 %v3548, %v3548
        %v3557 = vpack.c.bf16 %v3549, %v3549
        %v3558 = vpack.c.bf16 %v3550, %v3550
        %v3559 = vpack.c.bf16 %v3551, %v3551
        %v3560 = vpack.c.bf16 %v3552, %v3552
        %v3561 = vpack.c.bf16 %v3553, %v3553
        %3562 = vst [vmem:[#allocation4 + $0x14] sm:$0xf] %v3554
        %3563 = vst [vmem:[#allocation4 + $0x38] sm:$0xf] %v3555
        %3564 = vst [vmem:[#allocation4 + $0x5c] sm:$0xf] %v3556
        %3565 = vst [vmem:[#allocation4 + $0x80] sm:$0xf] %v3557
        %3566 = vst [vmem:[#allocation4 + $0xa4] sm:$0xf] %v3558
        %3567 = vst [vmem:[#allocation4 + $0xc8] sm:$0xf] %v3559
        %3568 = vst [vmem:[#allocation4 + $0xec] sm:$0xf] %v3560
        %3569 = vst [vmem:[#allocation4 + $0x110] sm:$0xf] %v3561
        %v3570 = vld [vmem:[%s722] sm:$0xff]
        %v3571 = vld [vmem:[%s722 + $0x10] sm:$0xff]
        %v3572 = vld [vmem:[%s722 + $0x20] sm:$0xff]
        %v3573 = vld [vmem:[%s722 + $0x30] sm:$0xff]
        %v3574 = vld [vmem:[%s722 + $0x40] sm:$0xff]
        %v3575 = vld [vmem:[%s722 + $0x50] sm:$0xff]
        %v3576 = vld [vmem:[%s722 + $0x60] sm:$0xff]
        %v3577 = vld [vmem:[%s722 + $0x70] sm:$0xff]
        %v3578 = vpack.c.bf16 %v3570, %v3570
        %v3579 = vpack.c.bf16 %v3571, %v3571
        %v3580 = vpack.c.bf16 %v3572, %v3572
        %v3581 = vpack.c.bf16 %v3573, %v3573
        %v3582 = vpack.c.bf16 %v3574, %v3574
        %v3583 = vpack.c.bf16 %v3575, %v3575
        %v3584 = vpack.c.bf16 %v3576, %v3576
        %v3585 = vpack.c.bf16 %v3577, %v3577
        %3586 = vst [vmem:[#allocation4 + $0x18] sm:$0xf] %v3578
        %3587 = vst [vmem:[#allocation4 + $0x3c] sm:$0xf] %v3579
        %3588 = vst [vmem:[#allocation4 + $0x60] sm:$0xf] %v3580
        %3589 = vst [vmem:[#allocation4 + $0x84] sm:$0xf] %v3581
        %3590 = vst [vmem:[#allocation4 + $0xa8] sm:$0xf] %v3582
        %3591 = vst [vmem:[#allocation4 + $0xcc] sm:$0xf] %v3583
        %3592 = vst [vmem:[#allocation4 + $0xf0] sm:$0xf] %v3584
        %3593 = vst [vmem:[#allocation4 + $0x114] sm:$0xf] %v3585
        %v3594 = vld [vmem:[%s722 + $0x1] sm:$0xff]
        %v3595 = vld [vmem:[%s722 + $0x11] sm:$0xff]
        %v3596 = vld [vmem:[%s722 + $0x21] sm:$0xff]
        %v3597 = vld [vmem:[%s722 + $0x31] sm:$0xff]
        %v3598 = vld [vmem:[%s722 + $0x41] sm:$0xff]
        %v3599 = vld [vmem:[%s722 + $0x51] sm:$0xff]
        %v3600 = vld [vmem:[%s722 + $0x61] sm:$0xff]
        %v3601 = vld [vmem:[%s722 + $0x71] sm:$0xff]
        %v3602 = vpack.c.bf16 %v3594, %v3594
        %v3603 = vpack.c.bf16 %v3595, %v3595
        %v3604 = vpack.c.bf16 %v3596, %v3596
        %v3605 = vpack.c.bf16 %v3597, %v3597
        %v3606 = vpack.c.bf16 %v3598, %v3598
        %v3607 = vpack.c.bf16 %v3599, %v3599
        %v3608 = vpack.c.bf16 %v3600, %v3600
        %v3609 = vpack.c.bf16 %v3601, %v3601
        %3610 = vst [vmem:[#allocation4 + $0x1c] sm:$0xf] %v3602
        %3611 = vst [vmem:[#allocation4 + $0x40] sm:$0xf] %v3603
        %3612 = vst [vmem:[#allocation4 + $0x64] sm:$0xf] %v3604
        %3613 = vst [vmem:[#allocation4 + $0x88] sm:$0xf] %v3605
        %3614 = vst [vmem:[#allocation4 + $0xac] sm:$0xf] %v3606
        %3615 = vst [vmem:[#allocation4 + $0xd0] sm:$0xf] %v3607
        %3616 = vst [vmem:[#allocation4 + $0xf4] sm:$0xf] %v3608
        %3617 = vst [vmem:[#allocation4 + $0x118] sm:$0xf] %v3609
        %v3618 = vld [vmem:[%s722 + $0x2] sm:$0xff]
        %v3619 = vld [vmem:[%s722 + $0x12] sm:$0xff]
        %v3620 = vld [vmem:[%s722 + $0x22] sm:$0xff]
        %v3621 = vld [vmem:[%s722 + $0x32] sm:$0xff]
        %v3622 = vld [vmem:[%s722 + $0x42] sm:$0xff]
        %v3623 = vld [vmem:[%s722 + $0x52] sm:$0xff]
        %v3624 = vld [vmem:[%s722 + $0x62] sm:$0xff]
        %v3625 = vld [vmem:[%s722 + $0x72] sm:$0xff]
        %v3626 = vpack.c.bf16 %v3618, %v3618
        %v3627 = vpack.c.bf16 %v3619, %v3619
        %v3628 = vpack.c.bf16 %v3620, %v3620
        %v3629 = vpack.c.bf16 %v3621, %v3621
        %v3630 = vpack.c.bf16 %v3622, %v3622
        %v3631 = vpack.c.bf16 %v3623, %v3623
        %v3632 = vpack.c.bf16 %v3624, %v3624
        %v3633 = vpack.c.bf16 %v3625, %v3625
        %3634 = vst [vmem:[#allocation4 + $0x20] sm:$0xf] %v3626
        %3635 = vst [vmem:[#allocation4 + $0x44] sm:$0xf] %v3627
        %3636 = vst [vmem:[#allocation4 + $0x68] sm:$0xf] %v3628
        %3637 = vst [vmem:[#allocation4 + $0x8c] sm:$0xf] %v3629
        %3638 = vst [vmem:[#allocation4 + $0xb0] sm:$0xf] %v3630
        %3639 = vst [vmem:[#allocation4 + $0xd4] sm:$0xf] %v3631
        %3640 = vst [vmem:[#allocation4 + $0xf8] sm:$0xf] %v3632
        %3641 = vst [vmem:[#allocation4 + $0x11c] sm:$0xf] %v3633
        %v3642 = vld [vmem:[#allocation4] sm:$0xff]
        %v3643 = vld [vmem:[#allocation4 + $0x8] sm:$0xff]
        %v3644 = vld [vmem:[#allocation4 + $0x10] sm:$0xff]
        %v3645 = vld [vmem:[#allocation4 + $0x18] sm:$0xff]
        %v3646 = vld [vmem:[#allocation4 + $0x20] sm:$0xf]
        %v3647 = vld [vmem:[#allocation4 + $0x24] sm:$0xff]
        %v3648 = vld [vmem:[#allocation4 + $0x2c] sm:$0xff]
        %v3649 = vld [vmem:[#allocation4 + $0x34] sm:$0xff]
        %v3650 = vld [vmem:[#allocation4 + $0x3c] sm:$0xff]
        %v3651 = vld [vmem:[#allocation4 + $0x44] sm:$0xf]
        %v3652 = vld [vmem:[#allocation4 + $0x48] sm:$0xff]
        %v3653 = vld [vmem:[#allocation4 + $0x50] sm:$0xff]
        %v3654 = vld [vmem:[#allocation4 + $0x58] sm:$0xff]
        %v3655 = vld [vmem:[#allocation4 + $0x60] sm:$0xff]
        %v3656 = vld [vmem:[#allocation4 + $0x68] sm:$0xf]
        %v3657 = vld [vmem:[#allocation4 + $0x6c] sm:$0xff]
        %v3658 = vld [vmem:[#allocation4 + $0x74] sm:$0xff]
        %v3659 = vld [vmem:[#allocation4 + $0x7c] sm:$0xff]
        %v3660 = vld [vmem:[#allocation4 + $0x84] sm:$0xff]
        %v3661 = vld [vmem:[#allocation4 + $0x8c] sm:$0xf]
        %v3662 = vld [vmem:[#allocation4 + $0x90] sm:$0xff]
        %v3663 = vld [vmem:[#allocation4 + $0x98] sm:$0xff]
        %v3664 = vld [vmem:[#allocation4 + $0xa0] sm:$0xff]
        %v3665 = vld [vmem:[#allocation4 + $0xa8] sm:$0xff]
        %v3666 = vld [vmem:[#allocation4 + $0xb0] sm:$0xf]
        %v3667 = vld [vmem:[#allocation4 + $0xb4] sm:$0xff]
        %v3668 = vld [vmem:[#allocation4 + $0xbc] sm:$0xff]
        %v3669 = vld [vmem:[#allocation4 + $0xc4] sm:$0xff]
        %v3670 = vld [vmem:[#allocation4 + $0xcc] sm:$0xff]
        %v3671 = vld [vmem:[#allocation4 + $0xd4] sm:$0xf]
        %v3672 = vld [vmem:[#allocation4 + $0xd8] sm:$0xff]
        %v3673 = vld [vmem:[#allocation4 + $0xe0] sm:$0xff]
        %v3674 = vld [vmem:[#allocation4 + $0xe8] sm:$0xff]
        %v3675 = vld [vmem:[#allocation4 + $0xf0] sm:$0xff]
        %v3676 = vld [vmem:[#allocation4 + $0xf8] sm:$0xf]
        %v3677 = vld [vmem:[#allocation4 + $0xfc] sm:$0xff]
        %v3678 = vld [vmem:[#allocation4 + $0x104] sm:$0xff]
        %v3679 = vld [vmem:[#allocation4 + $0x10c] sm:$0xff]
        %v3680 = vld [vmem:[#allocation4 + $0x114] sm:$0xff]
        %v3681 = vld [vmem:[#allocation4 + $0x11c] sm:$0xf]
        %s3682 = scalar_lea.vmem %s3, 1152
        %v3683 = vld [vmem:[%s3682] sm:$0xf]
        %v3684 = vld [vmem:[%s3682 + $0x4] sm:$0xf]
        %v3685 = vld [vmem:[%s3682 + $0x8] sm:$0xf]
        %v3686 = vld [vmem:[%s3682 + $0xc] sm:$0xf]
        %v3687 = vld [vmem:[%s3682 + $0x10] sm:$0xf]
        %v3688 = vld [vmem:[%s3682 + $0x14] sm:$0xf]
        %v3689 = vld [vmem:[%s3682 + $0x18] sm:$0xf]
        %v3690 = vld [vmem:[%s3682 + $0x1c] sm:$0xf]
        %v3691 = vld [vmem:[%s3682 + $0x20] sm:$0xf]
        %v3692 = vld [vmem:[%s3682 + $0x24] sm:$0xf]
        %v3693 = vld [vmem:[%s3682 + $0x28] sm:$0xf]
        %v3694 = vld [vmem:[%s3682 + $0x2c] sm:$0xf]
        %v3695 = vld [vmem:[%s3682 + $0x30] sm:$0xf]
        %v3696 = vld [vmem:[%s3682 + $0x34] sm:$0xf]
        %v3697 = vld [vmem:[%s3682 + $0x38] sm:$0xf]
        %v3698 = vld [vmem:[%s3682 + $0x3c] sm:$0xf]
        %v3699 = vld [vmem:[%s3682 + $0x40] sm:$0xf]
        %v3700 = vld [vmem:[%s3682 + $0x44] sm:$0xf]
        %v3701 = vld [vmem:[%s3682 + $0x48] sm:$0xf]
        %v3702 = vld [vmem:[%s3682 + $0x4c] sm:$0xf]
        %v3703 = vld [vmem:[%s3682 + $0x50] sm:$0xf]
        %v3704 = vld [vmem:[%s3682 + $0x54] sm:$0xf]
        %v3705 = vld [vmem:[%s3682 + $0x58] sm:$0xf]
        %v3706 = vld [vmem:[%s3682 + $0x5c] sm:$0xf]
        %v3707 = vld [vmem:[%s3682 + $0x60] sm:$0xf]
        %v3708 = vld [vmem:[%s3682 + $0x64] sm:$0xf]
        %v3709 = vld [vmem:[%s3682 + $0x68] sm:$0xf]
        %v3710 = vld [vmem:[%s3682 + $0x6c] sm:$0xf]
        %v3711 = vld [vmem:[%s3682 + $0x70] sm:$0xf]
        %v3712 = vld [vmem:[%s3682 + $0x74] sm:$0xf]
        %v3713 = vld [vmem:[%s3682 + $0x78] sm:$0xf]
        %v3714 = vld [vmem:[%s3682 + $0x7c] sm:$0xf]
        %v3715 = vld [vmem:[%s3682 + $0x80] sm:$0xf]
        %v3716 = vld [vmem:[%s3682 + $0x84] sm:$0xf]
        %v3717 = vld [vmem:[%s3682 + $0x88] sm:$0xf]
        %v3718 = vld [vmem:[%s3682 + $0x8c] sm:$0xf]
        %v3719 = vld [vmem:[%s3682 + $0x90] sm:$0xf]
        %v3720 = vld [vmem:[%s3682 + $0x94] sm:$0xf]
        %v3721 = vld [vmem:[%s3682 + $0x98] sm:$0xf]
        %v3722 = vld [vmem:[%s3682 + $0x9c] sm:$0xf]
        %v3723 = vld [vmem:[%s3682 + $0xa0] sm:$0xf]
        %v3724 = vld [vmem:[%s3682 + $0xa4] sm:$0xf]
        %v3725 = vld [vmem:[%s3682 + $0xa8] sm:$0xf]
        %v3726 = vld [vmem:[%s3682 + $0xac] sm:$0xf]
        %v3727 = vld [vmem:[%s3682 + $0xb0] sm:$0xf]
        %v3728 = vld [vmem:[%s3682 + $0xb4] sm:$0xf]
        %v3729 = vld [vmem:[%s3682 + $0xb8] sm:$0xf]
        %v3730 = vld [vmem:[%s3682 + $0xbc] sm:$0xf]
        %v3731 = vld [vmem:[%s3682 + $0xc0] sm:$0xf]
        %v3732 = vld [vmem:[%s3682 + $0xc4] sm:$0xf]
        %v3733 = vld [vmem:[%s3682 + $0xc8] sm:$0xf]
        %v3734 = vld [vmem:[%s3682 + $0xcc] sm:$0xf]
        %v3735 = vld [vmem:[%s3682 + $0xd0] sm:$0xf]
        %v3736 = vld [vmem:[%s3682 + $0xd4] sm:$0xf]
        %v3737 = vld [vmem:[%s3682 + $0xd8] sm:$0xf]
        %v3738 = vld [vmem:[%s3682 + $0xdc] sm:$0xf]
        %v3739 = vld [vmem:[%s3682 + $0xe0] sm:$0xf]
        %v3740 = vld [vmem:[%s3682 + $0xe4] sm:$0xf]
        %v3741 = vld [vmem:[%s3682 + $0xe8] sm:$0xf]
        %v3742 = vld [vmem:[%s3682 + $0xec] sm:$0xf]
        %v3743 = vld [vmem:[%s3682 + $0xf0] sm:$0xf]
        %v3744 = vld [vmem:[%s3682 + $0xf4] sm:$0xf]
        %v3745 = vld [vmem:[%s3682 + $0xf8] sm:$0xf]
        %v3746 = vld [vmem:[%s3682 + $0xfc] sm:$0xf]
        %v3747 = vld [vmem:[%s3682 + $0x100] sm:$0xf]
        %v3748 = vld [vmem:[%s3682 + $0x104] sm:$0xf]
        %v3749 = vld [vmem:[%s3682 + $0x108] sm:$0xf]
        %v3750 = vld [vmem:[%s3682 + $0x10c] sm:$0xf]
        %v3751 = vld [vmem:[%s3682 + $0x110] sm:$0xf]
        %v3752 = vld [vmem:[%s3682 + $0x114] sm:$0xf]
        %v3753 = vld [vmem:[%s3682 + $0x118] sm:$0xf]
        %v3754 = vld [vmem:[%s3682 + $0x11c] sm:$0xf]
        %v3755 = vld [vmem:[%s3682 + $0x120] sm:$0xf]
        %v3756 = vld [vmem:[%s3682 + $0x124] sm:$0xf]
        %v3757 = vld [vmem:[%s3682 + $0x128] sm:$0xf]
        %v3758 = vld [vmem:[%s3682 + $0x12c] sm:$0xf]
        %v3759 = vld [vmem:[%s3682 + $0x130] sm:$0xf]
        %v3760 = vld [vmem:[%s3682 + $0x134] sm:$0xf]
        %v3761 = vld [vmem:[%s3682 + $0x138] sm:$0xf]
        %v3762 = vld [vmem:[%s3682 + $0x13c] sm:$0xf]
        %v3763 = vld [vmem:[%s3682 + $0x140] sm:$0xf]
        %v3764 = vld [vmem:[%s3682 + $0x144] sm:$0xf]
        %v3765 = vld [vmem:[%s3682 + $0x148] sm:$0xf]
        %v3766 = vld [vmem:[%s3682 + $0x14c] sm:$0xf]
        %v3767 = vld [vmem:[%s3682 + $0x150] sm:$0xf]
        %v3768 = vld [vmem:[%s3682 + $0x154] sm:$0xf]
        %v3769 = vld [vmem:[%s3682 + $0x158] sm:$0xf]
        %v3770 = vld [vmem:[%s3682 + $0x15c] sm:$0xf]
        %v3771 = vld [vmem:[%s3682 + $0x160] sm:$0xf]
        %v3772 = vld [vmem:[%s3682 + $0x164] sm:$0xf]
        %v3773 = vld [vmem:[%s3682 + $0x168] sm:$0xf]
        %v3774 = vld [vmem:[%s3682 + $0x16c] sm:$0xf]
        %v3775 = vld [vmem:[%s3682 + $0x170] sm:$0xf]
        %v3776 = vld [vmem:[%s3682 + $0x174] sm:$0xf]
        %v3777 = vld [vmem:[%s3682 + $0x178] sm:$0xf]
        %v3778 = vld [vmem:[%s3682 + $0x17c] sm:$0xf]
        %v3779 = vld [vmem:[%s3682 + $0x180] sm:$0xf]
        %v3780 = vld [vmem:[%s3682 + $0x184] sm:$0xf]
        %v3781 = vld [vmem:[%s3682 + $0x188] sm:$0xf]
        %v3782 = vld [vmem:[%s3682 + $0x18c] sm:$0xf]
        %v3783 = vld [vmem:[%s3682 + $0x190] sm:$0xf]
        %v3784 = vld [vmem:[%s3682 + $0x194] sm:$0xf]
        %v3785 = vld [vmem:[%s3682 + $0x198] sm:$0xf]
        %v3786 = vld [vmem:[%s3682 + $0x19c] sm:$0xf]
        %v3787 = vld [vmem:[%s3682 + $0x1a0] sm:$0xf]
        %v3788 = vld [vmem:[%s3682 + $0x1a4] sm:$0xf]
        %v3789 = vld [vmem:[%s3682 + $0x1a8] sm:$0xf]
        %v3790 = vld [vmem:[%s3682 + $0x1ac] sm:$0xf]
        %v3791 = vld [vmem:[%s3682 + $0x1b0] sm:$0xf]
        %v3792 = vld [vmem:[%s3682 + $0x1b4] sm:$0xf]
        %v3793 = vld [vmem:[%s3682 + $0x1b8] sm:$0xf]
        %v3794 = vld [vmem:[%s3682 + $0x1bc] sm:$0xf]
        %v3795 = vld [vmem:[%s3682 + $0x1c0] sm:$0xf]
        %v3796 = vld [vmem:[%s3682 + $0x1c4] sm:$0xf]
        %v3797 = vld [vmem:[%s3682 + $0x1c8] sm:$0xf]
        %v3798 = vld [vmem:[%s3682 + $0x1cc] sm:$0xf]
        %v3799 = vld [vmem:[%s3682 + $0x1d0] sm:$0xf]
        %v3800 = vld [vmem:[%s3682 + $0x1d4] sm:$0xf]
        %v3801 = vld [vmem:[%s3682 + $0x1d8] sm:$0xf]
        %v3802 = vld [vmem:[%s3682 + $0x1dc] sm:$0xf]
        %v3803 = vld [vmem:[%s3682 + $0x1e0] sm:$0xf]
        %v3804 = vld [vmem:[%s3682 + $0x1e4] sm:$0xf]
        %v3805 = vld [vmem:[%s3682 + $0x1e8] sm:$0xf]
        %v3806 = vld [vmem:[%s3682 + $0x1ec] sm:$0xf]
        %v3807 = vld [vmem:[%s3682 + $0x1f0] sm:$0xf]
        %v3808 = vld [vmem:[%s3682 + $0x1f4] sm:$0xf]
        %v3809 = vld [vmem:[%s3682 + $0x1f8] sm:$0xf]
        %v3810 = vld [vmem:[%s3682 + $0x1fc] sm:$0xf]
        %v3811 = vld [vmem:[%s3682 + $0x200] sm:$0xf]
        %v3812 = vld [vmem:[%s3682 + $0x204] sm:$0xf]
        %v3813 = vld [vmem:[%s3682 + $0x208] sm:$0xf]
        %v3814 = vld [vmem:[%s3682 + $0x20c] sm:$0xf]
        %v3815 = vld [vmem:[%s3682 + $0x210] sm:$0xf]
        %v3816 = vld [vmem:[%s3682 + $0x214] sm:$0xf]
        %v3817 = vld [vmem:[%s3682 + $0x218] sm:$0xf]
        %v3818 = vld [vmem:[%s3682 + $0x21c] sm:$0xf]
        %v3819 = vld [vmem:[%s3682 + $0x220] sm:$0xf]
        %v3820 = vld [vmem:[%s3682 + $0x224] sm:$0xf]
        %v3821 = vld [vmem:[%s3682 + $0x228] sm:$0xf]
        %v3822 = vld [vmem:[%s3682 + $0x22c] sm:$0xf]
        %v3823 = vld [vmem:[%s3682 + $0x230] sm:$0xf]
        %v3824 = vld [vmem:[%s3682 + $0x234] sm:$0xf]
        %v3825 = vld [vmem:[%s3682 + $0x238] sm:$0xf]
        %v3826 = vld [vmem:[%s3682 + $0x23c] sm:$0xf]
        %v3867 = vunpack.c.l.b16 %v3642
        %v3868 = vunpack.c.h.b16 %v3642
        %v3869 = vunpack.c.l.b16 %v3643
        %v3870 = vunpack.c.h.b16 %v3643
        %v3871 = vunpack.c.l.b16 %v3644
        %v3872 = vunpack.c.h.b16 %v3644
        %v3873 = vunpack.c.l.b16 %v3645
        %v3874 = vunpack.c.h.b16 %v3645
        %v3875 = vunpack.c.l.b16 %v3646
        %v3876 = vunpack.c.l.b16 %v3647
        %v3877 = vunpack.c.h.b16 %v3647
        %v3878 = vunpack.c.l.b16 %v3648
        %v3879 = vunpack.c.h.b16 %v3648
        %v3880 = vunpack.c.l.b16 %v3649
        %v3881 = vunpack.c.h.b16 %v3649
        %v3882 = vunpack.c.l.b16 %v3650
        %v3883 = vunpack.c.h.b16 %v3650
        %v3884 = vunpack.c.l.b16 %v3651
        %v3885 = vunpack.c.l.b16 %v3652
        %v3886 = vunpack.c.h.b16 %v3652
        %v3887 = vunpack.c.l.b16 %v3653
        %v3888 = vunpack.c.h.b16 %v3653
        %v3889 = vunpack.c.l.b16 %v3654
        %v3890 = vunpack.c.h.b16 %v3654
        %v3891 = vunpack.c.l.b16 %v3655
        %v3892 = vunpack.c.h.b16 %v3655
        %v3893 = vunpack.c.l.b16 %v3656
        %v3894 = vunpack.c.l.b16 %v3657
        %v3895 = vunpack.c.h.b16 %v3657
        %v3896 = vunpack.c.l.b16 %v3658
        %v3897 = vunpack.c.h.b16 %v3658
        %v3898 = vunpack.c.l.b16 %v3659
        %v3899 = vunpack.c.h.b16 %v3659
        %v3900 = vunpack.c.l.b16 %v3660
        %v3901 = vunpack.c.h.b16 %v3660
        %v3902 = vunpack.c.l.b16 %v3661
        %v3903 = vunpack.c.l.b16 %v3662
        %v3904 = vunpack.c.h.b16 %v3662
        %v3905 = vunpack.c.l.b16 %v3663
        %v3906 = vunpack.c.h.b16 %v3663
        %v3907 = vunpack.c.l.b16 %v3664
        %v3908 = vunpack.c.h.b16 %v3664
        %v3909 = vunpack.c.l.b16 %v3665
        %v3910 = vunpack.c.h.b16 %v3665
        %v3911 = vunpack.c.l.b16 %v3666
        %v3912 = vunpack.c.l.b16 %v3667
        %v3913 = vunpack.c.h.b16 %v3667
        %v3914 = vunpack.c.l.b16 %v3668
        %v3915 = vunpack.c.h.b16 %v3668
        %v3916 = vunpack.c.l.b16 %v3669
        %v3917 = vunpack.c.h.b16 %v3669
        %v3918 = vunpack.c.l.b16 %v3670
        %v3919 = vunpack.c.h.b16 %v3670
        %v3920 = vunpack.c.l.b16 %v3671
        %v3921 = vunpack.c.l.b16 %v3672
        %v3922 = vunpack.c.h.b16 %v3672
        %v3923 = vunpack.c.l.b16 %v3673
        %v3924 = vunpack.c.h.b16 %v3673
        %v3925 = vunpack.c.l.b16 %v3674
        %v3926 = vunpack.c.h.b16 %v3674
        %v3927 = vunpack.c.l.b16 %v3675
        %v3928 = vunpack.c.h.b16 %v3675
        %v3929 = vunpack.c.l.b16 %v3676
        %v3930 = vunpack.c.l.b16 %v3677
        %v3931 = vunpack.c.h.b16 %v3677
        %v3932 = vunpack.c.l.b16 %v3678
        %v3933 = vunpack.c.h.b16 %v3678
        %v3934 = vunpack.c.l.b16 %v3679
        %v3935 = vunpack.c.h.b16 %v3679
        %v3936 = vunpack.c.l.b16 %v3680
        %v3937 = vunpack.c.h.b16 %v3680
        %v3938 = vunpack.c.l.b16 %v3681
        %v3939 = vpack.c.b16 %v3876, %v3867
        %v3940 = vpack.c.b16 %v3877, %v3868
        %v3941 = vpack.c.b16 %v3878, %v3869
        %v3942 = vpack.c.b16 %v3879, %v3870
        %v3943 = vpack.c.b16 %v3880, %v3871
        %v3944 = vpack.c.b16 %v3881, %v3872
        %v3945 = vpack.c.b16 %v3882, %v3873
        %v3946 = vpack.c.b16 %v3883, %v3874
        %v3947 = vpack.c.b16 %v3884, %v3875
        %v3948 = vpack.c.b16 %v3894, %v3885
        %v3949 = vpack.c.b16 %v3895, %v3886
        %v3950 = vpack.c.b16 %v3896, %v3887
        %v3951 = vpack.c.b16 %v3897, %v3888
        %v3952 = vpack.c.b16 %v3898, %v3889
        %v3953 = vpack.c.b16 %v3899, %v3890
        %v3954 = vpack.c.b16 %v3900, %v3891
        %v3955 = vpack.c.b16 %v3901, %v3892
        %v3956 = vpack.c.b16 %v3902, %v3893
        %v3957 = vpack.c.b16 %v3912, %v3903
        %v3958 = vpack.c.b16 %v3913, %v3904
        %v3959 = vpack.c.b16 %v3914, %v3905
        %v3960 = vpack.c.b16 %v3915, %v3906
        %v3961 = vpack.c.b16 %v3916, %v3907
        %v3962 = vpack.c.b16 %v3917, %v3908
        %v3963 = vpack.c.b16 %v3918, %v3909
        %v3964 = vpack.c.b16 %v3919, %v3910
        %v3965 = vpack.c.b16 %v3920, %v3911
        %v3966 = vpack.c.b16 %v3930, %v3921
        %v3967 = vpack.c.b16 %v3931, %v3922
        %v3968 = vpack.c.b16 %v3932, %v3923
        %v3969 = vpack.c.b16 %v3933, %v3924
        %v3970 = vpack.c.b16 %v3934, %v3925
        %v3971 = vpack.c.b16 %v3935, %v3926
        %v3972 = vpack.c.b16 %v3936, %v3927
        %v3973 = vpack.c.b16 %v3937, %v3928
        %v3974 = vpack.c.b16 %v3938, %v3929
        %v4155 = vunpack.c.l.b16 %v3683
        %v4156 = vunpack.c.l.b16 %v3684
        %v4157 = vunpack.c.l.b16 %v3685
        %v4158 = vunpack.c.l.b16 %v3686
        %v4159 = vunpack.c.l.b16 %v3687
        %v4160 = vunpack.c.l.b16 %v3688
        %v4161 = vunpack.c.l.b16 %v3689
        %v4162 = vunpack.c.l.b16 %v3690
        %v4163 = vunpack.c.l.b16 %v3691
        %v4164 = vunpack.c.l.b16 %v3692
        %v4165 = vunpack.c.l.b16 %v3693
        %v4166 = vunpack.c.l.b16 %v3694
        %v4167 = vunpack.c.l.b16 %v3695
        %v4168 = vunpack.c.l.b16 %v3696
        %v4169 = vunpack.c.l.b16 %v3697
        %v4170 = vunpack.c.l.b16 %v3698
        %v4171 = vunpack.c.l.b16 %v3699
        %v4172 = vunpack.c.l.b16 %v3700
        %v4173 = vunpack.c.l.b16 %v3701
        %v4174 = vunpack.c.l.b16 %v3702
        %v4175 = vunpack.c.l.b16 %v3703
        %v4176 = vunpack.c.l.b16 %v3704
        %v4177 = vunpack.c.l.b16 %v3705
        %v4178 = vunpack.c.l.b16 %v3706
        %v4179 = vunpack.c.l.b16 %v3707
        %v4180 = vunpack.c.l.b16 %v3708
        %v4181 = vunpack.c.l.b16 %v3709
        %v4182 = vunpack.c.l.b16 %v3710
        %v4183 = vunpack.c.l.b16 %v3711
        %v4184 = vunpack.c.l.b16 %v3712
        %v4185 = vunpack.c.l.b16 %v3713
        %v4186 = vunpack.c.l.b16 %v3714
        %v4187 = vunpack.c.l.b16 %v3715
        %v4188 = vunpack.c.l.b16 %v3716
        %v4189 = vunpack.c.l.b16 %v3717
        %v4190 = vunpack.c.l.b16 %v3718
        %v4191 = vunpack.c.l.b16 %v3719
        %v4192 = vunpack.c.l.b16 %v3720
        %v4193 = vunpack.c.l.b16 %v3721
        %v4194 = vunpack.c.l.b16 %v3722
        %v4195 = vunpack.c.l.b16 %v3723
        %v4196 = vunpack.c.l.b16 %v3724
        %v4197 = vunpack.c.l.b16 %v3725
        %v4198 = vunpack.c.l.b16 %v3726
        %v4199 = vunpack.c.l.b16 %v3727
        %v4200 = vunpack.c.l.b16 %v3728
        %v4201 = vunpack.c.l.b16 %v3729
        %v4202 = vunpack.c.l.b16 %v3730
        %v4203 = vunpack.c.l.b16 %v3731
        %v4204 = vunpack.c.l.b16 %v3732
        %v4205 = vunpack.c.l.b16 %v3733
        %v4206 = vunpack.c.l.b16 %v3734
        %v4207 = vunpack.c.l.b16 %v3735
        %v4208 = vunpack.c.l.b16 %v3736
        %v4209 = vunpack.c.l.b16 %v3737
        %v4210 = vunpack.c.l.b16 %v3738
        %v4211 = vunpack.c.l.b16 %v3739
        %v4212 = vunpack.c.l.b16 %v3740
        %v4213 = vunpack.c.l.b16 %v3741
        %v4214 = vunpack.c.l.b16 %v3742
        %v4215 = vunpack.c.l.b16 %v3743
        %v4216 = vunpack.c.l.b16 %v3744
        %v4217 = vunpack.c.l.b16 %v3745
        %v4218 = vunpack.c.l.b16 %v3746
        %v4219 = vunpack.c.l.b16 %v3747
        %v4220 = vunpack.c.l.b16 %v3748
        %v4221 = vunpack.c.l.b16 %v3749
        %v4222 = vunpack.c.l.b16 %v3750
        %v4223 = vunpack.c.l.b16 %v3751
        %v4224 = vunpack.c.l.b16 %v3752
        %v4225 = vunpack.c.l.b16 %v3753
        %v4226 = vunpack.c.l.b16 %v3754
        %v4227 = vunpack.c.l.b16 %v3755
        %v4228 = vunpack.c.l.b16 %v3756
        %v4229 = vunpack.c.l.b16 %v3757
        %v4230 = vunpack.c.l.b16 %v3758
        %v4231 = vunpack.c.l.b16 %v3759
        %v4232 = vunpack.c.l.b16 %v3760
        %v4233 = vunpack.c.l.b16 %v3761
        %v4234 = vunpack.c.l.b16 %v3762
        %v4235 = vunpack.c.l.b16 %v3763
        %v4236 = vunpack.c.l.b16 %v3764
        %v4237 = vunpack.c.l.b16 %v3765
        %v4238 = vunpack.c.l.b16 %v3766
        %v4239 = vunpack.c.l.b16 %v3767
        %v4240 = vunpack.c.l.b16 %v3768
        %v4241 = vunpack.c.l.b16 %v3769
        %v4242 = vunpack.c.l.b16 %v3770
        %v4243 = vunpack.c.l.b16 %v3771
        %v4244 = vunpack.c.l.b16 %v3772
        %v4245 = vunpack.c.l.b16 %v3773
        %v4246 = vunpack.c.l.b16 %v3774
        %v4247 = vunpack.c.l.b16 %v3775
        %v4248 = vunpack.c.l.b16 %v3776
        %v4249 = vunpack.c.l.b16 %v3777
        %v4250 = vunpack.c.l.b16 %v3778
        %v4251 = vunpack.c.l.b16 %v3779
        %v4252 = vunpack.c.l.b16 %v3780
        %v4253 = vunpack.c.l.b16 %v3781
        %v4254 = vunpack.c.l.b16 %v3782
        %v4255 = vunpack.c.l.b16 %v3783
        %v4256 = vunpack.c.l.b16 %v3784
        %v4257 = vunpack.c.l.b16 %v3785
        %v4258 = vunpack.c.l.b16 %v3786
        %v4259 = vunpack.c.l.b16 %v3787
        %v4260 = vunpack.c.l.b16 %v3788
        %v4261 = vunpack.c.l.b16 %v3789
        %v4262 = vunpack.c.l.b16 %v3790
        %v4263 = vunpack.c.l.b16 %v3791
        %v4264 = vunpack.c.l.b16 %v3792
        %v4265 = vunpack.c.l.b16 %v3793
        %v4266 = vunpack.c.l.b16 %v3794
        %v4267 = vunpack.c.l.b16 %v3795
        %v4268 = vunpack.c.l.b16 %v3796
        %v4269 = vunpack.c.l.b16 %v3797
        %v4270 = vunpack.c.l.b16 %v3798
        %v4271 = vunpack.c.l.b16 %v3799
        %v4272 = vunpack.c.l.b16 %v3800
        %v4273 = vunpack.c.l.b16 %v3801
        %v4274 = vunpack.c.l.b16 %v3802
        %v4275 = vunpack.c.l.b16 %v3803
        %v4276 = vunpack.c.l.b16 %v3804
        %v4277 = vunpack.c.l.b16 %v3805
        %v4278 = vunpack.c.l.b16 %v3806
        %v4279 = vunpack.c.l.b16 %v3807
        %v4280 = vunpack.c.l.b16 %v3808
        %v4281 = vunpack.c.l.b16 %v3809
        %v4282 = vunpack.c.l.b16 %v3810
        %v4283 = vunpack.c.l.b16 %v3811
        %v4284 = vunpack.c.l.b16 %v3812
        %v4285 = vunpack.c.l.b16 %v3813
        %v4286 = vunpack.c.l.b16 %v3814
        %v4287 = vunpack.c.l.b16 %v3815
        %v4288 = vunpack.c.l.b16 %v3816
        %v4289 = vunpack.c.l.b16 %v3817
        %v4290 = vunpack.c.l.b16 %v3818
        %v4291 = vunpack.c.l.b16 %v3819
        %v4292 = vunpack.c.l.b16 %v3820
        %v4293 = vunpack.c.l.b16 %v3821
        %v4294 = vunpack.c.l.b16 %v3822
        %v4295 = vunpack.c.l.b16 %v3823
        %v4296 = vunpack.c.l.b16 %v3824
        %v4297 = vunpack.c.l.b16 %v3825
        %v4298 = vunpack.c.l.b16 %v3826
        %v4299 = vpack.c.b16 %v4156, %v4155
        %v4300 = vpack.c.b16 %v4158, %v4157
        %v4301 = vpack.c.b16 %v4160, %v4159
        %v4302 = vpack.c.b16 %v4162, %v4161
        %v4303 = vpack.c.b16 %v4164, %v4163
        %v4304 = vpack.c.b16 %v4166, %v4165
        %v4305 = vpack.c.b16 %v4168, %v4167
        %v4306 = vpack.c.b16 %v4170, %v4169
        %v4307 = vpack.c.b16 %v4172, %v4171
        %v4308 = vpack.c.b16 %v4174, %v4173
        %v4309 = vpack.c.b16 %v4176, %v4175
        %v4310 = vpack.c.b16 %v4178, %v4177
        %v4311 = vpack.c.b16 %v4180, %v4179
        %v4312 = vpack.c.b16 %v4182, %v4181
        %v4313 = vpack.c.b16 %v4184, %v4183
        %v4314 = vpack.c.b16 %v4186, %v4185
        %v4315 = vpack.c.b16 %v4188, %v4187
        %v4316 = vpack.c.b16 %v4190, %v4189
        %v4317 = vpack.c.b16 %v4192, %v4191
        %v4318 = vpack.c.b16 %v4194, %v4193
        %v4319 = vpack.c.b16 %v4196, %v4195
        %v4320 = vpack.c.b16 %v4198, %v4197
        %v4321 = vpack.c.b16 %v4200, %v4199
        %v4322 = vpack.c.b16 %v4202, %v4201
        %v4323 = vpack.c.b16 %v4204, %v4203
        %v4324 = vpack.c.b16 %v4206, %v4205
        %v4325 = vpack.c.b16 %v4208, %v4207
        %v4326 = vpack.c.b16 %v4210, %v4209
        %v4327 = vpack.c.b16 %v4212, %v4211
        %v4328 = vpack.c.b16 %v4214, %v4213
        %v4329 = vpack.c.b16 %v4216, %v4215
        %v4330 = vpack.c.b16 %v4218, %v4217
        %v4331 = vpack.c.b16 %v4220, %v4219
        %v4332 = vpack.c.b16 %v4222, %v4221
        %v4333 = vpack.c.b16 %v4224, %v4223
        %v4334 = vpack.c.b16 %v4226, %v4225
        %v4335 = vpack.c.b16 %v4228, %v4227
        %v4336 = vpack.c.b16 %v4230, %v4229
        %v4337 = vpack.c.b16 %v4232, %v4231
        %v4338 = vpack.c.b16 %v4234, %v4233
        %v4339 = vpack.c.b16 %v4236, %v4235
        %v4340 = vpack.c.b16 %v4238, %v4237
        %v4341 = vpack.c.b16 %v4240, %v4239
        %v4342 = vpack.c.b16 %v4242, %v4241
        %v4343 = vpack.c.b16 %v4244, %v4243
        %v4344 = vpack.c.b16 %v4246, %v4245
        %v4345 = vpack.c.b16 %v4248, %v4247
        %v4346 = vpack.c.b16 %v4250, %v4249
        %v4347 = vpack.c.b16 %v4252, %v4251
        %v4348 = vpack.c.b16 %v4254, %v4253
        %v4349 = vpack.c.b16 %v4256, %v4255
        %v4350 = vpack.c.b16 %v4258, %v4257
        %v4351 = vpack.c.b16 %v4260, %v4259
        %v4352 = vpack.c.b16 %v4262, %v4261
        %v4353 = vpack.c.b16 %v4264, %v4263
        %v4354 = vpack.c.b16 %v4266, %v4265
        %v4355 = vpack.c.b16 %v4268, %v4267
        %v4356 = vpack.c.b16 %v4270, %v4269
        %v4357 = vpack.c.b16 %v4272, %v4271
        %v4358 = vpack.c.b16 %v4274, %v4273
        %v4359 = vpack.c.b16 %v4276, %v4275
        %v4360 = vpack.c.b16 %v4278, %v4277
        %v4361 = vpack.c.b16 %v4280, %v4279
        %v4362 = vpack.c.b16 %v4282, %v4281
        %v4363 = vpack.c.b16 %v4284, %v4283
        %v4364 = vpack.c.b16 %v4286, %v4285
        %v4365 = vpack.c.b16 %v4288, %v4287
        %v4366 = vpack.c.b16 %v4290, %v4289
        %v4367 = vpack.c.b16 %v4292, %v4291
        %v4368 = vpack.c.b16 %v4294, %v4293
        %v4369 = vpack.c.b16 %v4296, %v4295
        %v4370 = vpack.c.b16 %v4298, %v4297
        %4443 = vmatprep.subr.bf16.mxu0 0
        %4444 = vmatpush1.bf16.msra.mxu0 %v4306
        %4445 = vmatprep.subr.bf16.mxu0 0
        %4446 = vmatpush1.bf16.msra.mxu0 %v4305
        %4447 = vmatprep.subr.bf16.mxu0 0
        %4448 = vmatpush1.bf16.msra.mxu0 %v4304
        %4449 = vmatprep.subr.bf16.mxu0 0
        %4450 = vmatpush1.bf16.msra.mxu0 %v4303
        %4451 = vmatprep.subr.bf16.mxu0 0
        %4452 = vmatpush1.bf16.msra.mxu0 %v4302
        %4453 = vmatprep.subr.bf16.mxu0 0
        %4454 = vmatpush1.bf16.msra.mxu0 %v4301
        %4455 = vmatprep.subr.bf16.mxu0 0
        %4456 = vmatpush1.bf16.msra.mxu0 %v4300
        %4457 = vmatprep.subr.bf16.mxu0 0
        %4458 = vmatpush1.bf16.msra.mxu0 %v4299
        %4459 = vmatprep.subr.bf16.mxu0 0
        %4460 = vmatpush2.bf16.msra.mxu0 %v4314
        %4461 = vmatprep.subr.bf16.mxu0 0
        %4462 = vmatpush2.bf16.msra.mxu0 %v4313
        %4463 = vmatprep.subr.bf16.mxu0 0
        %4464 = vmatpush2.bf16.msra.mxu0 %v4312
        %4465 = vmatprep.subr.bf16.mxu0 0
        %4466 = vmatpush2.bf16.msra.mxu0 %v4311
        %4467 = vmatprep.subr.bf16.mxu0 0
        %4468 = vmatpush2.bf16.msra.mxu0 %v4310
        %4469 = vmatprep.subr.bf16.mxu0 0
        %4470 = vmatpush2.bf16.msra.mxu0 %v4309
        %4471 = vmatprep.subr.bf16.mxu0 0
        %4472 = vmatpush2.bf16.msra.mxu0 %v4308
        %4473 = vmatprep.subr.bf16.mxu0 0
        %4474 = vmatpush2.bf16.msra.mxu0 %v4307
        %4475 = vmatprep.mubr.bf16.mxu0 %v3940
        %4476 = vmatmul.mubr.bf16.gmra.mxu0 %v3939
        %v4477 = vpop.f32.mrf.mxu0
        %v4478 = vadd.f32 0.0, %v4477
        %v4479 = vpop.f32.mrf.mxu0
        %v4480 = vpop.f32.mrf.mxu0
        %v4481 = vadd.f32 0.0, %v4480
        %v4482 = vpop.f32.mrf.mxu0
        %4483 = vmatprep.mubr.bf16.mxu0 %v3949
        %4484 = vmatmul.mubr.bf16.gmra.mxu0 %v3948
        %v4485 = vpop.f32.mrf.mxu0
        %v4486 = vadd.f32 0.0, %v4485
        %v4487 = vpop.f32.mrf.mxu0
        %v4488 = vpop.f32.mrf.mxu0
        %v4489 = vadd.f32 0.0, %v4488
        %v4490 = vpop.f32.mrf.mxu0
        %4491 = vmatprep.mubr.bf16.mxu0 %v3958
        %4492 = vmatmul.mubr.bf16.gmra.mxu0 %v3957
        %v4493 = vpop.f32.mrf.mxu0
        %v4494 = vadd.f32 0.0, %v4493
        %v4495 = vpop.f32.mrf.mxu0
        %v4496 = vpop.f32.mrf.mxu0
        %v4497 = vadd.f32 0.0, %v4496
        %v4498 = vpop.f32.mrf.mxu0
        %4499 = vmatprep.mubr.bf16.mxu0 %v3967
        %4500 = vmatmul.mubr.bf16.gmra.mxu0 %v3966
        %v4501 = vpop.f32.mrf.mxu0
        %v4502 = vadd.f32 0.0, %v4501
        %v4503 = vpop.f32.mrf.mxu0
        %v4504 = vpop.f32.mrf.mxu0
        %v4505 = vadd.f32 0.0, %v4504
        %v4506 = vpop.f32.mrf.mxu0
        %4507 = vdwg.mxu0
        %4508 = vmatprep.subr.bf16.mxu0 0
        %4509 = vmatpush1.bf16.msra.mxu0 %v4322
        %4510 = vmatprep.subr.bf16.mxu0 0
        %4511 = vmatpush1.bf16.msra.mxu0 %v4321
        %4512 = vmatprep.subr.bf16.mxu0 0
        %4513 = vmatpush1.bf16.msra.mxu0 %v4320
        %4514 = vmatprep.subr.bf16.mxu0 0
        %4515 = vmatpush1.bf16.msra.mxu0 %v4319
        %4516 = vmatprep.subr.bf16.mxu0 0
        %4517 = vmatpush1.bf16.msra.mxu0 %v4318
        %4518 = vmatprep.subr.bf16.mxu0 0
        %4519 = vmatpush1.bf16.msra.mxu0 %v4317
        %4520 = vmatprep.subr.bf16.mxu0 0
        %4521 = vmatpush1.bf16.msra.mxu0 %v4316
        %4522 = vmatprep.subr.bf16.mxu0 0
        %4523 = vmatpush1.bf16.msra.mxu0 %v4315
        %4524 = vmatprep.subr.bf16.mxu0 0
        %4525 = vmatpush2.bf16.msra.mxu0 %v4330
        %4526 = vmatprep.subr.bf16.mxu0 0
        %4527 = vmatpush2.bf16.msra.mxu0 %v4329
        %4528 = vmatprep.subr.bf16.mxu0 0
        %4529 = vmatpush2.bf16.msra.mxu0 %v4328
        %4530 = vmatprep.subr.bf16.mxu0 0
        %4531 = vmatpush2.bf16.msra.mxu0 %v4327
        %4532 = vmatprep.subr.bf16.mxu0 0
        %4533 = vmatpush2.bf16.msra.mxu0 %v4326
        %4534 = vmatprep.subr.bf16.mxu0 0
        %4535 = vmatpush2.bf16.msra.mxu0 %v4325
        %4536 = vmatprep.subr.bf16.mxu0 0
        %4537 = vmatpush2.bf16.msra.mxu0 %v4324
        %4538 = vmatprep.subr.bf16.mxu0 0
        %4539 = vmatpush2.bf16.msra.mxu0 %v4323
        %4540 = vmatprep.mubr.bf16.mxu0 %v3942
        %4541 = vmatmul.mubr.bf16.gmra.mxu0 %v3941
        %v4542 = vpop.f32.mrf.mxu0
        %v4543 = vadd.f32 %v4478, %v4542
        %v4544 = vpop.f32.mrf.mxu0
        %v4545 = vpop.f32.mrf.mxu0
        %v4546 = vadd.f32 %v4481, %v4545
        %v4547 = vpop.f32.mrf.mxu0
        %4548 = vmatprep.mubr.bf16.mxu0 %v3951
        %4549 = vmatmul.mubr.bf16.gmra.mxu0 %v3950
        %v4550 = vpop.f32.mrf.mxu0
        %v4551 = vadd.f32 %v4486, %v4550
        %v4552 = vpop.f32.mrf.mxu0
        %v4553 = vpop.f32.mrf.mxu0
        %v4554 = vadd.f32 %v4489, %v4553
        %v4555 = vpop.f32.mrf.mxu0
        %4556 = vmatprep.mubr.bf16.mxu0 %v3960
        %4557 = vmatmul.mubr.bf16.gmra.mxu0 %v3959
        %v4558 = vpop.f32.mrf.mxu0
        %v4559 = vadd.f32 %v4494, %v4558
        %v4560 = vpop.f32.mrf.mxu0
        %v4561 = vpop.f32.mrf.mxu0
        %v4562 = vadd.f32 %v4497, %v4561
        %v4563 = vpop.f32.mrf.mxu0
        %4564 = vmatprep.mubr.bf16.mxu0 %v3969
        %4565 = vmatmul.mubr.bf16.gmra.mxu0 %v3968
        %v4566 = vpop.f32.mrf.mxu0
        %v4567 = vadd.f32 %v4502, %v4566
        %v4568 = vpop.f32.mrf.mxu0
        %v4569 = vpop.f32.mrf.mxu0
        %v4570 = vadd.f32 %v4505, %v4569
        %v4571 = vpop.f32.mrf.mxu0
        %4572 = vdwg.mxu0
        %4573 = vmatprep.subr.bf16.mxu0 0
        %4574 = vmatpush1.bf16.msra.mxu0 %v4338
        %4575 = vmatprep.subr.bf16.mxu0 0
        %4576 = vmatpush1.bf16.msra.mxu0 %v4337
        %4577 = vmatprep.subr.bf16.mxu0 0
        %4578 = vmatpush1.bf16.msra.mxu0 %v4336
        %4579 = vmatprep.subr.bf16.mxu0 0
        %4580 = vmatpush1.bf16.msra.mxu0 %v4335
        %4581 = vmatprep.subr.bf16.mxu0 0
        %4582 = vmatpush1.bf16.msra.mxu0 %v4334
        %4583 = vmatprep.subr.bf16.mxu0 0
        %4584 = vmatpush1.bf16.msra.mxu0 %v4333
        %4585 = vmatprep.subr.bf16.mxu0 0
        %4586 = vmatpush1.bf16.msra.mxu0 %v4332
        %4587 = vmatprep.subr.bf16.mxu0 0
        %4588 = vmatpush1.bf16.msra.mxu0 %v4331
        %4589 = vmatprep.subr.bf16.mxu0 0
        %4590 = vmatpush2.bf16.msra.mxu0 %v4346
        %4591 = vmatprep.subr.bf16.mxu0 0
        %4592 = vmatpush2.bf16.msra.mxu0 %v4345
        %4593 = vmatprep.subr.bf16.mxu0 0
        %4594 = vmatpush2.bf16.msra.mxu0 %v4344
        %4595 = vmatprep.subr.bf16.mxu0 0
        %4596 = vmatpush2.bf16.msra.mxu0 %v4343
        %4597 = vmatprep.subr.bf16.mxu0 0
        %4598 = vmatpush2.bf16.msra.mxu0 %v4342
        %4599 = vmatprep.subr.bf16.mxu0 0
        %4600 = vmatpush2.bf16.msra.mxu0 %v4341
        %4601 = vmatprep.subr.bf16.mxu0 0
        %4602 = vmatpush2.bf16.msra.mxu0 %v4340
        %4603 = vmatprep.subr.bf16.mxu0 0
        %4604 = vmatpush2.bf16.msra.mxu0 %v4339
        %4605 = vmatprep.mubr.bf16.mxu0 %v3944
        %4606 = vmatmul.mubr.bf16.gmra.mxu0 %v3943
        %v4607 = vpop.f32.mrf.mxu0
        %v4608 = vadd.f32 %v4543, %v4607
        %v4609 = vpop.f32.mrf.mxu0
        %v4610 = vpop.f32.mrf.mxu0
        %v4611 = vadd.f32 %v4546, %v4610
        %v4612 = vpop.f32.mrf.mxu0
        %4613 = vmatprep.mubr.bf16.mxu0 %v3953
        %4614 = vmatmul.mubr.bf16.gmra.mxu0 %v3952
        %v4615 = vpop.f32.mrf.mxu0
        %v4616 = vadd.f32 %v4551, %v4615
        %v4617 = vpop.f32.mrf.mxu0
        %v4618 = vpop.f32.mrf.mxu0
        %v4619 = vadd.f32 %v4554, %v4618
        %v4620 = vpop.f32.mrf.mxu0
        %4621 = vmatprep.mubr.bf16.mxu0 %v3962
        %4622 = vmatmul.mubr.bf16.gmra.mxu0 %v3961
        %v4623 = vpop.f32.mrf.mxu0
        %v4624 = vadd.f32 %v4559, %v4623
        %v4625 = vpop.f32.mrf.mxu0
        %v4626 = vpop.f32.mrf.mxu0
        %v4627 = vadd.f32 %v4562, %v4626
        %v4628 = vpop.f32.mrf.mxu0
        %4629 = vmatprep.mubr.bf16.mxu0 %v3971
        %4630 = vmatmul.mubr.bf16.gmra.mxu0 %v3970
        %v4631 = vpop.f32.mrf.mxu0
        %v4632 = vadd.f32 %v4567, %v4631
        %v4633 = vpop.f32.mrf.mxu0
        %v4634 = vpop.f32.mrf.mxu0
        %v4635 = vadd.f32 %v4570, %v4634
        %v4636 = vpop.f32.mrf.mxu0
        %4637 = vdwg.mxu0
        %4638 = vmatprep.subr.bf16.mxu0 0
        %4639 = vmatpush1.bf16.msra.mxu0 %v4354
        %4640 = vmatprep.subr.bf16.mxu0 0
        %4641 = vmatpush1.bf16.msra.mxu0 %v4353
        %4642 = vmatprep.subr.bf16.mxu0 0
        %4643 = vmatpush1.bf16.msra.mxu0 %v4352
        %4644 = vmatprep.subr.bf16.mxu0 0
        %4645 = vmatpush1.bf16.msra.mxu0 %v4351
        %4646 = vmatprep.subr.bf16.mxu0 0
        %4647 = vmatpush1.bf16.msra.mxu0 %v4350
        %4648 = vmatprep.subr.bf16.mxu0 0
        %4649 = vmatpush1.bf16.msra.mxu0 %v4349
        %4650 = vmatprep.subr.bf16.mxu0 0
        %4651 = vmatpush1.bf16.msra.mxu0 %v4348
        %4652 = vmatprep.subr.bf16.mxu0 0
        %4653 = vmatpush1.bf16.msra.mxu0 %v4347
        %4654 = vmatprep.subr.bf16.mxu0 0
        %4655 = vmatpush2.bf16.msra.mxu0 %v4362
        %4656 = vmatprep.subr.bf16.mxu0 0
        %4657 = vmatpush2.bf16.msra.mxu0 %v4361
        %4658 = vmatprep.subr.bf16.mxu0 0
        %4659 = vmatpush2.bf16.msra.mxu0 %v4360
        %4660 = vmatprep.subr.bf16.mxu0 0
        %4661 = vmatpush2.bf16.msra.mxu0 %v4359
        %4662 = vmatprep.subr.bf16.mxu0 0
        %4663 = vmatpush2.bf16.msra.mxu0 %v4358
        %4664 = vmatprep.subr.bf16.mxu0 0
        %4665 = vmatpush2.bf16.msra.mxu0 %v4357
        %4666 = vmatprep.subr.bf16.mxu0 0
        %4667 = vmatpush2.bf16.msra.mxu0 %v4356
        %4668 = vmatprep.subr.bf16.mxu0 0
        %4669 = vmatpush2.bf16.msra.mxu0 %v4355
        %4670 = vmatprep.mubr.bf16.mxu0 %v3946
        %4671 = vmatmul.mubr.bf16.gmra.mxu0 %v3945
        %v4672 = vpop.f32.mrf.mxu0
        %v4673 = vadd.f32 %v4608, %v4672
        %v4674 = vpop.f32.mrf.mxu0
        %v4675 = vpop.f32.mrf.mxu0
        %v4676 = vadd.f32 %v4611, %v4675
        %v4677 = vpop.f32.mrf.mxu0
        %4678 = vmatprep.mubr.bf16.mxu0 %v3955
        %4679 = vmatmul.mubr.bf16.gmra.mxu0 %v3954
        %v4680 = vpop.f32.mrf.mxu0
        %v4681 = vadd.f32 %v4616, %v4680
        %v4682 = vpop.f32.mrf.mxu0
        %v4683 = vpop.f32.mrf.mxu0
        %v4684 = vadd.f32 %v4619, %v4683
        %v4685 = vpop.f32.mrf.mxu0
        %4686 = vmatprep.mubr.bf16.mxu0 %v3964
        %4687 = vmatmul.mubr.bf16.gmra.mxu0 %v3963
        %v4688 = vpop.f32.mrf.mxu0
        %v4689 = vadd.f32 %v4624, %v4688
        %v4690 = vpop.f32.mrf.mxu0
        %v4691 = vpop.f32.mrf.mxu0
        %v4692 = vadd.f32 %v4627, %v4691
        %v4693 = vpop.f32.mrf.mxu0
        %4694 = vmatprep.mubr.bf16.mxu0 %v3973
        %4695 = vmatmul.mubr.bf16.gmra.mxu0 %v3972
        %v4696 = vpop.f32.mrf.mxu0
        %v4697 = vadd.f32 %v4632, %v4696
        %v4698 = vpop.f32.mrf.mxu0
        %v4699 = vpop.f32.mrf.mxu0
        %v4700 = vadd.f32 %v4635, %v4699
        %v4701 = vpop.f32.mrf.mxu0
        %4702 = vdwg.mxu0
        %4703 = vmatprep.subr.bf16.mxu0 0
        %4704 = vmatpush1.bf16.msra.mxu0 %v4370
        %4705 = vmatprep.subr.bf16.mxu0 0
        %4706 = vmatpush1.bf16.msra.mxu0 %v4369
        %4707 = vmatprep.subr.bf16.mxu0 0
        %4708 = vmatpush1.bf16.msra.mxu0 %v4368
        %4709 = vmatprep.subr.bf16.mxu0 0
        %4710 = vmatpush1.bf16.msra.mxu0 %v4367
        %4711 = vmatprep.subr.bf16.mxu0 0
        %4712 = vmatpush1.bf16.msra.mxu0 %v4366
        %4713 = vmatprep.subr.bf16.mxu0 0
        %4714 = vmatpush1.bf16.msra.mxu0 %v4365
        %4715 = vmatprep.subr.bf16.mxu0 0
        %4716 = vmatpush1.bf16.msra.mxu0 %v4364
        %4717 = vmatprep.subr.bf16.mxu0 0
        %4718 = vmatpush1.bf16.msra.mxu0 %v4363
        %4719 = vmatprep.subr.bf16.mxu0 0
        %4720 = vmatpush2.bf16.msra.mxu0 0
        %4721 = vmatprep.subr.bf16.mxu0 0
        %4722 = vmatpush2.bf16.msra.mxu0 0
        %4723 = vmatprep.subr.bf16.mxu0 0
        %4724 = vmatpush2.bf16.msra.mxu0 0
        %4725 = vmatprep.subr.bf16.mxu0 0
        %4726 = vmatpush2.bf16.msra.mxu0 0
        %4727 = vmatprep.subr.bf16.mxu0 0
        %4728 = vmatpush2.bf16.msra.mxu0 0
        %4729 = vmatprep.subr.bf16.mxu0 0
        %4730 = vmatpush2.bf16.msra.mxu0 0
        %4731 = vmatprep.subr.bf16.mxu0 0
        %4732 = vmatpush2.bf16.msra.mxu0 0
        %4733 = vmatprep.subr.bf16.mxu0 0
        %4734 = vmatpush2.bf16.msra.mxu0 0
        %4735 = vmatprep.mubr.bf16.mxu0 0
        %4736 = vmatmul.mubr.bf16.gmra.mxu0 %v3947
        %v4737 = vpop.f32.mrf.mxu0
        %v4738 = vadd.f32 %v4673, %v4737
        %v4739 = vpop.f32.mrf.mxu0
        %v4740 = vpop.f32.mrf.mxu0
        %v4741 = vadd.f32 %v4676, %v4740
        %v4742 = vpop.f32.mrf.mxu0
        %4743 = vmatprep.mubr.bf16.mxu0 0
        %4744 = vmatmul.mubr.bf16.gmra.mxu0 %v3956
        %v4745 = vpop.f32.mrf.mxu0
        %v4746 = vadd.f32 %v4681, %v4745
        %v4747 = vpop.f32.mrf.mxu0
        %v4748 = vpop.f32.mrf.mxu0
        %v4749 = vadd.f32 %v4684, %v4748
        %v4750 = vpop.f32.mrf.mxu0
        %4751 = vmatprep.mubr.bf16.mxu0 0
        %4752 = vmatmul.mubr.bf16.gmra.mxu0 %v3965
        %v4753 = vpop.f32.mrf.mxu0
        %v4754 = vadd.f32 %v4689, %v4753
        %v4755 = vpop.f32.mrf.mxu0
        %v4756 = vpop.f32.mrf.mxu0
        %v4757 = vadd.f32 %v4692, %v4756
        %v4758 = vpop.f32.mrf.mxu0
        %4759 = vmatprep.mubr.bf16.mxu0 0
        %4760 = vmatmul.mubr.bf16.gmra.mxu0 %v3974
        %v4761 = vpop.f32.mrf.mxu0
        %v4762 = vadd.f32 %v4697, %v4761
        %v4763 = vpop.f32.mrf.mxu0
        %v4764 = vpop.f32.mrf.mxu0
        %v4765 = vadd.f32 %v4700, %v4764
        %v4766 = vpop.f32.mrf.mxu0
        %4767 = vdwg.mxu0
        %v4768 = vld [vmem:[#allocation2] sm:$0xff]
        %v4769 = vld [vmem:[#allocation2 + $0x8] sm:$0xff]
        %v4770 = vld [vmem:[#allocation2 + $0x10] sm:$0xff]
        %v4771 = vld [vmem:[#allocation2 + $0x18] sm:$0xff]
        %v4772 = vld [vmem:[#allocation2 + $0x20] sm:$0xff]
        %v4773 = vld [vmem:[#allocation2 + $0x28] sm:$0xff]
        %v4774 = vld [vmem:[#allocation2 + $0x30] sm:$0xff]
        %v4775 = vld [vmem:[#allocation2 + $0x38] sm:$0xff]
        %v4776 = vadd.f32 %v4768, %v4738
        %v4777 = vadd.f32 %v4769, %v4741
        %v4778 = vadd.f32 %v4770, %v4746
        %v4779 = vadd.f32 %v4771, %v4749
        %v4780 = vadd.f32 %v4772, %v4754
        %v4781 = vadd.f32 %v4773, %v4757
        %v4782 = vadd.f32 %v4774, %v4762
        %v4783 = vadd.f32 %v4775, %v4765
        %4784 = vst [vmem:[#allocation2] sm:$0xff] %v4776
        %4785 = vst [vmem:[#allocation2 + $0x8] sm:$0xff] %v4777
        %4786 = vst [vmem:[#allocation2 + $0x10] sm:$0xff] %v4778
        %4787 = vst [vmem:[#allocation2 + $0x18] sm:$0xff] %v4779
        %4788 = vst [vmem:[#allocation2 + $0x20] sm:$0xff] %v4780
        %4789 = vst [vmem:[#allocation2 + $0x28] sm:$0xff] %v4781
        %4790 = vst [vmem:[#allocation2 + $0x30] sm:$0xff] %v4782
        %4791 = vst [vmem:[#allocation2 + $0x38] sm:$0xff] %v4783
      $region52: #{basic_block_3d_forward.4} parent=43 // pred_fallthru
        _
      %v4792 = vld [vmem:[#allocation2] sm:$0xff]
      %v4793 = vld [vmem:[#allocation2 + $0x8] sm:$0xff]
      %v4794 = vld [vmem:[#allocation2 + $0x10] sm:$0xff]
      %v4795 = vld [vmem:[#allocation2 + $0x18] sm:$0xff]
      %v4796 = vld [vmem:[#allocation2 + $0x20] sm:$0xff]
      %v4797 = vld [vmem:[#allocation2 + $0x28] sm:$0xff]
      %v4798 = vld [vmem:[#allocation2 + $0x30] sm:$0xff]
      %v4799 = vld [vmem:[#allocation2 + $0x38] sm:$0xff]
      %v4800 = vadd.f32 %v4792, %v4793
      %v4801 = vadd.f32 %v4800, %v4794
      %v4802 = vadd.f32 %v4801, %v4795
      %v4803 = vadd.f32 %v4802, %v4796
      %v4804 = vadd.f32 %v4803, %v4797
      %v4805 = vadd.f32 %v4804, %v4798
      %v4806 = vadd.f32 %v4805, %v4799
      %v4807 = vrot.slane %v4806, 4
      %v4808 = vadd.f32 %v4806, %v4807
      %v4809 = vrot.slane %v4808, 2
      %v4810 = vadd.f32 %v4808, %v4809
      %v4811 = vrot.slane %v4810, 1
      %v4812 = vadd.f32 %v4810, %v4811
      %4813 = vst [vmem:[%s479] sm:$0x1] %v4812
      %v4814 = vmul.f32 %v4792, %v4792
      %v4815 = vmul.f32 %v4793, %v4793
      %v4816 = vmul.f32 %v4794, %v4794
      %v4817 = vmul.f32 %v4795, %v4795
      %v4818 = vmul.f32 %v4796, %v4796
      %v4819 = vmul.f32 %v4797, %v4797
      %v4820 = vmul.f32 %v4798, %v4798
      %v4821 = vmul.f32 %v4799, %v4799
      %v4822 = vadd.f32 %v4814, %v4815
      %v4823 = vadd.f32 %v4822, %v4816
      %v4824 = vadd.f32 %v4823, %v4817
      %v4825 = vadd.f32 %v4824, %v4818
      %v4826 = vadd.f32 %v4825, %v4819
      %v4827 = vadd.f32 %v4826, %v4820
      %v4828 = vadd.f32 %v4827, %v4821
      %v4829 = vrot.slane %v4828, 4
      %v4830 = vadd.f32 %v4828, %v4829
      %v4831 = vrot.slane %v4830, 2
      %v4832 = vadd.f32 %v4830, %v4831
      %v4833 = vrot.slane %v4832, 1
      %v4834 = vadd.f32 %v4832, %v4833
      %4835 = vst [vmem:[%s486] sm:$0x1] %v4834
      %4836 = vst [vmem:[%s472] sm:$0xff] %v4792
      %4837 = vst [vmem:[%s472 + $0x8] sm:$0xff] %v4793
      %4838 = vst [vmem:[%s472 + $0x10] sm:$0xff] %v4794
      %4839 = vst [vmem:[%s472 + $0x18] sm:$0xff] %v4795
      %4840 = vst [vmem:[%s472 + $0x20] sm:$0xff] %v4796
      %4841 = vst [vmem:[%s472 + $0x28] sm:$0xff] %v4797
      %4842 = vst [vmem:[%s472 + $0x30] sm:$0xff] %v4798
      %4843 = vst [vmem:[%s472 + $0x38] sm:$0xff] %v4799
      %s4844 = smul.u32 %s24, 4
      %s4845 = sadd.s32 %s4844, %s25
      %p4846 = scmp.lt.s32.totalorder %s4845, 7
      %s4847 = scalar_select %p4846, %s4845, 7
      %s4848 = smul.addr %s4847, 8
      %s4849 = smul.addr %s4848, 8
      %s4850 = scalar_lea.vmem %s6, %s4849
      %s4851 = smul.u32 %s24, 4
      %s4852 = sadd.s32 %s4851, %s25
      %p4853 = scmp.lt.s32.totalorder %s4852, 7
      %s4854 = scalar_select %p4853, %s4852, 7
      %s4855 = scalar_lea.vmem %s7, %s4854
      %s4856 = smul.u32 %s24, 4
      %s4857 = sadd.s32 %s4856, %s25
      %p4858 = scmp.lt.s32.totalorder %s4857, 7
      %s4859 = scalar_select %p4858, %s4857, 7
      %s4860 = scalar_lea.vmem %s8, %s4859
      // Predicated region
      $region53: #{basic_block_3d_forward.4} parent=43 // pred_check
        %p4861 = pneg %p219
      $region54: #{basic_block_3d_forward.4} parent=43 // pred_check_branch
        %4863 = sbr.rel (%p4861) target = $region56
      $region55: #{basic_block_3d_forward.4} parent=43 // pred_region
        %s4864 = smul.u32 %s24, 4
        %s4865 = sadd.s32 %s4864, %s25
      $region56: #{basic_block_3d_forward.4} parent=43 // pred_fallthru
        _
      // Predicated region
      $region57: #{basic_block_3d_forward.4} parent=43 // pred_check
        %p4866 = pneg %p249
      $region58: #{basic_block_3d_forward.4} parent=43 // pred_check_branch
        %4868 = sbr.rel (%p4866) target = $region60
      $region59: #{basic_block_3d_forward.4} parent=43 // pred_region
        %s4869 = smul.u32 %s24, 4
        %s4870 = sadd.s32 %s4869, %s25
      $region60: #{basic_block_3d_forward.4} parent=43 // pred_fallthru
        _
      // Predicated region
      $region61: #{basic_block_3d_forward.4} parent=43 // pred_check
        %p4871 = pneg %p279
      $region62: #{basic_block_3d_forward.4} parent=43 // pred_check_branch
        %4873 = sbr.rel (%p4871) target = $region64
      $region63: #{basic_block_3d_forward.4} parent=43 // pred_region
        %s4874 = smul.u32 %s24, 4
        %s4875 = sadd.s32 %s4874, %s25
      $region64: #{basic_block_3d_forward.4} parent=43 // pred_fallthru
        _
    $region44: #{basic_block_3d_forward.4} parent=5 // pred_fallthru
      _
    %p4876 = scmp.le.s32.totalorder 2, %s15
    // Predicated region
    $region65: #{basic_block_3d_forward.4} parent=5 // pred_check
      %p4877 = pneg %p4876
    $region66: #{basic_block_3d_forward.4} parent=5 // pred_check_branch
      %4879 = sbr.rel (%p4877) target = $region68
    $region67: #{basic_block_3d_forward.4} parent=5 // pred_region
      %s4880 = ssub.s32 %s15, 2
      // Predicated region
      $region69: #{basic_block_3d_forward.4} parent=67 // pred_check
        %p4881 = pneg %p225
      $region70: #{basic_block_3d_forward.4} parent=67 // pred_check_branch
        %4883 = sbr.rel (%p4881) target = $region72
      $region71: #{basic_block_3d_forward.4} parent=67 // pred_region
        %s4884 = smul.u32 %s26, 4
        %s4885 = sadd.s32 %s4884, %s27
        %p4886 = scmp.lt.s32.totalorder %s4885, 7
        %s4887 = scalar_select %p4886, %s4885, 7
        %s4888 = smul.addr %s4887, 8
        %s4889 = smul.addr %s4888, 8
        %s4890 = scalar_lea.vmem %s6, %s4889
      $region72: #{basic_block_3d_forward.4} parent=67 // pred_fallthru
        _
      // Predicated region
      $region73: #{basic_block_3d_forward.4} parent=67 // pred_check
        %p4891 = pneg %p255
      $region74: #{basic_block_3d_forward.4} parent=67 // pred_check_branch
        %4893 = sbr.rel (%p4891) target = $region76
      $region75: #{basic_block_3d_forward.4} parent=67 // pred_region
        %s4894 = smul.u32 %s26, 4
        %s4895 = sadd.s32 %s4894, %s27
        %p4896 = scmp.lt.s32.totalorder %s4895, 7
        %s4897 = scalar_select %p4896, %s4895, 7
        %s4898 = scalar_lea.vmem %s7, %s4897
      $region76: #{basic_block_3d_forward.4} parent=67 // pred_fallthru
        _
      // Predicated region
      $region77: #{basic_block_3d_forward.4} parent=67 // pred_check
        %p4899 = pneg %p285
      $region78: #{basic_block_3d_forward.4} parent=67 // pred_check_branch
        %4901 = sbr.rel (%p4899) target = $region80
      $region79: #{basic_block_3d_forward.4} parent=67 // pred_region
        %s4902 = smul.u32 %s26, 4
        %s4903 = sadd.s32 %s4902, %s27
        %p4904 = scmp.lt.s32.totalorder %s4903, 7
        %s4905 = scalar_select %p4904, %s4903, 7
        %s4906 = scalar_lea.vmem %s8, %s4905
      $region80: #{basic_block_3d_forward.4} parent=67 // pred_fallthru
        _
    $region68: #{basic_block_3d_forward.4} parent=5 // pred_fallthru
      _
  $region6: #{basic_block_3d_forward.4} parent=0 // loop_footer
    %s19 = sadd.s32 1, %s15
  $region7: #{basic_block_3d_forward.4} parent=0 // loop_footer_branch
    %14 = sbr.rel target = $region3
  $region8: #{basic_block_3d_forward.4} parent=0 // loop_exit
    _

</llo_original>
